<compile_context>
chip_gen: v6e
topology: v6e:2x2x1
jax: 0.10.0
libtpu: 0.0.40
codegen_flags: <defaults>
</compile_context>

<pallas_src>
import functools

import jax
import jax.numpy as jnp
from jax.experimental import pallas as pl
from jax.experimental.pallas import tpu as pltpu


def _danet_head_kernel(C, C8, HW, HWp, Bblk,
                       x_ref, ws_ref, bs_ref, alpha_ref, wfc_ref, bfc_ref,
                       y_ref, f_ref):
    X = x_ref[...]                                    # (C, Bblk*HWp) f32
    Xb = X.astype(jnp.bfloat16)

    # conv_b / conv_c / conv_d (1x1 convs == channel matmuls) fused into a
    # single wide MXU matmul; lane dim = Bblk*HWp (>=256 on v6e/v7x).
    P = jnp.dot(ws_ref[...], Xb, preferred_element_type=jnp.float32)
    P = P + bs_ref[...]                               # (2*C8 + C, Bblk*HWp) f32

    if HWp != HW:
        # Zero the padded spatial columns (the conv bias would otherwise leak
        # into the attention) and build the key mask once (hoisted).
        col = jax.lax.broadcasted_iota(jnp.int32, (1, HWp), 1)
        valid = col < HW                              # (1, HWp) bool
        P = P * jnp.tile(valid, (1, Bblk)).astype(jnp.float32)
        key_bias = jnp.where(valid, 0.0, -1e30).astype(jnp.float32)  # (1, HWp)

    fb = P[:C8].astype(jnp.bfloat16)                  # (C8, Bblk*HWp)
    fcf = P[C8:2 * C8].astype(jnp.bfloat16)           # (C8, Bblk*HWp)
    fd = P[2 * C8:].astype(jnp.bfloat16)              # (C,  Bblk*HWp)

    alpha = alpha_ref[0, 0]

    # TODO(synk): for full-resolution DANet feature maps (HW in the thousands)
    # the (HWp, HWp) attention tile must be streamed with an online softmax and
    # the fc weight K-tiled with an accumulator, or the working set will not
    # fit v7x's 64 MiB VMEM (it may still fit v5e/v6e's 128 MiB).
    for bb in range(Bblk):        # static loop; all slices are 128-aligned lane tiles
        sl = slice(bb * HWp, (bb + 1) * HWp)
        # attention_S[i, j] = sum_k fb[k, i] * fcf[k, j]  ( = feature_b^T @ feature_c )
        S = jax.lax.dot_general(fb[:, sl], fcf[:, sl], (((0,), (0,)), ((), ())),
                                preferred_element_type=jnp.float32)   # (HWp, HWp)
        if HWp != HW:
            S = S + key_bias      # padded key columns -> -1e30 before softmax
        m = jnp.max(S, axis=-1, keepdims=True)
        # TODO(synk): at large HW compute this exp stream in bf16 on v6e/v7x
        # (bf16 EUP); keep f32 exp on v5e.
        p = jnp.exp(S - m)
        inv = pl.reciprocal(jnp.sum(p, axis=-1, keepdims=True), approx=True)
        A = (p * inv).astype(jnp.bfloat16)            # softmax(dim=-1)
        # feature_e = feature_d @ attention_S (no transpose, as in the PyTorch PAM)
        E_b = jnp.dot(fd[:, sl], A, preferred_element_type=jnp.float32)  # (C, HWp)
        X_b = X[:, sl]                                # (C, HWp) f32
        fused_b = X_b * (alpha * E_b + X_b)           # torch.mul(backbone, pam)
        # Flatten in x.view(b, -1) order (c*HWp + hw) straight into the VMEM
        # scratch row: no concatenate/stack, live range bounded per iteration.
        f_ref[pl.ds(bb, 1), :] = fused_b.reshape(1, C * HWp)

    # fc + relu: one lane-dense MXU matmul. M = Bblk (full sublane tile when
    # Bblk >= 8), K-major pre-transposed weight, N = n_pad (multiple of 128 ->
    # unmasked full-lane stores).
    y = jnp.dot(f_ref[...].astype(jnp.bfloat16), wfc_ref[...],
                preferred_element_type=jnp.float32)   # (Bblk, n_pad)
    y_ref[...] = jnp.maximum(y + bfc_ref[...], 0.0)


def _pick_block_b(B, C, HWp):
    """Generation-aware batch-block choice.

    * block_b*HWp >= 256 lanes fills the 2x256 MXU on v6e/v7x (automatic once
      block_b >= 2 with HWp >= 128; 128 lanes already saturate v5e's 4x128).
    * block_b >= 8 gives the fc matmul a full (8,128) sublane tile on M.
    * nb = B // block_b >= 2 keeps both v7x TensorCores busy.
    * the f32 activation block stays under a VMEM budget (it is double-buffered).
    """
    budget = 8 * 1024 * 1024
    best = 1
    for d in range(1, B + 1):
        if B % d:
            continue
        if B // d < 2 and B > 1:       # keep >= 2 grid steps when possible
            continue
        if d * HWp * C * 4 > budget:
            continue
        best = d
    return best


def _vmem_limit_bytes(C, C8, HWp, block_b, n_pad, chw_pad):
    """Advisory VMEM limit computed from the actual block / scratch sizes."""
    f32, bf16 = 4, 2
    lanes = block_b * HWp
    oc = 2 * C8 + C
    est = (
        2 * C * lanes * f32                     # x block, double-buffered
        + 2 * block_b * n_pad * f32             # out block, double-buffered
        + oc * C * bf16 + oc * f32              # stacked conv w/b (single-buffered)
        + chw_pad * n_pad * bf16 + n_pad * f32  # fc weight/bias (single-buffered)
        + block_b * chw_pad * f32               # fused scratch
        + block_b * chw_pad * bf16              # bf16 cast of fused for the fc
        + oc * lanes * (f32 + bf16)             # P and its bf16 slices
        + C * lanes * bf16                      # bf16 cast of X
        + 6 * HWp * HWp * f32                   # per-batch S / softmax temporaries
    )
    # generous headroom for compiler temporaries, capped below v7x's 64 MiB
    return int(min(max(2 * est, 16 * 1024 * 1024), 56 * 1024 * 1024))


def danet_attention_head(x_nchw, params, *, block_b=None):
    """PAM attention + elementwise mul + flatten + fc + relu as one Pallas kernel."""
    B, C, H, W = x_nchw.shape
    HW = H * W
    HWp = ((HW + 127) // 128) * 128      # per-batch lane padding -> aligned slices
    C8 = C // 8
    oc = 2 * C8 + C
    num_class = params["bfc"].shape[0]
    n_pad = ((num_class + 127) // 128) * 128
    chw_pad = C * HWp

    if block_b is None:
        block_b = _pick_block_b(B, C, HWp)
    assert B % block_b == 0, "batch must be divisible by the batch block"
    nb = B // block_b

    # Backbone feature map: pad HW to HWp and stack the batch block along the
    # lane dim (column index inside a block = bb*HWp + hw, 128-aligned chunks).
    x3 = x_nchw.reshape(B, C, HW).astype(jnp.float32)
    if HWp != HW:
        x3 = jnp.pad(x3, ((0, 0), (0, 0), (0, HWp - HW)))
    x_blk = (x3.reshape(nb, block_b, C, HWp)
               .transpose(0, 2, 1, 3)
               .reshape(nb, C, block_b * HWp))

    # Stacked 1x1-conv weights / biases (single MXU matmul in the kernel).
    w_stack = jnp.concatenate([params["wb"], params["wc"], params["wd"]],
                              axis=0).astype(jnp.bfloat16)              # (oc, C)
    b_stack = jnp.concatenate([params["bb"], params["bc"], params["bd"]],
                              axis=0).reshape(oc, 1).astype(jnp.float32)
    alpha = params["alpha"].reshape(1, 1).astype(jnp.float32)

    # fc weight pre-transposed to K-major (C*HWp, n_pad): MXU-native RHS layout.
    # Spatial-padding rows and class-padding columns are zero.
    wfc3 = params["wfc"].reshape(num_class, C, HW).astype(jnp.float32)
    wfc_pad = jnp.zeros((n_pad, C, HWp), jnp.float32).at[:num_class, :, :HW].set(wfc3)
    wfc_t = wfc_pad.reshape(n_pad, chw_pad).T.astype(jnp.bfloat16)       # (C*HWp, n_pad)
    bfc = jnp.zeros((1, n_pad), jnp.float32).at[0, :num_class].set(
        params["bfc"].astype(jnp.float32))

    kernel = functools.partial(_danet_head_kernel, C, C8, HW, HWp, block_b)

    grid_spec = pltpu.PrefetchScalarGridSpec(
        num_scalar_prefetch=0,
        grid=(nb,),
        in_specs=[
            # per-step activation block (double-buffered by default)
            pl.BlockSpec((None, C, block_b * HWp), lambda g: (g, 0, 0)),
            # constant-index operands: single-buffered (halves their VMEM cost)
            pl.BlockSpec((oc, C), lambda g: (0, 0), pipeline_mode=pl.Buffered(1)),
            pl.BlockSpec((oc, 1), lambda g: (0, 0), pipeline_mode=pl.Buffered(1)),
            pl.BlockSpec(memory_space=pltpu.MemorySpace.SMEM),           # alpha scalar
            pl.BlockSpec((chw_pad, n_pad), lambda g: (0, 0), pipeline_mode=pl.Buffered(1)),
            pl.BlockSpec((1, n_pad), lambda g: (0, 0), pipeline_mode=pl.Buffered(1)),
        ],
        out_specs=pl.BlockSpec((None, block_b, n_pad), lambda g: (g, 0, 0)),
        scratch_shapes=[pltpu.VMEM((block_b, chw_pad), jnp.float32)],   # fused rows
    )

    out = pl.pallas_call(
        kernel,
        out_shape=jax.ShapeDtypeStruct((nb, block_b, n_pad), jnp.float32),
        grid_spec=grid_spec,
        compiler_params=pltpu.CompilerParams(
            dimension_semantics=("parallel",),
            vmem_limit_bytes=_vmem_limit_bytes(C, C8, HWp, block_b, n_pad, chw_pad)),
    )(x_blk, w_stack, b_stack, alpha, wfc_t, bfc)

    return out.reshape(B, n_pad)[:, :num_class]


def reference_forward(x_nchw, params):
    """Pure-JAX f32 reference mirroring the PyTorch forward (post-backbone part)."""
    B, C, H, W = x_nchw.shape
    HW = H * W
    x = x_nchw.reshape(B, C, HW)
    fb = jnp.einsum("oc,bch->boh", params["wb"], x) + params["bb"][None, :, None]
    fcf = jnp.einsum("oc,bch->boh", params["wc"], x) + params["bc"][None, :, None]
    S = jnp.einsum("bki,bkj->bij", fb, fcf)            # torch.bmm(feature_b^T, feature_c)
    S = jax.nn.softmax(S, axis=-1)
    fd = jnp.einsum("oc,bch->boh", params["wd"], x) + params["bd"][None, :, None]
    E = jnp.einsum("bch,bhj->bcj", fd, S)              # torch.bmm(feature_d, attention_S)
    pam = params["alpha"] * E + x
    fused = (x * pam).reshape(B, C * HW)
    y = fused @ params["wfc"].T + params["bfc"][None, :]
    return jnp.maximum(y, 0.0)


if __name__ == "__main__":
    # Small stand-in shapes for the resnet34+avgpool output (real model: B, 512, 1, 1).
    # B=16 -> block_b=8 (full fc sublane tile, 1024-lane conv matmul) and nb=2
    # grid steps (both v7x TensorCores busy).  HW=64 exercises the HWp=128
    # padding + softmax-mask path.
    B, C, H, W = 16, 64, 8, 8
    NUM_CLASS = 10
    C8 = C // 8
    HW = H * W

    key = jax.random.PRNGKey(0)
    ks = jax.random.split(key, 9)

    def winit(k, shape, fan_in):
        return jax.random.normal(k, shape, jnp.float32) / jnp.sqrt(jnp.float32(fan_in))

    params = {
        "wb": winit(ks[0], (C8, C), C), "bb": winit(ks[1], (C8,), C),
        "wc": winit(ks[2], (C8, C), C), "bc": winit(ks[3], (C8,), C),
        "wd": winit(ks[4], (C, C), C), "bd": winit(ks[5], (C,), C),
        # PyTorch's PAM initializes alpha to 0; use a nonzero deterministic value
        # so the attention path actually contributes to the output here.
        "alpha": jnp.array([0.1], jnp.float32),
        "wfc": winit(ks[6], (NUM_CLASS, C * HW), C * HW),
        "bfc": winit(ks[7], (NUM_CLASS,), C * HW),
    }
    x = jax.random.normal(ks[8], (B, C, H, W), jnp.float32)   # backbone feature map

    y = jax.block_until_ready(danet_attention_head(x, params))
    y_ref = reference_forward(x, params)

    assert y.shape == (B, NUM_CLASS)
    # bf16 matmul operands (f32 accumulation) + approx softmax reciprocal ->
    # slightly looser tolerance than pure f32.
    assert bool(jnp.allclose(y, y_ref, rtol=2e-2, atol=2e-2)), (y, y_ref)
    print("KERNEL_OK")
</pallas_src>

<mosaic_0001>
module attributes {stable_mosaic.version = 11 : i64} {
  func.func @_danet_head_kernel(%arg0: i32, %arg1: memref<1x64x1024xf32, #tpu.memory_space<vmem>>, %arg2: memref<80x64xbf16, #tpu.memory_space<vmem>>, %arg3: memref<80x1xf32, #tpu.memory_space<vmem>>, %arg4: memref<1x1xf32, #tpu.memory_space<smem>>, %arg5: memref<8192x128xbf16, #tpu.memory_space<vmem>>, %arg6: memref<1x128xf32, #tpu.memory_space<vmem>>, %arg7: memref<1x8x128xf32, #tpu.memory_space<vmem>>, %arg8: memref<8x8192xf32, #tpu.memory_space<vmem>>) attributes {dimension_semantics = [#tpu.dimension_semantics<parallel>], iteration_bounds = array<i64: 2>, scalar_prefetch = 0 : i64, scratch_operands = 1 : i64, tpu.core_type = #tpu.core_type<tc>, window_params = [{transform_indices = @transform_0, window_bounds = array<i64: 1, 64, 1024>}, {pipeline_mode = #tpu.pipeline_mode<synchronous>, transform_indices = @transform_1, window_bounds = array<i64: 80, 64>}, {pipeline_mode = #tpu.pipeline_mode<synchronous>, transform_indices = @transform_2, window_bounds = array<i64: 80, 1>}, {transform_indices = @transform_3, window_bounds = array<i64: 1, 1>}, {pipeline_mode = #tpu.pipeline_mode<synchronous>, transform_indices = @transform_4, window_bounds = array<i64: 8192, 128>}, {pipeline_mode = #tpu.pipeline_mode<synchronous>, transform_indices = @transform_5, window_bounds = array<i64: 1, 128>}, {transform_indices = @transform_6, window_bounds = array<i64: 1, 8, 128>}]} {
    %c0 = arith.constant 0 : index
    %c0_0 = arith.constant 0 : index
    %c0_1 = arith.constant 0 : index
    %0 = vector.load %arg1[%c0, %c0_0, %c0_1] : memref<1x64x1024xf32, #tpu.memory_space<vmem>>, vector<1x64x1024xf32>
    %1 = vector.shape_cast %0 : vector<1x64x1024xf32> to vector<64x1024xf32>
    %2 = arith.truncf %1 : vector<64x1024xf32> to vector<64x1024xbf16>
    %c0_2 = arith.constant 0 : index
    %c0_3 = arith.constant 0 : index
    %3 = vector.load %arg2[%c0_2, %c0_3] : memref<80x64xbf16, #tpu.memory_space<vmem>>, vector<80x64xbf16>
    %cst = arith.constant dense<0.000000e+00> : vector<80x1024xf32>
    %4 = tpu.matmul %3, %2, %cst {dimension_numbers = #tpu.dot_dimension_numbers<[1], [0], [0], [1], [0, 0, 1, 1], [], []>} : vector<80x64xbf16>, vector<64x1024xbf16>, vector<80x1024xf32> -> vector<80x1024xf32>
    %c0_4 = arith.constant 0 : index
    %c0_5 = arith.constant 0 : index
    %5 = vector.load %arg3[%c0_4, %c0_5] : memref<80x1xf32, #tpu.memory_space<vmem>>, vector<80x1xf32>
    %6 = vector.broadcast %5 : vector<80x1xf32> to vector<80x1024xf32>
    %7 = arith.addf %4, %6 : vector<80x1024xf32>
    %8 = tpu.iota {dimensions = array<i32: 1>} : vector<1x128xi32>
    %c64_i32 = arith.constant 64 : i32
    %9 = vector.broadcast %c64_i32 : i32 to vector<1x128xi32>
    %10 = arith.cmpi slt, %8, %9 : vector<1x128xi32>
    %11 = tpu.concatenate %10, %10, %10, %10, %10, %10, %10, %10 in 1 : vector<1x128xi1>, vector<1x128xi1>, vector<1x128xi1>, vector<1x128xi1>, vector<1x128xi1>, vector<1x128xi1>, vector<1x128xi1>, vector<1x128xi1> -> vector<1x1024xi1>
    %12 = arith.extui %11 : vector<1x1024xi1> to vector<1x1024xi32>
    %13 = arith.sitofp %12 : vector<1x1024xi32> to vector<1x1024xf32>
    %14 = vector.broadcast %13 : vector<1x1024xf32> to vector<80x1024xf32>
    %15 = arith.mulf %7, %14 : vector<80x1024xf32>
    %cst_6 = arith.constant 0.000000e+00 : f32
    %cst_7 = arith.constant -1.000000e+30 : f32
    %16 = vector.broadcast %cst_6 : f32 to vector<1x128xf32>
    %17 = vector.broadcast %cst_7 : f32 to vector<1x128xf32>
    %18 = arith.select %10, %16, %17 : vector<1x128xi1>, vector<1x128xf32>
    %19 = vector.extract_strided_slice %15 {offsets = [0, 0], sizes = [8, 1024], strides = [1, 1]} : vector<80x1024xf32> to vector<8x1024xf32>
    %20 = arith.truncf %19 : vector<8x1024xf32> to vector<8x1024xbf16>
    %21 = vector.extract_strided_slice %15 {offsets = [8, 0], sizes = [8, 1024], strides = [1, 1]} : vector<80x1024xf32> to vector<8x1024xf32>
    %22 = arith.truncf %21 : vector<8x1024xf32> to vector<8x1024xbf16>
    %23 = vector.extract_strided_slice %15 {offsets = [16, 0], sizes = [64, 1024], strides = [1, 1]} : vector<80x1024xf32> to vector<64x1024xf32>
    %24 = arith.truncf %23 : vector<64x1024xf32> to vector<64x1024xbf16>
    %c0_8 = arith.constant 0 : index
    %c0_9 = arith.constant 0 : index
    %25 = memref.load %arg4[%c0_8, %c0_9] : memref<1x1xf32, #tpu.memory_space<smem>>
    %26 = vector.extract_strided_slice %20 {offsets = [0, 0], sizes = [8, 128], strides = [1, 1]} : vector<8x1024xbf16> to vector<8x128xbf16>
    %27 = vector.extract_strided_slice %22 {offsets = [0, 0], sizes = [8, 128], strides = [1, 1]} : vector<8x1024xbf16> to vector<8x128xbf16>
    %cst_10 = arith.constant dense<0.000000e+00> : vector<128x128xf32>
    %28 = tpu.matmul %26, %27, %cst_10 {dimension_numbers = #tpu.dot_dimension_numbers<[0], [0], [1], [1], [0, 1, 1, 1], [], []>} : vector<8x128xbf16>, vector<8x128xbf16>, vector<128x128xf32> -> vector<128x128xf32>
    %29 = vector.broadcast %18 : vector<1x128xf32> to vector<128x128xf32>
    %30 = arith.addf %28, %29 : vector<128x128xf32>
    %cst_11 = arith.constant dense<0xFF800000> : vector<128xf32>
    %31 = vector.multi_reduction <maximumf>, %30, %cst_11 [1] : vector<128x128xf32> to vector<128xf32>
    %32 = vector.shape_cast %31 : vector<128xf32> to vector<128x1xf32>
    %33 = vector.broadcast %32 : vector<128x1xf32> to vector<128x128xf32>
    %34 = arith.subf %30, %33 : vector<128x128xf32>
    %35 = math.exp %34 : vector<128x128xf32>
    %cst_12 = arith.constant dense<0.000000e+00> : vector<128xf32>
    %36 = vector.multi_reduction <add>, %35, %cst_12 [1] : vector<128x128xf32> to vector<128xf32>
    %37 = vector.shape_cast %36 : vector<128xf32> to vector<128x1xf32>
    %38 = tpu.reciprocal %37 {approx = true} : vector<128x1xf32> -> vector<128x1xf32>
    %39 = vector.broadcast %38 : vector<128x1xf32> to vector<128x128xf32>
    %40 = arith.mulf %35, %39 : vector<128x128xf32>
    %41 = arith.truncf %40 : vector<128x128xf32> to vector<128x128xbf16>
    %42 = vector.extract_strided_slice %24 {offsets = [0, 0], sizes = [64, 128], strides = [1, 1]} : vector<64x1024xbf16> to vector<64x128xbf16>
    %cst_13 = arith.constant dense<0.000000e+00> : vector<64x128xf32>
    %43 = tpu.matmul %42, %41, %cst_13 {dimension_numbers = #tpu.dot_dimension_numbers<[1], [0], [0], [1], [0, 0, 1, 1], [], []>} : vector<64x128xbf16>, vector<128x128xbf16>, vector<64x128xf32> -> vector<64x128xf32>
    %44 = vector.extract_strided_slice %1 {offsets = [0, 0], sizes = [64, 128], strides = [1, 1]} : vector<64x1024xf32> to vector<64x128xf32>
    %45 = vector.broadcast %25 : f32 to vector<64x128xf32>
    %46 = arith.mulf %45, %43 : vector<64x128xf32>
    %47 = arith.addf %46, %44 : vector<64x128xf32>
    %48 = arith.mulf %44, %47 : vector<64x128xf32>
    %49 = vector.shape_cast %48 : vector<64x128xf32> to vector<1x8192xf32>
    %c0_14 = arith.constant 0 : index
    %c0_15 = arith.constant 0 : index
    %50 = vector.load %arg8[%c0_14, %c0_15] : memref<8x8192xf32, #tpu.memory_space<vmem>>, vector<1x8192xf32>
    tpu.vector_store %arg8[%c0_14, %c0_15], %49 {strides = array<i32>} : memref<8x8192xf32, #tpu.memory_space<vmem>>, vector<1x8192xf32>,
    %51 = vector.extract_strided_slice %20 {offsets = [0, 128], sizes = [8, 128], strides = [1, 1]} : vector<8x1024xbf16> to vector<8x128xbf16>
    %52 = vector.extract_strided_slice %22 {offsets = [0, 128], sizes = [8, 128], strides = [1, 1]} : vector<8x1024xbf16> to vector<8x128xbf16>
    %cst_16 = arith.constant dense<0.000000e+00> : vector<128x128xf32>
    %53 = tpu.matmul %51, %52, %cst_16 {dimension_numbers = #tpu.dot_dimension_numbers<[0], [0], [1], [1], [0, 1, 1, 1], [], []>} : vector<8x128xbf16>, vector<8x128xbf16>, vector<128x128xf32> -> vector<128x128xf32>
    %54 = vector.broadcast %18 : vector<1x128xf32> to vector<128x128xf32>
    %55 = arith.addf %53, %54 : vector<128x128xf32>
    %cst_17 = arith.constant dense<0xFF800000> : vector<128xf32>
    %56 = vector.multi_reduction <maximumf>, %55, %cst_17 [1] : vector<128x128xf32> to vector<128xf32>
    %57 = vector.shape_cast %56 : vector<128xf32> to vector<128x1xf32>
    %58 = vector.broadcast %57 : vector<128x1xf32> to vector<128x128xf32>
    %59 = arith.subf %55, %58 : vector<128x128xf32>
    %60 = math.exp %59 : vector<128x128xf32>
    %cst_18 = arith.constant dense<0.000000e+00> : vector<128xf32>
    %61 = vector.multi_reduction <add>, %60, %cst_18 [1] : vector<128x128xf32> to vector<128xf32>
    %62 = vector.shape_cast %61 : vector<128xf32> to vector<128x1xf32>
    %63 = tpu.reciprocal %62 {approx = true} : vector<128x1xf32> -> vector<128x1xf32>
    %64 = vector.broadcast %63 : vector<128x1xf32> to vector<128x128xf32>
    %65 = arith.mulf %60, %64 : vector<128x128xf32>
    %66 = arith.truncf %65 : vector<128x128xf32> to vector<128x128xbf16>
    %67 = vector.extract_strided_slice %24 {offsets = [0, 128], sizes = [64, 128], strides = [1, 1]} : vector<64x1024xbf16> to vector<64x128xbf16>
    %cst_19 = arith.constant dense<0.000000e+00> : vector<64x128xf32>
    %68 = tpu.matmul %67, %66, %cst_19 {dimension_numbers = #tpu.dot_dimension_numbers<[1], [0], [0], [1], [0, 0, 1, 1], [], []>} : vector<64x128xbf16>, vector<128x128xbf16>, vector<64x128xf32> -> vector<64x128xf32>
    %69 = vector.extract_strided_slice %1 {offsets = [0, 128], sizes = [64, 128], strides = [1, 1]} : vector<64x1024xf32> to vector<64x128xf32>
    %70 = vector.broadcast %25 : f32 to vector<64x128xf32>
    %71 = arith.mulf %70, %68 : vector<64x128xf32>
    %72 = arith.addf %71, %69 : vector<64x128xf32>
    %73 = arith.mulf %69, %72 : vector<64x128xf32>
    %74 = vector.shape_cast %73 : vector<64x128xf32> to vector<1x8192xf32>
    %c1 = arith.constant 1 : index
    %c0_20 = arith.constant 0 : index
    %75 = vector.load %arg8[%c1, %c0_20] : memref<8x8192xf32, #tpu.memory_space<vmem>>, vector<1x8192xf32>
    tpu.vector_store %arg8[%c1, %c0_20], %74 {strides = array<i32>} : memref<8x8192xf32, #tpu.memory_space<vmem>>, vector<1x8192xf32>,
    %76 = vector.extract_strided_slice %20 {offsets = [0, 256], sizes = [8, 128], strides = [1, 1]} : vector<8x1024xbf16> to vector<8x128xbf16>
    %77 = vector.extract_strided_slice %22 {offsets = [0, 256], sizes = [8, 128], strides = [1, 1]} : vector<8x1024xbf16> to vector<8x128xbf16>
    %cst_21 = arith.constant dense<0.000000e+00> : vector<128x128xf32>
    %78 = tpu.matmul %76, %77, %cst_21 {dimension_numbers = #tpu.dot_dimension_numbers<[0], [0], [1], [1], [0, 1, 1, 1], [], []>} : vector<8x128xbf16>, vector<8x128xbf16>, vector<128x128xf32> -> vector<128x128xf32>
    %79 = vector.broadcast %18 : vector<1x128xf32> to vector<128x128xf32>
    %80 = arith.addf %78, %79 : vector<128x128xf32>
    %cst_22 = arith.constant dense<0xFF800000> : vector<128xf32>
    %81 = vector.multi_reduction <maximumf>, %80, %cst_22 [1] : vector<128x128xf32> to vector<128xf32>
    %82 = vector.shape_cast %81 : vector<128xf32> to vector<128x1xf32>
    %83 = vector.broadcast %82 : vector<128x1xf32> to vector<128x128xf32>
    %84 = arith.subf %80, %83 : vector<128x128xf32>
    %85 = math.exp %84 : vector<128x128xf32>
    %cst_23 = arith.constant dense<0.000000e+00> : vector<128xf32>
    %86 = vector.multi_reduction <add>, %85, %cst_23 [1] : vector<128x128xf32> to vector<128xf32>
    %87 = vector.shape_cast %86 : vector<128xf32> to vector<128x1xf32>
    %88 = tpu.reciprocal %87 {approx = true} : vector<128x1xf32> -> vector<128x1xf32>
    %89 = vector.broadcast %88 : vector<128x1xf32> to vector<128x128xf32>
    %90 = arith.mulf %85, %89 : vector<128x128xf32>
    %91 = arith.truncf %90 : vector<128x128xf32> to vector<128x128xbf16>
    %92 = vector.extract_strided_slice %24 {offsets = [0, 256], sizes = [64, 128], strides = [1, 1]} : vector<64x1024xbf16> to vector<64x128xbf16>
    %cst_24 = arith.constant dense<0.000000e+00> : vector<64x128xf32>
    %93 = tpu.matmul %92, %91, %cst_24 {dimension_numbers = #tpu.dot_dimension_numbers<[1], [0], [0], [1], [0, 0, 1, 1], [], []>} : vector<64x128xbf16>, vector<128x128xbf16>, vector<64x128xf32> -> vector<64x128xf32>
    %94 = vector.extract_strided_slice %1 {offsets = [0, 256], sizes = [64, 128], strides = [1, 1]} : vector<64x1024xf32> to vector<64x128xf32>
    %95 = vector.broadcast %25 : f32 to vector<64x128xf32>
    %96 = arith.mulf %95, %93 : vector<64x128xf32>
    %97 = arith.addf %96, %94 : vector<64x128xf32>
    %98 = arith.mulf %94, %97 : vector<64x128xf32>
    %99 = vector.shape_cast %98 : vector<64x128xf32> to vector<1x8192xf32>
    %c2 = arith.constant 2 : index
    %c0_25 = arith.constant 0 : index
    %100 = vector.load %arg8[%c2, %c0_25] : memref<8x8192xf32, #tpu.memory_space<vmem>>, vector<1x8192xf32>
    tpu.vector_store %arg8[%c2, %c0_25], %99 {strides = array<i32>} : memref<8x8192xf32, #tpu.memory_space<vmem>>, vector<1x8192xf32>,
    %101 = vector.extract_strided_slice %20 {offsets = [0, 384], sizes = [8, 128], strides = [1, 1]} : vector<8x1024xbf16> to vector<8x128xbf16>
    %102 = vector.extract_strided_slice %22 {offsets = [0, 384], sizes = [8, 128], strides = [1, 1]} : vector<8x1024xbf16> to vector<8x128xbf16>
    %cst_26 = arith.constant dense<0.000000e+00> : vector<128x128xf32>
    %103 = tpu.matmul %101, %102, %cst_26 {dimension_numbers = #tpu.dot_dimension_numbers<[0], [0], [1], [1], [0, 1, 1, 1], [], []>} : vector<8x128xbf16>, vector<8x128xbf16>, vector<128x128xf32> -> vector<128x128xf32>
    %104 = vector.broadcast %18 : vector<1x128xf32> to vector<128x128xf32>
    %105 = arith.addf %103, %104 : vector<128x128xf32>
    %cst_27 = arith.constant dense<0xFF800000> : vector<128xf32>
    %106 = vector.multi_reduction <maximumf>, %105, %cst_27 [1] : vector<128x128xf32> to vector<128xf32>
    %107 = vector.shape_cast %106 : vector<128xf32> to vector<128x1xf32>
    %108 = vector.broadcast %107 : vector<128x1xf32> to vector<128x128xf32>
    %109 = arith.subf %105, %108 : vector<128x128xf32>
    %110 = math.exp %109 : vector<128x128xf32>
    %cst_28 = arith.constant dense<0.000000e+00> : vector<128xf32>
    %111 = vector.multi_reduction <add>, %110, %cst_28 [1] : vector<128x128xf32> to vector<128xf32>
    %112 = vector.shape_cast %111 : vector<128xf32> to vector<128x1xf32>
    %113 = tpu.reciprocal %112 {approx = true} : vector<128x1xf32> -> vector<128x1xf32>
    %114 = vector.broadcast %113 : vector<128x1xf32> to vector<128x128xf32>
    %115 = arith.mulf %110, %114 : vector<128x128xf32>
    %116 = arith.truncf %115 : vector<128x128xf32> to vector<128x128xbf16>
    %117 = vector.extract_strided_slice %24 {offsets = [0, 384], sizes = [64, 128], strides = [1, 1]} : vector<64x1024xbf16> to vector<64x128xbf16>
    %cst_29 = arith.constant dense<0.000000e+00> : vector<64x128xf32>
    %118 = tpu.matmul %117, %116, %cst_29 {dimension_numbers = #tpu.dot_dimension_numbers<[1], [0], [0], [1], [0, 0, 1, 1], [], []>} : vector<64x128xbf16>, vector<128x128xbf16>, vector<64x128xf32> -> vector<64x128xf32>
    %119 = vector.extract_strided_slice %1 {offsets = [0, 384], sizes = [64, 128], strides = [1, 1]} : vector<64x1024xf32> to vector<64x128xf32>
    %120 = vector.broadcast %25 : f32 to vector<64x128xf32>
    %121 = arith.mulf %120, %118 : vector<64x128xf32>
    %122 = arith.addf %121, %119 : vector<64x128xf32>
    %123 = arith.mulf %119, %122 : vector<64x128xf32>
    %124 = vector.shape_cast %123 : vector<64x128xf32> to vector<1x8192xf32>
    %c3 = arith.constant 3 : index
    %c0_30 = arith.constant 0 : index
    %125 = vector.load %arg8[%c3, %c0_30] : memref<8x8192xf32, #tpu.memory_space<vmem>>, vector<1x8192xf32>
    tpu.vector_store %arg8[%c3, %c0_30], %124 {strides = array<i32>} : memref<8x8192xf32, #tpu.memory_space<vmem>>, vector<1x8192xf32>,
    %126 = vector.extract_strided_slice %20 {offsets = [0, 512], sizes = [8, 128], strides = [1, 1]} : vector<8x1024xbf16> to vector<8x128xbf16>
    %127 = vector.extract_strided_slice %22 {offsets = [0, 512], sizes = [8, 128], strides = [1, 1]} : vector<8x1024xbf16> to vector<8x128xbf16>
    %cst_31 = arith.constant dense<0.000000e+00> : vector<128x128xf32>
    %128 = tpu.matmul %126, %127, %cst_31 {dimension_numbers = #tpu.dot_dimension_numbers<[0], [0], [1], [1], [0, 1, 1, 1], [], []>} : vector<8x128xbf16>, vector<8x128xbf16>, vector<128x128xf32> -> vector<128x128xf32>
    %129 = vector.broadcast %18 : vector<1x128xf32> to vector<128x128xf32>
    %130 = arith.addf %128, %129 : vector<128x128xf32>
    %cst_32 = arith.constant dense<0xFF800000> : vector<128xf32>
    %131 = vector.multi_reduction <maximumf>, %130, %cst_32 [1] : vector<128x128xf32> to vector<128xf32>
    %132 = vector.shape_cast %131 : vector<128xf32> to vector<128x1xf32>
    %133 = vector.broadcast %132 : vector<128x1xf32> to vector<128x128xf32>
    %134 = arith.subf %130, %133 : vector<128x128xf32>
    %135 = math.exp %134 : vector<128x128xf32>
    %cst_33 = arith.constant dense<0.000000e+00> : vector<128xf32>
    %136 = vector.multi_reduction <add>, %135, %cst_33 [1] : vector<128x128xf32> to vector<128xf32>
    %137 = vector.shape_cast %136 : vector<128xf32> to vector<128x1xf32>
    %138 = tpu.reciprocal %137 {approx = true} : vector<128x1xf32> -> vector<128x1xf32>
    %139 = vector.broadcast %138 : vector<128x1xf32> to vector<128x128xf32>
    %140 = arith.mulf %135, %139 : vector<128x128xf32>
    %141 = arith.truncf %140 : vector<128x128xf32> to vector<128x128xbf16>
    %142 = vector.extract_strided_slice %24 {offsets = [0, 512], sizes = [64, 128], strides = [1, 1]} : vector<64x1024xbf16> to vector<64x128xbf16>
    %cst_34 = arith.constant dense<0.000000e+00> : vector<64x128xf32>
    %143 = tpu.matmul %142, %141, %cst_34 {dimension_numbers = #tpu.dot_dimension_numbers<[1], [0], [0], [1], [0, 0, 1, 1], [], []>} : vector<64x128xbf16>, vector<128x128xbf16>, vector<64x128xf32> -> vector<64x128xf32>
    %144 = vector.extract_strided_slice %1 {offsets = [0, 512], sizes = [64, 128], strides = [1, 1]} : vector<64x1024xf32> to vector<64x128xf32>
    %145 = vector.broadcast %25 : f32 to vector<64x128xf32>
    %146 = arith.mulf %145, %143 : vector<64x128xf32>
    %147 = arith.addf %146, %144 : vector<64x128xf32>
    %148 = arith.mulf %144, %147 : vector<64x128xf32>
    %149 = vector.shape_cast %148 : vector<64x128xf32> to vector<1x8192xf32>
    %c4 = arith.constant 4 : index
    %c0_35 = arith.constant 0 : index
    %150 = vector.load %arg8[%c4, %c0_35] : memref<8x8192xf32, #tpu.memory_space<vmem>>, vector<1x8192xf32>
    tpu.vector_store %arg8[%c4, %c0_35], %149 {strides = array<i32>} : memref<8x8192xf32, #tpu.memory_space<vmem>>, vector<1x8192xf32>,
    %151 = vector.extract_strided_slice %20 {offsets = [0, 640], sizes = [8, 128], strides = [1, 1]} : vector<8x1024xbf16> to vector<8x128xbf16>
    %152 = vector.extract_strided_slice %22 {offsets = [0, 640], sizes = [8, 128], strides = [1, 1]} : vector<8x1024xbf16> to vector<8x128xbf16>
    %cst_36 = arith.constant dense<0.000000e+00> : vector<128x128xf32>
    %153 = tpu.matmul %151, %152, %cst_36 {dimension_numbers = #tpu.dot_dimension_numbers<[0], [0], [1], [1], [0, 1, 1, 1], [], []>} : vector<8x128xbf16>, vector<8x128xbf16>, vector<128x128xf32> -> vector<128x128xf32>
    %154 = vector.broadcast %18 : vector<1x128xf32> to vector<128x128xf32>
    %155 = arith.addf %153, %154 : vector<128x128xf32>
    %cst_37 = arith.constant dense<0xFF800000> : vector<128xf32>
    %156 = vector.multi_reduction <maximumf>, %155, %cst_37 [1] : vector<128x128xf32> to vector<128xf32>
    %157 = vector.shape_cast %156 : vector<128xf32> to vector<128x1xf32>
    %158 = vector.broadcast %157 : vector<128x1xf32> to vector<128x128xf32>
    %159 = arith.subf %155, %158 : vector<128x128xf32>
    %160 = math.exp %159 : vector<128x128xf32>
    %cst_38 = arith.constant dense<0.000000e+00> : vector<128xf32>
    %161 = vector.multi_reduction <add>, %160, %cst_38 [1] : vector<128x128xf32> to vector<128xf32>
    %162 = vector.shape_cast %161 : vector<128xf32> to vector<128x1xf32>
    %163 = tpu.reciprocal %162 {approx = true} : vector<128x1xf32> -> vector<128x1xf32>
    %164 = vector.broadcast %163 : vector<128x1xf32> to vector<128x128xf32>
    %165 = arith.mulf %160, %164 : vector<128x128xf32>
    %166 = arith.truncf %165 : vector<128x128xf32> to vector<128x128xbf16>
    %167 = vector.extract_strided_slice %24 {offsets = [0, 640], sizes = [64, 128], strides = [1, 1]} : vector<64x1024xbf16> to vector<64x128xbf16>
    %cst_39 = arith.constant dense<0.000000e+00> : vector<64x128xf32>
    %168 = tpu.matmul %167, %166, %cst_39 {dimension_numbers = #tpu.dot_dimension_numbers<[1], [0], [0], [1], [0, 0, 1, 1], [], []>} : vector<64x128xbf16>, vector<128x128xbf16>, vector<64x128xf32> -> vector<64x128xf32>
    %169 = vector.extract_strided_slice %1 {offsets = [0, 640], sizes = [64, 128], strides = [1, 1]} : vector<64x1024xf32> to vector<64x128xf32>
    %170 = vector.broadcast %25 : f32 to vector<64x128xf32>
    %171 = arith.mulf %170, %168 : vector<64x128xf32>
    %172 = arith.addf %171, %169 : vector<64x128xf32>
    %173 = arith.mulf %169, %172 : vector<64x128xf32>
    %174 = vector.shape_cast %173 : vector<64x128xf32> to vector<1x8192xf32>
    %c5 = arith.constant 5 : index
    %c0_40 = arith.constant 0 : index
    %175 = vector.load %arg8[%c5, %c0_40] : memref<8x8192xf32, #tpu.memory_space<vmem>>, vector<1x8192xf32>
    tpu.vector_store %arg8[%c5, %c0_40], %174 {strides = array<i32>} : memref<8x8192xf32, #tpu.memory_space<vmem>>, vector<1x8192xf32>,
    %176 = vector.extract_strided_slice %20 {offsets = [0, 768], sizes = [8, 128], strides = [1, 1]} : vector<8x1024xbf16> to vector<8x128xbf16>
    %177 = vector.extract_strided_slice %22 {offsets = [0, 768], sizes = [8, 128], strides = [1, 1]} : vector<8x1024xbf16> to vector<8x128xbf16>
    %cst_41 = arith.constant dense<0.000000e+00> : vector<128x128xf32>
    %178 = tpu.matmul %176, %177, %cst_41 {dimension_numbers = #tpu.dot_dimension_numbers<[0], [0], [1], [1], [0, 1, 1, 1], [], []>} : vector<8x128xbf16>, vector<8x128xbf16>, vector<128x128xf32> -> vector<128x128xf32>
    %179 = vector.broadcast %18 : vector<1x128xf32> to vector<128x128xf32>
    %180 = arith.addf %178, %179 : vector<128x128xf32>
    %cst_42 = arith.constant dense<0xFF800000> : vector<128xf32>
    %181 = vector.multi_reduction <maximumf>, %180, %cst_42 [1] : vector<128x128xf32> to vector<128xf32>
    %182 = vector.shape_cast %181 : vector<128xf32> to vector<128x1xf32>
    %183 = vector.broadcast %182 : vector<128x1xf32> to vector<128x128xf32>
    %184 = arith.subf %180, %183 : vector<128x128xf32>
    %185 = math.exp %184 : vector<128x128xf32>
    %cst_43 = arith.constant dense<0.000000e+00> : vector<128xf32>
    %186 = vector.multi_reduction <add>, %185, %cst_43 [1] : vector<128x128xf32> to vector<128xf32>
    %187 = vector.shape_cast %186 : vector<128xf32> to vector<128x1xf32>
    %188 = tpu.reciprocal %187 {approx = true} : vector<128x1xf32> -> vector<128x1xf32>
    %189 = vector.broadcast %188 : vector<128x1xf32> to vector<128x128xf32>
    %190 = arith.mulf %185, %189 : vector<128x128xf32>
    %191 = arith.truncf %190 : vector<128x128xf32> to vector<128x128xbf16>
    %192 = vector.extract_strided_slice %24 {offsets = [0, 768], sizes = [64, 128], strides = [1, 1]} : vector<64x1024xbf16> to vector<64x128xbf16>
    %cst_44 = arith.constant dense<0.000000e+00> : vector<64x128xf32>
    %193 = tpu.matmul %192, %191, %cst_44 {dimension_numbers = #tpu.dot_dimension_numbers<[1], [0], [0], [1], [0, 0, 1, 1], [], []>} : vector<64x128xbf16>, vector<128x128xbf16>, vector<64x128xf32> -> vector<64x128xf32>
    %194 = vector.extract_strided_slice %1 {offsets = [0, 768], sizes = [64, 128], strides = [1, 1]} : vector<64x1024xf32> to vector<64x128xf32>
    %195 = vector.broadcast %25 : f32 to vector<64x128xf32>
    %196 = arith.mulf %195, %193 : vector<64x128xf32>
    %197 = arith.addf %196, %194 : vector<64x128xf32>
    %198 = arith.mulf %194, %197 : vector<64x128xf32>
    %199 = vector.shape_cast %198 : vector<64x128xf32> to vector<1x8192xf32>
    %c6 = arith.constant 6 : index
    %c0_45 = arith.constant 0 : index
    %200 = vector.load %arg8[%c6, %c0_45] : memref<8x8192xf32, #tpu.memory_space<vmem>>, vector<1x8192xf32>
    tpu.vector_store %arg8[%c6, %c0_45], %199 {strides = array<i32>} : memref<8x8192xf32, #tpu.memory_space<vmem>>, vector<1x8192xf32>,
    %201 = vector.extract_strided_slice %20 {offsets = [0, 896], sizes = [8, 128], strides = [1, 1]} : vector<8x1024xbf16> to vector<8x128xbf16>
    %202 = vector.extract_strided_slice %22 {offsets = [0, 896], sizes = [8, 128], strides = [1, 1]} : vector<8x1024xbf16> to vector<8x128xbf16>
    %cst_46 = arith.constant dense<0.000000e+00> : vector<128x128xf32>
    %203 = tpu.matmul %201, %202, %cst_46 {dimension_numbers = #tpu.dot_dimension_numbers<[0], [0], [1], [1], [0, 1, 1, 1], [], []>} : vector<8x128xbf16>, vector<8x128xbf16>, vector<128x128xf32> -> vector<128x128xf32>
    %204 = vector.broadcast %18 : vector<1x128xf32> to vector<128x128xf32>
    %205 = arith.addf %203, %204 : vector<128x128xf32>
    %cst_47 = arith.constant dense<0xFF800000> : vector<128xf32>
    %206 = vector.multi_reduction <maximumf>, %205, %cst_47 [1] : vector<128x128xf32> to vector<128xf32>
    %207 = vector.shape_cast %206 : vector<128xf32> to vector<128x1xf32>
    %208 = vector.broadcast %207 : vector<128x1xf32> to vector<128x128xf32>
    %209 = arith.subf %205, %208 : vector<128x128xf32>
    %210 = math.exp %209 : vector<128x128xf32>
    %cst_48 = arith.constant dense<0.000000e+00> : vector<128xf32>
    %211 = vector.multi_reduction <add>, %210, %cst_48 [1] : vector<128x128xf32> to vector<128xf32>
    %212 = vector.shape_cast %211 : vector<128xf32> to vector<128x1xf32>
    %213 = tpu.reciprocal %212 {approx = true} : vector<128x1xf32> -> vector<128x1xf32>
    %214 = vector.broadcast %213 : vector<128x1xf32> to vector<128x128xf32>
    %215 = arith.mulf %210, %214 : vector<128x128xf32>
    %216 = arith.truncf %215 : vector<128x128xf32> to vector<128x128xbf16>
    %217 = vector.extract_strided_slice %24 {offsets = [0, 896], sizes = [64, 128], strides = [1, 1]} : vector<64x1024xbf16> to vector<64x128xbf16>
    %cst_49 = arith.constant dense<0.000000e+00> : vector<64x128xf32>
    %218 = tpu.matmul %217, %216, %cst_49 {dimension_numbers = #tpu.dot_dimension_numbers<[1], [0], [0], [1], [0, 0, 1, 1], [], []>} : vector<64x128xbf16>, vector<128x128xbf16>, vector<64x128xf32> -> vector<64x128xf32>
    %219 = vector.extract_strided_slice %1 {offsets = [0, 896], sizes = [64, 128], strides = [1, 1]} : vector<64x1024xf32> to vector<64x128xf32>
    %220 = vector.broadcast %25 : f32 to vector<64x128xf32>
    %221 = arith.mulf %220, %218 : vector<64x128xf32>
    %222 = arith.addf %221, %219 : vector<64x128xf32>
    %223 = arith.mulf %219, %222 : vector<64x128xf32>
    %224 = vector.shape_cast %223 : vector<64x128xf32> to vector<1x8192xf32>
    %c7 = arith.constant 7 : index
    %c0_50 = arith.constant 0 : index
    %225 = vector.load %arg8[%c7, %c0_50] : memref<8x8192xf32, #tpu.memory_space<vmem>>, vector<1x8192xf32>
    tpu.vector_store %arg8[%c7, %c0_50], %224 {strides = array<i32>} : memref<8x8192xf32, #tpu.memory_space<vmem>>, vector<1x8192xf32>,
    %c0_51 = arith.constant 0 : index
    %c0_52 = arith.constant 0 : index
    %226 = vector.load %arg8[%c0_51, %c0_52] : memref<8x8192xf32, #tpu.memory_space<vmem>>, vector<8x8192xf32>
    %227 = arith.truncf %226 : vector<8x8192xf32> to vector<8x8192xbf16>
    %c0_53 = arith.constant 0 : index
    %c0_54 = arith.constant 0 : index
    %228 = vector.load %arg5[%c0_53, %c0_54] : memref<8192x128xbf16, #tpu.memory_space<vmem>>, vector<8192x128xbf16>
    %cst_55 = arith.constant dense<0.000000e+00> : vector<8x128xf32>
    %229 = tpu.matmul %227, %228, %cst_55 {dimension_numbers = #tpu.dot_dimension_numbers<[1], [0], [0], [1], [0, 0, 1, 1], [], []>} : vector<8x8192xbf16>, vector<8192x128xbf16>, vector<8x128xf32> -> vector<8x128xf32>
    %c0_56 = arith.constant 0 : index
    %c0_57 = arith.constant 0 : index
    %230 = vector.load %arg6[%c0_56, %c0_57] : memref<1x128xf32, #tpu.memory_space<vmem>>, vector<1x128xf32>
    %231 = vector.broadcast %230 : vector<1x128xf32> to vector<8x128xf32>
    %232 = arith.addf %229, %231 : vector<8x128xf32>
    %cst_58 = arith.constant 0.000000e+00 : f32
    %233 = vector.broadcast %cst_58 : f32 to vector<8x128xf32>
    %234 = arith.maximumf %232, %233 : vector<8x128xf32>
    %c0_59 = arith.constant 0 : index
    %c0_60 = arith.constant 0 : index
    %c0_61 = arith.constant 0 : index
    %235 = vector.load %arg7[%c0_59, %c0_60, %c0_61] : memref<1x8x128xf32, #tpu.memory_space<vmem>>, vector<1x8x128xf32>
    %236 = vector.shape_cast %235 : vector<1x8x128xf32> to vector<8x128xf32>
    %237 = vector.shape_cast %234 : vector<8x128xf32> to vector<1x8x128xf32>
    tpu.vector_store %arg7[%c0_59, %c0_60, %c0_61], %237 {strides = array<i32>} : memref<1x8x128xf32, #tpu.memory_space<vmem>>, vector<1x8x128xf32>,
    return
  }
  func.func @transform_0(%arg0: i32) -> (i32, i32, i32) {
    %c0_i32 = arith.constant 0 : i32
    %c0_i32_0 = arith.constant 0 : i32
    %c0_i32_1 = arith.constant 0 : i32
    return %arg0, %c0_i32, %c0_i32_0 : i32, i32, i32
  }
  func.func @transform_1(%arg0: i32) -> (i32, i32) {
    %c0_i32 = arith.constant 0 : i32
    %c0_i32_0 = arith.constant 0 : i32
    %c0_i32_1 = arith.constant 0 : i32
    return %c0_i32, %c0_i32_0 : i32, i32
  }
  func.func @transform_2(%arg0: i32) -> (i32, i32) {
    %c0_i32 = arith.constant 0 : i32
    %c0_i32_0 = arith.constant 0 : i32
    %c0_i32_1 = arith.constant 0 : i32
    return %c0_i32, %c0_i32_0 : i32, i32
  }
  func.func @transform_3(%arg0: i32) -> (i32, i32) {
    %c0_i32 = arith.constant 0 : i32
    %c0_i32_0 = arith.constant 0 : i32
    %c0_i32_1 = arith.constant 0 : i32
    return %c0_i32, %c0_i32_0 : i32, i32
  }
  func.func @transform_4(%arg0: i32) -> (i32, i32) {
    %c0_i32 = arith.constant 0 : i32
    %c0_i32_0 = arith.constant 0 : i32
    %c0_i32_1 = arith.constant 0 : i32
    return %c0_i32, %c0_i32_0 : i32, i32
  }
  func.func @transform_5(%arg0: i32) -> (i32, i32) {
    %c0_i32 = arith.constant 0 : i32
    %c0_i32_0 = arith.constant 0 : i32
    %c0_i32_1 = arith.constant 0 : i32
    return %c0_i32, %c0_i32_0 : i32, i32
  }
  func.func @transform_6(%arg0: i32) -> (i32, i32, i32) {
    %c0_i32 = arith.constant 0 : i32
    %c0_i32_0 = arith.constant 0 : i32
    %c0_i32_1 = arith.constant 0 : i32
    return %arg0, %c0_i32, %c0_i32_0 : i32, i32, i32
  }
}

</mosaic_0001>

<llo_original>
// kernel: tpu_custom_call.1
$region0: #{tpu_custom_call.1}
  #allocation0 [shape = 'u32[]', space=smem, size = 0x4, offset = 0x4, fixed_abs, tag = 'smem constant byte address 0x4 - core index']
  #allocation1 [shape = 'u32[144,128]{1,0:T(1,128)}', space=vmem, size = 0x12000, scoped, tag = 'internal scratch']
  #allocation2 [shape = 'f32[8,8192]{1,0:T(8,128)}', space=vmem, size = 0x40000, scoped, tag = 'scratch operand']
  #allocation3 [shape = 'f32[1,1]{1,0:T(1,128)S(6)}', space=smem, size = 0x200, scoped, tag = 'scoped memory for tpu_custom_call.1']
  %s0 = inlined_call_operand.hbm [shape: f32[2,64,1024], index: 0, kind: input, shape index: {}]
  %s1 = inlined_call_operand.vmem [shape: bf16[80,64], index: 1, kind: input, shape index: {}]
  %s2 = inlined_call_operand.vmem [shape: f32[80,1], index: 2, kind: input, shape index: {}]
  %s3 = inlined_call_operand.<no memory space> [shape: f32[1,1], index: 3, kind: input, shape index: {}]
  %s4 = inlined_call_operand.hbm [shape: bf16[8192,128], index: 4, kind: input, shape index: {}]
  %s5 = inlined_call_operand.hbm [shape: f32[1,128], index: 5, kind: input, shape index: {}]
  %s6 = inlined_call_operand.hbm [shape: f32[2,8,128], index: 6, kind: output, shape index: {}]
  %s7 = sld [smem:[#allocation0]]
  $region69: #{tpu_custom_call.1} parent=0
    _
  %s9 = ssub.s32 1, %s7
  %s10 = scalar_select 0, %s9, %s7
  %11 = sst [smem:[#allocation3]] %s3
  $region1: #{tpu_custom_call.1} parent=0
    #allocation4 [shape = 'u8[524288]{0}', space=vmem, size = 0x80000, scoped, tag = 'input window, operand 0']
    #allocation5 [shape = 's32[2]{0}', space=sflag, size = 0x8, scoped, tag = 'scoped memory for tpu_custom_call.1']
    #allocation6 [shape = 's32[2]{0}', space=sflag, size = 0x8, scoped, tag = 'scoped memory for tpu_custom_call.1']
    #allocation7 [shape = 'u8[2097152]{0}', space=vmem, size = 0x200000, scoped, tag = 'input window, operand 4, single buffered']
    #allocation8 [shape = 's32[1]{0}', space=sflag, size = 0x4, scoped, tag = 'scoped memory for tpu_custom_call.1']
    #allocation9 [shape = 'u8[512]{0}', space=vmem, size = 0x400, scoped, tag = 'input window, operand 5, single buffered']
    #allocation10 [shape = 'u8[8192]{0}', space=vmem, size = 0x2000, scoped, tag = 'output window, operand 0']
    %12 = vsyncpa [#allocation5], 0
    %s13 = scalar_lea.sflag [#allocation5], 1
    %14 = vsyncpa %s13, 0
    %15 = vsyncpa [#allocation8], 0
    %16 = vsyncpa [#allocation6], 0
    %s17 = scalar_lea.sflag [#allocation6], 1
    %18 = vsyncpa %s17, 0
    loop: start=0, step=1, limit=4
    $region2: #{tpu_custom_call.1} parent=1 // loop_pre_header
      _
    $region3: #{tpu_custom_call.1} parent=1 // loop_header
      %s20 = sphi 0, %s24
      %p21 = scmp.ge.s32.totalorder %s20, 4
      %s30 = sphi 0, %s32
      %s33 = sphi 0, %s30
      %s34 = sphi 0, %s33
      %s50 = sphi 0, %s34
      %s54 = sphi 0, %s54
      %s56 = sphi 0, %s54
      %s57 = sphi 0, %s56
      %s71 = sphi 0, %s57
      %s75 = sphi 0, %s75
      %s77 = sphi 0, %s75
      %s78 = sphi 0, %s77
      %s92 = sphi 0, %s78
      %s96 = sphi 0, %s96
      %s98 = sphi 0, %s96
      %s99 = sphi 0, %s98
      %s113 = sphi 0, %s99
      %s117 = sphi 0, %s117
      %s119 = sphi 0, %s117
      %s120 = sphi 0, %s119
      %s134 = sphi 0, %s120
      %s138 = sphi 0, %s138
      %s140 = sphi 0, %s138
      %s141 = sphi 0, %s140
      %s155 = sphi 0, %s141
      %s161 = sphi 0, %s163
      %s164 = sphi 0, %s161
      %s165 = sphi 0, %s164
      %s181 = sphi 0, %s165
    $region4: #{tpu_custom_call.1} parent=1 // loop_header_branch
      %23 = sbr.rel (%p21) target = $region8
    $region5: #{tpu_custom_call.1} parent=1 // loop_body
      %s25 = ssub.s32 %s20, 1
      %s26 = ssub.s32 %s20, 2
      %s27 = sadd.s32 %s20, 1
      %s28 = ssub.s32 %s20, %s27
      %p29 = scmp.eq.s32.totalorder %s28, 0
      %s31 = sadd.s32 %s30, 1
      %s32 = scalar_select %p29, %s30, %s31
      %p35 = pneg %p29
      %p36 = scmp.eq.s32.totalorder %s20, 1
      %p37 = por %p35, %p36
      %p38 = scmp.ne.s32.totalorder %s30, %s33
      %p39 = scmp.eq.s32.totalorder %s20, 0
      %p40 = por %p38, %p39
      %p41 = scmp.ne.s32.totalorder %s30, %s33
      %p42 = scmp.eq.s32.totalorder %s25, 1
      %p43 = por %p41, %p42
      %p44 = scmp.ne.s32.totalorder %s33, %s34
      %p45 = scmp.eq.s32.totalorder %s25, 0
      %p46 = por %p44, %p45
      %p47 = scmp.ne.s32.totalorder %s33, %s34
      %p48 = scmp.eq.s32.totalorder %s26, 1
      %p49 = por %p47, %p48
      %p51 = scmp.ne.s32.totalorder %s34, %s50
      %p52 = scmp.eq.s32.totalorder %s26, 0
      %p53 = por %p51, %p52
      %s55 = sadd.s32 %s54, 1
      %p58 = scmp.eq.s32.totalorder %s20, 1
      %p59 = scmp.ne.s32.totalorder %s54, %s56
      %p60 = scmp.eq.s32.totalorder %s20, 0
      %p61 = por %p59, %p60
      %p62 = scmp.ne.s32.totalorder %s54, %s56
      %p63 = scmp.eq.s32.totalorder %s25, 1
      %p64 = por %p62, %p63
      %p65 = scmp.ne.s32.totalorder %s56, %s57
      %p66 = scmp.eq.s32.totalorder %s25, 0
      %p67 = por %p65, %p66
      %p68 = scmp.ne.s32.totalorder %s56, %s57
      %p69 = scmp.eq.s32.totalorder %s26, 1
      %p70 = por %p68, %p69
      %p72 = scmp.ne.s32.totalorder %s57, %s71
      %p73 = scmp.eq.s32.totalorder %s26, 0
      %p74 = por %p72, %p73
      %s76 = sadd.s32 %s75, 1
      %p79 = scmp.eq.s32.totalorder %s20, 1
      %p80 = scmp.ne.s32.totalorder %s75, %s77
      %p81 = scmp.eq.s32.totalorder %s20, 0
      %p82 = por %p80, %p81
      %p83 = scmp.ne.s32.totalorder %s75, %s77
      %p84 = scmp.eq.s32.totalorder %s25, 1
      %p85 = por %p83, %p84
      %p86 = scmp.ne.s32.totalorder %s77, %s78
      %p87 = scmp.eq.s32.totalorder %s25, 0
      %p88 = por %p86, %p87
      %p89 = scmp.ne.s32.totalorder %s77, %s78
      %p90 = scmp.eq.s32.totalorder %s26, 1
      %p91 = por %p89, %p90
      %p93 = scmp.ne.s32.totalorder %s78, %s92
      %p94 = scmp.eq.s32.totalorder %s26, 0
      %p95 = por %p93, %p94
      %s97 = sadd.s32 %s96, 1
      %p100 = scmp.eq.s32.totalorder %s20, 1
      %p101 = scmp.ne.s32.totalorder %s96, %s98
      %p102 = scmp.eq.s32.totalorder %s20, 0
      %p103 = por %p101, %p102
      %p104 = scmp.ne.s32.totalorder %s96, %s98
      %p105 = scmp.eq.s32.totalorder %s25, 1
      %p106 = por %p104, %p105
      %p107 = scmp.ne.s32.totalorder %s98, %s99
      %p108 = scmp.eq.s32.totalorder %s25, 0
      %p109 = por %p107, %p108
      %p110 = scmp.ne.s32.totalorder %s98, %s99
      %p111 = scmp.eq.s32.totalorder %s26, 1
      %p112 = por %p110, %p111
      %p114 = scmp.ne.s32.totalorder %s99, %s113
      %p115 = scmp.eq.s32.totalorder %s26, 0
      %p116 = por %p114, %p115
      %s118 = sadd.s32 %s117, 1
      %p121 = scmp.eq.s32.totalorder %s20, 1
      %p122 = scmp.ne.s32.totalorder %s117, %s119
      %p123 = scmp.eq.s32.totalorder %s20, 0
      %p124 = por %p122, %p123
      %p125 = scmp.ne.s32.totalorder %s117, %s119
      %p126 = scmp.eq.s32.totalorder %s25, 1
      %p127 = por %p125, %p126
      %p128 = scmp.ne.s32.totalorder %s119, %s120
      %p129 = scmp.eq.s32.totalorder %s25, 0
      %p130 = por %p128, %p129
      %p131 = scmp.ne.s32.totalorder %s119, %s120
      %p132 = scmp.eq.s32.totalorder %s26, 1
      %p133 = por %p131, %p132
      %p135 = scmp.ne.s32.totalorder %s120, %s134
      %p136 = scmp.eq.s32.totalorder %s26, 0
      %p137 = por %p135, %p136
      %s139 = sadd.s32 %s138, 1
      %p142 = scmp.eq.s32.totalorder %s20, 1
      %p143 = scmp.ne.s32.totalorder %s138, %s140
      %p144 = scmp.eq.s32.totalorder %s20, 0
      %p145 = por %p143, %p144
      %p146 = scmp.ne.s32.totalorder %s138, %s140
      %p147 = scmp.eq.s32.totalorder %s25, 1
      %p148 = por %p146, %p147
      %p149 = scmp.ne.s32.totalorder %s140, %s141
      %p150 = scmp.eq.s32.totalorder %s25, 0
      %p151 = por %p149, %p150
      %p152 = scmp.ne.s32.totalorder %s140, %s141
      %p153 = scmp.eq.s32.totalorder %s26, 1
      %p154 = por %p152, %p153
      %p156 = scmp.ne.s32.totalorder %s141, %s155
      %p157 = scmp.eq.s32.totalorder %s26, 0
      %p158 = por %p156, %p157
      %s159 = ssub.s32 %s20, %s27
      %p160 = scmp.eq.s32.totalorder %s159, 0
      %s162 = sadd.s32 %s161, 1
      %s163 = scalar_select %p160, %s161, %s162
      %p166 = pneg %p160
      %p167 = scmp.eq.s32.totalorder %s20, 1
      %p168 = por %p166, %p167
      %p169 = scmp.ne.s32.totalorder %s161, %s164
      %p170 = scmp.eq.s32.totalorder %s20, 0
      %p171 = por %p169, %p170
      %p172 = scmp.ne.s32.totalorder %s161, %s164
      %p173 = scmp.eq.s32.totalorder %s25, 1
      %p174 = por %p172, %p173
      %p175 = scmp.ne.s32.totalorder %s164, %s165
      %p176 = scmp.eq.s32.totalorder %s25, 0
      %p177 = por %p175, %p176
      %p178 = scmp.ne.s32.totalorder %s164, %s165
      %p179 = scmp.eq.s32.totalorder %s26, 1
      %p180 = por %p178, %p179
      %p182 = scmp.ne.s32.totalorder %s165, %s181
      %p183 = scmp.eq.s32.totalorder %s26, 0
      %p184 = por %p182, %p183
      %p185 = scmp.le.s32.totalorder 1, %s20
      %p186 = scmp.lt.s32.totalorder %s20, 3
      %p187 = pnand %p185, %p186
      %p188 = pneg %p187
      // Predicated region
      $region9: #{tpu_custom_call.1} parent=5 // pred_check
        _
      $region10: #{tpu_custom_call.1} parent=5 // pred_check_branch
        %190 = sbr.rel (%p187) target = $region12
      $region11: #{tpu_custom_call.1} parent=5 // pred_region
        %s191 = ssub.s32 %s20, 1
        // Predicated region
        $region13: #{tpu_custom_call.1} parent=11 // pred_check
          %p192 = pneg %p67
        $region14: #{tpu_custom_call.1} parent=11 // pred_check_branch
          %194 = sbr.rel (%p192) target = $region16
        $region15: #{tpu_custom_call.1} parent=11 // pred_region
          _
        $region16: #{tpu_custom_call.1} parent=11 // pred_fallthru
          _
        // Predicated region
        $region17: #{tpu_custom_call.1} parent=11 // pred_check
          %p195 = pneg %p88
        $region18: #{tpu_custom_call.1} parent=11 // pred_check_branch
          %197 = sbr.rel (%p195) target = $region20
        $region19: #{tpu_custom_call.1} parent=11 // pred_region
          _
        $region20: #{tpu_custom_call.1} parent=11 // pred_fallthru
          _
        // Predicated region
        $region21: #{tpu_custom_call.1} parent=11 // pred_check
          %p198 = pneg %p109
        $region22: #{tpu_custom_call.1} parent=11 // pred_check_branch
          %200 = sbr.rel (%p198) target = $region24
        $region23: #{tpu_custom_call.1} parent=11 // pred_region
          _
        $region24: #{tpu_custom_call.1} parent=11 // pred_fallthru
          _
        // Predicated region
        $region25: #{tpu_custom_call.1} parent=11 // pred_check
          %p201 = pneg %p130
        $region26: #{tpu_custom_call.1} parent=11 // pred_check_branch
          %203 = sbr.rel (%p201) target = $region28
        $region27: #{tpu_custom_call.1} parent=11 // pred_region
          %s205 = ssub.s32 65536, 65536
          %206 = vsyncadd [#allocation8], %s205
          %s207 = sshll.u32 [#allocation7], 4
          %s208 = int_to_ptr.vmem [resolvable:$true] %s207
          %213 = dma.hbm_to_vmem [thread:$0]  %s4, 65536, %s208, [#allocation8], 64, 64, 4
        $region28: #{tpu_custom_call.1} parent=11 // pred_fallthru
          _
        // Predicated region
        $region29: #{tpu_custom_call.1} parent=11 // pred_check
          %p214 = pneg %p151
        $region30: #{tpu_custom_call.1} parent=11 // pred_check_branch
          %216 = sbr.rel (%p214) target = $region32
        $region31: #{tpu_custom_call.1} parent=11 // pred_region
          %s218 = ssub.s32 16, 16
          %219 = vsyncadd [#allocation8], %s218
          %s221 = sshll.u32 [#allocation9], 4
          %s222 = int_to_ptr.vmem [resolvable:$true] %s221
          %224 = dma.hbm_to_vmem [thread:$0]  %s5, 16, %s222, [#allocation8]
        $region32: #{tpu_custom_call.1} parent=11 // pred_fallthru
          _
      $region12: #{tpu_custom_call.1} parent=5 // pred_fallthru
        _
      %p225 = scmp.lt.s32.totalorder %s20, 2
      // Predicated region
      $region33: #{tpu_custom_call.1} parent=5 // pred_check
        %p226 = pneg %p225
      $region34: #{tpu_custom_call.1} parent=5 // pred_check_branch
        %228 = sbr.rel (%p226) target = $region36
      $region35: #{tpu_custom_call.1} parent=5 // pred_region
        // Predicated region
        $region37: #{tpu_custom_call.1} parent=35 // pred_check
          %p229 = pneg %p40
        $region38: #{tpu_custom_call.1} parent=35 // pred_check_branch
          %231 = sbr.rel (%p229) target = $region40
        $region39: #{tpu_custom_call.1} parent=35 // pred_region
          %s232 = sand.u32 %s30, 1
          %s233 = scalar_lea.sflag [#allocation5], %s232
          %s234 = sand.u32 %s30, 1
          %s235 = smul.addr %s234, 512
          %s236 = scalar_lea.vmem [#allocation4], %s235
          %s238 = ssub.s32 8192, 8192
          %239 = vsyncadd %s233, %s238
          %s240 = smul.addr %s20, 64
          %s241 = smul.addr %s240, 128
          %s242 = scalar_lea.hbm %s0, %s241
          %s243 = sshll.u32 %s236, 4
          %s244 = int_to_ptr.vmem [resolvable:$true] %s243
          %249 = dma.hbm_to_vmem [thread:$0]  %s242, 8192, %s244, %s233, 1024, 1024, 64
        $region40: #{tpu_custom_call.1} parent=35 // pred_fallthru
          _
      $region36: #{tpu_custom_call.1} parent=5 // pred_fallthru
        _
      %p250 = scmp.le.s32.totalorder 1, %s20
      %p251 = scmp.lt.s32.totalorder %s20, 3
      %p252 = pnand %p250, %p251
      %p253 = pneg %p252
      // Predicated region
      $region41: #{tpu_custom_call.1} parent=5 // pred_check
        _
      $region42: #{tpu_custom_call.1} parent=5 // pred_check_branch
        %255 = sbr.rel (%p252) target = $region44
      $region43: #{tpu_custom_call.1} parent=5 // pred_region
        %s256 = ssub.s32 %s20, 1
        %s257 = sand.u32 %s33, 1
        %s258 = scalar_lea.sflag [#allocation5], %s257
        %s259 = sand.u32 %s33, 1
        %s260 = smul.addr %s259, 512
        %s261 = scalar_lea.vmem [#allocation4], %s260
        // Predicated region
        $region45: #{tpu_custom_call.1} parent=43 // pred_check
          %p262 = pneg %p46
        $region46: #{tpu_custom_call.1} parent=43 // pred_check_branch
          %264 = sbr.rel (%p262) target = $region48
        $region47: #{tpu_custom_call.1} parent=43 // pred_region
          %265 = dma.done %s258, 8192
        $region48: #{tpu_custom_call.1} parent=43 // pred_fallthru
          _
        // Predicated region
        $region49: #{tpu_custom_call.1} parent=43 // pred_check
          %p266 = pneg %p130
        $region50: #{tpu_custom_call.1} parent=43 // pred_check_branch
          %268 = sbr.rel (%p266) target = $region52
        $region51: #{tpu_custom_call.1} parent=43 // pred_region
          %269 = dma.done [#allocation8], 65536
        $region52: #{tpu_custom_call.1} parent=43 // pred_fallthru
          _
        // Predicated region
        $region53: #{tpu_custom_call.1} parent=43 // pred_check
          %p270 = pneg %p151
        $region54: #{tpu_custom_call.1} parent=43 // pred_check_branch
          %272 = sbr.rel (%p270) target = $region56
        $region55: #{tpu_custom_call.1} parent=43 // pred_region
          %273 = dma.done [#allocation8], 16
        $region56: #{tpu_custom_call.1} parent=43 // pred_fallthru
          _
        %s274 = sand.u32 %s33, 1
        %s275 = scalar_lea.sflag [#allocation5], %s274
        %s276 = sand.u32 %s33, 1
        %s277 = smul.addr %s276, 512
        %s278 = scalar_lea.vmem [#allocation4], %s277
        %p279 = pneg %p46
        %p280 = pneg %p43
        %p281 = pneg %p67
        %p282 = pneg %p64
        %p283 = pneg %p88
        %p284 = pneg %p85
        %p285 = pneg %p109
        %p286 = pneg %p106
        %p287 = pneg %p130
        %p288 = pneg %p127
        %p289 = pneg %p151
        %p290 = pneg %p148
        %p291 = pneg %p177
        %p292 = pneg %p174
        %s293 = sand.u32 %s164, 1
        %s294 = scalar_lea.sflag [#allocation6], %s293
        %s295 = sand.u32 %s164, 1
        %s296 = smul.addr %s295, 8
        %s297 = scalar_lea.vmem [#allocation10], %s296
        %v299 = vld [vmem:[%s261] sm:$0xff]
        %v300 = vld [vmem:[%s261 + $0x8] sm:$0xff]
        %v301 = vld [vmem:[%s261 + $0x10] sm:$0xff]
        %v302 = vld [vmem:[%s261 + $0x18] sm:$0xff]
        %v303 = vld [vmem:[%s261 + $0x20] sm:$0xff]
        %v304 = vld [vmem:[%s261 + $0x28] sm:$0xff]
        %v305 = vld [vmem:[%s261 + $0x30] sm:$0xff]
        %v306 = vld [vmem:[%s261 + $0x38] sm:$0xff]
        %v307 = vld [vmem:[%s261 + $0x40] sm:$0xff]
        %v308 = vld [vmem:[%s261 + $0x48] sm:$0xff]
        %v309 = vld [vmem:[%s261 + $0x50] sm:$0xff]
        %v310 = vld [vmem:[%s261 + $0x58] sm:$0xff]
        %v311 = vld [vmem:[%s261 + $0x60] sm:$0xff]
        %v312 = vld [vmem:[%s261 + $0x68] sm:$0xff]
        %v313 = vld [vmem:[%s261 + $0x70] sm:$0xff]
        %v314 = vld [vmem:[%s261 + $0x78] sm:$0xff]
        %v315 = vld [vmem:[%s261 + $0x80] sm:$0xff]
        %v316 = vld [vmem:[%s261 + $0x88] sm:$0xff]
        %v317 = vld [vmem:[%s261 + $0x90] sm:$0xff]
        %v318 = vld [vmem:[%s261 + $0x98] sm:$0xff]
        %v319 = vld [vmem:[%s261 + $0xa0] sm:$0xff]
        %v320 = vld [vmem:[%s261 + $0xa8] sm:$0xff]
        %v321 = vld [vmem:[%s261 + $0xb0] sm:$0xff]
        %v322 = vld [vmem:[%s261 + $0xb8] sm:$0xff]
        %v323 = vld [vmem:[%s261 + $0xc0] sm:$0xff]
        %v324 = vld [vmem:[%s261 + $0xc8] sm:$0xff]
        %v325 = vld [vmem:[%s261 + $0xd0] sm:$0xff]
        %v326 = vld [vmem:[%s261 + $0xd8] sm:$0xff]
        %v327 = vld [vmem:[%s261 + $0xe0] sm:$0xff]
        %v328 = vld [vmem:[%s261 + $0xe8] sm:$0xff]
        %v329 = vld [vmem:[%s261 + $0xf0] sm:$0xff]
        %v330 = vld [vmem:[%s261 + $0xf8] sm:$0xff]
        %v331 = vld [vmem:[%s261 + $0x100] sm:$0xff]
        %v332 = vld [vmem:[%s261 + $0x108] sm:$0xff]
        %v333 = vld [vmem:[%s261 + $0x110] sm:$0xff]
        %v334 = vld [vmem:[%s261 + $0x118] sm:$0xff]
        %v335 = vld [vmem:[%s261 + $0x120] sm:$0xff]
        %v336 = vld [vmem:[%s261 + $0x128] sm:$0xff]
        %v337 = vld [vmem:[%s261 + $0x130] sm:$0xff]
        %v338 = vld [vmem:[%s261 + $0x138] sm:$0xff]
        %v339 = vld [vmem:[%s261 + $0x140] sm:$0xff]
        %v340 = vld [vmem:[%s261 + $0x148] sm:$0xff]
        %v341 = vld [vmem:[%s261 + $0x150] sm:$0xff]
        %v342 = vld [vmem:[%s261 + $0x158] sm:$0xff]
        %v343 = vld [vmem:[%s261 + $0x160] sm:$0xff]
        %v344 = vld [vmem:[%s261 + $0x168] sm:$0xff]
        %v345 = vld [vmem:[%s261 + $0x170] sm:$0xff]
        %v346 = vld [vmem:[%s261 + $0x178] sm:$0xff]
        %v347 = vld [vmem:[%s261 + $0x180] sm:$0xff]
        %v348 = vld [vmem:[%s261 + $0x188] sm:$0xff]
        %v349 = vld [vmem:[%s261 + $0x190] sm:$0xff]
        %v350 = vld [vmem:[%s261 + $0x198] sm:$0xff]
        %v351 = vld [vmem:[%s261 + $0x1a0] sm:$0xff]
        %v352 = vld [vmem:[%s261 + $0x1a8] sm:$0xff]
        %v353 = vld [vmem:[%s261 + $0x1b0] sm:$0xff]
        %v354 = vld [vmem:[%s261 + $0x1b8] sm:$0xff]
        %v355 = vld [vmem:[%s261 + $0x1c0] sm:$0xff]
        %v356 = vld [vmem:[%s261 + $0x1c8] sm:$0xff]
        %v357 = vld [vmem:[%s261 + $0x1d0] sm:$0xff]
        %v358 = vld [vmem:[%s261 + $0x1d8] sm:$0xff]
        %v359 = vld [vmem:[%s261 + $0x1e0] sm:$0xff]
        %v360 = vld [vmem:[%s261 + $0x1e8] sm:$0xff]
        %v361 = vld [vmem:[%s261 + $0x1f0] sm:$0xff]
        %v362 = vld [vmem:[%s261 + $0x1f8] sm:$0xff]
        %v363 = vpack.c.bf16 %v307, %v299
        %v364 = vpack.c.bf16 %v308, %v300
        %v365 = vpack.c.bf16 %v309, %v301
        %v366 = vpack.c.bf16 %v310, %v302
        %v367 = vpack.c.bf16 %v311, %v303
        %v368 = vpack.c.bf16 %v312, %v304
        %v369 = vpack.c.bf16 %v313, %v305
        %v370 = vpack.c.bf16 %v314, %v306
        %v371 = vpack.c.bf16 %v323, %v315
        %v372 = vpack.c.bf16 %v324, %v316
        %v373 = vpack.c.bf16 %v325, %v317
        %v374 = vpack.c.bf16 %v326, %v318
        %v375 = vpack.c.bf16 %v327, %v319
        %v376 = vpack.c.bf16 %v328, %v320
        %v377 = vpack.c.bf16 %v329, %v321
        %v378 = vpack.c.bf16 %v330, %v322
        %v379 = vpack.c.bf16 %v339, %v331
        %v380 = vpack.c.bf16 %v340, %v332
        %v381 = vpack.c.bf16 %v341, %v333
        %v382 = vpack.c.bf16 %v342, %v334
        %v383 = vpack.c.bf16 %v343, %v335
        %v384 = vpack.c.bf16 %v344, %v336
        %v385 = vpack.c.bf16 %v345, %v337
        %v386 = vpack.c.bf16 %v346, %v338
        %v387 = vpack.c.bf16 %v355, %v347
        %v388 = vpack.c.bf16 %v356, %v348
        %v389 = vpack.c.bf16 %v357, %v349
        %v390 = vpack.c.bf16 %v358, %v350
        %v391 = vpack.c.bf16 %v359, %v351
        %v392 = vpack.c.bf16 %v360, %v352
        %v393 = vpack.c.bf16 %v361, %v353
        %v394 = vpack.c.bf16 %v362, %v354
        %v395 = vld [vmem:[%s1] sm:$0xf]
        %v396 = vld [vmem:[%s1 + $0x4] sm:$0xf]
        %v397 = vld [vmem:[%s1 + $0x8] sm:$0xf]
        %v398 = vld [vmem:[%s1 + $0xc] sm:$0xf]
        %v399 = vld [vmem:[%s1 + $0x10] sm:$0xf]
        %v400 = vld [vmem:[%s1 + $0x14] sm:$0xf]
        %v401 = vld [vmem:[%s1 + $0x18] sm:$0xf]
        %v402 = vld [vmem:[%s1 + $0x1c] sm:$0xf]
        %v403 = vld [vmem:[%s1 + $0x20] sm:$0xf]
        %v404 = vld [vmem:[%s1 + $0x24] sm:$0xf]
        %v405 = vld [vmem:[%s2] sm:$0xff]
        %v406 = vld [vmem:[%s2 + $0x8] sm:$0xff]
        %v407 = vld [vmem:[%s2 + $0x10] sm:$0xff]
        %v408 = vld [vmem:[%s2 + $0x18] sm:$0xff]
        %v409 = vld [vmem:[%s2 + $0x20] sm:$0xff]
        %v410 = vld [vmem:[%s2 + $0x28] sm:$0xff]
        %v411 = vld [vmem:[%s2 + $0x30] sm:$0xff]
        %v412 = vld [vmem:[%s2 + $0x38] sm:$0xff]
        %v413 = vld [vmem:[%s2 + $0x40] sm:$0xff]
        %v414 = vld [vmem:[%s2 + $0x48] sm:$0xff]
        %416 = vset.pattern.permute.xlu0 0
        %417 = vperm.xlu0 %416, %v405
        %v418 = vpop.permute.xlu0 %417
        %421 = vset.pattern.permute.xlu0 0
        %422 = vperm.xlu0 %421, %v406
        %v423 = vpop.permute.xlu0 %422
        %426 = vset.pattern.permute.xlu0 0
        %427 = vperm.xlu0 %426, %v407
        %v428 = vpop.permute.xlu0 %427
        %431 = vset.pattern.permute.xlu0 0
        %432 = vperm.xlu0 %431, %v408
        %v433 = vpop.permute.xlu0 %432
        %436 = vset.pattern.permute.xlu0 0
        %437 = vperm.xlu0 %436, %v409
        %v438 = vpop.permute.xlu0 %437
        %441 = vset.pattern.permute.xlu0 0
        %442 = vperm.xlu0 %441, %v410
        %v443 = vpop.permute.xlu0 %442
        %446 = vset.pattern.permute.xlu0 0
        %447 = vperm.xlu0 %446, %v411
        %v448 = vpop.permute.xlu0 %447
        %451 = vset.pattern.permute.xlu0 0
        %452 = vperm.xlu0 %451, %v412
        %v453 = vpop.permute.xlu0 %452
        %456 = vset.pattern.permute.xlu0 0
        %457 = vperm.xlu0 %456, %v413
        %v458 = vpop.permute.xlu0 %457
        %461 = vset.pattern.permute.xlu0 0
        %462 = vperm.xlu0 %461, %v414
        %v463 = vpop.permute.xlu0 %462
        %v475 = vunpack.c.l.b16 %v395
        %v476 = vunpack.c.l.b16 %v396
        %v477 = vunpack.c.l.b16 %v397
        %v478 = vunpack.c.l.b16 %v398
        %v479 = vunpack.c.l.b16 %v399
        %v480 = vunpack.c.l.b16 %v400
        %v481 = vunpack.c.l.b16 %v401
        %v482 = vunpack.c.l.b16 %v402
        %v483 = vunpack.c.l.b16 %v403
        %v484 = vunpack.c.l.b16 %v404
        %v485 = vpack.c.b16 %v476, %v475
        %v486 = vpack.c.b16 %v478, %v477
        %v487 = vpack.c.b16 %v480, %v479
        %v488 = vpack.c.b16 %v482, %v481
        %v489 = vpack.c.b16 %v484, %v483
        %vm490 = vcmask 523264
        %v492 = vsel %vm490, %v485, 0
        %v495 = vsel %vm490, %v486, 0
        %v498 = vsel %vm490, %v487, 0
        %v501 = vsel %vm490, %v488, 0
        %v504 = vsel %vm490, %v489, 0
        %506 = vmatprep.subr.bf16.mxu0 0
        %507 = vmatpush1.bf16.msra.mxu0 0
        %508 = vmatprep.subr.bf16.mxu0 0
        %509 = vmatpush1.bf16.msra.mxu0 0
        %510 = vmatprep.subr.bf16.mxu0 0
        %511 = vmatpush1.bf16.msra.mxu0 0
        %512 = vmatprep.subr.bf16.mxu0 0
        %513 = vmatpush1.bf16.msra.mxu0 0
        %514 = vmatprep.subr.bf16.mxu0 %v388
        %515 = vmatpush1.bf16.msra.mxu0 %v387
        %516 = vmatprep.subr.bf16.mxu0 %v380
        %517 = vmatpush1.bf16.msra.mxu0 %v379
        %518 = vmatprep.subr.bf16.mxu0 %v372
        %519 = vmatpush1.bf16.msra.mxu0 %v371
        %520 = vmatprep.subr.bf16.mxu0 %v364
        %521 = vmatpush1.bf16.msra.mxu0 %v363
        %522 = vmatprep.subr.bf16.mxu0 0
        %523 = vmatpush2.bf16.msra.mxu0 0
        %524 = vmatprep.subr.bf16.mxu0 0
        %525 = vmatpush2.bf16.msra.mxu0 0
        %526 = vmatprep.subr.bf16.mxu0 0
        %527 = vmatpush2.bf16.msra.mxu0 0
        %528 = vmatprep.subr.bf16.mxu0 0
        %529 = vmatpush2.bf16.msra.mxu0 0
        %530 = vmatprep.subr.bf16.mxu0 0
        %531 = vmatpush2.bf16.msra.mxu0 0
        %532 = vmatprep.subr.bf16.mxu0 0
        %533 = vmatpush2.bf16.msra.mxu0 0
        %534 = vmatprep.subr.bf16.mxu0 0
        %535 = vmatpush2.bf16.msra.mxu0 0
        %536 = vmatprep.subr.bf16.mxu0 0
        %537 = vmatpush2.bf16.msra.mxu0 0
        %538 = vmatprep.mubr.bf16.mxu0 0
        %539 = vmatmul.mubr.bf16.gmra.mxu0 %v492
        %v540 = vpop.f32.mrf.mxu0
        %v541 = vadd.f32 %v418, %v540
        %v542 = vpop.f32.mrf.mxu0
        %v543 = vadd.f32 %v418, %v542
        %v544 = vpop.f32.mrf.mxu0
        %v545 = vadd.f32 %v423, %v544
        %v546 = vpop.f32.mrf.mxu0
        %v547 = vadd.f32 %v423, %v546
        %548 = vmatprep.mubr.bf16.mxu0 0
        %549 = vmatmul.mubr.bf16.gmra.mxu0 %v495
        %v550 = vpop.f32.mrf.mxu0
        %v551 = vadd.f32 %v428, %v550
        %v552 = vpop.f32.mrf.mxu0
        %v553 = vadd.f32 %v428, %v552
        %v554 = vpop.f32.mrf.mxu0
        %v555 = vadd.f32 %v433, %v554
        %v556 = vpop.f32.mrf.mxu0
        %v557 = vadd.f32 %v433, %v556
        %558 = vmatprep.mubr.bf16.mxu0 0
        %559 = vmatmul.mubr.bf16.gmra.mxu0 %v498
        %v560 = vpop.f32.mrf.mxu0
        %v561 = vadd.f32 %v438, %v560
        %v562 = vpop.f32.mrf.mxu0
        %v563 = vadd.f32 %v438, %v562
        %v564 = vpop.f32.mrf.mxu0
        %v565 = vadd.f32 %v443, %v564
        %v566 = vpop.f32.mrf.mxu0
        %v567 = vadd.f32 %v443, %v566
        %568 = vmatprep.mubr.bf16.mxu0 0
        %569 = vmatmul.mubr.bf16.gmra.mxu0 %v501
        %v570 = vpop.f32.mrf.mxu0
        %v571 = vadd.f32 %v448, %v570
        %v572 = vpop.f32.mrf.mxu0
        %v573 = vadd.f32 %v448, %v572
        %v574 = vpop.f32.mrf.mxu0
        %v575 = vadd.f32 %v453, %v574
        %v576 = vpop.f32.mrf.mxu0
        %v577 = vadd.f32 %v453, %v576
        %578 = vmatprep.mubr.bf16.mxu0 0
        %579 = vmatmul.mubr.bf16.gmra.mxu0 %v504
        %v580 = vpop.f32.mrf.mxu0
        %v581 = vadd.f32 %v458, %v580
        %v582 = vpop.f32.mrf.mxu0
        %v583 = vadd.f32 %v458, %v582
        %v584 = vpop.f32.mrf.mxu0
        %v585 = vadd.f32 %v463, %v584
        %v586 = vpop.f32.mrf.mxu0
        %v587 = vadd.f32 %v463, %v586
        %588 = vdwg.mxu0
        %589 = vmatprep.subr.bf16.mxu0 0
        %590 = vmatpush1.bf16.msra.mxu0 0
        %591 = vmatprep.subr.bf16.mxu0 0
        %592 = vmatpush1.bf16.msra.mxu0 0
        %593 = vmatprep.subr.bf16.mxu0 0
        %594 = vmatpush1.bf16.msra.mxu0 0
        %595 = vmatprep.subr.bf16.mxu0 0
        %596 = vmatpush1.bf16.msra.mxu0 0
        %597 = vmatprep.subr.bf16.mxu0 %v390
        %598 = vmatpush1.bf16.msra.mxu0 %v389
        %599 = vmatprep.subr.bf16.mxu0 %v382
        %600 = vmatpush1.bf16.msra.mxu0 %v381
        %601 = vmatprep.subr.bf16.mxu0 %v374
        %602 = vmatpush1.bf16.msra.mxu0 %v373
        %603 = vmatprep.subr.bf16.mxu0 %v366
        %604 = vmatpush1.bf16.msra.mxu0 %v365
        %605 = vmatprep.subr.bf16.mxu0 0
        %606 = vmatpush2.bf16.msra.mxu0 0
        %607 = vmatprep.subr.bf16.mxu0 0
        %608 = vmatpush2.bf16.msra.mxu0 0
        %609 = vmatprep.subr.bf16.mxu0 0
        %610 = vmatpush2.bf16.msra.mxu0 0
        %611 = vmatprep.subr.bf16.mxu0 0
        %612 = vmatpush2.bf16.msra.mxu0 0
        %613 = vmatprep.subr.bf16.mxu0 0
        %614 = vmatpush2.bf16.msra.mxu0 0
        %615 = vmatprep.subr.bf16.mxu0 0
        %616 = vmatpush2.bf16.msra.mxu0 0
        %617 = vmatprep.subr.bf16.mxu0 0
        %618 = vmatpush2.bf16.msra.mxu0 0
        %619 = vmatprep.subr.bf16.mxu0 0
        %620 = vmatpush2.bf16.msra.mxu0 0
        %621 = vmatprep.mubr.bf16.mxu0 0
        %622 = vmatmul.mubr.bf16.gmra.mxu0 %v492
        %v623 = vpop.f32.mrf.mxu0
        %v624 = vadd.f32 %v418, %v623
        %v625 = vpop.f32.mrf.mxu0
        %v626 = vadd.f32 %v418, %v625
        %v627 = vpop.f32.mrf.mxu0
        %v628 = vadd.f32 %v423, %v627
        %v629 = vpop.f32.mrf.mxu0
        %v630 = vadd.f32 %v423, %v629
        %631 = vmatprep.mubr.bf16.mxu0 0
        %632 = vmatmul.mubr.bf16.gmra.mxu0 %v495
        %v633 = vpop.f32.mrf.mxu0
        %v634 = vadd.f32 %v428, %v633
        %v635 = vpop.f32.mrf.mxu0
        %v636 = vadd.f32 %v428, %v635
        %v637 = vpop.f32.mrf.mxu0
        %v638 = vadd.f32 %v433, %v637
        %v639 = vpop.f32.mrf.mxu0
        %v640 = vadd.f32 %v433, %v639
        %641 = vmatprep.mubr.bf16.mxu0 0
        %642 = vmatmul.mubr.bf16.gmra.mxu0 %v498
        %v643 = vpop.f32.mrf.mxu0
        %v644 = vadd.f32 %v438, %v643
        %v645 = vpop.f32.mrf.mxu0
        %v646 = vadd.f32 %v438, %v645
        %v647 = vpop.f32.mrf.mxu0
        %v648 = vadd.f32 %v443, %v647
        %v649 = vpop.f32.mrf.mxu0
        %v650 = vadd.f32 %v443, %v649
        %651 = vmatprep.mubr.bf16.mxu0 0
        %652 = vmatmul.mubr.bf16.gmra.mxu0 %v501
        %v653 = vpop.f32.mrf.mxu0
        %v654 = vadd.f32 %v448, %v653
        %v655 = vpop.f32.mrf.mxu0
        %v656 = vadd.f32 %v448, %v655
        %v657 = vpop.f32.mrf.mxu0
        %v658 = vadd.f32 %v453, %v657
        %v659 = vpop.f32.mrf.mxu0
        %v660 = vadd.f32 %v453, %v659
        %661 = vmatprep.mubr.bf16.mxu0 0
        %662 = vmatmul.mubr.bf16.gmra.mxu0 %v504
        %v663 = vpop.f32.mrf.mxu0
        %v664 = vadd.f32 %v458, %v663
        %v665 = vpop.f32.mrf.mxu0
        %v666 = vadd.f32 %v458, %v665
        %v667 = vpop.f32.mrf.mxu0
        %v668 = vadd.f32 %v463, %v667
        %v669 = vpop.f32.mrf.mxu0
        %v670 = vadd.f32 %v463, %v669
        %671 = vdwg.mxu0
        %672 = vmatprep.subr.bf16.mxu0 0
        %673 = vmatpush1.bf16.msra.mxu0 0
        %674 = vmatprep.subr.bf16.mxu0 0
        %675 = vmatpush1.bf16.msra.mxu0 0
        %676 = vmatprep.subr.bf16.mxu0 0
        %677 = vmatpush1.bf16.msra.mxu0 0
        %678 = vmatprep.subr.bf16.mxu0 0
        %679 = vmatpush1.bf16.msra.mxu0 0
        %680 = vmatprep.subr.bf16.mxu0 %v392
        %681 = vmatpush1.bf16.msra.mxu0 %v391
        %682 = vmatprep.subr.bf16.mxu0 %v384
        %683 = vmatpush1.bf16.msra.mxu0 %v383
        %684 = vmatprep.subr.bf16.mxu0 %v376
        %685 = vmatpush1.bf16.msra.mxu0 %v375
        %686 = vmatprep.subr.bf16.mxu0 %v368
        %687 = vmatpush1.bf16.msra.mxu0 %v367
        %688 = vmatprep.subr.bf16.mxu0 0
        %689 = vmatpush2.bf16.msra.mxu0 0
        %690 = vmatprep.subr.bf16.mxu0 0
        %691 = vmatpush2.bf16.msra.mxu0 0
        %692 = vmatprep.subr.bf16.mxu0 0
        %693 = vmatpush2.bf16.msra.mxu0 0
        %694 = vmatprep.subr.bf16.mxu0 0
        %695 = vmatpush2.bf16.msra.mxu0 0
        %696 = vmatprep.subr.bf16.mxu0 0
        %697 = vmatpush2.bf16.msra.mxu0 0
        %698 = vmatprep.subr.bf16.mxu0 0
        %699 = vmatpush2.bf16.msra.mxu0 0
        %700 = vmatprep.subr.bf16.mxu0 0
        %701 = vmatpush2.bf16.msra.mxu0 0
        %702 = vmatprep.subr.bf16.mxu0 0
        %703 = vmatpush2.bf16.msra.mxu0 0
        %704 = vmatprep.mubr.bf16.mxu0 0
        %705 = vmatmul.mubr.bf16.gmra.mxu0 %v492
        %v706 = vpop.f32.mrf.mxu0
        %v707 = vadd.f32 %v418, %v706
        %v708 = vpop.f32.mrf.mxu0
        %v709 = vadd.f32 %v418, %v708
        %v710 = vpop.f32.mrf.mxu0
        %v711 = vadd.f32 %v423, %v710
        %v712 = vpop.f32.mrf.mxu0
        %v713 = vadd.f32 %v423, %v712
        %714 = vmatprep.mubr.bf16.mxu0 0
        %715 = vmatmul.mubr.bf16.gmra.mxu0 %v495
        %v716 = vpop.f32.mrf.mxu0
        %v717 = vadd.f32 %v428, %v716
        %v718 = vpop.f32.mrf.mxu0
        %v719 = vadd.f32 %v428, %v718
        %v720 = vpop.f32.mrf.mxu0
        %v721 = vadd.f32 %v433, %v720
        %v722 = vpop.f32.mrf.mxu0
        %v723 = vadd.f32 %v433, %v722
        %724 = vmatprep.mubr.bf16.mxu0 0
        %725 = vmatmul.mubr.bf16.gmra.mxu0 %v498
        %v726 = vpop.f32.mrf.mxu0
        %v727 = vadd.f32 %v438, %v726
        %v728 = vpop.f32.mrf.mxu0
        %v729 = vadd.f32 %v438, %v728
        %v730 = vpop.f32.mrf.mxu0
        %v731 = vadd.f32 %v443, %v730
        %v732 = vpop.f32.mrf.mxu0
        %v733 = vadd.f32 %v443, %v732
        %734 = vmatprep.mubr.bf16.mxu0 0
        %735 = vmatmul.mubr.bf16.gmra.mxu0 %v501
        %v736 = vpop.f32.mrf.mxu0
        %v737 = vadd.f32 %v448, %v736
        %v738 = vpop.f32.mrf.mxu0
        %v739 = vadd.f32 %v448, %v738
        %v740 = vpop.f32.mrf.mxu0
        %v741 = vadd.f32 %v453, %v740
        %v742 = vpop.f32.mrf.mxu0
        %v743 = vadd.f32 %v453, %v742
        %744 = vmatprep.mubr.bf16.mxu0 0
        %745 = vmatmul.mubr.bf16.gmra.mxu0 %v504
        %v746 = vpop.f32.mrf.mxu0
        %v747 = vadd.f32 %v458, %v746
        %v748 = vpop.f32.mrf.mxu0
        %v749 = vadd.f32 %v458, %v748
        %v750 = vpop.f32.mrf.mxu0
        %v751 = vadd.f32 %v463, %v750
        %v752 = vpop.f32.mrf.mxu0
        %v753 = vadd.f32 %v463, %v752
        %754 = vdwg.mxu0
        %755 = vmatprep.subr.bf16.mxu0 0
        %756 = vmatpush1.bf16.msra.mxu0 0
        %757 = vmatprep.subr.bf16.mxu0 0
        %758 = vmatpush1.bf16.msra.mxu0 0
        %759 = vmatprep.subr.bf16.mxu0 0
        %760 = vmatpush1.bf16.msra.mxu0 0
        %761 = vmatprep.subr.bf16.mxu0 0
        %762 = vmatpush1.bf16.msra.mxu0 0
        %763 = vmatprep.subr.bf16.mxu0 %v394
        %764 = vmatpush1.bf16.msra.mxu0 %v393
        %765 = vmatprep.subr.bf16.mxu0 %v386
        %766 = vmatpush1.bf16.msra.mxu0 %v385
        %767 = vmatprep.subr.bf16.mxu0 %v378
        %768 = vmatpush1.bf16.msra.mxu0 %v377
        %769 = vmatprep.subr.bf16.mxu0 %v370
        %770 = vmatpush1.bf16.msra.mxu0 %v369
        %771 = vmatprep.subr.bf16.mxu0 0
        %772 = vmatpush2.bf16.msra.mxu0 0
        %773 = vmatprep.subr.bf16.mxu0 0
        %774 = vmatpush2.bf16.msra.mxu0 0
        %775 = vmatprep.subr.bf16.mxu0 0
        %776 = vmatpush2.bf16.msra.mxu0 0
        %777 = vmatprep.subr.bf16.mxu0 0
        %778 = vmatpush2.bf16.msra.mxu0 0
        %779 = vmatprep.subr.bf16.mxu0 0
        %780 = vmatpush2.bf16.msra.mxu0 0
        %781 = vmatprep.subr.bf16.mxu0 0
        %782 = vmatpush2.bf16.msra.mxu0 0
        %783 = vmatprep.subr.bf16.mxu0 0
        %784 = vmatpush2.bf16.msra.mxu0 0
        %785 = vmatprep.subr.bf16.mxu0 0
        %786 = vmatpush2.bf16.msra.mxu0 0
        %787 = vmatprep.mubr.bf16.mxu0 0
        %788 = vmatmul.mubr.bf16.gmra.mxu0 %v492
        %v789 = vpop.f32.mrf.mxu0
        %v790 = vadd.f32 %v418, %v789
        %v791 = vpop.f32.mrf.mxu0
        %v792 = vadd.f32 %v418, %v791
        %v793 = vpop.f32.mrf.mxu0
        %v794 = vadd.f32 %v423, %v793
        %v795 = vpop.f32.mrf.mxu0
        %v796 = vadd.f32 %v423, %v795
        %797 = vmatprep.mubr.bf16.mxu0 0
        %798 = vmatmul.mubr.bf16.gmra.mxu0 %v495
        %v799 = vpop.f32.mrf.mxu0
        %v800 = vadd.f32 %v428, %v799
        %v801 = vpop.f32.mrf.mxu0
        %v802 = vadd.f32 %v428, %v801
        %v803 = vpop.f32.mrf.mxu0
        %v804 = vadd.f32 %v433, %v803
        %v805 = vpop.f32.mrf.mxu0
        %v806 = vadd.f32 %v433, %v805
        %807 = vmatprep.mubr.bf16.mxu0 0
        %808 = vmatmul.mubr.bf16.gmra.mxu0 %v498
        %v809 = vpop.f32.mrf.mxu0
        %v810 = vadd.f32 %v438, %v809
        %v811 = vpop.f32.mrf.mxu0
        %v812 = vadd.f32 %v438, %v811
        %v813 = vpop.f32.mrf.mxu0
        %v814 = vadd.f32 %v443, %v813
        %v815 = vpop.f32.mrf.mxu0
        %v816 = vadd.f32 %v443, %v815
        %817 = vmatprep.mubr.bf16.mxu0 0
        %818 = vmatmul.mubr.bf16.gmra.mxu0 %v501
        %v819 = vpop.f32.mrf.mxu0
        %v820 = vadd.f32 %v448, %v819
        %v821 = vpop.f32.mrf.mxu0
        %v822 = vadd.f32 %v448, %v821
        %v823 = vpop.f32.mrf.mxu0
        %v824 = vadd.f32 %v453, %v823
        %v825 = vpop.f32.mrf.mxu0
        %v826 = vadd.f32 %v453, %v825
        %827 = vmatprep.mubr.bf16.mxu0 0
        %828 = vmatmul.mubr.bf16.gmra.mxu0 %v504
        %v829 = vpop.f32.mrf.mxu0
        %v830 = vadd.f32 %v458, %v829
        %v831 = vpop.f32.mrf.mxu0
        %v832 = vadd.f32 %v458, %v831
        %v833 = vpop.f32.mrf.mxu0
        %v834 = vadd.f32 %v463, %v833
        %v835 = vpop.f32.mrf.mxu0
        %v836 = vadd.f32 %v463, %v835
        %837 = vdwg.mxu0
        %v838 = vlaneseq
        %v839 = vand.u32 %v838, 127
        %vm840 = vcmp.lt.s32.totalorder %v839, 64
        %v841 = vsel %vm840, 1, 0
        %v842 = vcvt.s32.f32 %v841
        %v843 = vlaneseq
        %v844 = vshrl.u32 %v843, 7
        %v845 = vsub.s32 0, %v844
        %v846 = vrot.slane %v842, %v845
        %v847 = vmul.f32 %v541, %v846
        %v848 = vmul.f32 %v543, %v846
        %v849 = vmul.f32 %v624, %v846
        %v850 = vmul.f32 %v626, %v846
        %v851 = vmul.f32 %v707, %v846
        %v852 = vmul.f32 %v709, %v846
        %v853 = vmul.f32 %v790, %v846
        %v854 = vmul.f32 %v792, %v846
        %v855 = vmul.f32 %v545, %v846
        %v856 = vmul.f32 %v547, %v846
        %v857 = vmul.f32 %v628, %v846
        %v858 = vmul.f32 %v630, %v846
        %v859 = vmul.f32 %v711, %v846
        %v860 = vmul.f32 %v713, %v846
        %v861 = vmul.f32 %v794, %v846
        %v862 = vmul.f32 %v796, %v846
        %v863 = vmul.f32 %v551, %v846
        %v864 = vmul.f32 %v553, %v846
        %v865 = vmul.f32 %v634, %v846
        %v866 = vmul.f32 %v636, %v846
        %v867 = vmul.f32 %v717, %v846
        %v868 = vmul.f32 %v719, %v846
        %v869 = vmul.f32 %v800, %v846
        %v870 = vmul.f32 %v802, %v846
        %v871 = vmul.f32 %v555, %v846
        %v872 = vmul.f32 %v557, %v846
        %v873 = vmul.f32 %v638, %v846
        %v874 = vmul.f32 %v640, %v846
        %v875 = vmul.f32 %v721, %v846
        %v876 = vmul.f32 %v723, %v846
        %v877 = vmul.f32 %v804, %v846
        %v878 = vmul.f32 %v806, %v846
        %v879 = vmul.f32 %v561, %v846
        %v880 = vmul.f32 %v563, %v846
        %v881 = vmul.f32 %v644, %v846
        %v882 = vmul.f32 %v646, %v846
        %v883 = vmul.f32 %v727, %v846
        %v884 = vmul.f32 %v729, %v846
        %v885 = vmul.f32 %v810, %v846
        %v886 = vmul.f32 %v812, %v846
        %v887 = vmul.f32 %v565, %v846
        %v888 = vmul.f32 %v567, %v846
        %v889 = vmul.f32 %v648, %v846
        %v890 = vmul.f32 %v650, %v846
        %v891 = vmul.f32 %v731, %v846
        %v892 = vmul.f32 %v733, %v846
        %v893 = vmul.f32 %v814, %v846
        %v894 = vmul.f32 %v816, %v846
        %v895 = vmul.f32 %v571, %v846
        %v896 = vmul.f32 %v573, %v846
        %v897 = vmul.f32 %v654, %v846
        %v898 = vmul.f32 %v656, %v846
        %v899 = vmul.f32 %v737, %v846
        %v900 = vmul.f32 %v739, %v846
        %v901 = vmul.f32 %v820, %v846
        %v902 = vmul.f32 %v822, %v846
        %v903 = vmul.f32 %v575, %v846
        %v904 = vmul.f32 %v577, %v846
        %v905 = vmul.f32 %v658, %v846
        %v906 = vmul.f32 %v660, %v846
        %v907 = vmul.f32 %v741, %v846
        %v908 = vmul.f32 %v743, %v846
        %v909 = vmul.f32 %v824, %v846
        %v910 = vmul.f32 %v826, %v846
        %v911 = vmul.f32 %v581, %v846
        %v912 = vmul.f32 %v583, %v846
        %v913 = vmul.f32 %v664, %v846
        %v914 = vmul.f32 %v666, %v846
        %v915 = vmul.f32 %v747, %v846
        %v916 = vmul.f32 %v749, %v846
        %v917 = vmul.f32 %v830, %v846
        %v918 = vmul.f32 %v832, %v846
        %v919 = vmul.f32 %v585, %v846
        %v920 = vmul.f32 %v587, %v846
        %v921 = vmul.f32 %v668, %v846
        %v922 = vmul.f32 %v670, %v846
        %v923 = vmul.f32 %v751, %v846
        %v924 = vmul.f32 %v753, %v846
        %v925 = vmul.f32 %v834, %v846
        %v926 = vmul.f32 %v836, %v846
        %v927 = vsel %vm840, 0.0, -1e+30
        %v928 = vpack.c.bf16 %v847, %v847
        %v929 = vpack.c.bf16 %v848, %v848
        %v930 = vpack.c.bf16 %v849, %v849
        %v931 = vpack.c.bf16 %v850, %v850
        %v932 = vpack.c.bf16 %v851, %v851
        %v933 = vpack.c.bf16 %v852, %v852
        %v934 = vpack.c.bf16 %v853, %v853
        %v935 = vpack.c.bf16 %v854, %v854
        %v936 = vpack.c.bf16 %v855, %v855
        %v937 = vpack.c.bf16 %v856, %v856
        %v938 = vpack.c.bf16 %v857, %v857
        %v939 = vpack.c.bf16 %v858, %v858
        %v940 = vpack.c.bf16 %v859, %v859
        %v941 = vpack.c.bf16 %v860, %v860
        %v942 = vpack.c.bf16 %v861, %v861
        %v943 = vpack.c.bf16 %v862, %v862
        %v944 = vpack.c.bf16 %v871, %v863
        %v945 = vpack.c.bf16 %v872, %v864
        %v946 = vpack.c.bf16 %v873, %v865
        %v947 = vpack.c.bf16 %v874, %v866
        %v948 = vpack.c.bf16 %v875, %v867
        %v949 = vpack.c.bf16 %v876, %v868
        %v950 = vpack.c.bf16 %v877, %v869
        %v951 = vpack.c.bf16 %v878, %v870
        %v952 = vpack.c.bf16 %v887, %v879
        %v953 = vpack.c.bf16 %v888, %v880
        %v954 = vpack.c.bf16 %v889, %v881
        %v955 = vpack.c.bf16 %v890, %v882
        %v956 = vpack.c.bf16 %v891, %v883
        %v957 = vpack.c.bf16 %v892, %v884
        %v958 = vpack.c.bf16 %v893, %v885
        %v959 = vpack.c.bf16 %v894, %v886
        %v960 = vpack.c.bf16 %v903, %v895
        %v961 = vpack.c.bf16 %v904, %v896
        %v962 = vpack.c.bf16 %v905, %v897
        %v963 = vpack.c.bf16 %v906, %v898
        %v964 = vpack.c.bf16 %v907, %v899
        %v965 = vpack.c.bf16 %v908, %v900
        %v966 = vpack.c.bf16 %v909, %v901
        %v967 = vpack.c.bf16 %v910, %v902
        %v968 = vpack.c.bf16 %v919, %v911
        %v969 = vpack.c.bf16 %v920, %v912
        %v970 = vpack.c.bf16 %v921, %v913
        %v971 = vpack.c.bf16 %v922, %v914
        %v972 = vpack.c.bf16 %v923, %v915
        %v973 = vpack.c.bf16 %v924, %v916
        %v974 = vpack.c.bf16 %v925, %v917
        %v975 = vpack.c.bf16 %v926, %v918
        %s976 = sld [smem:[#allocation3]]
        %977 = vxpose.xlu0.c.b16.start [1/8] %v928, 128
        %978 = vxpose.xlu0.c.b16.cont [2/8] 0, 128
        %979 = vxpose.xlu0.c.b16.cont [3/8] 0, 128
        %980 = vxpose.xlu0.c.b16.cont [4/8] 0, 128
        %981 = vxpose.xlu0.c.b16.cont [5/8] 0, 128
        %982 = vxpose.xlu0.c.b16.cont [6/8] 0, 128
        %983 = vxpose.xlu0.c.b16.cont [7/8] 0, 128
        %984 = vxpose.xlu0.c.b16.end [8/8] 0, 128
        %v985 = vpop.trf.xlu0
        %v986 = vpop.trf.xlu0
        %v987 = vpop.trf.xlu0
        %v988 = vpop.trf.xlu0
        %v989 = vpop.trf.xlu0
        %v990 = vpop.trf.xlu0
        %v991 = vpop.trf.xlu0
        %v992 = vpop.trf.xlu0
        %vm993 = vcmask 64512
        %v995 = vsel %vm993, %v985, 0
        %v998 = vsel %vm993, %v986, 0
        %v1001 = vsel %vm993, %v987, 0
        %v1004 = vsel %vm993, %v988, 0
        %v1007 = vsel %vm993, %v989, 0
        %v1010 = vsel %vm993, %v990, 0
        %v1013 = vsel %vm993, %v991, 0
        %v1016 = vsel %vm993, %v992, 0
        %vm1018 = vcmask 1043456
        %v1020 = vsel %vm1018, %v936, 0
        %1022 = vmatprep.subr.bf16.mxu0 0
        %1023 = vmatpush1.bf16.msra.mxu0 0
        %1024 = vmatprep.subr.bf16.mxu0 0
        %1025 = vmatpush1.bf16.msra.mxu0 0
        %1026 = vmatprep.subr.bf16.mxu0 0
        %1027 = vmatpush1.bf16.msra.mxu0 0
        %1028 = vmatprep.subr.bf16.mxu0 0
        %1029 = vmatpush1.bf16.msra.mxu0 0
        %1030 = vmatprep.subr.bf16.mxu0 0
        %1031 = vmatpush1.bf16.msra.mxu0 0
        %1032 = vmatprep.subr.bf16.mxu0 0
        %1033 = vmatpush1.bf16.msra.mxu0 0
        %1034 = vmatprep.subr.bf16.mxu0 0
        %1035 = vmatpush1.bf16.msra.mxu0 0
        %1036 = vmatprep.subr.bf16.mxu0 0
        %1037 = vmatpush1.bf16.msra.mxu0 %v1020
        %1038 = vmatprep.subr.bf16.mxu0 0
        %1039 = vmatpush2.bf16.msra.mxu0 0
        %1040 = vmatprep.subr.bf16.mxu0 0
        %1041 = vmatpush2.bf16.msra.mxu0 0
        %1042 = vmatprep.subr.bf16.mxu0 0
        %1043 = vmatpush2.bf16.msra.mxu0 0
        %1044 = vmatprep.subr.bf16.mxu0 0
        %1045 = vmatpush2.bf16.msra.mxu0 0
        %1046 = vmatprep.subr.bf16.mxu0 0
        %1047 = vmatpush2.bf16.msra.mxu0 0
        %1048 = vmatprep.subr.bf16.mxu0 0
        %1049 = vmatpush2.bf16.msra.mxu0 0
        %1050 = vmatprep.subr.bf16.mxu0 0
        %1051 = vmatpush2.bf16.msra.mxu0 0
        %1052 = vmatprep.subr.bf16.mxu0 0
        %1053 = vmatpush2.bf16.msra.mxu0 0
        %1054 = vmatprep.mubr.bf16.mxu0 0
        %1055 = vmatmul.mubr.bf16.gmra.mxu0 %v995
        %v1056 = vpop.f32.mrf.mxu0
        %v1057 = vadd.f32 %v927, %v1056
        %v1058 = vpop.f32.mrf.mxu0
        %v1059 = vpop.f32.mrf.mxu0
        %v1060 = vadd.f32 %v927, %v1059
        %v1061 = vpop.f32.mrf.mxu0
        %1062 = vmatprep.mubr.bf16.mxu0 0
        %1063 = vmatmul.mubr.bf16.gmra.mxu0 %v998
        %v1064 = vpop.f32.mrf.mxu0
        %v1065 = vadd.f32 %v927, %v1064
        %v1066 = vpop.f32.mrf.mxu0
        %v1067 = vpop.f32.mrf.mxu0
        %v1068 = vadd.f32 %v927, %v1067
        %v1069 = vpop.f32.mrf.mxu0
        %1070 = vmatprep.mubr.bf16.mxu0 0
        %1071 = vmatmul.mubr.bf16.gmra.mxu0 %v1001
        %v1072 = vpop.f32.mrf.mxu0
        %v1073 = vadd.f32 %v927, %v1072
        %v1074 = vpop.f32.mrf.mxu0
        %v1075 = vpop.f32.mrf.mxu0
        %v1076 = vadd.f32 %v927, %v1075
        %v1077 = vpop.f32.mrf.mxu0
        %1078 = vmatprep.mubr.bf16.mxu0 0
        %1079 = vmatmul.mubr.bf16.gmra.mxu0 %v1004
        %v1080 = vpop.f32.mrf.mxu0
        %v1081 = vadd.f32 %v927, %v1080
        %v1082 = vpop.f32.mrf.mxu0
        %v1083 = vpop.f32.mrf.mxu0
        %v1084 = vadd.f32 %v927, %v1083
        %v1085 = vpop.f32.mrf.mxu0
        %1086 = vmatprep.mubr.bf16.mxu0 0
        %1087 = vmatmul.mubr.bf16.gmra.mxu0 %v1007
        %v1088 = vpop.f32.mrf.mxu0
        %v1089 = vadd.f32 %v927, %v1088
        %v1090 = vpop.f32.mrf.mxu0
        %v1091 = vpop.f32.mrf.mxu0
        %v1092 = vadd.f32 %v927, %v1091
        %v1093 = vpop.f32.mrf.mxu0
        %1094 = vmatprep.mubr.bf16.mxu0 0
        %1095 = vmatmul.mubr.bf16.gmra.mxu0 %v1010
        %v1096 = vpop.f32.mrf.mxu0
        %v1097 = vadd.f32 %v927, %v1096
        %v1098 = vpop.f32.mrf.mxu0
        %v1099 = vpop.f32.mrf.mxu0
        %v1100 = vadd.f32 %v927, %v1099
        %v1101 = vpop.f32.mrf.mxu0
        %1102 = vmatprep.mubr.bf16.mxu0 0
        %1103 = vmatmul.mubr.bf16.gmra.mxu0 %v1013
        %v1104 = vpop.f32.mrf.mxu0
        %v1105 = vadd.f32 %v927, %v1104
        %v1106 = vpop.f32.mrf.mxu0
        %v1107 = vpop.f32.mrf.mxu0
        %v1108 = vadd.f32 %v927, %v1107
        %v1109 = vpop.f32.mrf.mxu0
        %1110 = vmatprep.mubr.bf16.mxu0 0
        %1111 = vmatmul.mubr.bf16.gmra.mxu0 %v1016
        %v1112 = vpop.f32.mrf.mxu0
        %v1113 = vadd.f32 %v927, %v1112
        %v1114 = vpop.f32.mrf.mxu0
        %v1115 = vpop.f32.mrf.mxu0
        %v1116 = vadd.f32 %v927, %v1115
        %v1117 = vpop.f32.mrf.mxu0
        %1118 = vdwg.mxu0
        %1119 = vmax.xlane.f32.xlu0 %v1057
        %v1120 = vpop.xlane.xlu0 %1119
        %1121 = vmax.xlane.f32.xlu0 %v1060
        %v1122 = vpop.xlane.xlu0 %1121
        %1123 = vmax.xlane.f32.xlu0 %v1065
        %v1124 = vpop.xlane.xlu0 %1123
        %1125 = vmax.xlane.f32.xlu0 %v1068
        %v1126 = vpop.xlane.xlu0 %1125
        %1127 = vmax.xlane.f32.xlu0 %v1073
        %v1128 = vpop.xlane.xlu0 %1127
        %1129 = vmax.xlane.f32.xlu0 %v1076
        %v1130 = vpop.xlane.xlu0 %1129
        %1131 = vmax.xlane.f32.xlu0 %v1081
        %v1132 = vpop.xlane.xlu0 %1131
        %1133 = vmax.xlane.f32.xlu0 %v1084
        %v1134 = vpop.xlane.xlu0 %1133
        %1135 = vmax.xlane.f32.xlu0 %v1089
        %v1136 = vpop.xlane.xlu0 %1135
        %1137 = vmax.xlane.f32.xlu0 %v1092
        %v1138 = vpop.xlane.xlu0 %1137
        %1139 = vmax.xlane.f32.xlu0 %v1097
        %v1140 = vpop.xlane.xlu0 %1139
        %1141 = vmax.xlane.f32.xlu0 %v1100
        %v1142 = vpop.xlane.xlu0 %1141
        %1143 = vmax.xlane.f32.xlu0 %v1105
        %v1144 = vpop.xlane.xlu0 %1143
        %1145 = vmax.xlane.f32.xlu0 %v1108
        %v1146 = vpop.xlane.xlu0 %1145
        %1147 = vmax.xlane.f32.xlu0 %v1113
        %v1148 = vpop.xlane.xlu0 %1147
        %1149 = vmax.xlane.f32.xlu0 %v1116
        %v1150 = vpop.xlane.xlu0 %1149
        %v1151 = vsub.f32 %v1057, %v1120
        %v1152 = vsub.f32 %v1060, %v1122
        %v1153 = vsub.f32 %v1065, %v1124
        %v1154 = vsub.f32 %v1068, %v1126
        %v1155 = vsub.f32 %v1073, %v1128
        %v1156 = vsub.f32 %v1076, %v1130
        %v1157 = vsub.f32 %v1081, %v1132
        %v1158 = vsub.f32 %v1084, %v1134
        %v1159 = vsub.f32 %v1089, %v1136
        %v1160 = vsub.f32 %v1092, %v1138
        %v1161 = vsub.f32 %v1097, %v1140
        %v1162 = vsub.f32 %v1100, %v1142
        %v1163 = vsub.f32 %v1105, %v1144
        %v1164 = vsub.f32 %v1108, %v1146
        %v1165 = vsub.f32 %v1113, %v1148
        %v1166 = vsub.f32 %v1116, %v1150
        %v1167 = vmul.f32 %v1151, 1.442695
        %v1168 = vpow.pop %v1167
        %v1169 = vmul.f32 %v1152, 1.442695
        %v1170 = vpow.pop %v1169
        %v1171 = vmul.f32 %v1153, 1.442695
        %v1172 = vpow.pop %v1171
        %v1173 = vmul.f32 %v1154, 1.442695
        %v1174 = vpow.pop %v1173
        %v1175 = vmul.f32 %v1155, 1.442695
        %v1176 = vpow.pop %v1175
        %v1177 = vmul.f32 %v1156, 1.442695
        %v1178 = vpow.pop %v1177
        %v1179 = vmul.f32 %v1157, 1.442695
        %v1180 = vpow.pop %v1179
        %v1181 = vmul.f32 %v1158, 1.442695
        %v1182 = vpow.pop %v1181
        %v1183 = vmul.f32 %v1159, 1.442695
        %v1184 = vpow.pop %v1183
        %v1185 = vmul.f32 %v1160, 1.442695
        %v1186 = vpow.pop %v1185
        %v1187 = vmul.f32 %v1161, 1.442695
        %v1188 = vpow.pop %v1187
        %v1189 = vmul.f32 %v1162, 1.442695
        %v1190 = vpow.pop %v1189
        %v1191 = vmul.f32 %v1163, 1.442695
        %v1192 = vpow.pop %v1191
        %v1193 = vmul.f32 %v1164, 1.442695
        %v1194 = vpow.pop %v1193
        %v1195 = vmul.f32 %v1165, 1.442695
        %v1196 = vpow.pop %v1195
        %v1197 = vmul.f32 %v1166, 1.442695
        %v1198 = vpow.pop %v1197
        %1199 = vadd.xlane.f32.xlu0 %v1168
        %v1200 = vpop.xlane.xlu0 %1199
        %1201 = vadd.xlane.f32.xlu0 %v1170
        %v1202 = vpop.xlane.xlu0 %1201
        %1203 = vadd.xlane.f32.xlu0 %v1172
        %v1204 = vpop.xlane.xlu0 %1203
        %1205 = vadd.xlane.f32.xlu0 %v1174
        %v1206 = vpop.xlane.xlu0 %1205
        %1207 = vadd.xlane.f32.xlu0 %v1176
        %v1208 = vpop.xlane.xlu0 %1207
        %1209 = vadd.xlane.f32.xlu0 %v1178
        %v1210 = vpop.xlane.xlu0 %1209
        %1211 = vadd.xlane.f32.xlu0 %v1180
        %v1212 = vpop.xlane.xlu0 %1211
        %1213 = vadd.xlane.f32.xlu0 %v1182
        %v1214 = vpop.xlane.xlu0 %1213
        %1215 = vadd.xlane.f32.xlu0 %v1184
        %v1216 = vpop.xlane.xlu0 %1215
        %1217 = vadd.xlane.f32.xlu0 %v1186
        %v1218 = vpop.xlane.xlu0 %1217
        %1219 = vadd.xlane.f32.xlu0 %v1188
        %v1220 = vpop.xlane.xlu0 %1219
        %1221 = vadd.xlane.f32.xlu0 %v1190
        %v1222 = vpop.xlane.xlu0 %1221
        %1223 = vadd.xlane.f32.xlu0 %v1192
        %v1224 = vpop.xlane.xlu0 %1223
        %1225 = vadd.xlane.f32.xlu0 %v1194
        %v1226 = vpop.xlane.xlu0 %1225
        %1227 = vadd.xlane.f32.xlu0 %v1196
        %v1228 = vpop.xlane.xlu0 %1227
        %1229 = vadd.xlane.f32.xlu0 %v1198
        %v1230 = vpop.xlane.xlu0 %1229
        %v1231 = vrcp.pop %v1200
        %v1232 = vrcp.pop %v1202
        %v1233 = vrcp.pop %v1204
        %v1234 = vrcp.pop %v1206
        %v1235 = vrcp.pop %v1208
        %v1236 = vrcp.pop %v1210
        %v1237 = vrcp.pop %v1212
        %v1238 = vrcp.pop %v1214
        %v1239 = vrcp.pop %v1216
        %v1240 = vrcp.pop %v1218
        %v1241 = vrcp.pop %v1220
        %v1242 = vrcp.pop %v1222
        %v1243 = vrcp.pop %v1224
        %v1244 = vrcp.pop %v1226
        %v1245 = vrcp.pop %v1228
        %v1246 = vrcp.pop %v1230
        %v1247 = vmul.f32 %v1168, %v1231
        %v1248 = vmul.f32 %v1170, %v1232
        %v1249 = vmul.f32 %v1172, %v1233
        %v1250 = vmul.f32 %v1174, %v1234
        %v1251 = vmul.f32 %v1176, %v1235
        %v1252 = vmul.f32 %v1178, %v1236
        %v1253 = vmul.f32 %v1180, %v1237
        %v1254 = vmul.f32 %v1182, %v1238
        %v1255 = vmul.f32 %v1184, %v1239
        %v1256 = vmul.f32 %v1186, %v1240
        %v1257 = vmul.f32 %v1188, %v1241
        %v1258 = vmul.f32 %v1190, %v1242
        %v1259 = vmul.f32 %v1192, %v1243
        %v1260 = vmul.f32 %v1194, %v1244
        %v1261 = vmul.f32 %v1196, %v1245
        %v1262 = vmul.f32 %v1198, %v1246
        %v1263 = vpack.c.bf16 %v1248, %v1247
        %v1264 = vpack.c.bf16 %v1250, %v1249
        %v1265 = vpack.c.bf16 %v1252, %v1251
        %v1266 = vpack.c.bf16 %v1254, %v1253
        %v1267 = vpack.c.bf16 %v1256, %v1255
        %v1268 = vpack.c.bf16 %v1258, %v1257
        %v1269 = vpack.c.bf16 %v1260, %v1259
        %v1270 = vpack.c.bf16 %v1262, %v1261
        %1271 = vmatprep.subr.bf16.mxu0 0
        %1272 = vmatpush1.bf16.msra.mxu0 %v1270
        %1273 = vmatprep.subr.bf16.mxu0 0
        %1274 = vmatpush1.bf16.msra.mxu0 %v1269
        %1275 = vmatprep.subr.bf16.mxu0 0
        %1276 = vmatpush1.bf16.msra.mxu0 %v1268
        %1277 = vmatprep.subr.bf16.mxu0 0
        %1278 = vmatpush1.bf16.msra.mxu0 %v1267
        %1279 = vmatprep.subr.bf16.mxu0 0
        %1280 = vmatpush1.bf16.msra.mxu0 %v1266
        %1281 = vmatprep.subr.bf16.mxu0 0
        %1282 = vmatpush1.bf16.msra.mxu0 %v1265
        %1283 = vmatprep.subr.bf16.mxu0 0
        %1284 = vmatpush1.bf16.msra.mxu0 %v1264
        %1285 = vmatprep.subr.bf16.mxu0 0
        %1286 = vmatpush1.bf16.msra.mxu0 %v1263
        %1287 = vmatprep.subr.bf16.mxu0 0
        %1288 = vmatpush2.bf16.msra.mxu0 0
        %1289 = vmatprep.subr.bf16.mxu0 0
        %1290 = vmatpush2.bf16.msra.mxu0 0
        %1291 = vmatprep.subr.bf16.mxu0 0
        %1292 = vmatpush2.bf16.msra.mxu0 0
        %1293 = vmatprep.subr.bf16.mxu0 0
        %1294 = vmatpush2.bf16.msra.mxu0 0
        %1295 = vmatprep.subr.bf16.mxu0 0
        %1296 = vmatpush2.bf16.msra.mxu0 0
        %1297 = vmatprep.subr.bf16.mxu0 0
        %1298 = vmatpush2.bf16.msra.mxu0 0
        %1299 = vmatprep.subr.bf16.mxu0 0
        %1300 = vmatpush2.bf16.msra.mxu0 0
        %1301 = vmatprep.subr.bf16.mxu0 0
        %1302 = vmatpush2.bf16.msra.mxu0 0
        %1303 = vmatprep.mubr.bf16.mxu0 0
        %1304 = vmatmul.mubr.bf16.gmra.mxu0 %v944
        %v1305 = vpop.f32.mrf.mxu0
        %v1306 = vadd.f32 0.0, %v1305
        %v1307 = vpop.f32.mrf.mxu0
        %v1308 = vpop.f32.mrf.mxu0
        %v1309 = vadd.f32 0.0, %v1308
        %v1310 = vpop.f32.mrf.mxu0
        %1311 = vmatprep.mubr.bf16.mxu0 0
        %1312 = vmatmul.mubr.bf16.gmra.mxu0 %v952
        %v1313 = vpop.f32.mrf.mxu0
        %v1314 = vadd.f32 0.0, %v1313
        %v1315 = vpop.f32.mrf.mxu0
        %v1316 = vpop.f32.mrf.mxu0
        %v1317 = vadd.f32 0.0, %v1316
        %v1318 = vpop.f32.mrf.mxu0
        %1319 = vmatprep.mubr.bf16.mxu0 0
        %1320 = vmatmul.mubr.bf16.gmra.mxu0 %v960
        %v1321 = vpop.f32.mrf.mxu0
        %v1322 = vadd.f32 0.0, %v1321
        %v1323 = vpop.f32.mrf.mxu0
        %v1324 = vpop.f32.mrf.mxu0
        %v1325 = vadd.f32 0.0, %v1324
        %v1326 = vpop.f32.mrf.mxu0
        %1327 = vmatprep.mubr.bf16.mxu0 0
        %1328 = vmatmul.mubr.bf16.gmra.mxu0 %v968
        %v1329 = vpop.f32.mrf.mxu0
        %v1330 = vadd.f32 0.0, %v1329
        %v1331 = vpop.f32.mrf.mxu0
        %v1332 = vpop.f32.mrf.mxu0
        %v1333 = vadd.f32 0.0, %v1332
        %v1334 = vpop.f32.mrf.mxu0
        %1335 = vdwg.mxu0
        %v1336 = vstv %s976
        %v1337 = vmul.f32 %v1336, %v1306
        %v1338 = vmul.f32 %v1336, %v1309
        %v1339 = vmul.f32 %v1336, %v1314
        %v1340 = vmul.f32 %v1336, %v1317
        %v1341 = vmul.f32 %v1336, %v1322
        %v1342 = vmul.f32 %v1336, %v1325
        %v1343 = vmul.f32 %v1336, %v1330
        %v1344 = vmul.f32 %v1336, %v1333
        %v1345 = vadd.f32 %v1337, %v299
        %v1346 = vadd.f32 %v1338, %v307
        %v1347 = vadd.f32 %v1339, %v315
        %v1348 = vadd.f32 %v1340, %v323
        %v1349 = vadd.f32 %v1341, %v331
        %v1350 = vadd.f32 %v1342, %v339
        %v1351 = vadd.f32 %v1343, %v347
        %v1352 = vadd.f32 %v1344, %v355
        %v1353 = vmul.f32 %v299, %v1345
        %v1354 = vmul.f32 %v307, %v1346
        %v1355 = vmul.f32 %v315, %v1347
        %v1356 = vmul.f32 %v323, %v1348
        %v1357 = vmul.f32 %v331, %v1349
        %v1358 = vmul.f32 %v339, %v1350
        %v1359 = vmul.f32 %v347, %v1351
        %v1360 = vmul.f32 %v355, %v1352
        %1361 = vst [vmem:[#allocation2] ss:$8 sm:$0xf] %v1353
        %1362 = vst [vmem:[#allocation2] ss:$8 sm:$0xf0] %v1353
        %s1363 = scalar_lea.vmem [#allocation2], 64
        %1364 = vst [vmem:[%s1363] ss:$8 sm:$0xf] %v1354
        %1365 = vst [vmem:[%s1363] ss:$8 sm:$0xf0] %v1354
        %s1366 = scalar_lea.vmem [#allocation2], 128
        %1367 = vst [vmem:[%s1366] ss:$8 sm:$0xf] %v1355
        %1368 = vst [vmem:[%s1366] ss:$8 sm:$0xf0] %v1355
        %s1369 = scalar_lea.vmem [#allocation2], 192
        %1370 = vst [vmem:[%s1369] ss:$8 sm:$0xf] %v1356
        %1371 = vst [vmem:[%s1369] ss:$8 sm:$0xf0] %v1356
        %s1372 = scalar_lea.vmem [#allocation2], 256
        %1373 = vst [vmem:[%s1372] ss:$8 sm:$0xf] %v1357
        %1374 = vst [vmem:[%s1372] ss:$8 sm:$0xf0] %v1357
        %s1375 = scalar_lea.vmem [#allocation2], 320
        %1376 = vst [vmem:[%s1375] ss:$8 sm:$0xf] %v1358
        %1377 = vst [vmem:[%s1375] ss:$8 sm:$0xf0] %v1358
        %s1378 = scalar_lea.vmem [#allocation2], 384
        %1379 = vst [vmem:[%s1378] ss:$8 sm:$0xf] %v1359
        %1380 = vst [vmem:[%s1378] ss:$8 sm:$0xf0] %v1359
        %s1381 = scalar_lea.vmem [#allocation2], 448
        %1382 = vst [vmem:[%s1381] ss:$8 sm:$0xf] %v1360
        %1383 = vst [vmem:[%s1381] ss:$8 sm:$0xf0] %v1360
        %1384 = vxpose.xlu0.c.b16.start [1/8] %v929, 128
        %1385 = vxpose.xlu0.c.b16.cont [2/8] 0, 128
        %1386 = vxpose.xlu0.c.b16.cont [3/8] 0, 128
        %1387 = vxpose.xlu0.c.b16.cont [4/8] 0, 128
        %1388 = vxpose.xlu0.c.b16.cont [5/8] 0, 128
        %1389 = vxpose.xlu0.c.b16.cont [6/8] 0, 128
        %1390 = vxpose.xlu0.c.b16.cont [7/8] 0, 128
        %1391 = vxpose.xlu0.c.b16.end [8/8] 0, 128
        %v1392 = vpop.trf.xlu0
        %v1393 = vpop.trf.xlu0
        %v1394 = vpop.trf.xlu0
        %v1395 = vpop.trf.xlu0
        %v1396 = vpop.trf.xlu0
        %v1397 = vpop.trf.xlu0
        %v1398 = vpop.trf.xlu0
        %v1399 = vpop.trf.xlu0
        %v1401 = vsel %vm993, %v1392, 0
        %v1404 = vsel %vm993, %v1393, 0
        %v1407 = vsel %vm993, %v1394, 0
        %v1410 = vsel %vm993, %v1395, 0
        %v1413 = vsel %vm993, %v1396, 0
        %v1416 = vsel %vm993, %v1397, 0
        %v1419 = vsel %vm993, %v1398, 0
        %v1422 = vsel %vm993, %v1399, 0
        %v1425 = vsel %vm1018, %v937, 0
        %1427 = vmatprep.subr.bf16.mxu0 0
        %1428 = vmatpush1.bf16.msra.mxu0 0
        %1429 = vmatprep.subr.bf16.mxu0 0
        %1430 = vmatpush1.bf16.msra.mxu0 0
        %1431 = vmatprep.subr.bf16.mxu0 0
        %1432 = vmatpush1.bf16.msra.mxu0 0
        %1433 = vmatprep.subr.bf16.mxu0 0
        %1434 = vmatpush1.bf16.msra.mxu0 0
        %1435 = vmatprep.subr.bf16.mxu0 0
        %1436 = vmatpush1.bf16.msra.mxu0 0
        %1437 = vmatprep.subr.bf16.mxu0 0
        %1438 = vmatpush1.bf16.msra.mxu0 0
        %1439 = vmatprep.subr.bf16.mxu0 0
        %1440 = vmatpush1.bf16.msra.mxu0 0
        %1441 = vmatprep.subr.bf16.mxu0 0
        %1442 = vmatpush1.bf16.msra.mxu0 %v1425
        %1443 = vmatprep.subr.bf16.mxu0 0
        %1444 = vmatpush2.bf16.msra.mxu0 0
        %1445 = vmatprep.subr.bf16.mxu0 0
        %1446 = vmatpush2.bf16.msra.mxu0 0
        %1447 = vmatprep.subr.bf16.mxu0 0
        %1448 = vmatpush2.bf16.msra.mxu0 0
        %1449 = vmatprep.subr.bf16.mxu0 0
        %1450 = vmatpush2.bf16.msra.mxu0 0
        %1451 = vmatprep.subr.bf16.mxu0 0
        %1452 = vmatpush2.bf16.msra.mxu0 0
        %1453 = vmatprep.subr.bf16.mxu0 0
        %1454 = vmatpush2.bf16.msra.mxu0 0
        %1455 = vmatprep.subr.bf16.mxu0 0
        %1456 = vmatpush2.bf16.msra.mxu0 0
        %1457 = vmatprep.subr.bf16.mxu0 0
        %1458 = vmatpush2.bf16.msra.mxu0 0
        %1459 = vmatprep.mubr.bf16.mxu0 0
        %1460 = vmatmul.mubr.bf16.gmra.mxu0 %v1401
        %v1461 = vpop.f32.mrf.mxu0
        %v1462 = vadd.f32 %v927, %v1461
        %v1463 = vpop.f32.mrf.mxu0
        %v1464 = vpop.f32.mrf.mxu0
        %v1465 = vadd.f32 %v927, %v1464
        %v1466 = vpop.f32.mrf.mxu0
        %1467 = vmatprep.mubr.bf16.mxu0 0
        %1468 = vmatmul.mubr.bf16.gmra.mxu0 %v1404
        %v1469 = vpop.f32.mrf.mxu0
        %v1470 = vadd.f32 %v927, %v1469
        %v1471 = vpop.f32.mrf.mxu0
        %v1472 = vpop.f32.mrf.mxu0
        %v1473 = vadd.f32 %v927, %v1472
        %v1474 = vpop.f32.mrf.mxu0
        %1475 = vmatprep.mubr.bf16.mxu0 0
        %1476 = vmatmul.mubr.bf16.gmra.mxu0 %v1407
        %v1477 = vpop.f32.mrf.mxu0
        %v1478 = vadd.f32 %v927, %v1477
        %v1479 = vpop.f32.mrf.mxu0
        %v1480 = vpop.f32.mrf.mxu0
        %v1481 = vadd.f32 %v927, %v1480
        %v1482 = vpop.f32.mrf.mxu0
        %1483 = vmatprep.mubr.bf16.mxu0 0
        %1484 = vmatmul.mubr.bf16.gmra.mxu0 %v1410
        %v1485 = vpop.f32.mrf.mxu0
        %v1486 = vadd.f32 %v927, %v1485
        %v1487 = vpop.f32.mrf.mxu0
        %v1488 = vpop.f32.mrf.mxu0
        %v1489 = vadd.f32 %v927, %v1488
        %v1490 = vpop.f32.mrf.mxu0
        %1491 = vmatprep.mubr.bf16.mxu0 0
        %1492 = vmatmul.mubr.bf16.gmra.mxu0 %v1413
        %v1493 = vpop.f32.mrf.mxu0
        %v1494 = vadd.f32 %v927, %v1493
        %v1495 = vpop.f32.mrf.mxu0
        %v1496 = vpop.f32.mrf.mxu0
        %v1497 = vadd.f32 %v927, %v1496
        %v1498 = vpop.f32.mrf.mxu0
        %1499 = vmatprep.mubr.bf16.mxu0 0
        %1500 = vmatmul.mubr.bf16.gmra.mxu0 %v1416
        %v1501 = vpop.f32.mrf.mxu0
        %v1502 = vadd.f32 %v927, %v1501
        %v1503 = vpop.f32.mrf.mxu0
        %v1504 = vpop.f32.mrf.mxu0
        %v1505 = vadd.f32 %v927, %v1504
        %v1506 = vpop.f32.mrf.mxu0
        %1507 = vmatprep.mubr.bf16.mxu0 0
        %1508 = vmatmul.mubr.bf16.gmra.mxu0 %v1419
        %v1509 = vpop.f32.mrf.mxu0
        %v1510 = vadd.f32 %v927, %v1509
        %v1511 = vpop.f32.mrf.mxu0
        %v1512 = vpop.f32.mrf.mxu0
        %v1513 = vadd.f32 %v927, %v1512
        %v1514 = vpop.f32.mrf.mxu0
        %1515 = vmatprep.mubr.bf16.mxu0 0
        %1516 = vmatmul.mubr.bf16.gmra.mxu0 %v1422
        %v1517 = vpop.f32.mrf.mxu0
        %v1518 = vadd.f32 %v927, %v1517
        %v1519 = vpop.f32.mrf.mxu0
        %v1520 = vpop.f32.mrf.mxu0
        %v1521 = vadd.f32 %v927, %v1520
        %v1522 = vpop.f32.mrf.mxu0
        %1523 = vdwg.mxu0
        %1524 = vmax.xlane.f32.xlu0 %v1462
        %v1525 = vpop.xlane.xlu0 %1524
        %1526 = vmax.xlane.f32.xlu0 %v1465
        %v1527 = vpop.xlane.xlu0 %1526
        %1528 = vmax.xlane.f32.xlu0 %v1470
        %v1529 = vpop.xlane.xlu0 %1528
        %1530 = vmax.xlane.f32.xlu0 %v1473
        %v1531 = vpop.xlane.xlu0 %1530
        %1532 = vmax.xlane.f32.xlu0 %v1478
        %v1533 = vpop.xlane.xlu0 %1532
        %1534 = vmax.xlane.f32.xlu0 %v1481
        %v1535 = vpop.xlane.xlu0 %1534
        %1536 = vmax.xlane.f32.xlu0 %v1486
        %v1537 = vpop.xlane.xlu0 %1536
        %1538 = vmax.xlane.f32.xlu0 %v1489
        %v1539 = vpop.xlane.xlu0 %1538
        %1540 = vmax.xlane.f32.xlu0 %v1494
        %v1541 = vpop.xlane.xlu0 %1540
        %1542 = vmax.xlane.f32.xlu0 %v1497
        %v1543 = vpop.xlane.xlu0 %1542
        %1544 = vmax.xlane.f32.xlu0 %v1502
        %v1545 = vpop.xlane.xlu0 %1544
        %1546 = vmax.xlane.f32.xlu0 %v1505
        %v1547 = vpop.xlane.xlu0 %1546
        %1548 = vmax.xlane.f32.xlu0 %v1510
        %v1549 = vpop.xlane.xlu0 %1548
        %1550 = vmax.xlane.f32.xlu0 %v1513
        %v1551 = vpop.xlane.xlu0 %1550
        %1552 = vmax.xlane.f32.xlu0 %v1518
        %v1553 = vpop.xlane.xlu0 %1552
        %1554 = vmax.xlane.f32.xlu0 %v1521
        %v1555 = vpop.xlane.xlu0 %1554
        %v1556 = vsub.f32 %v1462, %v1525
        %v1557 = vsub.f32 %v1465, %v1527
        %v1558 = vsub.f32 %v1470, %v1529
        %v1559 = vsub.f32 %v1473, %v1531
        %v1560 = vsub.f32 %v1478, %v1533
        %v1561 = vsub.f32 %v1481, %v1535
        %v1562 = vsub.f32 %v1486, %v1537
        %v1563 = vsub.f32 %v1489, %v1539
        %v1564 = vsub.f32 %v1494, %v1541
        %v1565 = vsub.f32 %v1497, %v1543
        %v1566 = vsub.f32 %v1502, %v1545
        %v1567 = vsub.f32 %v1505, %v1547
        %v1568 = vsub.f32 %v1510, %v1549
        %v1569 = vsub.f32 %v1513, %v1551
        %v1570 = vsub.f32 %v1518, %v1553
        %v1571 = vsub.f32 %v1521, %v1555
        %v1572 = vmul.f32 %v1556, 1.442695
        %v1573 = vpow.pop %v1572
        %v1574 = vmul.f32 %v1557, 1.442695
        %v1575 = vpow.pop %v1574
        %v1576 = vmul.f32 %v1558, 1.442695
        %v1577 = vpow.pop %v1576
        %v1578 = vmul.f32 %v1559, 1.442695
        %v1579 = vpow.pop %v1578
        %v1580 = vmul.f32 %v1560, 1.442695
        %v1581 = vpow.pop %v1580
        %v1582 = vmul.f32 %v1561, 1.442695
        %v1583 = vpow.pop %v1582
        %v1584 = vmul.f32 %v1562, 1.442695
        %v1585 = vpow.pop %v1584
        %v1586 = vmul.f32 %v1563, 1.442695
        %v1587 = vpow.pop %v1586
        %v1588 = vmul.f32 %v1564, 1.442695
        %v1589 = vpow.pop %v1588
        %v1590 = vmul.f32 %v1565, 1.442695
        %v1591 = vpow.pop %v1590
        %v1592 = vmul.f32 %v1566, 1.442695
        %v1593 = vpow.pop %v1592
        %v1594 = vmul.f32 %v1567, 1.442695
        %v1595 = vpow.pop %v1594
        %v1596 = vmul.f32 %v1568, 1.442695
        %v1597 = vpow.pop %v1596
        %v1598 = vmul.f32 %v1569, 1.442695
        %v1599 = vpow.pop %v1598
        %v1600 = vmul.f32 %v1570, 1.442695
        %v1601 = vpow.pop %v1600
        %v1602 = vmul.f32 %v1571, 1.442695
        %v1603 = vpow.pop %v1602
        %1604 = vadd.xlane.f32.xlu0 %v1573
        %v1605 = vpop.xlane.xlu0 %1604
        %1606 = vadd.xlane.f32.xlu0 %v1575
        %v1607 = vpop.xlane.xlu0 %1606
        %1608 = vadd.xlane.f32.xlu0 %v1577
        %v1609 = vpop.xlane.xlu0 %1608
        %1610 = vadd.xlane.f32.xlu0 %v1579
        %v1611 = vpop.xlane.xlu0 %1610
        %1612 = vadd.xlane.f32.xlu0 %v1581
        %v1613 = vpop.xlane.xlu0 %1612
        %1614 = vadd.xlane.f32.xlu0 %v1583
        %v1615 = vpop.xlane.xlu0 %1614
        %1616 = vadd.xlane.f32.xlu0 %v1585
        %v1617 = vpop.xlane.xlu0 %1616
        %1618 = vadd.xlane.f32.xlu0 %v1587
        %v1619 = vpop.xlane.xlu0 %1618
        %1620 = vadd.xlane.f32.xlu0 %v1589
        %v1621 = vpop.xlane.xlu0 %1620
        %1622 = vadd.xlane.f32.xlu0 %v1591
        %v1623 = vpop.xlane.xlu0 %1622
        %1624 = vadd.xlane.f32.xlu0 %v1593
        %v1625 = vpop.xlane.xlu0 %1624
        %1626 = vadd.xlane.f32.xlu0 %v1595
        %v1627 = vpop.xlane.xlu0 %1626
        %1628 = vadd.xlane.f32.xlu0 %v1597
        %v1629 = vpop.xlane.xlu0 %1628
        %1630 = vadd.xlane.f32.xlu0 %v1599
        %v1631 = vpop.xlane.xlu0 %1630
        %1632 = vadd.xlane.f32.xlu0 %v1601
        %v1633 = vpop.xlane.xlu0 %1632
        %1634 = vadd.xlane.f32.xlu0 %v1603
        %v1635 = vpop.xlane.xlu0 %1634
        %v1636 = vrcp.pop %v1605
        %v1637 = vrcp.pop %v1607
        %v1638 = vrcp.pop %v1609
        %v1639 = vrcp.pop %v1611
        %v1640 = vrcp.pop %v1613
        %v1641 = vrcp.pop %v1615
        %v1642 = vrcp.pop %v1617
        %v1643 = vrcp.pop %v1619
        %v1644 = vrcp.pop %v1621
        %v1645 = vrcp.pop %v1623
        %v1646 = vrcp.pop %v1625
        %v1647 = vrcp.pop %v1627
        %v1648 = vrcp.pop %v1629
        %v1649 = vrcp.pop %v1631
        %v1650 = vrcp.pop %v1633
        %v1651 = vrcp.pop %v1635
        %v1652 = vmul.f32 %v1573, %v1636
        %v1653 = vmul.f32 %v1575, %v1637
        %v1654 = vmul.f32 %v1577, %v1638
        %v1655 = vmul.f32 %v1579, %v1639
        %v1656 = vmul.f32 %v1581, %v1640
        %v1657 = vmul.f32 %v1583, %v1641
        %v1658 = vmul.f32 %v1585, %v1642
        %v1659 = vmul.f32 %v1587, %v1643
        %v1660 = vmul.f32 %v1589, %v1644
        %v1661 = vmul.f32 %v1591, %v1645
        %v1662 = vmul.f32 %v1593, %v1646
        %v1663 = vmul.f32 %v1595, %v1647
        %v1664 = vmul.f32 %v1597, %v1648
        %v1665 = vmul.f32 %v1599, %v1649
        %v1666 = vmul.f32 %v1601, %v1650
        %v1667 = vmul.f32 %v1603, %v1651
        %v1668 = vpack.c.bf16 %v1653, %v1652
        %v1669 = vpack.c.bf16 %v1655, %v1654
        %v1670 = vpack.c.bf16 %v1657, %v1656
        %v1671 = vpack.c.bf16 %v1659, %v1658
        %v1672 = vpack.c.bf16 %v1661, %v1660
        %v1673 = vpack.c.bf16 %v1663, %v1662
        %v1674 = vpack.c.bf16 %v1665, %v1664
        %v1675 = vpack.c.bf16 %v1667, %v1666
        %1676 = vmatprep.subr.bf16.mxu0 0
        %1677 = vmatpush1.bf16.msra.mxu0 %v1675
        %1678 = vmatprep.subr.bf16.mxu0 0
        %1679 = vmatpush1.bf16.msra.mxu0 %v1674
        %1680 = vmatprep.subr.bf16.mxu0 0
        %1681 = vmatpush1.bf16.msra.mxu0 %v1673
        %1682 = vmatprep.subr.bf16.mxu0 0
        %1683 = vmatpush1.bf16.msra.mxu0 %v1672
        %1684 = vmatprep.subr.bf16.mxu0 0
        %1685 = vmatpush1.bf16.msra.mxu0 %v1671
        %1686 = vmatprep.subr.bf16.mxu0 0
        %1687 = vmatpush1.bf16.msra.mxu0 %v1670
        %1688 = vmatprep.subr.bf16.mxu0 0
        %1689 = vmatpush1.bf16.msra.mxu0 %v1669
        %1690 = vmatprep.subr.bf16.mxu0 0
        %1691 = vmatpush1.bf16.msra.mxu0 %v1668
        %1692 = vmatprep.subr.bf16.mxu0 0
        %1693 = vmatpush2.bf16.msra.mxu0 0
        %1694 = vmatprep.subr.bf16.mxu0 0
        %1695 = vmatpush2.bf16.msra.mxu0 0
        %1696 = vmatprep.subr.bf16.mxu0 0
        %1697 = vmatpush2.bf16.msra.mxu0 0
        %1698 = vmatprep.subr.bf16.mxu0 0
        %1699 = vmatpush2.bf16.msra.mxu0 0
        %1700 = vmatprep.subr.bf16.mxu0 0
        %1701 = vmatpush2.bf16.msra.mxu0 0
        %1702 = vmatprep.subr.bf16.mxu0 0
        %1703 = vmatpush2.bf16.msra.mxu0 0
        %1704 = vmatprep.subr.bf16.mxu0 0
        %1705 = vmatpush2.bf16.msra.mxu0 0
        %1706 = vmatprep.subr.bf16.mxu0 0
        %1707 = vmatpush2.bf16.msra.mxu0 0
        %1708 = vmatprep.mubr.bf16.mxu0 0
        %1709 = vmatmul.mubr.bf16.gmra.mxu0 %v945
        %v1710 = vpop.f32.mrf.mxu0
        %v1711 = vadd.f32 0.0, %v1710
        %v1712 = vpop.f32.mrf.mxu0
        %v1713 = vpop.f32.mrf.mxu0
        %v1714 = vadd.f32 0.0, %v1713
        %v1715 = vpop.f32.mrf.mxu0
        %1716 = vmatprep.mubr.bf16.mxu0 0
        %1717 = vmatmul.mubr.bf16.gmra.mxu0 %v953
        %v1718 = vpop.f32.mrf.mxu0
        %v1719 = vadd.f32 0.0, %v1718
        %v1720 = vpop.f32.mrf.mxu0
        %v1721 = vpop.f32.mrf.mxu0
        %v1722 = vadd.f32 0.0, %v1721
        %v1723 = vpop.f32.mrf.mxu0
        %1724 = vmatprep.mubr.bf16.mxu0 0
        %1725 = vmatmul.mubr.bf16.gmra.mxu0 %v961
        %v1726 = vpop.f32.mrf.mxu0
        %v1727 = vadd.f32 0.0, %v1726
        %v1728 = vpop.f32.mrf.mxu0
        %v1729 = vpop.f32.mrf.mxu0
        %v1730 = vadd.f32 0.0, %v1729
        %v1731 = vpop.f32.mrf.mxu0
        %1732 = vmatprep.mubr.bf16.mxu0 0
        %1733 = vmatmul.mubr.bf16.gmra.mxu0 %v969
        %v1734 = vpop.f32.mrf.mxu0
        %v1735 = vadd.f32 0.0, %v1734
        %v1736 = vpop.f32.mrf.mxu0
        %v1737 = vpop.f32.mrf.mxu0
        %v1738 = vadd.f32 0.0, %v1737
        %v1739 = vpop.f32.mrf.mxu0
        %1740 = vdwg.mxu0
        %v1741 = vmul.f32 %v1336, %v1711
        %v1742 = vmul.f32 %v1336, %v1714
        %v1743 = vmul.f32 %v1336, %v1719
        %v1744 = vmul.f32 %v1336, %v1722
        %v1745 = vmul.f32 %v1336, %v1727
        %v1746 = vmul.f32 %v1336, %v1730
        %v1747 = vmul.f32 %v1336, %v1735
        %v1748 = vmul.f32 %v1336, %v1738
        %v1749 = vadd.f32 %v1741, %v300
        %v1750 = vadd.f32 %v1742, %v308
        %v1751 = vadd.f32 %v1743, %v316
        %v1752 = vadd.f32 %v1744, %v324
        %v1753 = vadd.f32 %v1745, %v332
        %v1754 = vadd.f32 %v1746, %v340
        %v1755 = vadd.f32 %v1747, %v348
        %v1756 = vadd.f32 %v1748, %v356
        %v1757 = vmul.f32 %v300, %v1749
        %v1758 = vmul.f32 %v308, %v1750
        %v1759 = vmul.f32 %v316, %v1751
        %v1760 = vmul.f32 %v324, %v1752
        %v1761 = vmul.f32 %v332, %v1753
        %v1762 = vmul.f32 %v340, %v1754
        %v1763 = vmul.f32 %v348, %v1755
        %v1764 = vmul.f32 %v356, %v1756
        %s1765 = scalar_lea.vmem [#allocation2], 1
        %1766 = vst [vmem:[%s1765] ss:$8 sm:$0xf] %v1757
        %1767 = vst [vmem:[%s1765] ss:$8 sm:$0xf0] %v1757
        %s1768 = scalar_lea.vmem [#allocation2], 65
        %1769 = vst [vmem:[%s1768] ss:$8 sm:$0xf] %v1758
        %1770 = vst [vmem:[%s1768] ss:$8 sm:$0xf0] %v1758
        %s1771 = scalar_lea.vmem [#allocation2], 129
        %1772 = vst [vmem:[%s1771] ss:$8 sm:$0xf] %v1759
        %1773 = vst [vmem:[%s1771] ss:$8 sm:$0xf0] %v1759
        %s1774 = scalar_lea.vmem [#allocation2], 193
        %1775 = vst [vmem:[%s1774] ss:$8 sm:$0xf] %v1760
        %1776 = vst [vmem:[%s1774] ss:$8 sm:$0xf0] %v1760
        %s1777 = scalar_lea.vmem [#allocation2], 257
        %1778 = vst [vmem:[%s1777] ss:$8 sm:$0xf] %v1761
        %1779 = vst [vmem:[%s1777] ss:$8 sm:$0xf0] %v1761
        %s1780 = scalar_lea.vmem [#allocation2], 321
        %1781 = vst [vmem:[%s1780] ss:$8 sm:$0xf] %v1762
        %1782 = vst [vmem:[%s1780] ss:$8 sm:$0xf0] %v1762
        %s1783 = scalar_lea.vmem [#allocation2], 385
        %1784 = vst [vmem:[%s1783] ss:$8 sm:$0xf] %v1763
        %1785 = vst [vmem:[%s1783] ss:$8 sm:$0xf0] %v1763
        %s1786 = scalar_lea.vmem [#allocation2], 449
        %1787 = vst [vmem:[%s1786] ss:$8 sm:$0xf] %v1764
        %1788 = vst [vmem:[%s1786] ss:$8 sm:$0xf0] %v1764
        %1789 = vxpose.xlu0.c.b16.start [1/8] %v930, 128
        %1790 = vxpose.xlu0.c.b16.cont [2/8] 0, 128
        %1791 = vxpose.xlu0.c.b16.cont [3/8] 0, 128
        %1792 = vxpose.xlu0.c.b16.cont [4/8] 0, 128
        %1793 = vxpose.xlu0.c.b16.cont [5/8] 0, 128
        %1794 = vxpose.xlu0.c.b16.cont [6/8] 0, 128
        %1795 = vxpose.xlu0.c.b16.cont [7/8] 0, 128
        %1796 = vxpose.xlu0.c.b16.end [8/8] 0, 128
        %v1797 = vpop.trf.xlu0
        %v1798 = vpop.trf.xlu0
        %v1799 = vpop.trf.xlu0
        %v1800 = vpop.trf.xlu0
        %v1801 = vpop.trf.xlu0
        %v1802 = vpop.trf.xlu0
        %v1803 = vpop.trf.xlu0
        %v1804 = vpop.trf.xlu0
        %v1806 = vsel %vm993, %v1797, 0
        %v1809 = vsel %vm993, %v1798, 0
        %v1812 = vsel %vm993, %v1799, 0
        %v1815 = vsel %vm993, %v1800, 0
        %v1818 = vsel %vm993, %v1801, 0
        %v1821 = vsel %vm993, %v1802, 0
        %v1824 = vsel %vm993, %v1803, 0
        %v1827 = vsel %vm993, %v1804, 0
        %v1830 = vsel %vm1018, %v938, 0
        %1832 = vmatprep.subr.bf16.mxu0 0
        %1833 = vmatpush1.bf16.msra.mxu0 0
        %1834 = vmatprep.subr.bf16.mxu0 0
        %1835 = vmatpush1.bf16.msra.mxu0 0
        %1836 = vmatprep.subr.bf16.mxu0 0
        %1837 = vmatpush1.bf16.msra.mxu0 0
        %1838 = vmatprep.subr.bf16.mxu0 0
        %1839 = vmatpush1.bf16.msra.mxu0 0
        %1840 = vmatprep.subr.bf16.mxu0 0
        %1841 = vmatpush1.bf16.msra.mxu0 0
        %1842 = vmatprep.subr.bf16.mxu0 0
        %1843 = vmatpush1.bf16.msra.mxu0 0
        %1844 = vmatprep.subr.bf16.mxu0 0
        %1845 = vmatpush1.bf16.msra.mxu0 0
        %1846 = vmatprep.subr.bf16.mxu0 0
        %1847 = vmatpush1.bf16.msra.mxu0 %v1830
        %1848 = vmatprep.subr.bf16.mxu0 0
        %1849 = vmatpush2.bf16.msra.mxu0 0
        %1850 = vmatprep.subr.bf16.mxu0 0
        %1851 = vmatpush2.bf16.msra.mxu0 0
        %1852 = vmatprep.subr.bf16.mxu0 0
        %1853 = vmatpush2.bf16.msra.mxu0 0
        %1854 = vmatprep.subr.bf16.mxu0 0
        %1855 = vmatpush2.bf16.msra.mxu0 0
        %1856 = vmatprep.subr.bf16.mxu0 0
        %1857 = vmatpush2.bf16.msra.mxu0 0
        %1858 = vmatprep.subr.bf16.mxu0 0
        %1859 = vmatpush2.bf16.msra.mxu0 0
        %1860 = vmatprep.subr.bf16.mxu0 0
        %1861 = vmatpush2.bf16.msra.mxu0 0
        %1862 = vmatprep.subr.bf16.mxu0 0
        %1863 = vmatpush2.bf16.msra.mxu0 0
        %1864 = vmatprep.mubr.bf16.mxu0 0
        %1865 = vmatmul.mubr.bf16.gmra.mxu0 %v1806
        %v1866 = vpop.f32.mrf.mxu0
        %v1867 = vadd.f32 %v927, %v1866
        %v1868 = vpop.f32.mrf.mxu0
        %v1869 = vpop.f32.mrf.mxu0
        %v1870 = vadd.f32 %v927, %v1869
        %v1871 = vpop.f32.mrf.mxu0
        %1872 = vmatprep.mubr.bf16.mxu0 0
        %1873 = vmatmul.mubr.bf16.gmra.mxu0 %v1809
        %v1874 = vpop.f32.mrf.mxu0
        %v1875 = vadd.f32 %v927, %v1874
        %v1876 = vpop.f32.mrf.mxu0
        %v1877 = vpop.f32.mrf.mxu0
        %v1878 = vadd.f32 %v927, %v1877
        %v1879 = vpop.f32.mrf.mxu0
        %1880 = vmatprep.mubr.bf16.mxu0 0
        %1881 = vmatmul.mubr.bf16.gmra.mxu0 %v1812
        %v1882 = vpop.f32.mrf.mxu0
        %v1883 = vadd.f32 %v927, %v1882
        %v1884 = vpop.f32.mrf.mxu0
        %v1885 = vpop.f32.mrf.mxu0
        %v1886 = vadd.f32 %v927, %v1885
        %v1887 = vpop.f32.mrf.mxu0
        %1888 = vmatprep.mubr.bf16.mxu0 0
        %1889 = vmatmul.mubr.bf16.gmra.mxu0 %v1815
        %v1890 = vpop.f32.mrf.mxu0
        %v1891 = vadd.f32 %v927, %v1890
        %v1892 = vpop.f32.mrf.mxu0
        %v1893 = vpop.f32.mrf.mxu0
        %v1894 = vadd.f32 %v927, %v1893
        %v1895 = vpop.f32.mrf.mxu0
        %1896 = vmatprep.mubr.bf16.mxu0 0
        %1897 = vmatmul.mubr.bf16.gmra.mxu0 %v1818
        %v1898 = vpop.f32.mrf.mxu0
        %v1899 = vadd.f32 %v927, %v1898
        %v1900 = vpop.f32.mrf.mxu0
        %v1901 = vpop.f32.mrf.mxu0
        %v1902 = vadd.f32 %v927, %v1901
        %v1903 = vpop.f32.mrf.mxu0
        %1904 = vmatprep.mubr.bf16.mxu0 0
        %1905 = vmatmul.mubr.bf16.gmra.mxu0 %v1821
        %v1906 = vpop.f32.mrf.mxu0
        %v1907 = vadd.f32 %v927, %v1906
        %v1908 = vpop.f32.mrf.mxu0
        %v1909 = vpop.f32.mrf.mxu0
        %v1910 = vadd.f32 %v927, %v1909
        %v1911 = vpop.f32.mrf.mxu0
        %1912 = vmatprep.mubr.bf16.mxu0 0
        %1913 = vmatmul.mubr.bf16.gmra.mxu0 %v1824
        %v1914 = vpop.f32.mrf.mxu0
        %v1915 = vadd.f32 %v927, %v1914
        %v1916 = vpop.f32.mrf.mxu0
        %v1917 = vpop.f32.mrf.mxu0
        %v1918 = vadd.f32 %v927, %v1917
        %v1919 = vpop.f32.mrf.mxu0
        %1920 = vmatprep.mubr.bf16.mxu0 0
        %1921 = vmatmul.mubr.bf16.gmra.mxu0 %v1827
        %v1922 = vpop.f32.mrf.mxu0
        %v1923 = vadd.f32 %v927, %v1922
        %v1924 = vpop.f32.mrf.mxu0
        %v1925 = vpop.f32.mrf.mxu0
        %v1926 = vadd.f32 %v927, %v1925
        %v1927 = vpop.f32.mrf.mxu0
        %1928 = vdwg.mxu0
        %1929 = vmax.xlane.f32.xlu0 %v1867
        %v1930 = vpop.xlane.xlu0 %1929
        %1931 = vmax.xlane.f32.xlu0 %v1870
        %v1932 = vpop.xlane.xlu0 %1931
        %1933 = vmax.xlane.f32.xlu0 %v1875
        %v1934 = vpop.xlane.xlu0 %1933
        %1935 = vmax.xlane.f32.xlu0 %v1878
        %v1936 = vpop.xlane.xlu0 %1935
        %1937 = vmax.xlane.f32.xlu0 %v1883
        %v1938 = vpop.xlane.xlu0 %1937
        %1939 = vmax.xlane.f32.xlu0 %v1886
        %v1940 = vpop.xlane.xlu0 %1939
        %1941 = vmax.xlane.f32.xlu0 %v1891
        %v1942 = vpop.xlane.xlu0 %1941
        %1943 = vmax.xlane.f32.xlu0 %v1894
        %v1944 = vpop.xlane.xlu0 %1943
        %1945 = vmax.xlane.f32.xlu0 %v1899
        %v1946 = vpop.xlane.xlu0 %1945
        %1947 = vmax.xlane.f32.xlu0 %v1902
        %v1948 = vpop.xlane.xlu0 %1947
        %1949 = vmax.xlane.f32.xlu0 %v1907
        %v1950 = vpop.xlane.xlu0 %1949
        %1951 = vmax.xlane.f32.xlu0 %v1910
        %v1952 = vpop.xlane.xlu0 %1951
        %1953 = vmax.xlane.f32.xlu0 %v1915
        %v1954 = vpop.xlane.xlu0 %1953
        %1955 = vmax.xlane.f32.xlu0 %v1918
        %v1956 = vpop.xlane.xlu0 %1955
        %1957 = vmax.xlane.f32.xlu0 %v1923
        %v1958 = vpop.xlane.xlu0 %1957
        %1959 = vmax.xlane.f32.xlu0 %v1926
        %v1960 = vpop.xlane.xlu0 %1959
        %v1961 = vsub.f32 %v1867, %v1930
        %v1962 = vsub.f32 %v1870, %v1932
        %v1963 = vsub.f32 %v1875, %v1934
        %v1964 = vsub.f32 %v1878, %v1936
        %v1965 = vsub.f32 %v1883, %v1938
        %v1966 = vsub.f32 %v1886, %v1940
        %v1967 = vsub.f32 %v1891, %v1942
        %v1968 = vsub.f32 %v1894, %v1944
        %v1969 = vsub.f32 %v1899, %v1946
        %v1970 = vsub.f32 %v1902, %v1948
        %v1971 = vsub.f32 %v1907, %v1950
        %v1972 = vsub.f32 %v1910, %v1952
        %v1973 = vsub.f32 %v1915, %v1954
        %v1974 = vsub.f32 %v1918, %v1956
        %v1975 = vsub.f32 %v1923, %v1958
        %v1976 = vsub.f32 %v1926, %v1960
        %v1977 = vmul.f32 %v1961, 1.442695
        %v1978 = vpow.pop %v1977
        %v1979 = vmul.f32 %v1962, 1.442695
        %v1980 = vpow.pop %v1979
        %v1981 = vmul.f32 %v1963, 1.442695
        %v1982 = vpow.pop %v1981
        %v1983 = vmul.f32 %v1964, 1.442695
        %v1984 = vpow.pop %v1983
        %v1985 = vmul.f32 %v1965, 1.442695
        %v1986 = vpow.pop %v1985
        %v1987 = vmul.f32 %v1966, 1.442695
        %v1988 = vpow.pop %v1987
        %v1989 = vmul.f32 %v1967, 1.442695
        %v1990 = vpow.pop %v1989
        %v1991 = vmul.f32 %v1968, 1.442695
        %v1992 = vpow.pop %v1991
        %v1993 = vmul.f32 %v1969, 1.442695
        %v1994 = vpow.pop %v1993
        %v1995 = vmul.f32 %v1970, 1.442695
        %v1996 = vpow.pop %v1995
        %v1997 = vmul.f32 %v1971, 1.442695
        %v1998 = vpow.pop %v1997
        %v1999 = vmul.f32 %v1972, 1.442695
        %v2000 = vpow.pop %v1999
        %v2001 = vmul.f32 %v1973, 1.442695
        %v2002 = vpow.pop %v2001
        %v2003 = vmul.f32 %v1974, 1.442695
        %v2004 = vpow.pop %v2003
        %v2005 = vmul.f32 %v1975, 1.442695
        %v2006 = vpow.pop %v2005
        %v2007 = vmul.f32 %v1976, 1.442695
        %v2008 = vpow.pop %v2007
        %2009 = vadd.xlane.f32.xlu0 %v1978
        %v2010 = vpop.xlane.xlu0 %2009
        %2011 = vadd.xlane.f32.xlu0 %v1980
        %v2012 = vpop.xlane.xlu0 %2011
        %2013 = vadd.xlane.f32.xlu0 %v1982
        %v2014 = vpop.xlane.xlu0 %2013
        %2015 = vadd.xlane.f32.xlu0 %v1984
        %v2016 = vpop.xlane.xlu0 %2015
        %2017 = vadd.xlane.f32.xlu0 %v1986
        %v2018 = vpop.xlane.xlu0 %2017
        %2019 = vadd.xlane.f32.xlu0 %v1988
        %v2020 = vpop.xlane.xlu0 %2019
        %2021 = vadd.xlane.f32.xlu0 %v1990
        %v2022 = vpop.xlane.xlu0 %2021
        %2023 = vadd.xlane.f32.xlu0 %v1992
        %v2024 = vpop.xlane.xlu0 %2023
        %2025 = vadd.xlane.f32.xlu0 %v1994
        %v2026 = vpop.xlane.xlu0 %2025
        %2027 = vadd.xlane.f32.xlu0 %v1996
        %v2028 = vpop.xlane.xlu0 %2027
        %2029 = vadd.xlane.f32.xlu0 %v1998
        %v2030 = vpop.xlane.xlu0 %2029
        %2031 = vadd.xlane.f32.xlu0 %v2000
        %v2032 = vpop.xlane.xlu0 %2031
        %2033 = vadd.xlane.f32.xlu0 %v2002
        %v2034 = vpop.xlane.xlu0 %2033
        %2035 = vadd.xlane.f32.xlu0 %v2004
        %v2036 = vpop.xlane.xlu0 %2035
        %2037 = vadd.xlane.f32.xlu0 %v2006
        %v2038 = vpop.xlane.xlu0 %2037
        %2039 = vadd.xlane.f32.xlu0 %v2008
        %v2040 = vpop.xlane.xlu0 %2039
        %v2041 = vrcp.pop %v2010
        %v2042 = vrcp.pop %v2012
        %v2043 = vrcp.pop %v2014
        %v2044 = vrcp.pop %v2016
        %v2045 = vrcp.pop %v2018
        %v2046 = vrcp.pop %v2020
        %v2047 = vrcp.pop %v2022
        %v2048 = vrcp.pop %v2024
        %v2049 = vrcp.pop %v2026
        %v2050 = vrcp.pop %v2028
        %v2051 = vrcp.pop %v2030
        %v2052 = vrcp.pop %v2032
        %v2053 = vrcp.pop %v2034
        %v2054 = vrcp.pop %v2036
        %v2055 = vrcp.pop %v2038
        %v2056 = vrcp.pop %v2040
        %v2057 = vmul.f32 %v1978, %v2041
        %v2058 = vmul.f32 %v1980, %v2042
        %v2059 = vmul.f32 %v1982, %v2043
        %v2060 = vmul.f32 %v1984, %v2044
        %v2061 = vmul.f32 %v1986, %v2045
        %v2062 = vmul.f32 %v1988, %v2046
        %v2063 = vmul.f32 %v1990, %v2047
        %v2064 = vmul.f32 %v1992, %v2048
        %v2065 = vmul.f32 %v1994, %v2049
        %v2066 = vmul.f32 %v1996, %v2050
        %v2067 = vmul.f32 %v1998, %v2051
        %v2068 = vmul.f32 %v2000, %v2052
        %v2069 = vmul.f32 %v2002, %v2053
        %v2070 = vmul.f32 %v2004, %v2054
        %v2071 = vmul.f32 %v2006, %v2055
        %v2072 = vmul.f32 %v2008, %v2056
        %v2073 = vpack.c.bf16 %v2058, %v2057
        %v2074 = vpack.c.bf16 %v2060, %v2059
        %v2075 = vpack.c.bf16 %v2062, %v2061
        %v2076 = vpack.c.bf16 %v2064, %v2063
        %v2077 = vpack.c.bf16 %v2066, %v2065
        %v2078 = vpack.c.bf16 %v2068, %v2067
        %v2079 = vpack.c.bf16 %v2070, %v2069
        %v2080 = vpack.c.bf16 %v2072, %v2071
        %2081 = vmatprep.subr.bf16.mxu0 0
        %2082 = vmatpush1.bf16.msra.mxu0 %v2080
        %2083 = vmatprep.subr.bf16.mxu0 0
        %2084 = vmatpush1.bf16.msra.mxu0 %v2079
        %2085 = vmatprep.subr.bf16.mxu0 0
        %2086 = vmatpush1.bf16.msra.mxu0 %v2078
        %2087 = vmatprep.subr.bf16.mxu0 0
        %2088 = vmatpush1.bf16.msra.mxu0 %v2077
        %2089 = vmatprep.subr.bf16.mxu0 0
        %2090 = vmatpush1.bf16.msra.mxu0 %v2076
        %2091 = vmatprep.subr.bf16.mxu0 0
        %2092 = vmatpush1.bf16.msra.mxu0 %v2075
        %2093 = vmatprep.subr.bf16.mxu0 0
        %2094 = vmatpush1.bf16.msra.mxu0 %v2074
        %2095 = vmatprep.subr.bf16.mxu0 0
        %2096 = vmatpush1.bf16.msra.mxu0 %v2073
        %2097 = vmatprep.subr.bf16.mxu0 0
        %2098 = vmatpush2.bf16.msra.mxu0 0
        %2099 = vmatprep.subr.bf16.mxu0 0
        %2100 = vmatpush2.bf16.msra.mxu0 0
        %2101 = vmatprep.subr.bf16.mxu0 0
        %2102 = vmatpush2.bf16.msra.mxu0 0
        %2103 = vmatprep.subr.bf16.mxu0 0
        %2104 = vmatpush2.bf16.msra.mxu0 0
        %2105 = vmatprep.subr.bf16.mxu0 0
        %2106 = vmatpush2.bf16.msra.mxu0 0
        %2107 = vmatprep.subr.bf16.mxu0 0
        %2108 = vmatpush2.bf16.msra.mxu0 0
        %2109 = vmatprep.subr.bf16.mxu0 0
        %2110 = vmatpush2.bf16.msra.mxu0 0
        %2111 = vmatprep.subr.bf16.mxu0 0
        %2112 = vmatpush2.bf16.msra.mxu0 0
        %2113 = vmatprep.mubr.bf16.mxu0 0
        %2114 = vmatmul.mubr.bf16.gmra.mxu0 %v946
        %v2115 = vpop.f32.mrf.mxu0
        %v2116 = vadd.f32 0.0, %v2115
        %v2117 = vpop.f32.mrf.mxu0
        %v2118 = vpop.f32.mrf.mxu0
        %v2119 = vadd.f32 0.0, %v2118
        %v2120 = vpop.f32.mrf.mxu0
        %2121 = vmatprep.mubr.bf16.mxu0 0
        %2122 = vmatmul.mubr.bf16.gmra.mxu0 %v954
        %v2123 = vpop.f32.mrf.mxu0
        %v2124 = vadd.f32 0.0, %v2123
        %v2125 = vpop.f32.mrf.mxu0
        %v2126 = vpop.f32.mrf.mxu0
        %v2127 = vadd.f32 0.0, %v2126
        %v2128 = vpop.f32.mrf.mxu0
        %2129 = vmatprep.mubr.bf16.mxu0 0
        %2130 = vmatmul.mubr.bf16.gmra.mxu0 %v962
        %v2131 = vpop.f32.mrf.mxu0
        %v2132 = vadd.f32 0.0, %v2131
        %v2133 = vpop.f32.mrf.mxu0
        %v2134 = vpop.f32.mrf.mxu0
        %v2135 = vadd.f32 0.0, %v2134
        %v2136 = vpop.f32.mrf.mxu0
        %2137 = vmatprep.mubr.bf16.mxu0 0
        %2138 = vmatmul.mubr.bf16.gmra.mxu0 %v970
        %v2139 = vpop.f32.mrf.mxu0
        %v2140 = vadd.f32 0.0, %v2139
        %v2141 = vpop.f32.mrf.mxu0
        %v2142 = vpop.f32.mrf.mxu0
        %v2143 = vadd.f32 0.0, %v2142
        %v2144 = vpop.f32.mrf.mxu0
        %2145 = vdwg.mxu0
        %v2146 = vmul.f32 %v1336, %v2116
        %v2147 = vmul.f32 %v1336, %v2119
        %v2148 = vmul.f32 %v1336, %v2124
        %v2149 = vmul.f32 %v1336, %v2127
        %v2150 = vmul.f32 %v1336, %v2132
        %v2151 = vmul.f32 %v1336, %v2135
        %v2152 = vmul.f32 %v1336, %v2140
        %v2153 = vmul.f32 %v1336, %v2143
        %v2154 = vadd.f32 %v2146, %v301
        %v2155 = vadd.f32 %v2147, %v309
        %v2156 = vadd.f32 %v2148, %v317
        %v2157 = vadd.f32 %v2149, %v325
        %v2158 = vadd.f32 %v2150, %v333
        %v2159 = vadd.f32 %v2151, %v341
        %v2160 = vadd.f32 %v2152, %v349
        %v2161 = vadd.f32 %v2153, %v357
        %v2162 = vmul.f32 %v301, %v2154
        %v2163 = vmul.f32 %v309, %v2155
        %v2164 = vmul.f32 %v317, %v2156
        %v2165 = vmul.f32 %v325, %v2157
        %v2166 = vmul.f32 %v333, %v2158
        %v2167 = vmul.f32 %v341, %v2159
        %v2168 = vmul.f32 %v349, %v2160
        %v2169 = vmul.f32 %v357, %v2161
        %s2170 = scalar_lea.vmem [#allocation2], 2
        %2171 = vst [vmem:[%s2170] ss:$8 sm:$0xf] %v2162
        %2172 = vst [vmem:[%s2170] ss:$8 sm:$0xf0] %v2162
        %s2173 = scalar_lea.vmem [#allocation2], 66
        %2174 = vst [vmem:[%s2173] ss:$8 sm:$0xf] %v2163
        %2175 = vst [vmem:[%s2173] ss:$8 sm:$0xf0] %v2163
        %s2176 = scalar_lea.vmem [#allocation2], 130
        %2177 = vst [vmem:[%s2176] ss:$8 sm:$0xf] %v2164
        %2178 = vst [vmem:[%s2176] ss:$8 sm:$0xf0] %v2164
        %s2179 = scalar_lea.vmem [#allocation2], 194
        %2180 = vst [vmem:[%s2179] ss:$8 sm:$0xf] %v2165
        %2181 = vst [vmem:[%s2179] ss:$8 sm:$0xf0] %v2165
        %s2182 = scalar_lea.vmem [#allocation2], 258
        %2183 = vst [vmem:[%s2182] ss:$8 sm:$0xf] %v2166
        %2184 = vst [vmem:[%s2182] ss:$8 sm:$0xf0] %v2166
        %s2185 = scalar_lea.vmem [#allocation2], 322
        %2186 = vst [vmem:[%s2185] ss:$8 sm:$0xf] %v2167
        %2187 = vst [vmem:[%s2185] ss:$8 sm:$0xf0] %v2167
        %s2188 = scalar_lea.vmem [#allocation2], 386
        %2189 = vst [vmem:[%s2188] ss:$8 sm:$0xf] %v2168
        %2190 = vst [vmem:[%s2188] ss:$8 sm:$0xf0] %v2168
        %s2191 = scalar_lea.vmem [#allocation2], 450
        %2192 = vst [vmem:[%s2191] ss:$8 sm:$0xf] %v2169
        %2193 = vst [vmem:[%s2191] ss:$8 sm:$0xf0] %v2169
        %2194 = vxpose.xlu0.c.b16.start [1/8] %v931, 128
        %2195 = vxpose.xlu0.c.b16.cont [2/8] 0, 128
        %2196 = vxpose.xlu0.c.b16.cont [3/8] 0, 128
        %2197 = vxpose.xlu0.c.b16.cont [4/8] 0, 128
        %2198 = vxpose.xlu0.c.b16.cont [5/8] 0, 128
        %2199 = vxpose.xlu0.c.b16.cont [6/8] 0, 128
        %2200 = vxpose.xlu0.c.b16.cont [7/8] 0, 128
        %2201 = vxpose.xlu0.c.b16.end [8/8] 0, 128
        %v2202 = vpop.trf.xlu0
        %v2203 = vpop.trf.xlu0
        %v2204 = vpop.trf.xlu0
        %v2205 = vpop.trf.xlu0
        %v2206 = vpop.trf.xlu0
        %v2207 = vpop.trf.xlu0
        %v2208 = vpop.trf.xlu0
        %v2209 = vpop.trf.xlu0
        %v2211 = vsel %vm993, %v2202, 0
        %v2214 = vsel %vm993, %v2203, 0
        %v2217 = vsel %vm993, %v2204, 0
        %v2220 = vsel %vm993, %v2205, 0
        %v2223 = vsel %vm993, %v2206, 0
        %v2226 = vsel %vm993, %v2207, 0
        %v2229 = vsel %vm993, %v2208, 0
        %v2232 = vsel %vm993, %v2209, 0
        %v2235 = vsel %vm1018, %v939, 0
        %2237 = vmatprep.subr.bf16.mxu0 0
        %2238 = vmatpush1.bf16.msra.mxu0 0
        %2239 = vmatprep.subr.bf16.mxu0 0
        %2240 = vmatpush1.bf16.msra.mxu0 0
        %2241 = vmatprep.subr.bf16.mxu0 0
        %2242 = vmatpush1.bf16.msra.mxu0 0
        %2243 = vmatprep.subr.bf16.mxu0 0
        %2244 = vmatpush1.bf16.msra.mxu0 0
        %2245 = vmatprep.subr.bf16.mxu0 0
        %2246 = vmatpush1.bf16.msra.mxu0 0
        %2247 = vmatprep.subr.bf16.mxu0 0
        %2248 = vmatpush1.bf16.msra.mxu0 0
        %2249 = vmatprep.subr.bf16.mxu0 0
        %2250 = vmatpush1.bf16.msra.mxu0 0
        %2251 = vmatprep.subr.bf16.mxu0 0
        %2252 = vmatpush1.bf16.msra.mxu0 %v2235
        %2253 = vmatprep.subr.bf16.mxu0 0
        %2254 = vmatpush2.bf16.msra.mxu0 0
        %2255 = vmatprep.subr.bf16.mxu0 0
        %2256 = vmatpush2.bf16.msra.mxu0 0
        %2257 = vmatprep.subr.bf16.mxu0 0
        %2258 = vmatpush2.bf16.msra.mxu0 0
        %2259 = vmatprep.subr.bf16.mxu0 0
        %2260 = vmatpush2.bf16.msra.mxu0 0
        %2261 = vmatprep.subr.bf16.mxu0 0
        %2262 = vmatpush2.bf16.msra.mxu0 0
        %2263 = vmatprep.subr.bf16.mxu0 0
        %2264 = vmatpush2.bf16.msra.mxu0 0
        %2265 = vmatprep.subr.bf16.mxu0 0
        %2266 = vmatpush2.bf16.msra.mxu0 0
        %2267 = vmatprep.subr.bf16.mxu0 0
        %2268 = vmatpush2.bf16.msra.mxu0 0
        %2269 = vmatprep.mubr.bf16.mxu0 0
        %2270 = vmatmul.mubr.bf16.gmra.mxu0 %v2211
        %v2271 = vpop.f32.mrf.mxu0
        %v2272 = vadd.f32 %v927, %v2271
        %v2273 = vpop.f32.mrf.mxu0
        %v2274 = vpop.f32.mrf.mxu0
        %v2275 = vadd.f32 %v927, %v2274
        %v2276 = vpop.f32.mrf.mxu0
        %2277 = vmatprep.mubr.bf16.mxu0 0
        %2278 = vmatmul.mubr.bf16.gmra.mxu0 %v2214
        %v2279 = vpop.f32.mrf.mxu0
        %v2280 = vadd.f32 %v927, %v2279
        %v2281 = vpop.f32.mrf.mxu0
        %v2282 = vpop.f32.mrf.mxu0
        %v2283 = vadd.f32 %v927, %v2282
        %v2284 = vpop.f32.mrf.mxu0
        %2285 = vmatprep.mubr.bf16.mxu0 0
        %2286 = vmatmul.mubr.bf16.gmra.mxu0 %v2217
        %v2287 = vpop.f32.mrf.mxu0
        %v2288 = vadd.f32 %v927, %v2287
        %v2289 = vpop.f32.mrf.mxu0
        %v2290 = vpop.f32.mrf.mxu0
        %v2291 = vadd.f32 %v927, %v2290
        %v2292 = vpop.f32.mrf.mxu0
        %2293 = vmatprep.mubr.bf16.mxu0 0
        %2294 = vmatmul.mubr.bf16.gmra.mxu0 %v2220
        %v2295 = vpop.f32.mrf.mxu0
        %v2296 = vadd.f32 %v927, %v2295
        %v2297 = vpop.f32.mrf.mxu0
        %v2298 = vpop.f32.mrf.mxu0
        %v2299 = vadd.f32 %v927, %v2298
        %v2300 = vpop.f32.mrf.mxu0
        %2301 = vmatprep.mubr.bf16.mxu0 0
        %2302 = vmatmul.mubr.bf16.gmra.mxu0 %v2223
        %v2303 = vpop.f32.mrf.mxu0
        %v2304 = vadd.f32 %v927, %v2303
        %v2305 = vpop.f32.mrf.mxu0
        %v2306 = vpop.f32.mrf.mxu0
        %v2307 = vadd.f32 %v927, %v2306
        %v2308 = vpop.f32.mrf.mxu0
        %2309 = vmatprep.mubr.bf16.mxu0 0
        %2310 = vmatmul.mubr.bf16.gmra.mxu0 %v2226
        %v2311 = vpop.f32.mrf.mxu0
        %v2312 = vadd.f32 %v927, %v2311
        %v2313 = vpop.f32.mrf.mxu0
        %v2314 = vpop.f32.mrf.mxu0
        %v2315 = vadd.f32 %v927, %v2314
        %v2316 = vpop.f32.mrf.mxu0
        %2317 = vmatprep.mubr.bf16.mxu0 0
        %2318 = vmatmul.mubr.bf16.gmra.mxu0 %v2229
        %v2319 = vpop.f32.mrf.mxu0
        %v2320 = vadd.f32 %v927, %v2319
        %v2321 = vpop.f32.mrf.mxu0
        %v2322 = vpop.f32.mrf.mxu0
        %v2323 = vadd.f32 %v927, %v2322
        %v2324 = vpop.f32.mrf.mxu0
        %2325 = vmatprep.mubr.bf16.mxu0 0
        %2326 = vmatmul.mubr.bf16.gmra.mxu0 %v2232
        %v2327 = vpop.f32.mrf.mxu0
        %v2328 = vadd.f32 %v927, %v2327
        %v2329 = vpop.f32.mrf.mxu0
        %v2330 = vpop.f32.mrf.mxu0
        %v2331 = vadd.f32 %v927, %v2330
        %v2332 = vpop.f32.mrf.mxu0
        %2333 = vdwg.mxu0
        %2334 = vmax.xlane.f32.xlu0 %v2272
        %v2335 = vpop.xlane.xlu0 %2334
        %2336 = vmax.xlane.f32.xlu0 %v2275
        %v2337 = vpop.xlane.xlu0 %2336
        %2338 = vmax.xlane.f32.xlu0 %v2280
        %v2339 = vpop.xlane.xlu0 %2338
        %2340 = vmax.xlane.f32.xlu0 %v2283
        %v2341 = vpop.xlane.xlu0 %2340
        %2342 = vmax.xlane.f32.xlu0 %v2288
        %v2343 = vpop.xlane.xlu0 %2342
        %2344 = vmax.xlane.f32.xlu0 %v2291
        %v2345 = vpop.xlane.xlu0 %2344
        %2346 = vmax.xlane.f32.xlu0 %v2296
        %v2347 = vpop.xlane.xlu0 %2346
        %2348 = vmax.xlane.f32.xlu0 %v2299
        %v2349 = vpop.xlane.xlu0 %2348
        %2350 = vmax.xlane.f32.xlu0 %v2304
        %v2351 = vpop.xlane.xlu0 %2350
        %2352 = vmax.xlane.f32.xlu0 %v2307
        %v2353 = vpop.xlane.xlu0 %2352
        %2354 = vmax.xlane.f32.xlu0 %v2312
        %v2355 = vpop.xlane.xlu0 %2354
        %2356 = vmax.xlane.f32.xlu0 %v2315
        %v2357 = vpop.xlane.xlu0 %2356
        %2358 = vmax.xlane.f32.xlu0 %v2320
        %v2359 = vpop.xlane.xlu0 %2358
        %2360 = vmax.xlane.f32.xlu0 %v2323
        %v2361 = vpop.xlane.xlu0 %2360
        %2362 = vmax.xlane.f32.xlu0 %v2328
        %v2363 = vpop.xlane.xlu0 %2362
        %2364 = vmax.xlane.f32.xlu0 %v2331
        %v2365 = vpop.xlane.xlu0 %2364
        %v2366 = vsub.f32 %v2272, %v2335
        %v2367 = vsub.f32 %v2275, %v2337
        %v2368 = vsub.f32 %v2280, %v2339
        %v2369 = vsub.f32 %v2283, %v2341
        %v2370 = vsub.f32 %v2288, %v2343
        %v2371 = vsub.f32 %v2291, %v2345
        %v2372 = vsub.f32 %v2296, %v2347
        %v2373 = vsub.f32 %v2299, %v2349
        %v2374 = vsub.f32 %v2304, %v2351
        %v2375 = vsub.f32 %v2307, %v2353
        %v2376 = vsub.f32 %v2312, %v2355
        %v2377 = vsub.f32 %v2315, %v2357
        %v2378 = vsub.f32 %v2320, %v2359
        %v2379 = vsub.f32 %v2323, %v2361
        %v2380 = vsub.f32 %v2328, %v2363
        %v2381 = vsub.f32 %v2331, %v2365
        %v2382 = vmul.f32 %v2366, 1.442695
        %v2383 = vpow.pop %v2382
        %v2384 = vmul.f32 %v2367, 1.442695
        %v2385 = vpow.pop %v2384
        %v2386 = vmul.f32 %v2368, 1.442695
        %v2387 = vpow.pop %v2386
        %v2388 = vmul.f32 %v2369, 1.442695
        %v2389 = vpow.pop %v2388
        %v2390 = vmul.f32 %v2370, 1.442695
        %v2391 = vpow.pop %v2390
        %v2392 = vmul.f32 %v2371, 1.442695
        %v2393 = vpow.pop %v2392
        %v2394 = vmul.f32 %v2372, 1.442695
        %v2395 = vpow.pop %v2394
        %v2396 = vmul.f32 %v2373, 1.442695
        %v2397 = vpow.pop %v2396
        %v2398 = vmul.f32 %v2374, 1.442695
        %v2399 = vpow.pop %v2398
        %v2400 = vmul.f32 %v2375, 1.442695
        %v2401 = vpow.pop %v2400
        %v2402 = vmul.f32 %v2376, 1.442695
        %v2403 = vpow.pop %v2402
        %v2404 = vmul.f32 %v2377, 1.442695
        %v2405 = vpow.pop %v2404
        %v2406 = vmul.f32 %v2378, 1.442695
        %v2407 = vpow.pop %v2406
        %v2408 = vmul.f32 %v2379, 1.442695
        %v2409 = vpow.pop %v2408
        %v2410 = vmul.f32 %v2380, 1.442695
        %v2411 = vpow.pop %v2410
        %v2412 = vmul.f32 %v2381, 1.442695
        %v2413 = vpow.pop %v2412
        %2414 = vadd.xlane.f32.xlu0 %v2383
        %v2415 = vpop.xlane.xlu0 %2414
        %2416 = vadd.xlane.f32.xlu0 %v2385
        %v2417 = vpop.xlane.xlu0 %2416
        %2418 = vadd.xlane.f32.xlu0 %v2387
        %v2419 = vpop.xlane.xlu0 %2418
        %2420 = vadd.xlane.f32.xlu0 %v2389
        %v2421 = vpop.xlane.xlu0 %2420
        %2422 = vadd.xlane.f32.xlu0 %v2391
        %v2423 = vpop.xlane.xlu0 %2422
        %2424 = vadd.xlane.f32.xlu0 %v2393
        %v2425 = vpop.xlane.xlu0 %2424
        %2426 = vadd.xlane.f32.xlu0 %v2395
        %v2427 = vpop.xlane.xlu0 %2426
        %2428 = vadd.xlane.f32.xlu0 %v2397
        %v2429 = vpop.xlane.xlu0 %2428
        %2430 = vadd.xlane.f32.xlu0 %v2399
        %v2431 = vpop.xlane.xlu0 %2430
        %2432 = vadd.xlane.f32.xlu0 %v2401
        %v2433 = vpop.xlane.xlu0 %2432
        %2434 = vadd.xlane.f32.xlu0 %v2403
        %v2435 = vpop.xlane.xlu0 %2434
        %2436 = vadd.xlane.f32.xlu0 %v2405
        %v2437 = vpop.xlane.xlu0 %2436
        %2438 = vadd.xlane.f32.xlu0 %v2407
        %v2439 = vpop.xlane.xlu0 %2438
        %2440 = vadd.xlane.f32.xlu0 %v2409
        %v2441 = vpop.xlane.xlu0 %2440
        %2442 = vadd.xlane.f32.xlu0 %v2411
        %v2443 = vpop.xlane.xlu0 %2442
        %2444 = vadd.xlane.f32.xlu0 %v2413
        %v2445 = vpop.xlane.xlu0 %2444
        %v2446 = vrcp.pop %v2415
        %v2447 = vrcp.pop %v2417
        %v2448 = vrcp.pop %v2419
        %v2449 = vrcp.pop %v2421
        %v2450 = vrcp.pop %v2423
        %v2451 = vrcp.pop %v2425
        %v2452 = vrcp.pop %v2427
        %v2453 = vrcp.pop %v2429
        %v2454 = vrcp.pop %v2431
        %v2455 = vrcp.pop %v2433
        %v2456 = vrcp.pop %v2435
        %v2457 = vrcp.pop %v2437
        %v2458 = vrcp.pop %v2439
        %v2459 = vrcp.pop %v2441
        %v2460 = vrcp.pop %v2443
        %v2461 = vrcp.pop %v2445
        %v2462 = vmul.f32 %v2383, %v2446
        %v2463 = vmul.f32 %v2385, %v2447
        %v2464 = vmul.f32 %v2387, %v2448
        %v2465 = vmul.f32 %v2389, %v2449
        %v2466 = vmul.f32 %v2391, %v2450
        %v2467 = vmul.f32 %v2393, %v2451
        %v2468 = vmul.f32 %v2395, %v2452
        %v2469 = vmul.f32 %v2397, %v2453
        %v2470 = vmul.f32 %v2399, %v2454
        %v2471 = vmul.f32 %v2401, %v2455
        %v2472 = vmul.f32 %v2403, %v2456
        %v2473 = vmul.f32 %v2405, %v2457
        %v2474 = vmul.f32 %v2407, %v2458
        %v2475 = vmul.f32 %v2409, %v2459
        %v2476 = vmul.f32 %v2411, %v2460
        %v2477 = vmul.f32 %v2413, %v2461
        %v2478 = vpack.c.bf16 %v2463, %v2462
        %v2479 = vpack.c.bf16 %v2465, %v2464
        %v2480 = vpack.c.bf16 %v2467, %v2466
        %v2481 = vpack.c.bf16 %v2469, %v2468
        %v2482 = vpack.c.bf16 %v2471, %v2470
        %v2483 = vpack.c.bf16 %v2473, %v2472
        %v2484 = vpack.c.bf16 %v2475, %v2474
        %v2485 = vpack.c.bf16 %v2477, %v2476
        %2486 = vmatprep.subr.bf16.mxu0 0
        %2487 = vmatpush1.bf16.msra.mxu0 %v2485
        %2488 = vmatprep.subr.bf16.mxu0 0
        %2489 = vmatpush1.bf16.msra.mxu0 %v2484
        %2490 = vmatprep.subr.bf16.mxu0 0
        %2491 = vmatpush1.bf16.msra.mxu0 %v2483
        %2492 = vmatprep.subr.bf16.mxu0 0
        %2493 = vmatpush1.bf16.msra.mxu0 %v2482
        %2494 = vmatprep.subr.bf16.mxu0 0
        %2495 = vmatpush1.bf16.msra.mxu0 %v2481
        %2496 = vmatprep.subr.bf16.mxu0 0
        %2497 = vmatpush1.bf16.msra.mxu0 %v2480
        %2498 = vmatprep.subr.bf16.mxu0 0
        %2499 = vmatpush1.bf16.msra.mxu0 %v2479
        %2500 = vmatprep.subr.bf16.mxu0 0
        %2501 = vmatpush1.bf16.msra.mxu0 %v2478
        %2502 = vmatprep.subr.bf16.mxu0 0
        %2503 = vmatpush2.bf16.msra.mxu0 0
        %2504 = vmatprep.subr.bf16.mxu0 0
        %2505 = vmatpush2.bf16.msra.mxu0 0
        %2506 = vmatprep.subr.bf16.mxu0 0
        %2507 = vmatpush2.bf16.msra.mxu0 0
        %2508 = vmatprep.subr.bf16.mxu0 0
        %2509 = vmatpush2.bf16.msra.mxu0 0
        %2510 = vmatprep.subr.bf16.mxu0 0
        %2511 = vmatpush2.bf16.msra.mxu0 0
        %2512 = vmatprep.subr.bf16.mxu0 0
        %2513 = vmatpush2.bf16.msra.mxu0 0
        %2514 = vmatprep.subr.bf16.mxu0 0
        %2515 = vmatpush2.bf16.msra.mxu0 0
        %2516 = vmatprep.subr.bf16.mxu0 0
        %2517 = vmatpush2.bf16.msra.mxu0 0
        %2518 = vmatprep.mubr.bf16.mxu0 0
        %2519 = vmatmul.mubr.bf16.gmra.mxu0 %v947
        %v2520 = vpop.f32.mrf.mxu0
        %v2521 = vadd.f32 0.0, %v2520
        %v2522 = vpop.f32.mrf.mxu0
        %v2523 = vpop.f32.mrf.mxu0
        %v2524 = vadd.f32 0.0, %v2523
        %v2525 = vpop.f32.mrf.mxu0
        %2526 = vmatprep.mubr.bf16.mxu0 0
        %2527 = vmatmul.mubr.bf16.gmra.mxu0 %v955
        %v2528 = vpop.f32.mrf.mxu0
        %v2529 = vadd.f32 0.0, %v2528
        %v2530 = vpop.f32.mrf.mxu0
        %v2531 = vpop.f32.mrf.mxu0
        %v2532 = vadd.f32 0.0, %v2531
        %v2533 = vpop.f32.mrf.mxu0
        %2534 = vmatprep.mubr.bf16.mxu0 0
        %2535 = vmatmul.mubr.bf16.gmra.mxu0 %v963
        %v2536 = vpop.f32.mrf.mxu0
        %v2537 = vadd.f32 0.0, %v2536
        %v2538 = vpop.f32.mrf.mxu0
        %v2539 = vpop.f32.mrf.mxu0
        %v2540 = vadd.f32 0.0, %v2539
        %v2541 = vpop.f32.mrf.mxu0
        %2542 = vmatprep.mubr.bf16.mxu0 0
        %2543 = vmatmul.mubr.bf16.gmra.mxu0 %v971
        %v2544 = vpop.f32.mrf.mxu0
        %v2545 = vadd.f32 0.0, %v2544
        %v2546 = vpop.f32.mrf.mxu0
        %v2547 = vpop.f32.mrf.mxu0
        %v2548 = vadd.f32 0.0, %v2547
        %v2549 = vpop.f32.mrf.mxu0
        %2550 = vdwg.mxu0
        %v2551 = vmul.f32 %v1336, %v2521
        %v2552 = vmul.f32 %v1336, %v2524
        %v2553 = vmul.f32 %v1336, %v2529
        %v2554 = vmul.f32 %v1336, %v2532
        %v2555 = vmul.f32 %v1336, %v2537
        %v2556 = vmul.f32 %v1336, %v2540
        %v2557 = vmul.f32 %v1336, %v2545
        %v2558 = vmul.f32 %v1336, %v2548
        %v2559 = vadd.f32 %v2551, %v302
        %v2560 = vadd.f32 %v2552, %v310
        %v2561 = vadd.f32 %v2553, %v318
        %v2562 = vadd.f32 %v2554, %v326
        %v2563 = vadd.f32 %v2555, %v334
        %v2564 = vadd.f32 %v2556, %v342
        %v2565 = vadd.f32 %v2557, %v350
        %v2566 = vadd.f32 %v2558, %v358
        %v2567 = vmul.f32 %v302, %v2559
        %v2568 = vmul.f32 %v310, %v2560
        %v2569 = vmul.f32 %v318, %v2561
        %v2570 = vmul.f32 %v326, %v2562
        %v2571 = vmul.f32 %v334, %v2563
        %v2572 = vmul.f32 %v342, %v2564
        %v2573 = vmul.f32 %v350, %v2565
        %v2574 = vmul.f32 %v358, %v2566
        %s2575 = scalar_lea.vmem [#allocation2], 3
        %2576 = vst [vmem:[%s2575] ss:$8 sm:$0xf] %v2567
        %2577 = vst [vmem:[%s2575] ss:$8 sm:$0xf0] %v2567
        %s2578 = scalar_lea.vmem [#allocation2], 67
        %2579 = vst [vmem:[%s2578] ss:$8 sm:$0xf] %v2568
        %2580 = vst [vmem:[%s2578] ss:$8 sm:$0xf0] %v2568
        %s2581 = scalar_lea.vmem [#allocation2], 131
        %2582 = vst [vmem:[%s2581] ss:$8 sm:$0xf] %v2569
        %2583 = vst [vmem:[%s2581] ss:$8 sm:$0xf0] %v2569
        %s2584 = scalar_lea.vmem [#allocation2], 195
        %2585 = vst [vmem:[%s2584] ss:$8 sm:$0xf] %v2570
        %2586 = vst [vmem:[%s2584] ss:$8 sm:$0xf0] %v2570
        %s2587 = scalar_lea.vmem [#allocation2], 259
        %2588 = vst [vmem:[%s2587] ss:$8 sm:$0xf] %v2571
        %2589 = vst [vmem:[%s2587] ss:$8 sm:$0xf0] %v2571
        %s2590 = scalar_lea.vmem [#allocation2], 323
        %2591 = vst [vmem:[%s2590] ss:$8 sm:$0xf] %v2572
        %2592 = vst [vmem:[%s2590] ss:$8 sm:$0xf0] %v2572
        %s2593 = scalar_lea.vmem [#allocation2], 387
        %2594 = vst [vmem:[%s2593] ss:$8 sm:$0xf] %v2573
        %2595 = vst [vmem:[%s2593] ss:$8 sm:$0xf0] %v2573
        %s2596 = scalar_lea.vmem [#allocation2], 451
        %2597 = vst [vmem:[%s2596] ss:$8 sm:$0xf] %v2574
        %2598 = vst [vmem:[%s2596] ss:$8 sm:$0xf0] %v2574
        %2599 = vxpose.xlu0.c.b16.start [1/8] %v932, 128
        %2600 = vxpose.xlu0.c.b16.cont [2/8] 0, 128
        %2601 = vxpose.xlu0.c.b16.cont [3/8] 0, 128
        %2602 = vxpose.xlu0.c.b16.cont [4/8] 0, 128
        %2603 = vxpose.xlu0.c.b16.cont [5/8] 0, 128
        %2604 = vxpose.xlu0.c.b16.cont [6/8] 0, 128
        %2605 = vxpose.xlu0.c.b16.cont [7/8] 0, 128
        %2606 = vxpose.xlu0.c.b16.end [8/8] 0, 128
        %v2607 = vpop.trf.xlu0
        %v2608 = vpop.trf.xlu0
        %v2609 = vpop.trf.xlu0
        %v2610 = vpop.trf.xlu0
        %v2611 = vpop.trf.xlu0
        %v2612 = vpop.trf.xlu0
        %v2613 = vpop.trf.xlu0
        %v2614 = vpop.trf.xlu0
        %v2616 = vsel %vm993, %v2607, 0
        %v2619 = vsel %vm993, %v2608, 0
        %v2622 = vsel %vm993, %v2609, 0
        %v2625 = vsel %vm993, %v2610, 0
        %v2628 = vsel %vm993, %v2611, 0
        %v2631 = vsel %vm993, %v2612, 0
        %v2634 = vsel %vm993, %v2613, 0
        %v2637 = vsel %vm993, %v2614, 0
        %v2640 = vsel %vm1018, %v940, 0
        %2642 = vmatprep.subr.bf16.mxu0 0
        %2643 = vmatpush1.bf16.msra.mxu0 0
        %2644 = vmatprep.subr.bf16.mxu0 0
        %2645 = vmatpush1.bf16.msra.mxu0 0
        %2646 = vmatprep.subr.bf16.mxu0 0
        %2647 = vmatpush1.bf16.msra.mxu0 0
        %2648 = vmatprep.subr.bf16.mxu0 0
        %2649 = vmatpush1.bf16.msra.mxu0 0
        %2650 = vmatprep.subr.bf16.mxu0 0
        %2651 = vmatpush1.bf16.msra.mxu0 0
        %2652 = vmatprep.subr.bf16.mxu0 0
        %2653 = vmatpush1.bf16.msra.mxu0 0
        %2654 = vmatprep.subr.bf16.mxu0 0
        %2655 = vmatpush1.bf16.msra.mxu0 0
        %2656 = vmatprep.subr.bf16.mxu0 0
        %2657 = vmatpush1.bf16.msra.mxu0 %v2640
        %2658 = vmatprep.subr.bf16.mxu0 0
        %2659 = vmatpush2.bf16.msra.mxu0 0
        %2660 = vmatprep.subr.bf16.mxu0 0
        %2661 = vmatpush2.bf16.msra.mxu0 0
        %2662 = vmatprep.subr.bf16.mxu0 0
        %2663 = vmatpush2.bf16.msra.mxu0 0
        %2664 = vmatprep.subr.bf16.mxu0 0
        %2665 = vmatpush2.bf16.msra.mxu0 0
        %2666 = vmatprep.subr.bf16.mxu0 0
        %2667 = vmatpush2.bf16.msra.mxu0 0
        %2668 = vmatprep.subr.bf16.mxu0 0
        %2669 = vmatpush2.bf16.msra.mxu0 0
        %2670 = vmatprep.subr.bf16.mxu0 0
        %2671 = vmatpush2.bf16.msra.mxu0 0
        %2672 = vmatprep.subr.bf16.mxu0 0
        %2673 = vmatpush2.bf16.msra.mxu0 0
        %2674 = vmatprep.mubr.bf16.mxu0 0
        %2675 = vmatmul.mubr.bf16.gmra.mxu0 %v2616
        %v2676 = vpop.f32.mrf.mxu0
        %v2677 = vadd.f32 %v927, %v2676
        %v2678 = vpop.f32.mrf.mxu0
        %v2679 = vpop.f32.mrf.mxu0
        %v2680 = vadd.f32 %v927, %v2679
        %v2681 = vpop.f32.mrf.mxu0
        %2682 = vmatprep.mubr.bf16.mxu0 0
        %2683 = vmatmul.mubr.bf16.gmra.mxu0 %v2619
        %v2684 = vpop.f32.mrf.mxu0
        %v2685 = vadd.f32 %v927, %v2684
        %v2686 = vpop.f32.mrf.mxu0
        %v2687 = vpop.f32.mrf.mxu0
        %v2688 = vadd.f32 %v927, %v2687
        %v2689 = vpop.f32.mrf.mxu0
        %2690 = vmatprep.mubr.bf16.mxu0 0
        %2691 = vmatmul.mubr.bf16.gmra.mxu0 %v2622
        %v2692 = vpop.f32.mrf.mxu0
        %v2693 = vadd.f32 %v927, %v2692
        %v2694 = vpop.f32.mrf.mxu0
        %v2695 = vpop.f32.mrf.mxu0
        %v2696 = vadd.f32 %v927, %v2695
        %v2697 = vpop.f32.mrf.mxu0
        %2698 = vmatprep.mubr.bf16.mxu0 0
        %2699 = vmatmul.mubr.bf16.gmra.mxu0 %v2625
        %v2700 = vpop.f32.mrf.mxu0
        %v2701 = vadd.f32 %v927, %v2700
        %v2702 = vpop.f32.mrf.mxu0
        %v2703 = vpop.f32.mrf.mxu0
        %v2704 = vadd.f32 %v927, %v2703
        %v2705 = vpop.f32.mrf.mxu0
        %2706 = vmatprep.mubr.bf16.mxu0 0
        %2707 = vmatmul.mubr.bf16.gmra.mxu0 %v2628
        %v2708 = vpop.f32.mrf.mxu0
        %v2709 = vadd.f32 %v927, %v2708
        %v2710 = vpop.f32.mrf.mxu0
        %v2711 = vpop.f32.mrf.mxu0
        %v2712 = vadd.f32 %v927, %v2711
        %v2713 = vpop.f32.mrf.mxu0
        %2714 = vmatprep.mubr.bf16.mxu0 0
        %2715 = vmatmul.mubr.bf16.gmra.mxu0 %v2631
        %v2716 = vpop.f32.mrf.mxu0
        %v2717 = vadd.f32 %v927, %v2716
        %v2718 = vpop.f32.mrf.mxu0
        %v2719 = vpop.f32.mrf.mxu0
        %v2720 = vadd.f32 %v927, %v2719
        %v2721 = vpop.f32.mrf.mxu0
        %2722 = vmatprep.mubr.bf16.mxu0 0
        %2723 = vmatmul.mubr.bf16.gmra.mxu0 %v2634
        %v2724 = vpop.f32.mrf.mxu0
        %v2725 = vadd.f32 %v927, %v2724
        %v2726 = vpop.f32.mrf.mxu0
        %v2727 = vpop.f32.mrf.mxu0
        %v2728 = vadd.f32 %v927, %v2727
        %v2729 = vpop.f32.mrf.mxu0
        %2730 = vmatprep.mubr.bf16.mxu0 0
        %2731 = vmatmul.mubr.bf16.gmra.mxu0 %v2637
        %v2732 = vpop.f32.mrf.mxu0
        %v2733 = vadd.f32 %v927, %v2732
        %v2734 = vpop.f32.mrf.mxu0
        %v2735 = vpop.f32.mrf.mxu0
        %v2736 = vadd.f32 %v927, %v2735
        %v2737 = vpop.f32.mrf.mxu0
        %2738 = vdwg.mxu0
        %2739 = vmax.xlane.f32.xlu0 %v2677
        %v2740 = vpop.xlane.xlu0 %2739
        %2741 = vmax.xlane.f32.xlu0 %v2680
        %v2742 = vpop.xlane.xlu0 %2741
        %2743 = vmax.xlane.f32.xlu0 %v2685
        %v2744 = vpop.xlane.xlu0 %2743
        %2745 = vmax.xlane.f32.xlu0 %v2688
        %v2746 = vpop.xlane.xlu0 %2745
        %2747 = vmax.xlane.f32.xlu0 %v2693
        %v2748 = vpop.xlane.xlu0 %2747
        %2749 = vmax.xlane.f32.xlu0 %v2696
        %v2750 = vpop.xlane.xlu0 %2749
        %2751 = vmax.xlane.f32.xlu0 %v2701
        %v2752 = vpop.xlane.xlu0 %2751
        %2753 = vmax.xlane.f32.xlu0 %v2704
        %v2754 = vpop.xlane.xlu0 %2753
        %2755 = vmax.xlane.f32.xlu0 %v2709
        %v2756 = vpop.xlane.xlu0 %2755
        %2757 = vmax.xlane.f32.xlu0 %v2712
        %v2758 = vpop.xlane.xlu0 %2757
        %2759 = vmax.xlane.f32.xlu0 %v2717
        %v2760 = vpop.xlane.xlu0 %2759
        %2761 = vmax.xlane.f32.xlu0 %v2720
        %v2762 = vpop.xlane.xlu0 %2761
        %2763 = vmax.xlane.f32.xlu0 %v2725
        %v2764 = vpop.xlane.xlu0 %2763
        %2765 = vmax.xlane.f32.xlu0 %v2728
        %v2766 = vpop.xlane.xlu0 %2765
        %2767 = vmax.xlane.f32.xlu0 %v2733
        %v2768 = vpop.xlane.xlu0 %2767
        %2769 = vmax.xlane.f32.xlu0 %v2736
        %v2770 = vpop.xlane.xlu0 %2769
        %v2771 = vsub.f32 %v2677, %v2740
        %v2772 = vsub.f32 %v2680, %v2742
        %v2773 = vsub.f32 %v2685, %v2744
        %v2774 = vsub.f32 %v2688, %v2746
        %v2775 = vsub.f32 %v2693, %v2748
        %v2776 = vsub.f32 %v2696, %v2750
        %v2777 = vsub.f32 %v2701, %v2752
        %v2778 = vsub.f32 %v2704, %v2754
        %v2779 = vsub.f32 %v2709, %v2756
        %v2780 = vsub.f32 %v2712, %v2758
        %v2781 = vsub.f32 %v2717, %v2760
        %v2782 = vsub.f32 %v2720, %v2762
        %v2783 = vsub.f32 %v2725, %v2764
        %v2784 = vsub.f32 %v2728, %v2766
        %v2785 = vsub.f32 %v2733, %v2768
        %v2786 = vsub.f32 %v2736, %v2770
        %v2787 = vmul.f32 %v2771, 1.442695
        %v2788 = vpow.pop %v2787
        %v2789 = vmul.f32 %v2772, 1.442695
        %v2790 = vpow.pop %v2789
        %v2791 = vmul.f32 %v2773, 1.442695
        %v2792 = vpow.pop %v2791
        %v2793 = vmul.f32 %v2774, 1.442695
        %v2794 = vpow.pop %v2793
        %v2795 = vmul.f32 %v2775, 1.442695
        %v2796 = vpow.pop %v2795
        %v2797 = vmul.f32 %v2776, 1.442695
        %v2798 = vpow.pop %v2797
        %v2799 = vmul.f32 %v2777, 1.442695
        %v2800 = vpow.pop %v2799
        %v2801 = vmul.f32 %v2778, 1.442695
        %v2802 = vpow.pop %v2801
        %v2803 = vmul.f32 %v2779, 1.442695
        %v2804 = vpow.pop %v2803
        %v2805 = vmul.f32 %v2780, 1.442695
        %v2806 = vpow.pop %v2805
        %v2807 = vmul.f32 %v2781, 1.442695
        %v2808 = vpow.pop %v2807
        %v2809 = vmul.f32 %v2782, 1.442695
        %v2810 = vpow.pop %v2809
        %v2811 = vmul.f32 %v2783, 1.442695
        %v2812 = vpow.pop %v2811
        %v2813 = vmul.f32 %v2784, 1.442695
        %v2814 = vpow.pop %v2813
        %v2815 = vmul.f32 %v2785, 1.442695
        %v2816 = vpow.pop %v2815
        %v2817 = vmul.f32 %v2786, 1.442695
        %v2818 = vpow.pop %v2817
        %2819 = vadd.xlane.f32.xlu0 %v2788
        %v2820 = vpop.xlane.xlu0 %2819
        %2821 = vadd.xlane.f32.xlu0 %v2790
        %v2822 = vpop.xlane.xlu0 %2821
        %2823 = vadd.xlane.f32.xlu0 %v2792
        %v2824 = vpop.xlane.xlu0 %2823
        %2825 = vadd.xlane.f32.xlu0 %v2794
        %v2826 = vpop.xlane.xlu0 %2825
        %2827 = vadd.xlane.f32.xlu0 %v2796
        %v2828 = vpop.xlane.xlu0 %2827
        %2829 = vadd.xlane.f32.xlu0 %v2798
        %v2830 = vpop.xlane.xlu0 %2829
        %2831 = vadd.xlane.f32.xlu0 %v2800
        %v2832 = vpop.xlane.xlu0 %2831
        %2833 = vadd.xlane.f32.xlu0 %v2802
        %v2834 = vpop.xlane.xlu0 %2833
        %2835 = vadd.xlane.f32.xlu0 %v2804
        %v2836 = vpop.xlane.xlu0 %2835
        %2837 = vadd.xlane.f32.xlu0 %v2806
        %v2838 = vpop.xlane.xlu0 %2837
        %2839 = vadd.xlane.f32.xlu0 %v2808
        %v2840 = vpop.xlane.xlu0 %2839
        %2841 = vadd.xlane.f32.xlu0 %v2810
        %v2842 = vpop.xlane.xlu0 %2841
        %2843 = vadd.xlane.f32.xlu0 %v2812
        %v2844 = vpop.xlane.xlu0 %2843
        %2845 = vadd.xlane.f32.xlu0 %v2814
        %v2846 = vpop.xlane.xlu0 %2845
        %2847 = vadd.xlane.f32.xlu0 %v2816
        %v2848 = vpop.xlane.xlu0 %2847
        %2849 = vadd.xlane.f32.xlu0 %v2818
        %v2850 = vpop.xlane.xlu0 %2849
        %v2851 = vrcp.pop %v2820
        %v2852 = vrcp.pop %v2822
        %v2853 = vrcp.pop %v2824
        %v2854 = vrcp.pop %v2826
        %v2855 = vrcp.pop %v2828
        %v2856 = vrcp.pop %v2830
        %v2857 = vrcp.pop %v2832
        %v2858 = vrcp.pop %v2834
        %v2859 = vrcp.pop %v2836
        %v2860 = vrcp.pop %v2838
        %v2861 = vrcp.pop %v2840
        %v2862 = vrcp.pop %v2842
        %v2863 = vrcp.pop %v2844
        %v2864 = vrcp.pop %v2846
        %v2865 = vrcp.pop %v2848
        %v2866 = vrcp.pop %v2850
        %v2867 = vmul.f32 %v2788, %v2851
        %v2868 = vmul.f32 %v2790, %v2852
        %v2869 = vmul.f32 %v2792, %v2853
        %v2870 = vmul.f32 %v2794, %v2854
        %v2871 = vmul.f32 %v2796, %v2855
        %v2872 = vmul.f32 %v2798, %v2856
        %v2873 = vmul.f32 %v2800, %v2857
        %v2874 = vmul.f32 %v2802, %v2858
        %v2875 = vmul.f32 %v2804, %v2859
        %v2876 = vmul.f32 %v2806, %v2860
        %v2877 = vmul.f32 %v2808, %v2861
        %v2878 = vmul.f32 %v2810, %v2862
        %v2879 = vmul.f32 %v2812, %v2863
        %v2880 = vmul.f32 %v2814, %v2864
        %v2881 = vmul.f32 %v2816, %v2865
        %v2882 = vmul.f32 %v2818, %v2866
        %v2883 = vpack.c.bf16 %v2868, %v2867
        %v2884 = vpack.c.bf16 %v2870, %v2869
        %v2885 = vpack.c.bf16 %v2872, %v2871
        %v2886 = vpack.c.bf16 %v2874, %v2873
        %v2887 = vpack.c.bf16 %v2876, %v2875
        %v2888 = vpack.c.bf16 %v2878, %v2877
        %v2889 = vpack.c.bf16 %v2880, %v2879
        %v2890 = vpack.c.bf16 %v2882, %v2881
        %2891 = vmatprep.subr.bf16.mxu0 0
        %2892 = vmatpush1.bf16.msra.mxu0 %v2890
        %2893 = vmatprep.subr.bf16.mxu0 0
        %2894 = vmatpush1.bf16.msra.mxu0 %v2889
        %2895 = vmatprep.subr.bf16.mxu0 0
        %2896 = vmatpush1.bf16.msra.mxu0 %v2888
        %2897 = vmatprep.subr.bf16.mxu0 0
        %2898 = vmatpush1.bf16.msra.mxu0 %v2887
        %2899 = vmatprep.subr.bf16.mxu0 0
        %2900 = vmatpush1.bf16.msra.mxu0 %v2886
        %2901 = vmatprep.subr.bf16.mxu0 0
        %2902 = vmatpush1.bf16.msra.mxu0 %v2885
        %2903 = vmatprep.subr.bf16.mxu0 0
        %2904 = vmatpush1.bf16.msra.mxu0 %v2884
        %2905 = vmatprep.subr.bf16.mxu0 0
        %2906 = vmatpush1.bf16.msra.mxu0 %v2883
        %2907 = vmatprep.subr.bf16.mxu0 0
        %2908 = vmatpush2.bf16.msra.mxu0 0
        %2909 = vmatprep.subr.bf16.mxu0 0
        %2910 = vmatpush2.bf16.msra.mxu0 0
        %2911 = vmatprep.subr.bf16.mxu0 0
        %2912 = vmatpush2.bf16.msra.mxu0 0
        %2913 = vmatprep.subr.bf16.mxu0 0
        %2914 = vmatpush2.bf16.msra.mxu0 0
        %2915 = vmatprep.subr.bf16.mxu0 0
        %2916 = vmatpush2.bf16.msra.mxu0 0
        %2917 = vmatprep.subr.bf16.mxu0 0
        %2918 = vmatpush2.bf16.msra.mxu0 0
        %2919 = vmatprep.subr.bf16.mxu0 0
        %2920 = vmatpush2.bf16.msra.mxu0 0
        %2921 = vmatprep.subr.bf16.mxu0 0
        %2922 = vmatpush2.bf16.msra.mxu0 0
        %2923 = vmatprep.mubr.bf16.mxu0 0
        %2924 = vmatmul.mubr.bf16.gmra.mxu0 %v948
        %v2925 = vpop.f32.mrf.mxu0
        %v2926 = vadd.f32 0.0, %v2925
        %v2927 = vpop.f32.mrf.mxu0
        %v2928 = vpop.f32.mrf.mxu0
        %v2929 = vadd.f32 0.0, %v2928
        %v2930 = vpop.f32.mrf.mxu0
        %2931 = vmatprep.mubr.bf16.mxu0 0
        %2932 = vmatmul.mubr.bf16.gmra.mxu0 %v956
        %v2933 = vpop.f32.mrf.mxu0
        %v2934 = vadd.f32 0.0, %v2933
        %v2935 = vpop.f32.mrf.mxu0
        %v2936 = vpop.f32.mrf.mxu0
        %v2937 = vadd.f32 0.0, %v2936
        %v2938 = vpop.f32.mrf.mxu0
        %2939 = vmatprep.mubr.bf16.mxu0 0
        %2940 = vmatmul.mubr.bf16.gmra.mxu0 %v964
        %v2941 = vpop.f32.mrf.mxu0
        %v2942 = vadd.f32 0.0, %v2941
        %v2943 = vpop.f32.mrf.mxu0
        %v2944 = vpop.f32.mrf.mxu0
        %v2945 = vadd.f32 0.0, %v2944
        %v2946 = vpop.f32.mrf.mxu0
        %2947 = vmatprep.mubr.bf16.mxu0 0
        %2948 = vmatmul.mubr.bf16.gmra.mxu0 %v972
        %v2949 = vpop.f32.mrf.mxu0
        %v2950 = vadd.f32 0.0, %v2949
        %v2951 = vpop.f32.mrf.mxu0
        %v2952 = vpop.f32.mrf.mxu0
        %v2953 = vadd.f32 0.0, %v2952
        %v2954 = vpop.f32.mrf.mxu0
        %2955 = vdwg.mxu0
        %v2956 = vmul.f32 %v1336, %v2926
        %v2957 = vmul.f32 %v1336, %v2929
        %v2958 = vmul.f32 %v1336, %v2934
        %v2959 = vmul.f32 %v1336, %v2937
        %v2960 = vmul.f32 %v1336, %v2942
        %v2961 = vmul.f32 %v1336, %v2945
        %v2962 = vmul.f32 %v1336, %v2950
        %v2963 = vmul.f32 %v1336, %v2953
        %v2964 = vadd.f32 %v2956, %v303
        %v2965 = vadd.f32 %v2957, %v311
        %v2966 = vadd.f32 %v2958, %v319
        %v2967 = vadd.f32 %v2959, %v327
        %v2968 = vadd.f32 %v2960, %v335
        %v2969 = vadd.f32 %v2961, %v343
        %v2970 = vadd.f32 %v2962, %v351
        %v2971 = vadd.f32 %v2963, %v359
        %v2972 = vmul.f32 %v303, %v2964
        %v2973 = vmul.f32 %v311, %v2965
        %v2974 = vmul.f32 %v319, %v2966
        %v2975 = vmul.f32 %v327, %v2967
        %v2976 = vmul.f32 %v335, %v2968
        %v2977 = vmul.f32 %v343, %v2969
        %v2978 = vmul.f32 %v351, %v2970
        %v2979 = vmul.f32 %v359, %v2971
        %s2980 = scalar_lea.vmem [#allocation2], 4
        %2981 = vst [vmem:[%s2980] ss:$8 sm:$0xf] %v2972
        %2982 = vst [vmem:[%s2980] ss:$8 sm:$0xf0] %v2972
        %s2983 = scalar_lea.vmem [#allocation2], 68
        %2984 = vst [vmem:[%s2983] ss:$8 sm:$0xf] %v2973
        %2985 = vst [vmem:[%s2983] ss:$8 sm:$0xf0] %v2973
        %s2986 = scalar_lea.vmem [#allocation2], 132
        %2987 = vst [vmem:[%s2986] ss:$8 sm:$0xf] %v2974
        %2988 = vst [vmem:[%s2986] ss:$8 sm:$0xf0] %v2974
        %s2989 = scalar_lea.vmem [#allocation2], 196
        %2990 = vst [vmem:[%s2989] ss:$8 sm:$0xf] %v2975
        %2991 = vst [vmem:[%s2989] ss:$8 sm:$0xf0] %v2975
        %s2992 = scalar_lea.vmem [#allocation2], 260
        %2993 = vst [vmem:[%s2992] ss:$8 sm:$0xf] %v2976
        %2994 = vst [vmem:[%s2992] ss:$8 sm:$0xf0] %v2976
        %s2995 = scalar_lea.vmem [#allocation2], 324
        %2996 = vst [vmem:[%s2995] ss:$8 sm:$0xf] %v2977
        %2997 = vst [vmem:[%s2995] ss:$8 sm:$0xf0] %v2977
        %s2998 = scalar_lea.vmem [#allocation2], 388
        %2999 = vst [vmem:[%s2998] ss:$8 sm:$0xf] %v2978
        %3000 = vst [vmem:[%s2998] ss:$8 sm:$0xf0] %v2978
        %s3001 = scalar_lea.vmem [#allocation2], 452
        %3002 = vst [vmem:[%s3001] ss:$8 sm:$0xf] %v2979
        %3003 = vst [vmem:[%s3001] ss:$8 sm:$0xf0] %v2979
        %3004 = vxpose.xlu0.c.b16.start [1/8] %v933, 128
        %3005 = vxpose.xlu0.c.b16.cont [2/8] 0, 128
        %3006 = vxpose.xlu0.c.b16.cont [3/8] 0, 128
        %3007 = vxpose.xlu0.c.b16.cont [4/8] 0, 128
        %3008 = vxpose.xlu0.c.b16.cont [5/8] 0, 128
        %3009 = vxpose.xlu0.c.b16.cont [6/8] 0, 128
        %3010 = vxpose.xlu0.c.b16.cont [7/8] 0, 128
        %3011 = vxpose.xlu0.c.b16.end [8/8] 0, 128
        %v3012 = vpop.trf.xlu0
        %v3013 = vpop.trf.xlu0
        %v3014 = vpop.trf.xlu0
        %v3015 = vpop.trf.xlu0
        %v3016 = vpop.trf.xlu0
        %v3017 = vpop.trf.xlu0
        %v3018 = vpop.trf.xlu0
        %v3019 = vpop.trf.xlu0
        %v3021 = vsel %vm993, %v3012, 0
        %v3024 = vsel %vm993, %v3013, 0
        %v3027 = vsel %vm993, %v3014, 0
        %v3030 = vsel %vm993, %v3015, 0
        %v3033 = vsel %vm993, %v3016, 0
        %v3036 = vsel %vm993, %v3017, 0
        %v3039 = vsel %vm993, %v3018, 0
        %v3042 = vsel %vm993, %v3019, 0
        %v3045 = vsel %vm1018, %v941, 0
        %3047 = vmatprep.subr.bf16.mxu0 0
        %3048 = vmatpush1.bf16.msra.mxu0 0
        %3049 = vmatprep.subr.bf16.mxu0 0
        %3050 = vmatpush1.bf16.msra.mxu0 0
        %3051 = vmatprep.subr.bf16.mxu0 0
        %3052 = vmatpush1.bf16.msra.mxu0 0
        %3053 = vmatprep.subr.bf16.mxu0 0
        %3054 = vmatpush1.bf16.msra.mxu0 0
        %3055 = vmatprep.subr.bf16.mxu0 0
        %3056 = vmatpush1.bf16.msra.mxu0 0
        %3057 = vmatprep.subr.bf16.mxu0 0
        %3058 = vmatpush1.bf16.msra.mxu0 0
        %3059 = vmatprep.subr.bf16.mxu0 0
        %3060 = vmatpush1.bf16.msra.mxu0 0
        %3061 = vmatprep.subr.bf16.mxu0 0
        %3062 = vmatpush1.bf16.msra.mxu0 %v3045
        %3063 = vmatprep.subr.bf16.mxu0 0
        %3064 = vmatpush2.bf16.msra.mxu0 0
        %3065 = vmatprep.subr.bf16.mxu0 0
        %3066 = vmatpush2.bf16.msra.mxu0 0
        %3067 = vmatprep.subr.bf16.mxu0 0
        %3068 = vmatpush2.bf16.msra.mxu0 0
        %3069 = vmatprep.subr.bf16.mxu0 0
        %3070 = vmatpush2.bf16.msra.mxu0 0
        %3071 = vmatprep.subr.bf16.mxu0 0
        %3072 = vmatpush2.bf16.msra.mxu0 0
        %3073 = vmatprep.subr.bf16.mxu0 0
        %3074 = vmatpush2.bf16.msra.mxu0 0
        %3075 = vmatprep.subr.bf16.mxu0 0
        %3076 = vmatpush2.bf16.msra.mxu0 0
        %3077 = vmatprep.subr.bf16.mxu0 0
        %3078 = vmatpush2.bf16.msra.mxu0 0
        %3079 = vmatprep.mubr.bf16.mxu0 0
        %3080 = vmatmul.mubr.bf16.gmra.mxu0 %v3021
        %v3081 = vpop.f32.mrf.mxu0
        %v3082 = vadd.f32 %v927, %v3081
        %v3083 = vpop.f32.mrf.mxu0
        %v3084 = vpop.f32.mrf.mxu0
        %v3085 = vadd.f32 %v927, %v3084
        %v3086 = vpop.f32.mrf.mxu0
        %3087 = vmatprep.mubr.bf16.mxu0 0
        %3088 = vmatmul.mubr.bf16.gmra.mxu0 %v3024
        %v3089 = vpop.f32.mrf.mxu0
        %v3090 = vadd.f32 %v927, %v3089
        %v3091 = vpop.f32.mrf.mxu0
        %v3092 = vpop.f32.mrf.mxu0
        %v3093 = vadd.f32 %v927, %v3092
        %v3094 = vpop.f32.mrf.mxu0
        %3095 = vmatprep.mubr.bf16.mxu0 0
        %3096 = vmatmul.mubr.bf16.gmra.mxu0 %v3027
        %v3097 = vpop.f32.mrf.mxu0
        %v3098 = vadd.f32 %v927, %v3097
        %v3099 = vpop.f32.mrf.mxu0
        %v3100 = vpop.f32.mrf.mxu0
        %v3101 = vadd.f32 %v927, %v3100
        %v3102 = vpop.f32.mrf.mxu0
        %3103 = vmatprep.mubr.bf16.mxu0 0
        %3104 = vmatmul.mubr.bf16.gmra.mxu0 %v3030
        %v3105 = vpop.f32.mrf.mxu0
        %v3106 = vadd.f32 %v927, %v3105
        %v3107 = vpop.f32.mrf.mxu0
        %v3108 = vpop.f32.mrf.mxu0
        %v3109 = vadd.f32 %v927, %v3108
        %v3110 = vpop.f32.mrf.mxu0
        %3111 = vmatprep.mubr.bf16.mxu0 0
        %3112 = vmatmul.mubr.bf16.gmra.mxu0 %v3033
        %v3113 = vpop.f32.mrf.mxu0
        %v3114 = vadd.f32 %v927, %v3113
        %v3115 = vpop.f32.mrf.mxu0
        %v3116 = vpop.f32.mrf.mxu0
        %v3117 = vadd.f32 %v927, %v3116
        %v3118 = vpop.f32.mrf.mxu0
        %3119 = vmatprep.mubr.bf16.mxu0 0
        %3120 = vmatmul.mubr.bf16.gmra.mxu0 %v3036
        %v3121 = vpop.f32.mrf.mxu0
        %v3122 = vadd.f32 %v927, %v3121
        %v3123 = vpop.f32.mrf.mxu0
        %v3124 = vpop.f32.mrf.mxu0
        %v3125 = vadd.f32 %v927, %v3124
        %v3126 = vpop.f32.mrf.mxu0
        %3127 = vmatprep.mubr.bf16.mxu0 0
        %3128 = vmatmul.mubr.bf16.gmra.mxu0 %v3039
        %v3129 = vpop.f32.mrf.mxu0
        %v3130 = vadd.f32 %v927, %v3129
        %v3131 = vpop.f32.mrf.mxu0
        %v3132 = vpop.f32.mrf.mxu0
        %v3133 = vadd.f32 %v927, %v3132
        %v3134 = vpop.f32.mrf.mxu0
        %3135 = vmatprep.mubr.bf16.mxu0 0
        %3136 = vmatmul.mubr.bf16.gmra.mxu0 %v3042
        %v3137 = vpop.f32.mrf.mxu0
        %v3138 = vadd.f32 %v927, %v3137
        %v3139 = vpop.f32.mrf.mxu0
        %v3140 = vpop.f32.mrf.mxu0
        %v3141 = vadd.f32 %v927, %v3140
        %v3142 = vpop.f32.mrf.mxu0
        %3143 = vdwg.mxu0
        %3144 = vmax.xlane.f32.xlu0 %v3082
        %v3145 = vpop.xlane.xlu0 %3144
        %3146 = vmax.xlane.f32.xlu0 %v3085
        %v3147 = vpop.xlane.xlu0 %3146
        %3148 = vmax.xlane.f32.xlu0 %v3090
        %v3149 = vpop.xlane.xlu0 %3148
        %3150 = vmax.xlane.f32.xlu0 %v3093
        %v3151 = vpop.xlane.xlu0 %3150
        %3152 = vmax.xlane.f32.xlu0 %v3098
        %v3153 = vpop.xlane.xlu0 %3152
        %3154 = vmax.xlane.f32.xlu0 %v3101
        %v3155 = vpop.xlane.xlu0 %3154
        %3156 = vmax.xlane.f32.xlu0 %v3106
        %v3157 = vpop.xlane.xlu0 %3156
        %3158 = vmax.xlane.f32.xlu0 %v3109
        %v3159 = vpop.xlane.xlu0 %3158
        %3160 = vmax.xlane.f32.xlu0 %v3114
        %v3161 = vpop.xlane.xlu0 %3160
        %3162 = vmax.xlane.f32.xlu0 %v3117
        %v3163 = vpop.xlane.xlu0 %3162
        %3164 = vmax.xlane.f32.xlu0 %v3122
        %v3165 = vpop.xlane.xlu0 %3164
        %3166 = vmax.xlane.f32.xlu0 %v3125
        %v3167 = vpop.xlane.xlu0 %3166
        %3168 = vmax.xlane.f32.xlu0 %v3130
        %v3169 = vpop.xlane.xlu0 %3168
        %3170 = vmax.xlane.f32.xlu0 %v3133
        %v3171 = vpop.xlane.xlu0 %3170
        %3172 = vmax.xlane.f32.xlu0 %v3138
        %v3173 = vpop.xlane.xlu0 %3172
        %3174 = vmax.xlane.f32.xlu0 %v3141
        %v3175 = vpop.xlane.xlu0 %3174
        %v3176 = vsub.f32 %v3082, %v3145
        %v3177 = vsub.f32 %v3085, %v3147
        %v3178 = vsub.f32 %v3090, %v3149
        %v3179 = vsub.f32 %v3093, %v3151
        %v3180 = vsub.f32 %v3098, %v3153
        %v3181 = vsub.f32 %v3101, %v3155
        %v3182 = vsub.f32 %v3106, %v3157
        %v3183 = vsub.f32 %v3109, %v3159
        %v3184 = vsub.f32 %v3114, %v3161
        %v3185 = vsub.f32 %v3117, %v3163
        %v3186 = vsub.f32 %v3122, %v3165
        %v3187 = vsub.f32 %v3125, %v3167
        %v3188 = vsub.f32 %v3130, %v3169
        %v3189 = vsub.f32 %v3133, %v3171
        %v3190 = vsub.f32 %v3138, %v3173
        %v3191 = vsub.f32 %v3141, %v3175
        %v3192 = vmul.f32 %v3176, 1.442695
        %v3193 = vpow.pop %v3192
        %v3194 = vmul.f32 %v3177, 1.442695
        %v3195 = vpow.pop %v3194
        %v3196 = vmul.f32 %v3178, 1.442695
        %v3197 = vpow.pop %v3196
        %v3198 = vmul.f32 %v3179, 1.442695
        %v3199 = vpow.pop %v3198
        %v3200 = vmul.f32 %v3180, 1.442695
        %v3201 = vpow.pop %v3200
        %v3202 = vmul.f32 %v3181, 1.442695
        %v3203 = vpow.pop %v3202
        %v3204 = vmul.f32 %v3182, 1.442695
        %v3205 = vpow.pop %v3204
        %v3206 = vmul.f32 %v3183, 1.442695
        %v3207 = vpow.pop %v3206
        %v3208 = vmul.f32 %v3184, 1.442695
        %v3209 = vpow.pop %v3208
        %v3210 = vmul.f32 %v3185, 1.442695
        %v3211 = vpow.pop %v3210
        %v3212 = vmul.f32 %v3186, 1.442695
        %v3213 = vpow.pop %v3212
        %v3214 = vmul.f32 %v3187, 1.442695
        %v3215 = vpow.pop %v3214
        %v3216 = vmul.f32 %v3188, 1.442695
        %v3217 = vpow.pop %v3216
        %v3218 = vmul.f32 %v3189, 1.442695
        %v3219 = vpow.pop %v3218
        %v3220 = vmul.f32 %v3190, 1.442695
        %v3221 = vpow.pop %v3220
        %v3222 = vmul.f32 %v3191, 1.442695
        %v3223 = vpow.pop %v3222
        %3224 = vadd.xlane.f32.xlu0 %v3193
        %v3225 = vpop.xlane.xlu0 %3224
        %3226 = vadd.xlane.f32.xlu0 %v3195
        %v3227 = vpop.xlane.xlu0 %3226
        %3228 = vadd.xlane.f32.xlu0 %v3197
        %v3229 = vpop.xlane.xlu0 %3228
        %3230 = vadd.xlane.f32.xlu0 %v3199
        %v3231 = vpop.xlane.xlu0 %3230
        %3232 = vadd.xlane.f32.xlu0 %v3201
        %v3233 = vpop.xlane.xlu0 %3232
        %3234 = vadd.xlane.f32.xlu0 %v3203
        %v3235 = vpop.xlane.xlu0 %3234
        %3236 = vadd.xlane.f32.xlu0 %v3205
        %v3237 = vpop.xlane.xlu0 %3236
        %3238 = vadd.xlane.f32.xlu0 %v3207
        %v3239 = vpop.xlane.xlu0 %3238
        %3240 = vadd.xlane.f32.xlu0 %v3209
        %v3241 = vpop.xlane.xlu0 %3240
        %3242 = vadd.xlane.f32.xlu0 %v3211
        %v3243 = vpop.xlane.xlu0 %3242
        %3244 = vadd.xlane.f32.xlu0 %v3213
        %v3245 = vpop.xlane.xlu0 %3244
        %3246 = vadd.xlane.f32.xlu0 %v3215
        %v3247 = vpop.xlane.xlu0 %3246
        %3248 = vadd.xlane.f32.xlu0 %v3217
        %v3249 = vpop.xlane.xlu0 %3248
        %3250 = vadd.xlane.f32.xlu0 %v3219
        %v3251 = vpop.xlane.xlu0 %3250
        %3252 = vadd.xlane.f32.xlu0 %v3221
        %v3253 = vpop.xlane.xlu0 %3252
        %3254 = vadd.xlane.f32.xlu0 %v3223
        %v3255 = vpop.xlane.xlu0 %3254
        %v3256 = vrcp.pop %v3225
        %v3257 = vrcp.pop %v3227
        %v3258 = vrcp.pop %v3229
        %v3259 = vrcp.pop %v3231
        %v3260 = vrcp.pop %v3233
        %v3261 = vrcp.pop %v3235
        %v3262 = vrcp.pop %v3237
        %v3263 = vrcp.pop %v3239
        %v3264 = vrcp.pop %v3241
        %v3265 = vrcp.pop %v3243
        %v3266 = vrcp.pop %v3245
        %v3267 = vrcp.pop %v3247
        %v3268 = vrcp.pop %v3249
        %v3269 = vrcp.pop %v3251
        %v3270 = vrcp.pop %v3253
        %v3271 = vrcp.pop %v3255
        %v3272 = vmul.f32 %v3193, %v3256
        %v3273 = vmul.f32 %v3195, %v3257
        %v3274 = vmul.f32 %v3197, %v3258
        %v3275 = vmul.f32 %v3199, %v3259
        %v3276 = vmul.f32 %v3201, %v3260
        %v3277 = vmul.f32 %v3203, %v3261
        %v3278 = vmul.f32 %v3205, %v3262
        %v3279 = vmul.f32 %v3207, %v3263
        %v3280 = vmul.f32 %v3209, %v3264
        %v3281 = vmul.f32 %v3211, %v3265
        %v3282 = vmul.f32 %v3213, %v3266
        %v3283 = vmul.f32 %v3215, %v3267
        %v3284 = vmul.f32 %v3217, %v3268
        %v3285 = vmul.f32 %v3219, %v3269
        %v3286 = vmul.f32 %v3221, %v3270
        %v3287 = vmul.f32 %v3223, %v3271
        %v3288 = vpack.c.bf16 %v3273, %v3272
        %v3289 = vpack.c.bf16 %v3275, %v3274
        %v3290 = vpack.c.bf16 %v3277, %v3276
        %v3291 = vpack.c.bf16 %v3279, %v3278
        %v3292 = vpack.c.bf16 %v3281, %v3280
        %v3293 = vpack.c.bf16 %v3283, %v3282
        %v3294 = vpack.c.bf16 %v3285, %v3284
        %v3295 = vpack.c.bf16 %v3287, %v3286
        %3296 = vmatprep.subr.bf16.mxu0 0
        %3297 = vmatpush1.bf16.msra.mxu0 %v3295
        %3298 = vmatprep.subr.bf16.mxu0 0
        %3299 = vmatpush1.bf16.msra.mxu0 %v3294
        %3300 = vmatprep.subr.bf16.mxu0 0
        %3301 = vmatpush1.bf16.msra.mxu0 %v3293
        %3302 = vmatprep.subr.bf16.mxu0 0
        %3303 = vmatpush1.bf16.msra.mxu0 %v3292
        %3304 = vmatprep.subr.bf16.mxu0 0
        %3305 = vmatpush1.bf16.msra.mxu0 %v3291
        %3306 = vmatprep.subr.bf16.mxu0 0
        %3307 = vmatpush1.bf16.msra.mxu0 %v3290
        %3308 = vmatprep.subr.bf16.mxu0 0
        %3309 = vmatpush1.bf16.msra.mxu0 %v3289
        %3310 = vmatprep.subr.bf16.mxu0 0
        %3311 = vmatpush1.bf16.msra.mxu0 %v3288
        %3312 = vmatprep.subr.bf16.mxu0 0
        %3313 = vmatpush2.bf16.msra.mxu0 0
        %3314 = vmatprep.subr.bf16.mxu0 0
        %3315 = vmatpush2.bf16.msra.mxu0 0
        %3316 = vmatprep.subr.bf16.mxu0 0
        %3317 = vmatpush2.bf16.msra.mxu0 0
        %3318 = vmatprep.subr.bf16.mxu0 0
        %3319 = vmatpush2.bf16.msra.mxu0 0
        %3320 = vmatprep.subr.bf16.mxu0 0
        %3321 = vmatpush2.bf16.msra.mxu0 0
        %3322 = vmatprep.subr.bf16.mxu0 0
        %3323 = vmatpush2.bf16.msra.mxu0 0
        %3324 = vmatprep.subr.bf16.mxu0 0
        %3325 = vmatpush2.bf16.msra.mxu0 0
        %3326 = vmatprep.subr.bf16.mxu0 0
        %3327 = vmatpush2.bf16.msra.mxu0 0
        %3328 = vmatprep.mubr.bf16.mxu0 0
        %3329 = vmatmul.mubr.bf16.gmra.mxu0 %v949
        %v3330 = vpop.f32.mrf.mxu0
        %v3331 = vadd.f32 0.0, %v3330
        %v3332 = vpop.f32.mrf.mxu0
        %v3333 = vpop.f32.mrf.mxu0
        %v3334 = vadd.f32 0.0, %v3333
        %v3335 = vpop.f32.mrf.mxu0
        %3336 = vmatprep.mubr.bf16.mxu0 0
        %3337 = vmatmul.mubr.bf16.gmra.mxu0 %v957
        %v3338 = vpop.f32.mrf.mxu0
        %v3339 = vadd.f32 0.0, %v3338
        %v3340 = vpop.f32.mrf.mxu0
        %v3341 = vpop.f32.mrf.mxu0
        %v3342 = vadd.f32 0.0, %v3341
        %v3343 = vpop.f32.mrf.mxu0
        %3344 = vmatprep.mubr.bf16.mxu0 0
        %3345 = vmatmul.mubr.bf16.gmra.mxu0 %v965
        %v3346 = vpop.f32.mrf.mxu0
        %v3347 = vadd.f32 0.0, %v3346
        %v3348 = vpop.f32.mrf.mxu0
        %v3349 = vpop.f32.mrf.mxu0
        %v3350 = vadd.f32 0.0, %v3349
        %v3351 = vpop.f32.mrf.mxu0
        %3352 = vmatprep.mubr.bf16.mxu0 0
        %3353 = vmatmul.mubr.bf16.gmra.mxu0 %v973
        %v3354 = vpop.f32.mrf.mxu0
        %v3355 = vadd.f32 0.0, %v3354
        %v3356 = vpop.f32.mrf.mxu0
        %v3357 = vpop.f32.mrf.mxu0
        %v3358 = vadd.f32 0.0, %v3357
        %v3359 = vpop.f32.mrf.mxu0
        %3360 = vdwg.mxu0
        %v3361 = vmul.f32 %v1336, %v3331
        %v3362 = vmul.f32 %v1336, %v3334
        %v3363 = vmul.f32 %v1336, %v3339
        %v3364 = vmul.f32 %v1336, %v3342
        %v3365 = vmul.f32 %v1336, %v3347
        %v3366 = vmul.f32 %v1336, %v3350
        %v3367 = vmul.f32 %v1336, %v3355
        %v3368 = vmul.f32 %v1336, %v3358
        %v3369 = vadd.f32 %v3361, %v304
        %v3370 = vadd.f32 %v3362, %v312
        %v3371 = vadd.f32 %v3363, %v320
        %v3372 = vadd.f32 %v3364, %v328
        %v3373 = vadd.f32 %v3365, %v336
        %v3374 = vadd.f32 %v3366, %v344
        %v3375 = vadd.f32 %v3367, %v352
        %v3376 = vadd.f32 %v3368, %v360
        %v3377 = vmul.f32 %v304, %v3369
        %v3378 = vmul.f32 %v312, %v3370
        %v3379 = vmul.f32 %v320, %v3371
        %v3380 = vmul.f32 %v328, %v3372
        %v3381 = vmul.f32 %v336, %v3373
        %v3382 = vmul.f32 %v344, %v3374
        %v3383 = vmul.f32 %v352, %v3375
        %v3384 = vmul.f32 %v360, %v3376
        %s3385 = scalar_lea.vmem [#allocation2], 5
        %3386 = vst [vmem:[%s3385] ss:$8 sm:$0xf] %v3377
        %3387 = vst [vmem:[%s3385] ss:$8 sm:$0xf0] %v3377
        %s3388 = scalar_lea.vmem [#allocation2], 69
        %3389 = vst [vmem:[%s3388] ss:$8 sm:$0xf] %v3378
        %3390 = vst [vmem:[%s3388] ss:$8 sm:$0xf0] %v3378
        %s3391 = scalar_lea.vmem [#allocation2], 133
        %3392 = vst [vmem:[%s3391] ss:$8 sm:$0xf] %v3379
        %3393 = vst [vmem:[%s3391] ss:$8 sm:$0xf0] %v3379
        %s3394 = scalar_lea.vmem [#allocation2], 197
        %3395 = vst [vmem:[%s3394] ss:$8 sm:$0xf] %v3380
        %3396 = vst [vmem:[%s3394] ss:$8 sm:$0xf0] %v3380
        %s3397 = scalar_lea.vmem [#allocation2], 261
        %3398 = vst [vmem:[%s3397] ss:$8 sm:$0xf] %v3381
        %3399 = vst [vmem:[%s3397] ss:$8 sm:$0xf0] %v3381
        %s3400 = scalar_lea.vmem [#allocation2], 325
        %3401 = vst [vmem:[%s3400] ss:$8 sm:$0xf] %v3382
        %3402 = vst [vmem:[%s3400] ss:$8 sm:$0xf0] %v3382
        %s3403 = scalar_lea.vmem [#allocation2], 389
        %3404 = vst [vmem:[%s3403] ss:$8 sm:$0xf] %v3383
        %3405 = vst [vmem:[%s3403] ss:$8 sm:$0xf0] %v3383
        %s3406 = scalar_lea.vmem [#allocation2], 453
        %3407 = vst [vmem:[%s3406] ss:$8 sm:$0xf] %v3384
        %3408 = vst [vmem:[%s3406] ss:$8 sm:$0xf0] %v3384
        %3409 = vxpose.xlu0.c.b16.start [1/8] %v934, 128
        %3410 = vxpose.xlu0.c.b16.cont [2/8] 0, 128
        %3411 = vxpose.xlu0.c.b16.cont [3/8] 0, 128
        %3412 = vxpose.xlu0.c.b16.cont [4/8] 0, 128
        %3413 = vxpose.xlu0.c.b16.cont [5/8] 0, 128
        %3414 = vxpose.xlu0.c.b16.cont [6/8] 0, 128
        %3415 = vxpose.xlu0.c.b16.cont [7/8] 0, 128
        %3416 = vxpose.xlu0.c.b16.end [8/8] 0, 128
        %v3417 = vpop.trf.xlu0
        %v3418 = vpop.trf.xlu0
        %v3419 = vpop.trf.xlu0
        %v3420 = vpop.trf.xlu0
        %v3421 = vpop.trf.xlu0
        %v3422 = vpop.trf.xlu0
        %v3423 = vpop.trf.xlu0
        %v3424 = vpop.trf.xlu0
        %v3426 = vsel %vm993, %v3417, 0
        %v3429 = vsel %vm993, %v3418, 0
        %v3432 = vsel %vm993, %v3419, 0
        %v3435 = vsel %vm993, %v3420, 0
        %v3438 = vsel %vm993, %v3421, 0
        %v3441 = vsel %vm993, %v3422, 0
        %v3444 = vsel %vm993, %v3423, 0
        %v3447 = vsel %vm993, %v3424, 0
        %v3450 = vsel %vm1018, %v942, 0
        %3452 = vmatprep.subr.bf16.mxu0 0
        %3453 = vmatpush1.bf16.msra.mxu0 0
        %3454 = vmatprep.subr.bf16.mxu0 0
        %3455 = vmatpush1.bf16.msra.mxu0 0
        %3456 = vmatprep.subr.bf16.mxu0 0
        %3457 = vmatpush1.bf16.msra.mxu0 0
        %3458 = vmatprep.subr.bf16.mxu0 0
        %3459 = vmatpush1.bf16.msra.mxu0 0
        %3460 = vmatprep.subr.bf16.mxu0 0
        %3461 = vmatpush1.bf16.msra.mxu0 0
        %3462 = vmatprep.subr.bf16.mxu0 0
        %3463 = vmatpush1.bf16.msra.mxu0 0
        %3464 = vmatprep.subr.bf16.mxu0 0
        %3465 = vmatpush1.bf16.msra.mxu0 0
        %3466 = vmatprep.subr.bf16.mxu0 0
        %3467 = vmatpush1.bf16.msra.mxu0 %v3450
        %3468 = vmatprep.subr.bf16.mxu0 0
        %3469 = vmatpush2.bf16.msra.mxu0 0
        %3470 = vmatprep.subr.bf16.mxu0 0
        %3471 = vmatpush2.bf16.msra.mxu0 0
        %3472 = vmatprep.subr.bf16.mxu0 0
        %3473 = vmatpush2.bf16.msra.mxu0 0
        %3474 = vmatprep.subr.bf16.mxu0 0
        %3475 = vmatpush2.bf16.msra.mxu0 0
        %3476 = vmatprep.subr.bf16.mxu0 0
        %3477 = vmatpush2.bf16.msra.mxu0 0
        %3478 = vmatprep.subr.bf16.mxu0 0
        %3479 = vmatpush2.bf16.msra.mxu0 0
        %3480 = vmatprep.subr.bf16.mxu0 0
        %3481 = vmatpush2.bf16.msra.mxu0 0
        %3482 = vmatprep.subr.bf16.mxu0 0
        %3483 = vmatpush2.bf16.msra.mxu0 0
        %3484 = vmatprep.mubr.bf16.mxu0 0
        %3485 = vmatmul.mubr.bf16.gmra.mxu0 %v3426
        %v3486 = vpop.f32.mrf.mxu0
        %v3487 = vadd.f32 %v927, %v3486
        %v3488 = vpop.f32.mrf.mxu0
        %v3489 = vpop.f32.mrf.mxu0
        %v3490 = vadd.f32 %v927, %v3489
        %v3491 = vpop.f32.mrf.mxu0
        %3492 = vmatprep.mubr.bf16.mxu0 0
        %3493 = vmatmul.mubr.bf16.gmra.mxu0 %v3429
        %v3494 = vpop.f32.mrf.mxu0
        %v3495 = vadd.f32 %v927, %v3494
        %v3496 = vpop.f32.mrf.mxu0
        %v3497 = vpop.f32.mrf.mxu0
        %v3498 = vadd.f32 %v927, %v3497
        %v3499 = vpop.f32.mrf.mxu0
        %3500 = vmatprep.mubr.bf16.mxu0 0
        %3501 = vmatmul.mubr.bf16.gmra.mxu0 %v3432
        %v3502 = vpop.f32.mrf.mxu0
        %v3503 = vadd.f32 %v927, %v3502
        %v3504 = vpop.f32.mrf.mxu0
        %v3505 = vpop.f32.mrf.mxu0
        %v3506 = vadd.f32 %v927, %v3505
        %v3507 = vpop.f32.mrf.mxu0
        %3508 = vmatprep.mubr.bf16.mxu0 0
        %3509 = vmatmul.mubr.bf16.gmra.mxu0 %v3435
        %v3510 = vpop.f32.mrf.mxu0
        %v3511 = vadd.f32 %v927, %v3510
        %v3512 = vpop.f32.mrf.mxu0
        %v3513 = vpop.f32.mrf.mxu0
        %v3514 = vadd.f32 %v927, %v3513
        %v3515 = vpop.f32.mrf.mxu0
        %3516 = vmatprep.mubr.bf16.mxu0 0
        %3517 = vmatmul.mubr.bf16.gmra.mxu0 %v3438
        %v3518 = vpop.f32.mrf.mxu0
        %v3519 = vadd.f32 %v927, %v3518
        %v3520 = vpop.f32.mrf.mxu0
        %v3521 = vpop.f32.mrf.mxu0
        %v3522 = vadd.f32 %v927, %v3521
        %v3523 = vpop.f32.mrf.mxu0
        %3524 = vmatprep.mubr.bf16.mxu0 0
        %3525 = vmatmul.mubr.bf16.gmra.mxu0 %v3441
        %v3526 = vpop.f32.mrf.mxu0
        %v3527 = vadd.f32 %v927, %v3526
        %v3528 = vpop.f32.mrf.mxu0
        %v3529 = vpop.f32.mrf.mxu0
        %v3530 = vadd.f32 %v927, %v3529
        %v3531 = vpop.f32.mrf.mxu0
        %3532 = vmatprep.mubr.bf16.mxu0 0
        %3533 = vmatmul.mubr.bf16.gmra.mxu0 %v3444
        %v3534 = vpop.f32.mrf.mxu0
        %v3535 = vadd.f32 %v927, %v3534
        %v3536 = vpop.f32.mrf.mxu0
        %v3537 = vpop.f32.mrf.mxu0
        %v3538 = vadd.f32 %v927, %v3537
        %v3539 = vpop.f32.mrf.mxu0
        %3540 = vmatprep.mubr.bf16.mxu0 0
        %3541 = vmatmul.mubr.bf16.gmra.mxu0 %v3447
        %v3542 = vpop.f32.mrf.mxu0
        %v3543 = vadd.f32 %v927, %v3542
        %v3544 = vpop.f32.mrf.mxu0
        %v3545 = vpop.f32.mrf.mxu0
        %v3546 = vadd.f32 %v927, %v3545
        %v3547 = vpop.f32.mrf.mxu0
        %3548 = vdwg.mxu0
        %3549 = vmax.xlane.f32.xlu0 %v3487
        %v3550 = vpop.xlane.xlu0 %3549
        %3551 = vmax.xlane.f32.xlu0 %v3490
        %v3552 = vpop.xlane.xlu0 %3551
        %3553 = vmax.xlane.f32.xlu0 %v3495
        %v3554 = vpop.xlane.xlu0 %3553
        %3555 = vmax.xlane.f32.xlu0 %v3498
        %v3556 = vpop.xlane.xlu0 %3555
        %3557 = vmax.xlane.f32.xlu0 %v3503
        %v3558 = vpop.xlane.xlu0 %3557
        %3559 = vmax.xlane.f32.xlu0 %v3506
        %v3560 = vpop.xlane.xlu0 %3559
        %3561 = vmax.xlane.f32.xlu0 %v3511
        %v3562 = vpop.xlane.xlu0 %3561
        %3563 = vmax.xlane.f32.xlu0 %v3514
        %v3564 = vpop.xlane.xlu0 %3563
        %3565 = vmax.xlane.f32.xlu0 %v3519
        %v3566 = vpop.xlane.xlu0 %3565
        %3567 = vmax.xlane.f32.xlu0 %v3522
        %v3568 = vpop.xlane.xlu0 %3567
        %3569 = vmax.xlane.f32.xlu0 %v3527
        %v3570 = vpop.xlane.xlu0 %3569
        %3571 = vmax.xlane.f32.xlu0 %v3530
        %v3572 = vpop.xlane.xlu0 %3571
        %3573 = vmax.xlane.f32.xlu0 %v3535
        %v3574 = vpop.xlane.xlu0 %3573
        %3575 = vmax.xlane.f32.xlu0 %v3538
        %v3576 = vpop.xlane.xlu0 %3575
        %3577 = vmax.xlane.f32.xlu0 %v3543
        %v3578 = vpop.xlane.xlu0 %3577
        %3579 = vmax.xlane.f32.xlu0 %v3546
        %v3580 = vpop.xlane.xlu0 %3579
        %v3581 = vsub.f32 %v3487, %v3550
        %v3582 = vsub.f32 %v3490, %v3552
        %v3583 = vsub.f32 %v3495, %v3554
        %v3584 = vsub.f32 %v3498, %v3556
        %v3585 = vsub.f32 %v3503, %v3558
        %v3586 = vsub.f32 %v3506, %v3560
        %v3587 = vsub.f32 %v3511, %v3562
        %v3588 = vsub.f32 %v3514, %v3564
        %v3589 = vsub.f32 %v3519, %v3566
        %v3590 = vsub.f32 %v3522, %v3568
        %v3591 = vsub.f32 %v3527, %v3570
        %v3592 = vsub.f32 %v3530, %v3572
        %v3593 = vsub.f32 %v3535, %v3574
        %v3594 = vsub.f32 %v3538, %v3576
        %v3595 = vsub.f32 %v3543, %v3578
        %v3596 = vsub.f32 %v3546, %v3580
        %v3597 = vmul.f32 %v3581, 1.442695
        %v3598 = vpow.pop %v3597
        %v3599 = vmul.f32 %v3582, 1.442695
        %v3600 = vpow.pop %v3599
        %v3601 = vmul.f32 %v3583, 1.442695
        %v3602 = vpow.pop %v3601
        %v3603 = vmul.f32 %v3584, 1.442695
        %v3604 = vpow.pop %v3603
        %v3605 = vmul.f32 %v3585, 1.442695
        %v3606 = vpow.pop %v3605
        %v3607 = vmul.f32 %v3586, 1.442695
        %v3608 = vpow.pop %v3607
        %v3609 = vmul.f32 %v3587, 1.442695
        %v3610 = vpow.pop %v3609
        %v3611 = vmul.f32 %v3588, 1.442695
        %v3612 = vpow.pop %v3611
        %v3613 = vmul.f32 %v3589, 1.442695
        %v3614 = vpow.pop %v3613
        %v3615 = vmul.f32 %v3590, 1.442695
        %v3616 = vpow.pop %v3615
        %v3617 = vmul.f32 %v3591, 1.442695
        %v3618 = vpow.pop %v3617
        %v3619 = vmul.f32 %v3592, 1.442695
        %v3620 = vpow.pop %v3619
        %v3621 = vmul.f32 %v3593, 1.442695
        %v3622 = vpow.pop %v3621
        %v3623 = vmul.f32 %v3594, 1.442695
        %v3624 = vpow.pop %v3623
        %v3625 = vmul.f32 %v3595, 1.442695
        %v3626 = vpow.pop %v3625
        %v3627 = vmul.f32 %v3596, 1.442695
        %v3628 = vpow.pop %v3627
        %3629 = vadd.xlane.f32.xlu0 %v3598
        %v3630 = vpop.xlane.xlu0 %3629
        %3631 = vadd.xlane.f32.xlu0 %v3600
        %v3632 = vpop.xlane.xlu0 %3631
        %3633 = vadd.xlane.f32.xlu0 %v3602
        %v3634 = vpop.xlane.xlu0 %3633
        %3635 = vadd.xlane.f32.xlu0 %v3604
        %v3636 = vpop.xlane.xlu0 %3635
        %3637 = vadd.xlane.f32.xlu0 %v3606
        %v3638 = vpop.xlane.xlu0 %3637
        %3639 = vadd.xlane.f32.xlu0 %v3608
        %v3640 = vpop.xlane.xlu0 %3639
        %3641 = vadd.xlane.f32.xlu0 %v3610
        %v3642 = vpop.xlane.xlu0 %3641
        %3643 = vadd.xlane.f32.xlu0 %v3612
        %v3644 = vpop.xlane.xlu0 %3643
        %3645 = vadd.xlane.f32.xlu0 %v3614
        %v3646 = vpop.xlane.xlu0 %3645
        %3647 = vadd.xlane.f32.xlu0 %v3616
        %v3648 = vpop.xlane.xlu0 %3647
        %3649 = vadd.xlane.f32.xlu0 %v3618
        %v3650 = vpop.xlane.xlu0 %3649
        %3651 = vadd.xlane.f32.xlu0 %v3620
        %v3652 = vpop.xlane.xlu0 %3651
        %3653 = vadd.xlane.f32.xlu0 %v3622
        %v3654 = vpop.xlane.xlu0 %3653
        %3655 = vadd.xlane.f32.xlu0 %v3624
        %v3656 = vpop.xlane.xlu0 %3655
        %3657 = vadd.xlane.f32.xlu0 %v3626
        %v3658 = vpop.xlane.xlu0 %3657
        %3659 = vadd.xlane.f32.xlu0 %v3628
        %v3660 = vpop.xlane.xlu0 %3659
        %v3661 = vrcp.pop %v3630
        %v3662 = vrcp.pop %v3632
        %v3663 = vrcp.pop %v3634
        %v3664 = vrcp.pop %v3636
        %v3665 = vrcp.pop %v3638
        %v3666 = vrcp.pop %v3640
        %v3667 = vrcp.pop %v3642
        %v3668 = vrcp.pop %v3644
        %v3669 = vrcp.pop %v3646
        %v3670 = vrcp.pop %v3648
        %v3671 = vrcp.pop %v3650
        %v3672 = vrcp.pop %v3652
        %v3673 = vrcp.pop %v3654
        %v3674 = vrcp.pop %v3656
        %v3675 = vrcp.pop %v3658
        %v3676 = vrcp.pop %v3660
        %v3677 = vmul.f32 %v3598, %v3661
        %v3678 = vmul.f32 %v3600, %v3662
        %v3679 = vmul.f32 %v3602, %v3663
        %v3680 = vmul.f32 %v3604, %v3664
        %v3681 = vmul.f32 %v3606, %v3665
        %v3682 = vmul.f32 %v3608, %v3666
        %v3683 = vmul.f32 %v3610, %v3667
        %v3684 = vmul.f32 %v3612, %v3668
        %v3685 = vmul.f32 %v3614, %v3669
        %v3686 = vmul.f32 %v3616, %v3670
        %v3687 = vmul.f32 %v3618, %v3671
        %v3688 = vmul.f32 %v3620, %v3672
        %v3689 = vmul.f32 %v3622, %v3673
        %v3690 = vmul.f32 %v3624, %v3674
        %v3691 = vmul.f32 %v3626, %v3675
        %v3692 = vmul.f32 %v3628, %v3676
        %v3693 = vpack.c.bf16 %v3678, %v3677
        %v3694 = vpack.c.bf16 %v3680, %v3679
        %v3695 = vpack.c.bf16 %v3682, %v3681
        %v3696 = vpack.c.bf16 %v3684, %v3683
        %v3697 = vpack.c.bf16 %v3686, %v3685
        %v3698 = vpack.c.bf16 %v3688, %v3687
        %v3699 = vpack.c.bf16 %v3690, %v3689
        %v3700 = vpack.c.bf16 %v3692, %v3691
        %3701 = vmatprep.subr.bf16.mxu0 0
        %3702 = vmatpush1.bf16.msra.mxu0 %v3700
        %3703 = vmatprep.subr.bf16.mxu0 0
        %3704 = vmatpush1.bf16.msra.mxu0 %v3699
        %3705 = vmatprep.subr.bf16.mxu0 0
        %3706 = vmatpush1.bf16.msra.mxu0 %v3698
        %3707 = vmatprep.subr.bf16.mxu0 0
        %3708 = vmatpush1.bf16.msra.mxu0 %v3697
        %3709 = vmatprep.subr.bf16.mxu0 0
        %3710 = vmatpush1.bf16.msra.mxu0 %v3696
        %3711 = vmatprep.subr.bf16.mxu0 0
        %3712 = vmatpush1.bf16.msra.mxu0 %v3695
        %3713 = vmatprep.subr.bf16.mxu0 0
        %3714 = vmatpush1.bf16.msra.mxu0 %v3694
        %3715 = vmatprep.subr.bf16.mxu0 0
        %3716 = vmatpush1.bf16.msra.mxu0 %v3693
        %3717 = vmatprep.subr.bf16.mxu0 0
        %3718 = vmatpush2.bf16.msra.mxu0 0
        %3719 = vmatprep.subr.bf16.mxu0 0
        %3720 = vmatpush2.bf16.msra.mxu0 0
        %3721 = vmatprep.subr.bf16.mxu0 0
        %3722 = vmatpush2.bf16.msra.mxu0 0
        %3723 = vmatprep.subr.bf16.mxu0 0
        %3724 = vmatpush2.bf16.msra.mxu0 0
        %3725 = vmatprep.subr.bf16.mxu0 0
        %3726 = vmatpush2.bf16.msra.mxu0 0
        %3727 = vmatprep.subr.bf16.mxu0 0
        %3728 = vmatpush2.bf16.msra.mxu0 0
        %3729 = vmatprep.subr.bf16.mxu0 0
        %3730 = vmatpush2.bf16.msra.mxu0 0
        %3731 = vmatprep.subr.bf16.mxu0 0
        %3732 = vmatpush2.bf16.msra.mxu0 0
        %3733 = vmatprep.mubr.bf16.mxu0 0
        %3734 = vmatmul.mubr.bf16.gmra.mxu0 %v950
        %v3735 = vpop.f32.mrf.mxu0
        %v3736 = vadd.f32 0.0, %v3735
        %v3737 = vpop.f32.mrf.mxu0
        %v3738 = vpop.f32.mrf.mxu0
        %v3739 = vadd.f32 0.0, %v3738
        %v3740 = vpop.f32.mrf.mxu0
        %3741 = vmatprep.mubr.bf16.mxu0 0
        %3742 = vmatmul.mubr.bf16.gmra.mxu0 %v958
        %v3743 = vpop.f32.mrf.mxu0
        %v3744 = vadd.f32 0.0, %v3743
        %v3745 = vpop.f32.mrf.mxu0
        %v3746 = vpop.f32.mrf.mxu0
        %v3747 = vadd.f32 0.0, %v3746
        %v3748 = vpop.f32.mrf.mxu0
        %3749 = vmatprep.mubr.bf16.mxu0 0
        %3750 = vmatmul.mubr.bf16.gmra.mxu0 %v966
        %v3751 = vpop.f32.mrf.mxu0
        %v3752 = vadd.f32 0.0, %v3751
        %v3753 = vpop.f32.mrf.mxu0
        %v3754 = vpop.f32.mrf.mxu0
        %v3755 = vadd.f32 0.0, %v3754
        %v3756 = vpop.f32.mrf.mxu0
        %3757 = vmatprep.mubr.bf16.mxu0 0
        %3758 = vmatmul.mubr.bf16.gmra.mxu0 %v974
        %v3759 = vpop.f32.mrf.mxu0
        %v3760 = vadd.f32 0.0, %v3759
        %v3761 = vpop.f32.mrf.mxu0
        %v3762 = vpop.f32.mrf.mxu0
        %v3763 = vadd.f32 0.0, %v3762
        %v3764 = vpop.f32.mrf.mxu0
        %3765 = vdwg.mxu0
        %v3766 = vmul.f32 %v1336, %v3736
        %v3767 = vmul.f32 %v1336, %v3739
        %v3768 = vmul.f32 %v1336, %v3744
        %v3769 = vmul.f32 %v1336, %v3747
        %v3770 = vmul.f32 %v1336, %v3752
        %v3771 = vmul.f32 %v1336, %v3755
        %v3772 = vmul.f32 %v1336, %v3760
        %v3773 = vmul.f32 %v1336, %v3763
        %v3774 = vadd.f32 %v3766, %v305
        %v3775 = vadd.f32 %v3767, %v313
        %v3776 = vadd.f32 %v3768, %v321
        %v3777 = vadd.f32 %v3769, %v329
        %v3778 = vadd.f32 %v3770, %v337
        %v3779 = vadd.f32 %v3771, %v345
        %v3780 = vadd.f32 %v3772, %v353
        %v3781 = vadd.f32 %v3773, %v361
        %v3782 = vmul.f32 %v305, %v3774
        %v3783 = vmul.f32 %v313, %v3775
        %v3784 = vmul.f32 %v321, %v3776
        %v3785 = vmul.f32 %v329, %v3777
        %v3786 = vmul.f32 %v337, %v3778
        %v3787 = vmul.f32 %v345, %v3779
        %v3788 = vmul.f32 %v353, %v3780
        %v3789 = vmul.f32 %v361, %v3781
        %s3790 = scalar_lea.vmem [#allocation2], 6
        %3791 = vst [vmem:[%s3790] ss:$8 sm:$0xf] %v3782
        %3792 = vst [vmem:[%s3790] ss:$8 sm:$0xf0] %v3782
        %s3793 = scalar_lea.vmem [#allocation2], 70
        %3794 = vst [vmem:[%s3793] ss:$8 sm:$0xf] %v3783
        %3795 = vst [vmem:[%s3793] ss:$8 sm:$0xf0] %v3783
        %s3796 = scalar_lea.vmem [#allocation2], 134
        %3797 = vst [vmem:[%s3796] ss:$8 sm:$0xf] %v3784
        %3798 = vst [vmem:[%s3796] ss:$8 sm:$0xf0] %v3784
        %s3799 = scalar_lea.vmem [#allocation2], 198
        %3800 = vst [vmem:[%s3799] ss:$8 sm:$0xf] %v3785
        %3801 = vst [vmem:[%s3799] ss:$8 sm:$0xf0] %v3785
        %s3802 = scalar_lea.vmem [#allocation2], 262
        %3803 = vst [vmem:[%s3802] ss:$8 sm:$0xf] %v3786
        %3804 = vst [vmem:[%s3802] ss:$8 sm:$0xf0] %v3786
        %s3805 = scalar_lea.vmem [#allocation2], 326
        %3806 = vst [vmem:[%s3805] ss:$8 sm:$0xf] %v3787
        %3807 = vst [vmem:[%s3805] ss:$8 sm:$0xf0] %v3787
        %s3808 = scalar_lea.vmem [#allocation2], 390
        %3809 = vst [vmem:[%s3808] ss:$8 sm:$0xf] %v3788
        %3810 = vst [vmem:[%s3808] ss:$8 sm:$0xf0] %v3788
        %s3811 = scalar_lea.vmem [#allocation2], 454
        %3812 = vst [vmem:[%s3811] ss:$8 sm:$0xf] %v3789
        %3813 = vst [vmem:[%s3811] ss:$8 sm:$0xf0] %v3789
        %3814 = vxpose.xlu0.c.b16.start [1/8] %v935, 128
        %3815 = vxpose.xlu0.c.b16.cont [2/8] 0, 128
        %3816 = vxpose.xlu0.c.b16.cont [3/8] 0, 128
        %3817 = vxpose.xlu0.c.b16.cont [4/8] 0, 128
        %3818 = vxpose.xlu0.c.b16.cont [5/8] 0, 128
        %3819 = vxpose.xlu0.c.b16.cont [6/8] 0, 128
        %3820 = vxpose.xlu0.c.b16.cont [7/8] 0, 128
        %3821 = vxpose.xlu0.c.b16.end [8/8] 0, 128
        %v3822 = vpop.trf.xlu0
        %v3823 = vpop.trf.xlu0
        %v3824 = vpop.trf.xlu0
        %v3825 = vpop.trf.xlu0
        %v3826 = vpop.trf.xlu0
        %v3827 = vpop.trf.xlu0
        %v3828 = vpop.trf.xlu0
        %v3829 = vpop.trf.xlu0
        %v3831 = vsel %vm993, %v3822, 0
        %v3834 = vsel %vm993, %v3823, 0
        %v3837 = vsel %vm993, %v3824, 0
        %v3840 = vsel %vm993, %v3825, 0
        %v3843 = vsel %vm993, %v3826, 0
        %v3846 = vsel %vm993, %v3827, 0
        %v3849 = vsel %vm993, %v3828, 0
        %v3852 = vsel %vm993, %v3829, 0
        %v3855 = vsel %vm1018, %v943, 0
        %3857 = vmatprep.subr.bf16.mxu0 0
        %3858 = vmatpush1.bf16.msra.mxu0 0
        %3859 = vmatprep.subr.bf16.mxu0 0
        %3860 = vmatpush1.bf16.msra.mxu0 0
        %3861 = vmatprep.subr.bf16.mxu0 0
        %3862 = vmatpush1.bf16.msra.mxu0 0
        %3863 = vmatprep.subr.bf16.mxu0 0
        %3864 = vmatpush1.bf16.msra.mxu0 0
        %3865 = vmatprep.subr.bf16.mxu0 0
        %3866 = vmatpush1.bf16.msra.mxu0 0
        %3867 = vmatprep.subr.bf16.mxu0 0
        %3868 = vmatpush1.bf16.msra.mxu0 0
        %3869 = vmatprep.subr.bf16.mxu0 0
        %3870 = vmatpush1.bf16.msra.mxu0 0
        %3871 = vmatprep.subr.bf16.mxu0 0
        %3872 = vmatpush1.bf16.msra.mxu0 %v3855
        %3873 = vmatprep.subr.bf16.mxu0 0
        %3874 = vmatpush2.bf16.msra.mxu0 0
        %3875 = vmatprep.subr.bf16.mxu0 0
        %3876 = vmatpush2.bf16.msra.mxu0 0
        %3877 = vmatprep.subr.bf16.mxu0 0
        %3878 = vmatpush2.bf16.msra.mxu0 0
        %3879 = vmatprep.subr.bf16.mxu0 0
        %3880 = vmatpush2.bf16.msra.mxu0 0
        %3881 = vmatprep.subr.bf16.mxu0 0
        %3882 = vmatpush2.bf16.msra.mxu0 0
        %3883 = vmatprep.subr.bf16.mxu0 0
        %3884 = vmatpush2.bf16.msra.mxu0 0
        %3885 = vmatprep.subr.bf16.mxu0 0
        %3886 = vmatpush2.bf16.msra.mxu0 0
        %3887 = vmatprep.subr.bf16.mxu0 0
        %3888 = vmatpush2.bf16.msra.mxu0 0
        %3889 = vmatprep.mubr.bf16.mxu0 0
        %3890 = vmatmul.mubr.bf16.gmra.mxu0 %v3831
        %v3891 = vpop.f32.mrf.mxu0
        %v3892 = vadd.f32 %v927, %v3891
        %v3893 = vpop.f32.mrf.mxu0
        %v3894 = vpop.f32.mrf.mxu0
        %v3895 = vadd.f32 %v927, %v3894
        %v3896 = vpop.f32.mrf.mxu0
        %3897 = vmatprep.mubr.bf16.mxu0 0
        %3898 = vmatmul.mubr.bf16.gmra.mxu0 %v3834
        %v3899 = vpop.f32.mrf.mxu0
        %v3900 = vadd.f32 %v927, %v3899
        %v3901 = vpop.f32.mrf.mxu0
        %v3902 = vpop.f32.mrf.mxu0
        %v3903 = vadd.f32 %v927, %v3902
        %v3904 = vpop.f32.mrf.mxu0
        %3905 = vmatprep.mubr.bf16.mxu0 0
        %3906 = vmatmul.mubr.bf16.gmra.mxu0 %v3837
        %v3907 = vpop.f32.mrf.mxu0
        %v3908 = vadd.f32 %v927, %v3907
        %v3909 = vpop.f32.mrf.mxu0
        %v3910 = vpop.f32.mrf.mxu0
        %v3911 = vadd.f32 %v927, %v3910
        %v3912 = vpop.f32.mrf.mxu0
        %3913 = vmatprep.mubr.bf16.mxu0 0
        %3914 = vmatmul.mubr.bf16.gmra.mxu0 %v3840
        %v3915 = vpop.f32.mrf.mxu0
        %v3916 = vadd.f32 %v927, %v3915
        %v3917 = vpop.f32.mrf.mxu0
        %v3918 = vpop.f32.mrf.mxu0
        %v3919 = vadd.f32 %v927, %v3918
        %v3920 = vpop.f32.mrf.mxu0
        %3921 = vmatprep.mubr.bf16.mxu0 0
        %3922 = vmatmul.mubr.bf16.gmra.mxu0 %v3843
        %v3923 = vpop.f32.mrf.mxu0
        %v3924 = vadd.f32 %v927, %v3923
        %v3925 = vpop.f32.mrf.mxu0
        %v3926 = vpop.f32.mrf.mxu0
        %v3927 = vadd.f32 %v927, %v3926
        %v3928 = vpop.f32.mrf.mxu0
        %3929 = vmatprep.mubr.bf16.mxu0 0
        %3930 = vmatmul.mubr.bf16.gmra.mxu0 %v3846
        %v3931 = vpop.f32.mrf.mxu0
        %v3932 = vadd.f32 %v927, %v3931
        %v3933 = vpop.f32.mrf.mxu0
        %v3934 = vpop.f32.mrf.mxu0
        %v3935 = vadd.f32 %v927, %v3934
        %v3936 = vpop.f32.mrf.mxu0
        %3937 = vmatprep.mubr.bf16.mxu0 0
        %3938 = vmatmul.mubr.bf16.gmra.mxu0 %v3849
        %v3939 = vpop.f32.mrf.mxu0
        %v3940 = vadd.f32 %v927, %v3939
        %v3941 = vpop.f32.mrf.mxu0
        %v3942 = vpop.f32.mrf.mxu0
        %v3943 = vadd.f32 %v927, %v3942
        %v3944 = vpop.f32.mrf.mxu0
        %3945 = vmatprep.mubr.bf16.mxu0 0
        %3946 = vmatmul.mubr.bf16.gmra.mxu0 %v3852
        %v3947 = vpop.f32.mrf.mxu0
        %v3948 = vadd.f32 %v927, %v3947
        %v3949 = vpop.f32.mrf.mxu0
        %v3950 = vpop.f32.mrf.mxu0
        %v3951 = vadd.f32 %v927, %v3950
        %v3952 = vpop.f32.mrf.mxu0
        %3953 = vdwg.mxu0
        %3954 = vmax.xlane.f32.xlu0 %v3892
        %v3955 = vpop.xlane.xlu0 %3954
        %3956 = vmax.xlane.f32.xlu0 %v3895
        %v3957 = vpop.xlane.xlu0 %3956
        %3958 = vmax.xlane.f32.xlu0 %v3900
        %v3959 = vpop.xlane.xlu0 %3958
        %3960 = vmax.xlane.f32.xlu0 %v3903
        %v3961 = vpop.xlane.xlu0 %3960
        %3962 = vmax.xlane.f32.xlu0 %v3908
        %v3963 = vpop.xlane.xlu0 %3962
        %3964 = vmax.xlane.f32.xlu0 %v3911
        %v3965 = vpop.xlane.xlu0 %3964
        %3966 = vmax.xlane.f32.xlu0 %v3916
        %v3967 = vpop.xlane.xlu0 %3966
        %3968 = vmax.xlane.f32.xlu0 %v3919
        %v3969 = vpop.xlane.xlu0 %3968
        %3970 = vmax.xlane.f32.xlu0 %v3924
        %v3971 = vpop.xlane.xlu0 %3970
        %3972 = vmax.xlane.f32.xlu0 %v3927
        %v3973 = vpop.xlane.xlu0 %3972
        %3974 = vmax.xlane.f32.xlu0 %v3932
        %v3975 = vpop.xlane.xlu0 %3974
        %3976 = vmax.xlane.f32.xlu0 %v3935
        %v3977 = vpop.xlane.xlu0 %3976
        %3978 = vmax.xlane.f32.xlu0 %v3940
        %v3979 = vpop.xlane.xlu0 %3978
        %3980 = vmax.xlane.f32.xlu0 %v3943
        %v3981 = vpop.xlane.xlu0 %3980
        %3982 = vmax.xlane.f32.xlu0 %v3948
        %v3983 = vpop.xlane.xlu0 %3982
        %3984 = vmax.xlane.f32.xlu0 %v3951
        %v3985 = vpop.xlane.xlu0 %3984
        %v3986 = vsub.f32 %v3892, %v3955
        %v3987 = vsub.f32 %v3895, %v3957
        %v3988 = vsub.f32 %v3900, %v3959
        %v3989 = vsub.f32 %v3903, %v3961
        %v3990 = vsub.f32 %v3908, %v3963
        %v3991 = vsub.f32 %v3911, %v3965
        %v3992 = vsub.f32 %v3916, %v3967
        %v3993 = vsub.f32 %v3919, %v3969
        %v3994 = vsub.f32 %v3924, %v3971
        %v3995 = vsub.f32 %v3927, %v3973
        %v3996 = vsub.f32 %v3932, %v3975
        %v3997 = vsub.f32 %v3935, %v3977
        %v3998 = vsub.f32 %v3940, %v3979
        %v3999 = vsub.f32 %v3943, %v3981
        %v4000 = vsub.f32 %v3948, %v3983
        %v4001 = vsub.f32 %v3951, %v3985
        %v4002 = vmul.f32 %v3986, 1.442695
        %v4003 = vpow.pop %v4002
        %v4004 = vmul.f32 %v3987, 1.442695
        %v4005 = vpow.pop %v4004
        %v4006 = vmul.f32 %v3988, 1.442695
        %v4007 = vpow.pop %v4006
        %v4008 = vmul.f32 %v3989, 1.442695
        %v4009 = vpow.pop %v4008
        %v4010 = vmul.f32 %v3990, 1.442695
        %v4011 = vpow.pop %v4010
        %v4012 = vmul.f32 %v3991, 1.442695
        %v4013 = vpow.pop %v4012
        %v4014 = vmul.f32 %v3992, 1.442695
        %v4015 = vpow.pop %v4014
        %v4016 = vmul.f32 %v3993, 1.442695
        %v4017 = vpow.pop %v4016
        %v4018 = vmul.f32 %v3994, 1.442695
        %v4019 = vpow.pop %v4018
        %v4020 = vmul.f32 %v3995, 1.442695
        %v4021 = vpow.pop %v4020
        %v4022 = vmul.f32 %v3996, 1.442695
        %v4023 = vpow.pop %v4022
        %v4024 = vmul.f32 %v3997, 1.442695
        %v4025 = vpow.pop %v4024
        %v4026 = vmul.f32 %v3998, 1.442695
        %v4027 = vpow.pop %v4026
        %v4028 = vmul.f32 %v3999, 1.442695
        %v4029 = vpow.pop %v4028
        %v4030 = vmul.f32 %v4000, 1.442695
        %v4031 = vpow.pop %v4030
        %v4032 = vmul.f32 %v4001, 1.442695
        %v4033 = vpow.pop %v4032
        %4034 = vadd.xlane.f32.xlu0 %v4003
        %v4035 = vpop.xlane.xlu0 %4034
        %4036 = vadd.xlane.f32.xlu0 %v4005
        %v4037 = vpop.xlane.xlu0 %4036
        %4038 = vadd.xlane.f32.xlu0 %v4007
        %v4039 = vpop.xlane.xlu0 %4038
        %4040 = vadd.xlane.f32.xlu0 %v4009
        %v4041 = vpop.xlane.xlu0 %4040
        %4042 = vadd.xlane.f32.xlu0 %v4011
        %v4043 = vpop.xlane.xlu0 %4042
        %4044 = vadd.xlane.f32.xlu0 %v4013
        %v4045 = vpop.xlane.xlu0 %4044
        %4046 = vadd.xlane.f32.xlu0 %v4015
        %v4047 = vpop.xlane.xlu0 %4046
        %4048 = vadd.xlane.f32.xlu0 %v4017
        %v4049 = vpop.xlane.xlu0 %4048
        %4050 = vadd.xlane.f32.xlu0 %v4019
        %v4051 = vpop.xlane.xlu0 %4050
        %4052 = vadd.xlane.f32.xlu0 %v4021
        %v4053 = vpop.xlane.xlu0 %4052
        %4054 = vadd.xlane.f32.xlu0 %v4023
        %v4055 = vpop.xlane.xlu0 %4054
        %4056 = vadd.xlane.f32.xlu0 %v4025
        %v4057 = vpop.xlane.xlu0 %4056
        %4058 = vadd.xlane.f32.xlu0 %v4027
        %v4059 = vpop.xlane.xlu0 %4058
        %4060 = vadd.xlane.f32.xlu0 %v4029
        %v4061 = vpop.xlane.xlu0 %4060
        %4062 = vadd.xlane.f32.xlu0 %v4031
        %v4063 = vpop.xlane.xlu0 %4062
        %4064 = vadd.xlane.f32.xlu0 %v4033
        %v4065 = vpop.xlane.xlu0 %4064
        %v4066 = vrcp.pop %v4035
        %v4067 = vrcp.pop %v4037
        %v4068 = vrcp.pop %v4039
        %v4069 = vrcp.pop %v4041
        %v4070 = vrcp.pop %v4043
        %v4071 = vrcp.pop %v4045
        %v4072 = vrcp.pop %v4047
        %v4073 = vrcp.pop %v4049
        %v4074 = vrcp.pop %v4051
        %v4075 = vrcp.pop %v4053
        %v4076 = vrcp.pop %v4055
        %v4077 = vrcp.pop %v4057
        %v4078 = vrcp.pop %v4059
        %v4079 = vrcp.pop %v4061
        %v4080 = vrcp.pop %v4063
        %v4081 = vrcp.pop %v4065
        %v4082 = vmul.f32 %v4003, %v4066
        %v4083 = vmul.f32 %v4005, %v4067
        %v4084 = vmul.f32 %v4007, %v4068
        %v4085 = vmul.f32 %v4009, %v4069
        %v4086 = vmul.f32 %v4011, %v4070
        %v4087 = vmul.f32 %v4013, %v4071
        %v4088 = vmul.f32 %v4015, %v4072
        %v4089 = vmul.f32 %v4017, %v4073
        %v4090 = vmul.f32 %v4019, %v4074
        %v4091 = vmul.f32 %v4021, %v4075
        %v4092 = vmul.f32 %v4023, %v4076
        %v4093 = vmul.f32 %v4025, %v4077
        %v4094 = vmul.f32 %v4027, %v4078
        %v4095 = vmul.f32 %v4029, %v4079
        %v4096 = vmul.f32 %v4031, %v4080
        %v4097 = vmul.f32 %v4033, %v4081
        %v4098 = vpack.c.bf16 %v4083, %v4082
        %v4099 = vpack.c.bf16 %v4085, %v4084
        %v4100 = vpack.c.bf16 %v4087, %v4086
        %v4101 = vpack.c.bf16 %v4089, %v4088
        %v4102 = vpack.c.bf16 %v4091, %v4090
        %v4103 = vpack.c.bf16 %v4093, %v4092
        %v4104 = vpack.c.bf16 %v4095, %v4094
        %v4105 = vpack.c.bf16 %v4097, %v4096
        %4106 = vmatprep.subr.bf16.mxu0 0
        %4107 = vmatpush1.bf16.msra.mxu0 %v4105
        %4108 = vmatprep.subr.bf16.mxu0 0
        %4109 = vmatpush1.bf16.msra.mxu0 %v4104
        %4110 = vmatprep.subr.bf16.mxu0 0
        %4111 = vmatpush1.bf16.msra.mxu0 %v4103
        %4112 = vmatprep.subr.bf16.mxu0 0
        %4113 = vmatpush1.bf16.msra.mxu0 %v4102
        %4114 = vmatprep.subr.bf16.mxu0 0
        %4115 = vmatpush1.bf16.msra.mxu0 %v4101
        %4116 = vmatprep.subr.bf16.mxu0 0
        %4117 = vmatpush1.bf16.msra.mxu0 %v4100
        %4118 = vmatprep.subr.bf16.mxu0 0
        %4119 = vmatpush1.bf16.msra.mxu0 %v4099
        %4120 = vmatprep.subr.bf16.mxu0 0
        %4121 = vmatpush1.bf16.msra.mxu0 %v4098
        %4122 = vmatprep.subr.bf16.mxu0 0
        %4123 = vmatpush2.bf16.msra.mxu0 0
        %4124 = vmatprep.subr.bf16.mxu0 0
        %4125 = vmatpush2.bf16.msra.mxu0 0
        %4126 = vmatprep.subr.bf16.mxu0 0
        %4127 = vmatpush2.bf16.msra.mxu0 0
        %4128 = vmatprep.subr.bf16.mxu0 0
        %4129 = vmatpush2.bf16.msra.mxu0 0
        %4130 = vmatprep.subr.bf16.mxu0 0
        %4131 = vmatpush2.bf16.msra.mxu0 0
        %4132 = vmatprep.subr.bf16.mxu0 0
        %4133 = vmatpush2.bf16.msra.mxu0 0
        %4134 = vmatprep.subr.bf16.mxu0 0
        %4135 = vmatpush2.bf16.msra.mxu0 0
        %4136 = vmatprep.subr.bf16.mxu0 0
        %4137 = vmatpush2.bf16.msra.mxu0 0
        %4138 = vmatprep.mubr.bf16.mxu0 0
        %4139 = vmatmul.mubr.bf16.gmra.mxu0 %v951
        %v4140 = vpop.f32.mrf.mxu0
        %v4141 = vadd.f32 0.0, %v4140
        %v4142 = vpop.f32.mrf.mxu0
        %v4143 = vpop.f32.mrf.mxu0
        %v4144 = vadd.f32 0.0, %v4143
        %v4145 = vpop.f32.mrf.mxu0
        %4146 = vmatprep.mubr.bf16.mxu0 0
        %4147 = vmatmul.mubr.bf16.gmra.mxu0 %v959
        %v4148 = vpop.f32.mrf.mxu0
        %v4149 = vadd.f32 0.0, %v4148
        %v4150 = vpop.f32.mrf.mxu0
        %v4151 = vpop.f32.mrf.mxu0
        %v4152 = vadd.f32 0.0, %v4151
        %v4153 = vpop.f32.mrf.mxu0
        %4154 = vmatprep.mubr.bf16.mxu0 0
        %4155 = vmatmul.mubr.bf16.gmra.mxu0 %v967
        %v4156 = vpop.f32.mrf.mxu0
        %v4157 = vadd.f32 0.0, %v4156
        %v4158 = vpop.f32.mrf.mxu0
        %v4159 = vpop.f32.mrf.mxu0
        %v4160 = vadd.f32 0.0, %v4159
        %v4161 = vpop.f32.mrf.mxu0
        %4162 = vmatprep.mubr.bf16.mxu0 0
        %4163 = vmatmul.mubr.bf16.gmra.mxu0 %v975
        %v4164 = vpop.f32.mrf.mxu0
        %v4165 = vadd.f32 0.0, %v4164
        %v4166 = vpop.f32.mrf.mxu0
        %v4167 = vpop.f32.mrf.mxu0
        %v4168 = vadd.f32 0.0, %v4167
        %v4169 = vpop.f32.mrf.mxu0
        %4170 = vdwg.mxu0
        %v4171 = vmul.f32 %v1336, %v4141
        %v4172 = vmul.f32 %v1336, %v4144
        %v4173 = vmul.f32 %v1336, %v4149
        %v4174 = vmul.f32 %v1336, %v4152
        %v4175 = vmul.f32 %v1336, %v4157
        %v4176 = vmul.f32 %v1336, %v4160
        %v4177 = vmul.f32 %v1336, %v4165
        %v4178 = vmul.f32 %v1336, %v4168
        %v4179 = vadd.f32 %v4171, %v306
        %v4180 = vadd.f32 %v4172, %v314
        %v4181 = vadd.f32 %v4173, %v322
        %v4182 = vadd.f32 %v4174, %v330
        %v4183 = vadd.f32 %v4175, %v338
        %v4184 = vadd.f32 %v4176, %v346
        %v4185 = vadd.f32 %v4177, %v354
        %v4186 = vadd.f32 %v4178, %v362
        %v4187 = vmul.f32 %v306, %v4179
        %v4188 = vmul.f32 %v314, %v4180
        %v4189 = vmul.f32 %v322, %v4181
        %v4190 = vmul.f32 %v330, %v4182
        %v4191 = vmul.f32 %v338, %v4183
        %v4192 = vmul.f32 %v346, %v4184
        %v4193 = vmul.f32 %v354, %v4185
        %v4194 = vmul.f32 %v362, %v4186
        %s4195 = scalar_lea.vmem [#allocation2], 7
        %4196 = vst [vmem:[%s4195] ss:$8 sm:$0xf] %v4187
        %4197 = vst [vmem:[%s4195] ss:$8 sm:$0xf0] %v4187
        %s4198 = scalar_lea.vmem [#allocation2], 71
        %4199 = vst [vmem:[%s4198] ss:$8 sm:$0xf] %v4188
        %4200 = vst [vmem:[%s4198] ss:$8 sm:$0xf0] %v4188
        %s4201 = scalar_lea.vmem [#allocation2], 135
        %4202 = vst [vmem:[%s4201] ss:$8 sm:$0xf] %v4189
        %4203 = vst [vmem:[%s4201] ss:$8 sm:$0xf0] %v4189
        %s4204 = scalar_lea.vmem [#allocation2], 199
        %4205 = vst [vmem:[%s4204] ss:$8 sm:$0xf] %v4190
        %4206 = vst [vmem:[%s4204] ss:$8 sm:$0xf0] %v4190
        %s4207 = scalar_lea.vmem [#allocation2], 263
        %4208 = vst [vmem:[%s4207] ss:$8 sm:$0xf] %v4191
        %4209 = vst [vmem:[%s4207] ss:$8 sm:$0xf0] %v4191
        %s4210 = scalar_lea.vmem [#allocation2], 327
        %4211 = vst [vmem:[%s4210] ss:$8 sm:$0xf] %v4192
        %4212 = vst [vmem:[%s4210] ss:$8 sm:$0xf0] %v4192
        %s4213 = scalar_lea.vmem [#allocation2], 391
        %4214 = vst [vmem:[%s4213] ss:$8 sm:$0xf] %v4193
        %4215 = vst [vmem:[%s4213] ss:$8 sm:$0xf0] %v4193
        %s4216 = scalar_lea.vmem [#allocation2], 455
        %4217 = vst [vmem:[%s4216] ss:$8 sm:$0xf] %v4194
        %4218 = vst [vmem:[%s4216] ss:$8 sm:$0xf0] %v4194
        %v4219 = vld [vmem:[#allocation2] sm:$0xff]
        %v4220 = vld [vmem:[#allocation2 + $0x8] sm:$0xff]
        %v4221 = vld [vmem:[#allocation2 + $0x10] sm:$0xff]
        %v4222 = vld [vmem:[#allocation2 + $0x18] sm:$0xff]
        %v4223 = vld [vmem:[#allocation2 + $0x20] sm:$0xff]
        %v4224 = vld [vmem:[#allocation2 + $0x28] sm:$0xff]
        %v4225 = vld [vmem:[#allocation2 + $0x30] sm:$0xff]
        %v4226 = vld [vmem:[#allocation2 + $0x38] sm:$0xff]
        %v4227 = vld [vmem:[#allocation2 + $0x40] sm:$0xff]
        %v4228 = vld [vmem:[#allocation2 + $0x48] sm:$0xff]
        %v4229 = vld [vmem:[#allocation2 + $0x50] sm:$0xff]
        %v4230 = vld [vmem:[#allocation2 + $0x58] sm:$0xff]
        %v4231 = vld [vmem:[#allocation2 + $0x60] sm:$0xff]
        %v4232 = vld [vmem:[#allocation2 + $0x68] sm:$0xff]
        %v4233 = vld [vmem:[#allocation2 + $0x70] sm:$0xff]
        %v4234 = vld [vmem:[#allocation2 + $0x78] sm:$0xff]
        %v4235 = vld [vmem:[#allocation2 + $0x80] sm:$0xff]
        %v4236 = vld [vmem:[#allocation2 + $0x88] sm:$0xff]
        %v4237 = vld [vmem:[#allocation2 + $0x90] sm:$0xff]
        %v4238 = vld [vmem:[#allocation2 + $0x98] sm:$0xff]
        %v4239 = vld [vmem:[#allocation2 + $0xa0] sm:$0xff]
        %v4240 = vld [vmem:[#allocation2 + $0xa8] sm:$0xff]
        %v4241 = vld [vmem:[#allocation2 + $0xb0] sm:$0xff]
        %v4242 = vld [vmem:[#allocation2 + $0xb8] sm:$0xff]
        %v4243 = vld [vmem:[#allocation2 + $0xc0] sm:$0xff]
        %v4244 = vld [vmem:[#allocation2 + $0xc8] sm:$0xff]
        %v4245 = vld [vmem:[#allocation2 + $0xd0] sm:$0xff]
        %v4246 = vld [vmem:[#allocation2 + $0xd8] sm:$0xff]
        %v4247 = vld [vmem:[#allocation2 + $0xe0] sm:$0xff]
        %v4248 = vld [vmem:[#allocation2 + $0xe8] sm:$0xff]
        %v4249 = vld [vmem:[#allocation2 + $0xf0] sm:$0xff]
        %v4250 = vld [vmem:[#allocation2 + $0xf8] sm:$0xff]
        %v4251 = vld [vmem:[#allocation2 + $0x100] sm:$0xff]
        %v4252 = vld [vmem:[#allocation2 + $0x108] sm:$0xff]
        %v4253 = vld [vmem:[#allocation2 + $0x110] sm:$0xff]
        %v4254 = vld [vmem:[#allocation2 + $0x118] sm:$0xff]
        %v4255 = vld [vmem:[#allocation2 + $0x120] sm:$0xff]
        %v4256 = vld [vmem:[#allocation2 + $0x128] sm:$0xff]
        %v4257 = vld [vmem:[#allocation2 + $0x130] sm:$0xff]
        %v4258 = vld [vmem:[#allocation2 + $0x138] sm:$0xff]
        %v4259 = vld [vmem:[#allocation2 + $0x140] sm:$0xff]
        %v4260 = vld [vmem:[#allocation2 + $0x148] sm:$0xff]
        %v4261 = vld [vmem:[#allocation2 + $0x150] sm:$0xff]
        %v4262 = vld [vmem:[#allocation2 + $0x158] sm:$0xff]
        %v4263 = vld [vmem:[#allocation2 + $0x160] sm:$0xff]
        %v4264 = vld [vmem:[#allocation2 + $0x168] sm:$0xff]
        %v4265 = vld [vmem:[#allocation2 + $0x170] sm:$0xff]
        %v4266 = vld [vmem:[#allocation2 + $0x178] sm:$0xff]
        %v4267 = vld [vmem:[#allocation2 + $0x180] sm:$0xff]
        %v4268 = vld [vmem:[#allocation2 + $0x188] sm:$0xff]
        %v4269 = vld [vmem:[#allocation2 + $0x190] sm:$0xff]
        %v4270 = vld [vmem:[#allocation2 + $0x198] sm:$0xff]
        %v4271 = vld [vmem:[#allocation2 + $0x1a0] sm:$0xff]
        %v4272 = vld [vmem:[#allocation2 + $0x1a8] sm:$0xff]
        %v4273 = vld [vmem:[#allocation2 + $0x1b0] sm:$0xff]
        %v4274 = vld [vmem:[#allocation2 + $0x1b8] sm:$0xff]
        %v4275 = vld [vmem:[#allocation2 + $0x1c0] sm:$0xff]
        %v4276 = vld [vmem:[#allocation2 + $0x1c8] sm:$0xff]
        %v4277 = vld [vmem:[#allocation2 + $0x1d0] sm:$0xff]
        %v4278 = vld [vmem:[#allocation2 + $0x1d8] sm:$0xff]
        %v4279 = vld [vmem:[#allocation2 + $0x1e0] sm:$0xff]
        %v4280 = vld [vmem:[#allocation2 + $0x1e8] sm:$0xff]
        %v4281 = vld [vmem:[#allocation2 + $0x1f0] sm:$0xff]
        %v4282 = vld [vmem:[#allocation2 + $0x1f8] sm:$0xff]
        %v4283 = vpack.c.bf16 %v4219, %v4219
        %v4284 = vpack.c.bf16 %v4220, %v4220
        %v4285 = vpack.c.bf16 %v4221, %v4221
        %v4286 = vpack.c.bf16 %v4222, %v4222
        %v4287 = vpack.c.bf16 %v4223, %v4223
        %v4288 = vpack.c.bf16 %v4224, %v4224
        %v4289 = vpack.c.bf16 %v4225, %v4225
        %v4290 = vpack.c.bf16 %v4226, %v4226
        %v4291 = vpack.c.bf16 %v4227, %v4227
        %v4292 = vpack.c.bf16 %v4228, %v4228
        %v4293 = vpack.c.bf16 %v4229, %v4229
        %v4294 = vpack.c.bf16 %v4230, %v4230
        %v4295 = vpack.c.bf16 %v4231, %v4231
        %v4296 = vpack.c.bf16 %v4232, %v4232
        %v4297 = vpack.c.bf16 %v4233, %v4233
        %v4298 = vpack.c.bf16 %v4234, %v4234
        %v4299 = vpack.c.bf16 %v4235, %v4235
        %v4300 = vpack.c.bf16 %v4236, %v4236
        %v4301 = vpack.c.bf16 %v4237, %v4237
        %v4302 = vpack.c.bf16 %v4238, %v4238
        %v4303 = vpack.c.bf16 %v4239, %v4239
        %v4304 = vpack.c.bf16 %v4240, %v4240
        %v4305 = vpack.c.bf16 %v4241, %v4241
        %v4306 = vpack.c.bf16 %v4242, %v4242
        %v4307 = vpack.c.bf16 %v4243, %v4243
        %v4308 = vpack.c.bf16 %v4244, %v4244
        %v4309 = vpack.c.bf16 %v4245, %v4245
        %v4310 = vpack.c.bf16 %v4246, %v4246
        %v4311 = vpack.c.bf16 %v4247, %v4247
        %v4312 = vpack.c.bf16 %v4248, %v4248
        %v4313 = vpack.c.bf16 %v4249, %v4249
        %v4314 = vpack.c.bf16 %v4250, %v4250
        %v4315 = vpack.c.bf16 %v4251, %v4251
        %v4316 = vpack.c.bf16 %v4252, %v4252
        %v4317 = vpack.c.bf16 %v4253, %v4253
        %v4318 = vpack.c.bf16 %v4254, %v4254
        %v4319 = vpack.c.bf16 %v4255, %v4255
        %v4320 = vpack.c.bf16 %v4256, %v4256
        %v4321 = vpack.c.bf16 %v4257, %v4257
        %v4322 = vpack.c.bf16 %v4258, %v4258
        %v4323 = vpack.c.bf16 %v4259, %v4259
        %v4324 = vpack.c.bf16 %v4260, %v4260
        %v4325 = vpack.c.bf16 %v4261, %v4261
        %v4326 = vpack.c.bf16 %v4262, %v4262
        %v4327 = vpack.c.bf16 %v4263, %v4263
        %v4328 = vpack.c.bf16 %v4264, %v4264
        %v4329 = vpack.c.bf16 %v4265, %v4265
        %v4330 = vpack.c.bf16 %v4266, %v4266
        %v4331 = vpack.c.bf16 %v4267, %v4267
        %v4332 = vpack.c.bf16 %v4268, %v4268
        %v4333 = vpack.c.bf16 %v4269, %v4269
        %v4334 = vpack.c.bf16 %v4270, %v4270
        %v4335 = vpack.c.bf16 %v4271, %v4271
        %v4336 = vpack.c.bf16 %v4272, %v4272
        %v4337 = vpack.c.bf16 %v4273, %v4273
        %v4338 = vpack.c.bf16 %v4274, %v4274
        %v4339 = vpack.c.bf16 %v4275, %v4275
        %v4340 = vpack.c.bf16 %v4276, %v4276
        %v4341 = vpack.c.bf16 %v4277, %v4277
        %v4342 = vpack.c.bf16 %v4278, %v4278
        %v4343 = vpack.c.bf16 %v4279, %v4279
        %v4344 = vpack.c.bf16 %v4280, %v4280
        %v4345 = vpack.c.bf16 %v4281, %v4281
        %v4346 = vpack.c.bf16 %v4282, %v4282
        %v4347 = vld [vmem:[#allocation7] sm:$0xf]
        %v4348 = vld [vmem:[#allocation7 + $0x4] sm:$0xf]
        %v4349 = vld [vmem:[#allocation7 + $0x8] sm:$0xf]
        %v4350 = vld [vmem:[#allocation7 + $0xc] sm:$0xf]
        %v4351 = vld [vmem:[#allocation7 + $0x10] sm:$0xf]
        %v4352 = vld [vmem:[#allocation7 + $0x14] sm:$0xf]
        %v4353 = vld [vmem:[#allocation7 + $0x18] sm:$0xf]
        %v4354 = vld [vmem:[#allocation7 + $0x1c] sm:$0xf]
        %v4355 = vld [vmem:[#allocation7 + $0x20] sm:$0xf]
        %v4356 = vld [vmem:[#allocation7 + $0x24] sm:$0xf]
        %v4357 = vld [vmem:[#allocation7 + $0x28] sm:$0xf]
        %v4358 = vld [vmem:[#allocation7 + $0x2c] sm:$0xf]
        %v4359 = vld [vmem:[#allocation7 + $0x30] sm:$0xf]
        %v4360 = vld [vmem:[#allocation7 + $0x34] sm:$0xf]
        %v4361 = vld [vmem:[#allocation7 + $0x38] sm:$0xf]
        %v4362 = vld [vmem:[#allocation7 + $0x3c] sm:$0xf]
        %v4363 = vld [vmem:[#allocation7 + $0x40] sm:$0xf]
        %v4364 = vld [vmem:[#allocation7 + $0x44] sm:$0xf]
        %v4365 = vld [vmem:[#allocation7 + $0x48] sm:$0xf]
        %v4366 = vld [vmem:[#allocation7 + $0x4c] sm:$0xf]
        %v4367 = vld [vmem:[#allocation7 + $0x50] sm:$0xf]
        %v4368 = vld [vmem:[#allocation7 + $0x54] sm:$0xf]
        %v4369 = vld [vmem:[#allocation7 + $0x58] sm:$0xf]
        %v4370 = vld [vmem:[#allocation7 + $0x5c] sm:$0xf]
        %v4371 = vld [vmem:[#allocation7 + $0x60] sm:$0xf]
        %v4372 = vld [vmem:[#allocation7 + $0x64] sm:$0xf]
        %v4373 = vld [vmem:[#allocation7 + $0x68] sm:$0xf]
        %v4374 = vld [vmem:[#allocation7 + $0x6c] sm:$0xf]
        %v4375 = vld [vmem:[#allocation7 + $0x70] sm:$0xf]
        %v4376 = vld [vmem:[#allocation7 + $0x74] sm:$0xf]
        %v4377 = vld [vmem:[#allocation7 + $0x78] sm:$0xf]
        %v4378 = vld [vmem:[#allocation7 + $0x7c] sm:$0xf]
        %v4379 = vld [vmem:[#allocation7 + $0x80] sm:$0xf]
        %v4380 = vld [vmem:[#allocation7 + $0x84] sm:$0xf]
        %v4381 = vld [vmem:[#allocation7 + $0x88] sm:$0xf]
        %v4382 = vld [vmem:[#allocation7 + $0x8c] sm:$0xf]
        %v4383 = vld [vmem:[#allocation7 + $0x90] sm:$0xf]
        %v4384 = vld [vmem:[#allocation7 + $0x94] sm:$0xf]
        %v4385 = vld [vmem:[#allocation7 + $0x98] sm:$0xf]
        %v4386 = vld [vmem:[#allocation7 + $0x9c] sm:$0xf]
        %v4387 = vld [vmem:[#allocation7 + $0xa0] sm:$0xf]
        %v4388 = vld [vmem:[#allocation7 + $0xa4] sm:$0xf]
        %v4389 = vld [vmem:[#allocation7 + $0xa8] sm:$0xf]
        %v4390 = vld [vmem:[#allocation7 + $0xac] sm:$0xf]
        %v4391 = vld [vmem:[#allocation7 + $0xb0] sm:$0xf]
        %v4392 = vld [vmem:[#allocation7 + $0xb4] sm:$0xf]
        %v4393 = vld [vmem:[#allocation7 + $0xb8] sm:$0xf]
        %v4394 = vld [vmem:[#allocation7 + $0xbc] sm:$0xf]
        %v4395 = vld [vmem:[#allocation7 + $0xc0] sm:$0xf]
        %v4396 = vld [vmem:[#allocation7 + $0xc4] sm:$0xf]
        %v4397 = vld [vmem:[#allocation7 + $0xc8] sm:$0xf]
        %v4398 = vld [vmem:[#allocation7 + $0xcc] sm:$0xf]
        %v4399 = vld [vmem:[#allocation7 + $0xd0] sm:$0xf]
        %v4400 = vld [vmem:[#allocation7 + $0xd4] sm:$0xf]
        %v4401 = vld [vmem:[#allocation7 + $0xd8] sm:$0xf]
        %v4402 = vld [vmem:[#allocation7 + $0xdc] sm:$0xf]
        %v4403 = vld [vmem:[#allocation7 + $0xe0] sm:$0xf]
        %v4404 = vld [vmem:[#allocation7 + $0xe4] sm:$0xf]
        %v4405 = vld [vmem:[#allocation7 + $0xe8] sm:$0xf]
        %v4406 = vld [vmem:[#allocation7 + $0xec] sm:$0xf]
        %v4407 = vld [vmem:[#allocation7 + $0xf0] sm:$0xf]
        %v4408 = vld [vmem:[#allocation7 + $0xf4] sm:$0xf]
        %v4409 = vld [vmem:[#allocation7 + $0xf8] sm:$0xf]
        %v4410 = vld [vmem:[#allocation7 + $0xfc] sm:$0xf]
        %v4411 = vld [vmem:[#allocation7 + $0x100] sm:$0xf]
        %v4412 = vld [vmem:[#allocation7 + $0x104] sm:$0xf]
        %v4413 = vld [vmem:[#allocation7 + $0x108] sm:$0xf]
        %v4414 = vld [vmem:[#allocation7 + $0x10c] sm:$0xf]
        %v4415 = vld [vmem:[#allocation7 + $0x110] sm:$0xf]
        %v4416 = vld [vmem:[#allocation7 + $0x114] sm:$0xf]
        %v4417 = vld [vmem:[#allocation7 + $0x118] sm:$0xf]
        %v4418 = vld [vmem:[#allocation7 + $0x11c] sm:$0xf]
        %v4419 = vld [vmem:[#allocation7 + $0x120] sm:$0xf]
        %v4420 = vld [vmem:[#allocation7 + $0x124] sm:$0xf]
        %v4421 = vld [vmem:[#allocation7 + $0x128] sm:$0xf]
        %v4422 = vld [vmem:[#allocation7 + $0x12c] sm:$0xf]
        %v4423 = vld [vmem:[#allocation7 + $0x130] sm:$0xf]
        %v4424 = vld [vmem:[#allocation7 + $0x134] sm:$0xf]
        %v4425 = vld [vmem:[#allocation7 + $0x138] sm:$0xf]
        %v4426 = vld [vmem:[#allocation7 + $0x13c] sm:$0xf]
        %v4427 = vld [vmem:[#allocation7 + $0x140] sm:$0xf]
        %v4428 = vld [vmem:[#allocation7 + $0x144] sm:$0xf]
        %v4429 = vld [vmem:[#allocation7 + $0x148] sm:$0xf]
        %v4430 = vld [vmem:[#allocation7 + $0x14c] sm:$0xf]
        %v4431 = vld [vmem:[#allocation7 + $0x150] sm:$0xf]
        %v4432 = vld [vmem:[#allocation7 + $0x154] sm:$0xf]
        %v4433 = vld [vmem:[#allocation7 + $0x158] sm:$0xf]
        %v4434 = vld [vmem:[#allocation7 + $0x15c] sm:$0xf]
        %v4435 = vld [vmem:[#allocation7 + $0x160] sm:$0xf]
        %v4436 = vld [vmem:[#allocation7 + $0x164] sm:$0xf]
        %v4437 = vld [vmem:[#allocation7 + $0x168] sm:$0xf]
        %v4438 = vld [vmem:[#allocation7 + $0x16c] sm:$0xf]
        %v4439 = vld [vmem:[#allocation7 + $0x170] sm:$0xf]
        %v4440 = vld [vmem:[#allocation7 + $0x174] sm:$0xf]
        %v4441 = vld [vmem:[#allocation7 + $0x178] sm:$0xf]
        %v4442 = vld [vmem:[#allocation7 + $0x17c] sm:$0xf]
        %v4443 = vld [vmem:[#allocation7 + $0x180] sm:$0xf]
        %v4444 = vld [vmem:[#allocation7 + $0x184] sm:$0xf]
        %v4445 = vld [vmem:[#allocation7 + $0x188] sm:$0xf]
        %v4446 = vld [vmem:[#allocation7 + $0x18c] sm:$0xf]
        %v4447 = vld [vmem:[#allocation7 + $0x190] sm:$0xf]
        %v4448 = vld [vmem:[#allocation7 + $0x194] sm:$0xf]
        %v4449 = vld [vmem:[#allocation7 + $0x198] sm:$0xf]
        %v4450 = vld [vmem:[#allocation7 + $0x19c] sm:$0xf]
        %v4451 = vld [vmem:[#allocation7 + $0x1a0] sm:$0xf]
        %v4452 = vld [vmem:[#allocation7 + $0x1a4] sm:$0xf]
        %v4453 = vld [vmem:[#allocation7 + $0x1a8] sm:$0xf]
        %v4454 = vld [vmem:[#allocation7 + $0x1ac] sm:$0xf]
        %v4455 = vld [vmem:[#allocation7 + $0x1b0] sm:$0xf]
        %v4456 = vld [vmem:[#allocation7 + $0x1b4] sm:$0xf]
        %v4457 = vld [vmem:[#allocation7 + $0x1b8] sm:$0xf]
        %v4458 = vld [vmem:[#allocation7 + $0x1bc] sm:$0xf]
        %v4459 = vld [vmem:[#allocation7 + $0x1c0] sm:$0xf]
        %v4460 = vld [vmem:[#allocation7 + $0x1c4] sm:$0xf]
        %v4461 = vld [vmem:[#allocation7 + $0x1c8] sm:$0xf]
        %v4462 = vld [vmem:[#allocation7 + $0x1cc] sm:$0xf]
        %v4463 = vld [vmem:[#allocation7 + $0x1d0] sm:$0xf]
        %v4464 = vld [vmem:[#allocation7 + $0x1d4] sm:$0xf]
        %v4465 = vld [vmem:[#allocation7 + $0x1d8] sm:$0xf]
        %v4466 = vld [vmem:[#allocation7 + $0x1dc] sm:$0xf]
        %v4467 = vld [vmem:[#allocation7 + $0x1e0] sm:$0xf]
        %v4468 = vld [vmem:[#allocation7 + $0x1e4] sm:$0xf]
        %v4469 = vld [vmem:[#allocation7 + $0x1e8] sm:$0xf]
        %v4470 = vld [vmem:[#allocation7 + $0x1ec] sm:$0xf]
        %v4471 = vld [vmem:[#allocation7 + $0x1f0] sm:$0xf]
        %v4472 = vld [vmem:[#allocation7 + $0x1f4] sm:$0xf]
        %v4473 = vld [vmem:[#allocation7 + $0x1f8] sm:$0xf]
        %v4474 = vld [vmem:[#allocation7 + $0x1fc] sm:$0xf]
        %v4475 = vld [vmem:[#allocation7 + $0x200] sm:$0xf]
        %v4476 = vld [vmem:[#allocation7 + $0x204] sm:$0xf]
        %v4477 = vld [vmem:[#allocation7 + $0x208] sm:$0xf]
        %v4478 = vld [vmem:[#allocation7 + $0x20c] sm:$0xf]
        %v4479 = vld [vmem:[#allocation7 + $0x210] sm:$0xf]
        %v4480 = vld [vmem:[#allocation7 + $0x214] sm:$0xf]
        %v4481 = vld [vmem:[#allocation7 + $0x218] sm:$0xf]
        %v4482 = vld [vmem:[#allocation7 + $0x21c] sm:$0xf]
        %v4483 = vld [vmem:[#allocation7 + $0x220] sm:$0xf]
        %v4484 = vld [vmem:[#allocation7 + $0x224] sm:$0xf]
        %v4485 = vld [vmem:[#allocation7 + $0x228] sm:$0xf]
        %v4486 = vld [vmem:[#allocation7 + $0x22c] sm:$0xf]
        %v4487 = vld [vmem:[#allocation7 + $0x230] sm:$0xf]
        %v4488 = vld [vmem:[#allocation7 + $0x234] sm:$0xf]
        %v4489 = vld [vmem:[#allocation7 + $0x238] sm:$0xf]
        %v4490 = vld [vmem:[#allocation7 + $0x23c] sm:$0xf]
        %v4491 = vld [vmem:[#allocation7 + $0x240] sm:$0xf]
        %v4492 = vld [vmem:[#allocation7 + $0x244] sm:$0xf]
        %v4493 = vld [vmem:[#allocation7 + $0x248] sm:$0xf]
        %v4494 = vld [vmem:[#allocation7 + $0x24c] sm:$0xf]
        %v4495 = vld [vmem:[#allocation7 + $0x250] sm:$0xf]
        %v4496 = vld [vmem:[#allocation7 + $0x254] sm:$0xf]
        %v4497 = vld [vmem:[#allocation7 + $0x258] sm:$0xf]
        %v4498 = vld [vmem:[#allocation7 + $0x25c] sm:$0xf]
        %v4499 = vld [vmem:[#allocation7 + $0x260] sm:$0xf]
        %v4500 = vld [vmem:[#allocation7 + $0x264] sm:$0xf]
        %v4501 = vld [vmem:[#allocation7 + $0x268] sm:$0xf]
        %v4502 = vld [vmem:[#allocation7 + $0x26c] sm:$0xf]
        %v4503 = vld [vmem:[#allocation7 + $0x270] sm:$0xf]
        %v4504 = vld [vmem:[#allocation7 + $0x274] sm:$0xf]
        %v4505 = vld [vmem:[#allocation7 + $0x278] sm:$0xf]
        %v4506 = vld [vmem:[#allocation7 + $0x27c] sm:$0xf]
        %v4507 = vld [vmem:[#allocation7 + $0x280] sm:$0xf]
        %v4508 = vld [vmem:[#allocation7 + $0x284] sm:$0xf]
        %v4509 = vld [vmem:[#allocation7 + $0x288] sm:$0xf]
        %v4510 = vld [vmem:[#allocation7 + $0x28c] sm:$0xf]
        %v4511 = vld [vmem:[#allocation7 + $0x290] sm:$0xf]
        %v4512 = vld [vmem:[#allocation7 + $0x294] sm:$0xf]
        %v4513 = vld [vmem:[#allocation7 + $0x298] sm:$0xf]
        %v4514 = vld [vmem:[#allocation7 + $0x29c] sm:$0xf]
        %v4515 = vld [vmem:[#allocation7 + $0x2a0] sm:$0xf]
        %v4516 = vld [vmem:[#allocation7 + $0x2a4] sm:$0xf]
        %v4517 = vld [vmem:[#allocation7 + $0x2a8] sm:$0xf]
        %v4518 = vld [vmem:[#allocation7 + $0x2ac] sm:$0xf]
        %v4519 = vld [vmem:[#allocation7 + $0x2b0] sm:$0xf]
        %v4520 = vld [vmem:[#allocation7 + $0x2b4] sm:$0xf]
        %v4521 = vld [vmem:[#allocation7 + $0x2b8] sm:$0xf]
        %v4522 = vld [vmem:[#allocation7 + $0x2bc] sm:$0xf]
        %v4523 = vld [vmem:[#allocation7 + $0x2c0] sm:$0xf]
        %v4524 = vld [vmem:[#allocation7 + $0x2c4] sm:$0xf]
        %v4525 = vld [vmem:[#allocation7 + $0x2c8] sm:$0xf]
        %v4526 = vld [vmem:[#allocation7 + $0x2cc] sm:$0xf]
        %v4527 = vld [vmem:[#allocation7 + $0x2d0] sm:$0xf]
        %v4528 = vld [vmem:[#allocation7 + $0x2d4] sm:$0xf]
        %v4529 = vld [vmem:[#allocation7 + $0x2d8] sm:$0xf]
        %v4530 = vld [vmem:[#allocation7 + $0x2dc] sm:$0xf]
        %v4531 = vld [vmem:[#allocation7 + $0x2e0] sm:$0xf]
        %v4532 = vld [vmem:[#allocation7 + $0x2e4] sm:$0xf]
        %v4533 = vld [vmem:[#allocation7 + $0x2e8] sm:$0xf]
        %v4534 = vld [vmem:[#allocation7 + $0x2ec] sm:$0xf]
        %v4535 = vld [vmem:[#allocation7 + $0x2f0] sm:$0xf]
        %v4536 = vld [vmem:[#allocation7 + $0x2f4] sm:$0xf]
        %v4537 = vld [vmem:[#allocation7 + $0x2f8] sm:$0xf]
        %v4538 = vld [vmem:[#allocation7 + $0x2fc] sm:$0xf]
        %v4539 = vld [vmem:[#allocation7 + $0x300] sm:$0xf]
        %v4540 = vld [vmem:[#allocation7 + $0x304] sm:$0xf]
        %v4541 = vld [vmem:[#allocation7 + $0x308] sm:$0xf]
        %v4542 = vld [vmem:[#allocation7 + $0x30c] sm:$0xf]
        %v4543 = vld [vmem:[#allocation7 + $0x310] sm:$0xf]
        %v4544 = vld [vmem:[#allocation7 + $0x314] sm:$0xf]
        %v4545 = vld [vmem:[#allocation7 + $0x318] sm:$0xf]
        %v4546 = vld [vmem:[#allocation7 + $0x31c] sm:$0xf]
        %v4547 = vld [vmem:[#allocation7 + $0x320] sm:$0xf]
        %v4548 = vld [vmem:[#allocation7 + $0x324] sm:$0xf]
        %v4549 = vld [vmem:[#allocation7 + $0x328] sm:$0xf]
        %v4550 = vld [vmem:[#allocation7 + $0x32c] sm:$0xf]
        %v4551 = vld [vmem:[#allocation7 + $0x330] sm:$0xf]
        %v4552 = vld [vmem:[#allocation7 + $0x334] sm:$0xf]
        %v4553 = vld [vmem:[#allocation7 + $0x338] sm:$0xf]
        %v4554 = vld [vmem:[#allocation7 + $0x33c] sm:$0xf]
        %v4555 = vld [vmem:[#allocation7 + $0x340] sm:$0xf]
        %v4556 = vld [vmem:[#allocation7 + $0x344] sm:$0xf]
        %v4557 = vld [vmem:[#allocation7 + $0x348] sm:$0xf]
        %v4558 = vld [vmem:[#allocation7 + $0x34c] sm:$0xf]
        %v4559 = vld [vmem:[#allocation7 + $0x350] sm:$0xf]
        %v4560 = vld [vmem:[#allocation7 + $0x354] sm:$0xf]
        %v4561 = vld [vmem:[#allocation7 + $0x358] sm:$0xf]
        %v4562 = vld [vmem:[#allocation7 + $0x35c] sm:$0xf]
        %v4563 = vld [vmem:[#allocation7 + $0x360] sm:$0xf]
        %v4564 = vld [vmem:[#allocation7 + $0x364] sm:$0xf]
        %v4565 = vld [vmem:[#allocation7 + $0x368] sm:$0xf]
        %v4566 = vld [vmem:[#allocation7 + $0x36c] sm:$0xf]
        %v4567 = vld [vmem:[#allocation7 + $0x370] sm:$0xf]
        %v4568 = vld [vmem:[#allocation7 + $0x374] sm:$0xf]
        %v4569 = vld [vmem:[#allocation7 + $0x378] sm:$0xf]
        %v4570 = vld [vmem:[#allocation7 + $0x37c] sm:$0xf]
        %v4571 = vld [vmem:[#allocation7 + $0x380] sm:$0xf]
        %v4572 = vld [vmem:[#allocation7 + $0x384] sm:$0xf]
        %v4573 = vld [vmem:[#allocation7 + $0x388] sm:$0xf]
        %v4574 = vld [vmem:[#allocation7 + $0x38c] sm:$0xf]
        %v4575 = vld [vmem:[#allocation7 + $0x390] sm:$0xf]
        %v4576 = vld [vmem:[#allocation7 + $0x394] sm:$0xf]
        %v4577 = vld [vmem:[#allocation7 + $0x398] sm:$0xf]
        %v4578 = vld [vmem:[#allocation7 + $0x39c] sm:$0xf]
        %v4579 = vld [vmem:[#allocation7 + $0x3a0] sm:$0xf]
        %v4580 = vld [vmem:[#allocation7 + $0x3a4] sm:$0xf]
        %v4581 = vld [vmem:[#allocation7 + $0x3a8] sm:$0xf]
        %v4582 = vld [vmem:[#allocation7 + $0x3ac] sm:$0xf]
        %v4583 = vld [vmem:[#allocation7 + $0x3b0] sm:$0xf]
        %v4584 = vld [vmem:[#allocation7 + $0x3b4] sm:$0xf]
        %v4585 = vld [vmem:[#allocation7 + $0x3b8] sm:$0xf]
        %v4586 = vld [vmem:[#allocation7 + $0x3bc] sm:$0xf]
        %v4587 = vld [vmem:[#allocation7 + $0x3c0] sm:$0xf]
        %v4588 = vld [vmem:[#allocation7 + $0x3c4] sm:$0xf]
        %v4589 = vld [vmem:[#allocation7 + $0x3c8] sm:$0xf]
        %v4590 = vld [vmem:[#allocation7 + $0x3cc] sm:$0xf]
        %v4591 = vld [vmem:[#allocation7 + $0x3d0] sm:$0xf]
        %v4592 = vld [vmem:[#allocation7 + $0x3d4] sm:$0xf]
        %v4593 = vld [vmem:[#allocation7 + $0x3d8] sm:$0xf]
        %v4594 = vld [vmem:[#allocation7 + $0x3dc] sm:$0xf]
        %v4595 = vld [vmem:[#allocation7 + $0x3e0] sm:$0xf]
        %v4596 = vld [vmem:[#allocation7 + $0x3e4] sm:$0xf]
        %v4597 = vld [vmem:[#allocation7 + $0x3e8] sm:$0xf]
        %v4598 = vld [vmem:[#allocation7 + $0x3ec] sm:$0xf]
        %v4599 = vld [vmem:[#allocation7 + $0x3f0] sm:$0xf]
        %v4600 = vld [vmem:[#allocation7 + $0x3f4] sm:$0xf]
        %v4601 = vld [vmem:[#allocation7 + $0x3f8] sm:$0xf]
        %v4602 = vld [vmem:[#allocation7 + $0x3fc] sm:$0xf]
        %v4603 = vld [vmem:[#allocation7 + $0x400] sm:$0xf]
        %v4604 = vld [vmem:[#allocation7 + $0x404] sm:$0xf]
        %v4605 = vld [vmem:[#allocation7 + $0x408] sm:$0xf]
        %v4606 = vld [vmem:[#allocation7 + $0x40c] sm:$0xf]
        %v4607 = vld [vmem:[#allocation7 + $0x410] sm:$0xf]
        %v4608 = vld [vmem:[#allocation7 + $0x414] sm:$0xf]
        %v4609 = vld [vmem:[#allocation7 + $0x418] sm:$0xf]
        %v4610 = vld [vmem:[#allocation7 + $0x41c] sm:$0xf]
        %v4611 = vld [vmem:[#allocation7 + $0x420] sm:$0xf]
        %v4612 = vld [vmem:[#allocation7 + $0x424] sm:$0xf]
        %v4613 = vld [vmem:[#allocation7 + $0x428] sm:$0xf]
        %v4614 = vld [vmem:[#allocation7 + $0x42c] sm:$0xf]
        %v4615 = vld [vmem:[#allocation7 + $0x430] sm:$0xf]
        %v4616 = vld [vmem:[#allocation7 + $0x434] sm:$0xf]
        %v4617 = vld [vmem:[#allocation7 + $0x438] sm:$0xf]
        %v4618 = vld [vmem:[#allocation7 + $0x43c] sm:$0xf]
        %v4619 = vld [vmem:[#allocation7 + $0x440] sm:$0xf]
        %v4620 = vld [vmem:[#allocation7 + $0x444] sm:$0xf]
        %v4621 = vld [vmem:[#allocation7 + $0x448] sm:$0xf]
        %v4622 = vld [vmem:[#allocation7 + $0x44c] sm:$0xf]
        %v4623 = vld [vmem:[#allocation7 + $0x450] sm:$0xf]
        %v4624 = vld [vmem:[#allocation7 + $0x454] sm:$0xf]
        %v4625 = vld [vmem:[#allocation7 + $0x458] sm:$0xf]
        %v4626 = vld [vmem:[#allocation7 + $0x45c] sm:$0xf]
        %v4627 = vld [vmem:[#allocation7 + $0x460] sm:$0xf]
        %v4628 = vld [vmem:[#allocation7 + $0x464] sm:$0xf]
        %v4629 = vld [vmem:[#allocation7 + $0x468] sm:$0xf]
        %v4630 = vld [vmem:[#allocation7 + $0x46c] sm:$0xf]
        %v4631 = vld [vmem:[#allocation7 + $0x470] sm:$0xf]
        %v4632 = vld [vmem:[#allocation7 + $0x474] sm:$0xf]
        %v4633 = vld [vmem:[#allocation7 + $0x478] sm:$0xf]
        %v4634 = vld [vmem:[#allocation7 + $0x47c] sm:$0xf]
        %v4635 = vld [vmem:[#allocation7 + $0x480] sm:$0xf]
        %v4636 = vld [vmem:[#allocation7 + $0x484] sm:$0xf]
        %v4637 = vld [vmem:[#allocation7 + $0x488] sm:$0xf]
        %v4638 = vld [vmem:[#allocation7 + $0x48c] sm:$0xf]
        %v4639 = vld [vmem:[#allocation7 + $0x490] sm:$0xf]
        %v4640 = vld [vmem:[#allocation7 + $0x494] sm:$0xf]
        %v4641 = vld [vmem:[#allocation7 + $0x498] sm:$0xf]
        %v4642 = vld [vmem:[#allocation7 + $0x49c] sm:$0xf]
        %v4643 = vld [vmem:[#allocation7 + $0x4a0] sm:$0xf]
        %v4644 = vld [vmem:[#allocation7 + $0x4a4] sm:$0xf]
        %v4645 = vld [vmem:[#allocation7 + $0x4a8] sm:$0xf]
        %v4646 = vld [vmem:[#allocation7 + $0x4ac] sm:$0xf]
        %v4647 = vld [vmem:[#allocation7 + $0x4b0] sm:$0xf]
        %v4648 = vld [vmem:[#allocation7 + $0x4b4] sm:$0xf]
        %v4649 = vld [vmem:[#allocation7 + $0x4b8] sm:$0xf]
        %v4650 = vld [vmem:[#allocation7 + $0x4bc] sm:$0xf]
        %v4651 = vld [vmem:[#allocation7 + $0x4c0] sm:$0xf]
        %v4652 = vld [vmem:[#allocation7 + $0x4c4] sm:$0xf]
        %v4653 = vld [vmem:[#allocation7 + $0x4c8] sm:$0xf]
        %v4654 = vld [vmem:[#allocation7 + $0x4cc] sm:$0xf]
        %v4655 = vld [vmem:[#allocation7 + $0x4d0] sm:$0xf]
        %v4656 = vld [vmem:[#allocation7 + $0x4d4] sm:$0xf]
        %v4657 = vld [vmem:[#allocation7 + $0x4d8] sm:$0xf]
        %v4658 = vld [vmem:[#allocation7 + $0x4dc] sm:$0xf]
        %v4659 = vld [vmem:[#allocation7 + $0x4e0] sm:$0xf]
        %v4660 = vld [vmem:[#allocation7 + $0x4e4] sm:$0xf]
        %v4661 = vld [vmem:[#allocation7 + $0x4e8] sm:$0xf]
        %v4662 = vld [vmem:[#allocation7 + $0x4ec] sm:$0xf]
        %v4663 = vld [vmem:[#allocation7 + $0x4f0] sm:$0xf]
        %v4664 = vld [vmem:[#allocation7 + $0x4f4] sm:$0xf]
        %v4665 = vld [vmem:[#allocation7 + $0x4f8] sm:$0xf]
        %v4666 = vld [vmem:[#allocation7 + $0x4fc] sm:$0xf]
        %v4667 = vld [vmem:[#allocation7 + $0x500] sm:$0xf]
        %v4668 = vld [vmem:[#allocation7 + $0x504] sm:$0xf]
        %v4669 = vld [vmem:[#allocation7 + $0x508] sm:$0xf]
        %v4670 = vld [vmem:[#allocation7 + $0x50c] sm:$0xf]
        %v4671 = vld [vmem:[#allocation7 + $0x510] sm:$0xf]
        %v4672 = vld [vmem:[#allocation7 + $0x514] sm:$0xf]
        %v4673 = vld [vmem:[#allocation7 + $0x518] sm:$0xf]
        %v4674 = vld [vmem:[#allocation7 + $0x51c] sm:$0xf]
        %v4675 = vld [vmem:[#allocation7 + $0x520] sm:$0xf]
        %v4676 = vld [vmem:[#allocation7 + $0x524] sm:$0xf]
        %v4677 = vld [vmem:[#allocation7 + $0x528] sm:$0xf]
        %v4678 = vld [vmem:[#allocation7 + $0x52c] sm:$0xf]
        %v4679 = vld [vmem:[#allocation7 + $0x530] sm:$0xf]
        %v4680 = vld [vmem:[#allocation7 + $0x534] sm:$0xf]
        %v4681 = vld [vmem:[#allocation7 + $0x538] sm:$0xf]
        %v4682 = vld [vmem:[#allocation7 + $0x53c] sm:$0xf]
        %v4683 = vld [vmem:[#allocation7 + $0x540] sm:$0xf]
        %v4684 = vld [vmem:[#allocation7 + $0x544] sm:$0xf]
        %v4685 = vld [vmem:[#allocation7 + $0x548] sm:$0xf]
        %v4686 = vld [vmem:[#allocation7 + $0x54c] sm:$0xf]
        %v4687 = vld [vmem:[#allocation7 + $0x550] sm:$0xf]
        %v4688 = vld [vmem:[#allocation7 + $0x554] sm:$0xf]
        %v4689 = vld [vmem:[#allocation7 + $0x558] sm:$0xf]
        %v4690 = vld [vmem:[#allocation7 + $0x55c] sm:$0xf]
        %v4691 = vld [vmem:[#allocation7 + $0x560] sm:$0xf]
        %v4692 = vld [vmem:[#allocation7 + $0x564] sm:$0xf]
        %v4693 = vld [vmem:[#allocation7 + $0x568] sm:$0xf]
        %v4694 = vld [vmem:[#allocation7 + $0x56c] sm:$0xf]
        %v4695 = vld [vmem:[#allocation7 + $0x570] sm:$0xf]
        %v4696 = vld [vmem:[#allocation7 + $0x574] sm:$0xf]
        %v4697 = vld [vmem:[#allocation7 + $0x578] sm:$0xf]
        %v4698 = vld [vmem:[#allocation7 + $0x57c] sm:$0xf]
        %v4699 = vld [vmem:[#allocation7 + $0x580] sm:$0xf]
        %v4700 = vld [vmem:[#allocation7 + $0x584] sm:$0xf]
        %v4701 = vld [vmem:[#allocation7 + $0x588] sm:$0xf]
        %v4702 = vld [vmem:[#allocation7 + $0x58c] sm:$0xf]
        %v4703 = vld [vmem:[#allocation7 + $0x590] sm:$0xf]
        %v4704 = vld [vmem:[#allocation7 + $0x594] sm:$0xf]
        %v4705 = vld [vmem:[#allocation7 + $0x598] sm:$0xf]
        %v4706 = vld [vmem:[#allocation7 + $0x59c] sm:$0xf]
        %v4707 = vld [vmem:[#allocation7 + $0x5a0] sm:$0xf]
        %v4708 = vld [vmem:[#allocation7 + $0x5a4] sm:$0xf]
        %v4709 = vld [vmem:[#allocation7 + $0x5a8] sm:$0xf]
        %v4710 = vld [vmem:[#allocation7 + $0x5ac] sm:$0xf]
        %v4711 = vld [vmem:[#allocation7 + $0x5b0] sm:$0xf]
        %v4712 = vld [vmem:[#allocation7 + $0x5b4] sm:$0xf]
        %v4713 = vld [vmem:[#allocation7 + $0x5b8] sm:$0xf]
        %v4714 = vld [vmem:[#allocation7 + $0x5bc] sm:$0xf]
        %v4715 = vld [vmem:[#allocation7 + $0x5c0] sm:$0xf]
        %v4716 = vld [vmem:[#allocation7 + $0x5c4] sm:$0xf]
        %v4717 = vld [vmem:[#allocation7 + $0x5c8] sm:$0xf]
        %v4718 = vld [vmem:[#allocation7 + $0x5cc] sm:$0xf]
        %v4719 = vld [vmem:[#allocation7 + $0x5d0] sm:$0xf]
        %v4720 = vld [vmem:[#allocation7 + $0x5d4] sm:$0xf]
        %v4721 = vld [vmem:[#allocation7 + $0x5d8] sm:$0xf]
        %v4722 = vld [vmem:[#allocation7 + $0x5dc] sm:$0xf]
        %v4723 = vld [vmem:[#allocation7 + $0x5e0] sm:$0xf]
        %v4724 = vld [vmem:[#allocation7 + $0x5e4] sm:$0xf]
        %v4725 = vld [vmem:[#allocation7 + $0x5e8] sm:$0xf]
        %v4726 = vld [vmem:[#allocation7 + $0x5ec] sm:$0xf]
        %v4727 = vld [vmem:[#allocation7 + $0x5f0] sm:$0xf]
        %v4728 = vld [vmem:[#allocation7 + $0x5f4] sm:$0xf]
        %v4729 = vld [vmem:[#allocation7 + $0x5f8] sm:$0xf]
        %v4730 = vld [vmem:[#allocation7 + $0x5fc] sm:$0xf]
        %v4731 = vld [vmem:[#allocation7 + $0x600] sm:$0xf]
        %v4732 = vld [vmem:[#allocation7 + $0x604] sm:$0xf]
        %v4733 = vld [vmem:[#allocation7 + $0x608] sm:$0xf]
        %v4734 = vld [vmem:[#allocation7 + $0x60c] sm:$0xf]
        %v4735 = vld [vmem:[#allocation7 + $0x610] sm:$0xf]
        %v4736 = vld [vmem:[#allocation7 + $0x614] sm:$0xf]
        %v4737 = vld [vmem:[#allocation7 + $0x618] sm:$0xf]
        %v4738 = vld [vmem:[#allocation7 + $0x61c] sm:$0xf]
        %v4739 = vld [vmem:[#allocation7 + $0x620] sm:$0xf]
        %v4740 = vld [vmem:[#allocation7 + $0x624] sm:$0xf]
        %v4741 = vld [vmem:[#allocation7 + $0x628] sm:$0xf]
        %v4742 = vld [vmem:[#allocation7 + $0x62c] sm:$0xf]
        %v4743 = vld [vmem:[#allocation7 + $0x630] sm:$0xf]
        %v4744 = vld [vmem:[#allocation7 + $0x634] sm:$0xf]
        %v4745 = vld [vmem:[#allocation7 + $0x638] sm:$0xf]
        %v4746 = vld [vmem:[#allocation7 + $0x63c] sm:$0xf]
        %v4747 = vld [vmem:[#allocation7 + $0x640] sm:$0xf]
        %v4748 = vld [vmem:[#allocation7 + $0x644] sm:$0xf]
        %v4749 = vld [vmem:[#allocation7 + $0x648] sm:$0xf]
        %v4750 = vld [vmem:[#allocation7 + $0x64c] sm:$0xf]
        %v4751 = vld [vmem:[#allocation7 + $0x650] sm:$0xf]
        %v4752 = vld [vmem:[#allocation7 + $0x654] sm:$0xf]
        %v4753 = vld [vmem:[#allocation7 + $0x658] sm:$0xf]
        %v4754 = vld [vmem:[#allocation7 + $0x65c] sm:$0xf]
        %v4755 = vld [vmem:[#allocation7 + $0x660] sm:$0xf]
        %v4756 = vld [vmem:[#allocation7 + $0x664] sm:$0xf]
        %v4757 = vld [vmem:[#allocation7 + $0x668] sm:$0xf]
        %v4758 = vld [vmem:[#allocation7 + $0x66c] sm:$0xf]
        %v4759 = vld [vmem:[#allocation7 + $0x670] sm:$0xf]
        %v4760 = vld [vmem:[#allocation7 + $0x674] sm:$0xf]
        %v4761 = vld [vmem:[#allocation7 + $0x678] sm:$0xf]
        %v4762 = vld [vmem:[#allocation7 + $0x67c] sm:$0xf]
        %v4763 = vld [vmem:[#allocation7 + $0x680] sm:$0xf]
        %v4764 = vld [vmem:[#allocation7 + $0x684] sm:$0xf]
        %v4765 = vld [vmem:[#allocation7 + $0x688] sm:$0xf]
        %v4766 = vld [vmem:[#allocation7 + $0x68c] sm:$0xf]
        %v4767 = vld [vmem:[#allocation7 + $0x690] sm:$0xf]
        %v4768 = vld [vmem:[#allocation7 + $0x694] sm:$0xf]
        %v4769 = vld [vmem:[#allocation7 + $0x698] sm:$0xf]
        %v4770 = vld [vmem:[#allocation7 + $0x69c] sm:$0xf]
        %v4771 = vld [vmem:[#allocation7 + $0x6a0] sm:$0xf]
        %v4772 = vld [vmem:[#allocation7 + $0x6a4] sm:$0xf]
        %v4773 = vld [vmem:[#allocation7 + $0x6a8] sm:$0xf]
        %v4774 = vld [vmem:[#allocation7 + $0x6ac] sm:$0xf]
        %v4775 = vld [vmem:[#allocation7 + $0x6b0] sm:$0xf]
        %v4776 = vld [vmem:[#allocation7 + $0x6b4] sm:$0xf]
        %v4777 = vld [vmem:[#allocation7 + $0x6b8] sm:$0xf]
        %v4778 = vld [vmem:[#allocation7 + $0x6bc] sm:$0xf]
        %v4779 = vld [vmem:[#allocation7 + $0x6c0] sm:$0xf]
        %v4780 = vld [vmem:[#allocation7 + $0x6c4] sm:$0xf]
        %v4781 = vld [vmem:[#allocation7 + $0x6c8] sm:$0xf]
        %v4782 = vld [vmem:[#allocation7 + $0x6cc] sm:$0xf]
        %v4783 = vld [vmem:[#allocation7 + $0x6d0] sm:$0xf]
        %v4784 = vld [vmem:[#allocation7 + $0x6d4] sm:$0xf]
        %v4785 = vld [vmem:[#allocation7 + $0x6d8] sm:$0xf]
        %v4786 = vld [vmem:[#allocation7 + $0x6dc] sm:$0xf]
        %v4787 = vld [vmem:[#allocation7 + $0x6e0] sm:$0xf]
        %v4788 = vld [vmem:[#allocation7 + $0x6e4] sm:$0xf]
        %v4789 = vld [vmem:[#allocation7 + $0x6e8] sm:$0xf]
        %v4790 = vld [vmem:[#allocation7 + $0x6ec] sm:$0xf]
        %v4791 = vld [vmem:[#allocation7 + $0x6f0] sm:$0xf]
        %v4792 = vld [vmem:[#allocation7 + $0x6f4] sm:$0xf]
        %v4793 = vld [vmem:[#allocation7 + $0x6f8] sm:$0xf]
        %v4794 = vld [vmem:[#allocation7 + $0x6fc] sm:$0xf]
        %v4795 = vld [vmem:[#allocation7 + $0x700] sm:$0xf]
        %v4796 = vld [vmem:[#allocation7 + $0x704] sm:$0xf]
        %v4797 = vld [vmem:[#allocation7 + $0x708] sm:$0xf]
        %v4798 = vld [vmem:[#allocation7 + $0x70c] sm:$0xf]
        %v4799 = vld [vmem:[#allocation7 + $0x710] sm:$0xf]
        %v4800 = vld [vmem:[#allocation7 + $0x714] sm:$0xf]
        %v4801 = vld [vmem:[#allocation7 + $0x718] sm:$0xf]
        %v4802 = vld [vmem:[#allocation7 + $0x71c] sm:$0xf]
        %v4803 = vld [vmem:[#allocation7 + $0x720] sm:$0xf]
        %v4804 = vld [vmem:[#allocation7 + $0x724] sm:$0xf]
        %v4805 = vld [vmem:[#allocation7 + $0x728] sm:$0xf]
        %v4806 = vld [vmem:[#allocation7 + $0x72c] sm:$0xf]
        %v4807 = vld [vmem:[#allocation7 + $0x730] sm:$0xf]
        %v4808 = vld [vmem:[#allocation7 + $0x734] sm:$0xf]
        %v4809 = vld [vmem:[#allocation7 + $0x738] sm:$0xf]
        %v4810 = vld [vmem:[#allocation7 + $0x73c] sm:$0xf]
        %v4811 = vld [vmem:[#allocation7 + $0x740] sm:$0xf]
        %v4812 = vld [vmem:[#allocation7 + $0x744] sm:$0xf]
        %v4813 = vld [vmem:[#allocation7 + $0x748] sm:$0xf]
        %v4814 = vld [vmem:[#allocation7 + $0x74c] sm:$0xf]
        %v4815 = vld [vmem:[#allocation7 + $0x750] sm:$0xf]
        %v4816 = vld [vmem:[#allocation7 + $0x754] sm:$0xf]
        %v4817 = vld [vmem:[#allocation7 + $0x758] sm:$0xf]
        %v4818 = vld [vmem:[#allocation7 + $0x75c] sm:$0xf]
        %v4819 = vld [vmem:[#allocation7 + $0x760] sm:$0xf]
        %v4820 = vld [vmem:[#allocation7 + $0x764] sm:$0xf]
        %v4821 = vld [vmem:[#allocation7 + $0x768] sm:$0xf]
        %v4822 = vld [vmem:[#allocation7 + $0x76c] sm:$0xf]
        %v4823 = vld [vmem:[#allocation7 + $0x770] sm:$0xf]
        %v4824 = vld [vmem:[#allocation7 + $0x774] sm:$0xf]
        %v4825 = vld [vmem:[#allocation7 + $0x778] sm:$0xf]
        %v4826 = vld [vmem:[#allocation7 + $0x77c] sm:$0xf]
        %v4827 = vld [vmem:[#allocation7 + $0x780] sm:$0xf]
        %v4828 = vld [vmem:[#allocation7 + $0x784] sm:$0xf]
        %v4829 = vld [vmem:[#allocation7 + $0x788] sm:$0xf]
        %v4830 = vld [vmem:[#allocation7 + $0x78c] sm:$0xf]
        %v4831 = vld [vmem:[#allocation7 + $0x790] sm:$0xf]
        %v4832 = vld [vmem:[#allocation7 + $0x794] sm:$0xf]
        %v4833 = vld [vmem:[#allocation7 + $0x798] sm:$0xf]
        %v4834 = vld [vmem:[#allocation7 + $0x79c] sm:$0xf]
        %v4835 = vld [vmem:[#allocation7 + $0x7a0] sm:$0xf]
        %v4836 = vld [vmem:[#allocation7 + $0x7a4] sm:$0xf]
        %v4837 = vld [vmem:[#allocation7 + $0x7a8] sm:$0xf]
        %v4838 = vld [vmem:[#allocation7 + $0x7ac] sm:$0xf]
        %v4839 = vld [vmem:[#allocation7 + $0x7b0] sm:$0xf]
        %v4840 = vld [vmem:[#allocation7 + $0x7b4] sm:$0xf]
        %v4841 = vld [vmem:[#allocation7 + $0x7b8] sm:$0xf]
        %v4842 = vld [vmem:[#allocation7 + $0x7bc] sm:$0xf]
        %v4843 = vld [vmem:[#allocation7 + $0x7c0] sm:$0xf]
        %v4844 = vld [vmem:[#allocation7 + $0x7c4] sm:$0xf]
        %v4845 = vld [vmem:[#allocation7 + $0x7c8] sm:$0xf]
        %v4846 = vld [vmem:[#allocation7 + $0x7cc] sm:$0xf]
        %v4847 = vld [vmem:[#allocation7 + $0x7d0] sm:$0xf]
        %v4848 = vld [vmem:[#allocation7 + $0x7d4] sm:$0xf]
        %v4849 = vld [vmem:[#allocation7 + $0x7d8] sm:$0xf]
        %v4850 = vld [vmem:[#allocation7 + $0x7dc] sm:$0xf]
        %v4851 = vld [vmem:[#allocation7 + $0x7e0] sm:$0xf]
        %v4852 = vld [vmem:[#allocation7 + $0x7e4] sm:$0xf]
        %v4853 = vld [vmem:[#allocation7 + $0x7e8] sm:$0xf]
        %v4854 = vld [vmem:[#allocation7 + $0x7ec] sm:$0xf]
        %v4855 = vld [vmem:[#allocation7 + $0x7f0] sm:$0xf]
        %v4856 = vld [vmem:[#allocation7 + $0x7f4] sm:$0xf]
        %v4857 = vld [vmem:[#allocation7 + $0x7f8] sm:$0xf]
        %v4858 = vld [vmem:[#allocation7 + $0x7fc] sm:$0xf]
        %v4859 = vld [vmem:[#allocation7 + $0x800] sm:$0xf]
        %v4860 = vld [vmem:[#allocation7 + $0x804] sm:$0xf]
        %v4861 = vld [vmem:[#allocation7 + $0x808] sm:$0xf]
        %v4862 = vld [vmem:[#allocation7 + $0x80c] sm:$0xf]
        %v4863 = vld [vmem:[#allocation7 + $0x810] sm:$0xf]
        %v4864 = vld [vmem:[#allocation7 + $0x814] sm:$0xf]
        %v4865 = vld [vmem:[#allocation7 + $0x818] sm:$0xf]
        %v4866 = vld [vmem:[#allocation7 + $0x81c] sm:$0xf]
        %v4867 = vld [vmem:[#allocation7 + $0x820] sm:$0xf]
        %v4868 = vld [vmem:[#allocation7 + $0x824] sm:$0xf]
        %v4869 = vld [vmem:[#allocation7 + $0x828] sm:$0xf]
        %v4870 = vld [vmem:[#allocation7 + $0x82c] sm:$0xf]
        %v4871 = vld [vmem:[#allocation7 + $0x830] sm:$0xf]
        %v4872 = vld [vmem:[#allocation7 + $0x834] sm:$0xf]
        %v4873 = vld [vmem:[#allocation7 + $0x838] sm:$0xf]
        %v4874 = vld [vmem:[#allocation7 + $0x83c] sm:$0xf]
        %v4875 = vld [vmem:[#allocation7 + $0x840] sm:$0xf]
        %v4876 = vld [vmem:[#allocation7 + $0x844] sm:$0xf]
        %v4877 = vld [vmem:[#allocation7 + $0x848] sm:$0xf]
        %v4878 = vld [vmem:[#allocation7 + $0x84c] sm:$0xf]
        %v4879 = vld [vmem:[#allocation7 + $0x850] sm:$0xf]
        %v4880 = vld [vmem:[#allocation7 + $0x854] sm:$0xf]
        %v4881 = vld [vmem:[#allocation7 + $0x858] sm:$0xf]
        %v4882 = vld [vmem:[#allocation7 + $0x85c] sm:$0xf]
        %v4883 = vld [vmem:[#allocation7 + $0x860] sm:$0xf]
        %v4884 = vld [vmem:[#allocation7 + $0x864] sm:$0xf]
        %v4885 = vld [vmem:[#allocation7 + $0x868] sm:$0xf]
        %v4886 = vld [vmem:[#allocation7 + $0x86c] sm:$0xf]
        %v4887 = vld [vmem:[#allocation7 + $0x870] sm:$0xf]
        %v4888 = vld [vmem:[#allocation7 + $0x874] sm:$0xf]
        %v4889 = vld [vmem:[#allocation7 + $0x878] sm:$0xf]
        %v4890 = vld [vmem:[#allocation7 + $0x87c] sm:$0xf]
        %v4891 = vld [vmem:[#allocation7 + $0x880] sm:$0xf]
        %v4892 = vld [vmem:[#allocation7 + $0x884] sm:$0xf]
        %v4893 = vld [vmem:[#allocation7 + $0x888] sm:$0xf]
        %v4894 = vld [vmem:[#allocation7 + $0x88c] sm:$0xf]
        %v4895 = vld [vmem:[#allocation7 + $0x890] sm:$0xf]
        %v4896 = vld [vmem:[#allocation7 + $0x894] sm:$0xf]
        %v4897 = vld [vmem:[#allocation7 + $0x898] sm:$0xf]
        %v4898 = vld [vmem:[#allocation7 + $0x89c] sm:$0xf]
        %v4899 = vld [vmem:[#allocation7 + $0x8a0] sm:$0xf]
        %v4900 = vld [vmem:[#allocation7 + $0x8a4] sm:$0xf]
        %v4901 = vld [vmem:[#allocation7 + $0x8a8] sm:$0xf]
        %v4902 = vld [vmem:[#allocation7 + $0x8ac] sm:$0xf]
        %v4903 = vld [vmem:[#allocation7 + $0x8b0] sm:$0xf]
        %v4904 = vld [vmem:[#allocation7 + $0x8b4] sm:$0xf]
        %v4905 = vld [vmem:[#allocation7 + $0x8b8] sm:$0xf]
        %v4906 = vld [vmem:[#allocation7 + $0x8bc] sm:$0xf]
        %v4907 = vld [vmem:[#allocation7 + $0x8c0] sm:$0xf]
        %v4908 = vld [vmem:[#allocation7 + $0x8c4] sm:$0xf]
        %v4909 = vld [vmem:[#allocation7 + $0x8c8] sm:$0xf]
        %v4910 = vld [vmem:[#allocation7 + $0x8cc] sm:$0xf]
        %v4911 = vld [vmem:[#allocation7 + $0x8d0] sm:$0xf]
        %v4912 = vld [vmem:[#allocation7 + $0x8d4] sm:$0xf]
        %v4913 = vld [vmem:[#allocation7 + $0x8d8] sm:$0xf]
        %v4914 = vld [vmem:[#allocation7 + $0x8dc] sm:$0xf]
        %v4915 = vld [vmem:[#allocation7 + $0x8e0] sm:$0xf]
        %v4916 = vld [vmem:[#allocation7 + $0x8e4] sm:$0xf]
        %v4917 = vld [vmem:[#allocation7 + $0x8e8] sm:$0xf]
        %v4918 = vld [vmem:[#allocation7 + $0x8ec] sm:$0xf]
        %v4919 = vld [vmem:[#allocation7 + $0x8f0] sm:$0xf]
        %v4920 = vld [vmem:[#allocation7 + $0x8f4] sm:$0xf]
        %v4921 = vld [vmem:[#allocation7 + $0x8f8] sm:$0xf]
        %v4922 = vld [vmem:[#allocation7 + $0x8fc] sm:$0xf]
        %v4923 = vld [vmem:[#allocation7 + $0x900] sm:$0xf]
        %v4924 = vld [vmem:[#allocation7 + $0x904] sm:$0xf]
        %v4925 = vld [vmem:[#allocation7 + $0x908] sm:$0xf]
        %v4926 = vld [vmem:[#allocation7 + $0x90c] sm:$0xf]
        %v4927 = vld [vmem:[#allocation7 + $0x910] sm:$0xf]
        %v4928 = vld [vmem:[#allocation7 + $0x914] sm:$0xf]
        %v4929 = vld [vmem:[#allocation7 + $0x918] sm:$0xf]
        %v4930 = vld [vmem:[#allocation7 + $0x91c] sm:$0xf]
        %v4931 = vld [vmem:[#allocation7 + $0x920] sm:$0xf]
        %v4932 = vld [vmem:[#allocation7 + $0x924] sm:$0xf]
        %v4933 = vld [vmem:[#allocation7 + $0x928] sm:$0xf]
        %v4934 = vld [vmem:[#allocation7 + $0x92c] sm:$0xf]
        %v4935 = vld [vmem:[#allocation7 + $0x930] sm:$0xf]
        %v4936 = vld [vmem:[#allocation7 + $0x934] sm:$0xf]
        %v4937 = vld [vmem:[#allocation7 + $0x938] sm:$0xf]
        %v4938 = vld [vmem:[#allocation7 + $0x93c] sm:$0xf]
        %v4939 = vld [vmem:[#allocation7 + $0x940] sm:$0xf]
        %v4940 = vld [vmem:[#allocation7 + $0x944] sm:$0xf]
        %v4941 = vld [vmem:[#allocation7 + $0x948] sm:$0xf]
        %v4942 = vld [vmem:[#allocation7 + $0x94c] sm:$0xf]
        %v4943 = vld [vmem:[#allocation7 + $0x950] sm:$0xf]
        %v4944 = vld [vmem:[#allocation7 + $0x954] sm:$0xf]
        %v4945 = vld [vmem:[#allocation7 + $0x958] sm:$0xf]
        %v4946 = vld [vmem:[#allocation7 + $0x95c] sm:$0xf]
        %v4947 = vld [vmem:[#allocation7 + $0x960] sm:$0xf]
        %v4948 = vld [vmem:[#allocation7 + $0x964] sm:$0xf]
        %v4949 = vld [vmem:[#allocation7 + $0x968] sm:$0xf]
        %v4950 = vld [vmem:[#allocation7 + $0x96c] sm:$0xf]
        %v4951 = vld [vmem:[#allocation7 + $0x970] sm:$0xf]
        %v4952 = vld [vmem:[#allocation7 + $0x974] sm:$0xf]
        %v4953 = vld [vmem:[#allocation7 + $0x978] sm:$0xf]
        %v4954 = vld [vmem:[#allocation7 + $0x97c] sm:$0xf]
        %v4955 = vld [vmem:[#allocation7 + $0x980] sm:$0xf]
        %v4956 = vld [vmem:[#allocation7 + $0x984] sm:$0xf]
        %v4957 = vld [vmem:[#allocation7 + $0x988] sm:$0xf]
        %v4958 = vld [vmem:[#allocation7 + $0x98c] sm:$0xf]
        %v4959 = vld [vmem:[#allocation7 + $0x990] sm:$0xf]
        %v4960 = vld [vmem:[#allocation7 + $0x994] sm:$0xf]
        %v4961 = vld [vmem:[#allocation7 + $0x998] sm:$0xf]
        %v4962 = vld [vmem:[#allocation7 + $0x99c] sm:$0xf]
        %v4963 = vld [vmem:[#allocation7 + $0x9a0] sm:$0xf]
        %v4964 = vld [vmem:[#allocation7 + $0x9a4] sm:$0xf]
        %v4965 = vld [vmem:[#allocation7 + $0x9a8] sm:$0xf]
        %v4966 = vld [vmem:[#allocation7 + $0x9ac] sm:$0xf]
        %v4967 = vld [vmem:[#allocation7 + $0x9b0] sm:$0xf]
        %v4968 = vld [vmem:[#allocation7 + $0x9b4] sm:$0xf]
        %v4969 = vld [vmem:[#allocation7 + $0x9b8] sm:$0xf]
        %v4970 = vld [vmem:[#allocation7 + $0x9bc] sm:$0xf]
        %v4971 = vld [vmem:[#allocation7 + $0x9c0] sm:$0xf]
        %v4972 = vld [vmem:[#allocation7 + $0x9c4] sm:$0xf]
        %v4973 = vld [vmem:[#allocation7 + $0x9c8] sm:$0xf]
        %v4974 = vld [vmem:[#allocation7 + $0x9cc] sm:$0xf]
        %v4975 = vld [vmem:[#allocation7 + $0x9d0] sm:$0xf]
        %v4976 = vld [vmem:[#allocation7 + $0x9d4] sm:$0xf]
        %v4977 = vld [vmem:[#allocation7 + $0x9d8] sm:$0xf]
        %v4978 = vld [vmem:[#allocation7 + $0x9dc] sm:$0xf]
        %v4979 = vld [vmem:[#allocation7 + $0x9e0] sm:$0xf]
        %v4980 = vld [vmem:[#allocation7 + $0x9e4] sm:$0xf]
        %v4981 = vld [vmem:[#allocation7 + $0x9e8] sm:$0xf]
        %v4982 = vld [vmem:[#allocation7 + $0x9ec] sm:$0xf]
        %v4983 = vld [vmem:[#allocation7 + $0x9f0] sm:$0xf]
        %v4984 = vld [vmem:[#allocation7 + $0x9f4] sm:$0xf]
        %v4985 = vld [vmem:[#allocation7 + $0x9f8] sm:$0xf]
        %v4986 = vld [vmem:[#allocation7 + $0x9fc] sm:$0xf]
        %v4987 = vld [vmem:[#allocation7 + $0xa00] sm:$0xf]
        %v4988 = vld [vmem:[#allocation7 + $0xa04] sm:$0xf]
        %v4989 = vld [vmem:[#allocation7 + $0xa08] sm:$0xf]
        %v4990 = vld [vmem:[#allocation7 + $0xa0c] sm:$0xf]
        %v4991 = vld [vmem:[#allocation7 + $0xa10] sm:$0xf]
        %v4992 = vld [vmem:[#allocation7 + $0xa14] sm:$0xf]
        %v4993 = vld [vmem:[#allocation7 + $0xa18] sm:$0xf]
        %v4994 = vld [vmem:[#allocation7 + $0xa1c] sm:$0xf]
        %v4995 = vld [vmem:[#allocation7 + $0xa20] sm:$0xf]
        %v4996 = vld [vmem:[#allocation7 + $0xa24] sm:$0xf]
        %v4997 = vld [vmem:[#allocation7 + $0xa28] sm:$0xf]
        %v4998 = vld [vmem:[#allocation7 + $0xa2c] sm:$0xf]
        %v4999 = vld [vmem:[#allocation7 + $0xa30] sm:$0xf]
        %v5000 = vld [vmem:[#allocation7 + $0xa34] sm:$0xf]
        %v5001 = vld [vmem:[#allocation7 + $0xa38] sm:$0xf]
        %v5002 = vld [vmem:[#allocation7 + $0xa3c] sm:$0xf]
        %v5003 = vld [vmem:[#allocation7 + $0xa40] sm:$0xf]
        %v5004 = vld [vmem:[#allocation7 + $0xa44] sm:$0xf]
        %v5005 = vld [vmem:[#allocation7 + $0xa48] sm:$0xf]
        %v5006 = vld [vmem:[#allocation7 + $0xa4c] sm:$0xf]
        %v5007 = vld [vmem:[#allocation7 + $0xa50] sm:$0xf]
        %v5008 = vld [vmem:[#allocation7 + $0xa54] sm:$0xf]
        %v5009 = vld [vmem:[#allocation7 + $0xa58] sm:$0xf]
        %v5010 = vld [vmem:[#allocation7 + $0xa5c] sm:$0xf]
        %v5011 = vld [vmem:[#allocation7 + $0xa60] sm:$0xf]
        %v5012 = vld [vmem:[#allocation7 + $0xa64] sm:$0xf]
        %v5013 = vld [vmem:[#allocation7 + $0xa68] sm:$0xf]
        %v5014 = vld [vmem:[#allocation7 + $0xa6c] sm:$0xf]
        %v5015 = vld [vmem:[#allocation7 + $0xa70] sm:$0xf]
        %v5016 = vld [vmem:[#allocation7 + $0xa74] sm:$0xf]
        %v5017 = vld [vmem:[#allocation7 + $0xa78] sm:$0xf]
        %v5018 = vld [vmem:[#allocation7 + $0xa7c] sm:$0xf]
        %v5019 = vld [vmem:[#allocation7 + $0xa80] sm:$0xf]
        %v5020 = vld [vmem:[#allocation7 + $0xa84] sm:$0xf]
        %v5021 = vld [vmem:[#allocation7 + $0xa88] sm:$0xf]
        %v5022 = vld [vmem:[#allocation7 + $0xa8c] sm:$0xf]
        %v5023 = vld [vmem:[#allocation7 + $0xa90] sm:$0xf]
        %v5024 = vld [vmem:[#allocation7 + $0xa94] sm:$0xf]
        %v5025 = vld [vmem:[#allocation7 + $0xa98] sm:$0xf]
        %v5026 = vld [vmem:[#allocation7 + $0xa9c] sm:$0xf]
        %v5027 = vld [vmem:[#allocation7 + $0xaa0] sm:$0xf]
        %v5028 = vld [vmem:[#allocation7 + $0xaa4] sm:$0xf]
        %v5029 = vld [vmem:[#allocation7 + $0xaa8] sm:$0xf]
        %v5030 = vld [vmem:[#allocation7 + $0xaac] sm:$0xf]
        %v5031 = vld [vmem:[#allocation7 + $0xab0] sm:$0xf]
        %v5032 = vld [vmem:[#allocation7 + $0xab4] sm:$0xf]
        %v5033 = vld [vmem:[#allocation7 + $0xab8] sm:$0xf]
        %v5034 = vld [vmem:[#allocation7 + $0xabc] sm:$0xf]
        %v5035 = vld [vmem:[#allocation7 + $0xac0] sm:$0xf]
        %v5036 = vld [vmem:[#allocation7 + $0xac4] sm:$0xf]
        %v5037 = vld [vmem:[#allocation7 + $0xac8] sm:$0xf]
        %v5038 = vld [vmem:[#allocation7 + $0xacc] sm:$0xf]
        %v5039 = vld [vmem:[#allocation7 + $0xad0] sm:$0xf]
        %v5040 = vld [vmem:[#allocation7 + $0xad4] sm:$0xf]
        %v5041 = vld [vmem:[#allocation7 + $0xad8] sm:$0xf]
        %v5042 = vld [vmem:[#allocation7 + $0xadc] sm:$0xf]
        %v5043 = vld [vmem:[#allocation7 + $0xae0] sm:$0xf]
        %v5044 = vld [vmem:[#allocation7 + $0xae4] sm:$0xf]
        %v5045 = vld [vmem:[#allocation7 + $0xae8] sm:$0xf]
        %v5046 = vld [vmem:[#allocation7 + $0xaec] sm:$0xf]
        %v5047 = vld [vmem:[#allocation7 + $0xaf0] sm:$0xf]
        %v5048 = vld [vmem:[#allocation7 + $0xaf4] sm:$0xf]
        %v5049 = vld [vmem:[#allocation7 + $0xaf8] sm:$0xf]
        %v5050 = vld [vmem:[#allocation7 + $0xafc] sm:$0xf]
        %v5051 = vld [vmem:[#allocation7 + $0xb00] sm:$0xf]
        %v5052 = vld [vmem:[#allocation7 + $0xb04] sm:$0xf]
        %v5053 = vld [vmem:[#allocation7 + $0xb08] sm:$0xf]
        %v5054 = vld [vmem:[#allocation7 + $0xb0c] sm:$0xf]
        %v5055 = vld [vmem:[#allocation7 + $0xb10] sm:$0xf]
        %v5056 = vld [vmem:[#allocation7 + $0xb14] sm:$0xf]
        %v5057 = vld [vmem:[#allocation7 + $0xb18] sm:$0xf]
        %v5058 = vld [vmem:[#allocation7 + $0xb1c] sm:$0xf]
        %v5059 = vld [vmem:[#allocation7 + $0xb20] sm:$0xf]
        %v5060 = vld [vmem:[#allocation7 + $0xb24] sm:$0xf]
        %v5061 = vld [vmem:[#allocation7 + $0xb28] sm:$0xf]
        %v5062 = vld [vmem:[#allocation7 + $0xb2c] sm:$0xf]
        %v5063 = vld [vmem:[#allocation7 + $0xb30] sm:$0xf]
        %v5064 = vld [vmem:[#allocation7 + $0xb34] sm:$0xf]
        %v5065 = vld [vmem:[#allocation7 + $0xb38] sm:$0xf]
        %v5066 = vld [vmem:[#allocation7 + $0xb3c] sm:$0xf]
        %v5067 = vld [vmem:[#allocation7 + $0xb40] sm:$0xf]
        %v5068 = vld [vmem:[#allocation7 + $0xb44] sm:$0xf]
        %v5069 = vld [vmem:[#allocation7 + $0xb48] sm:$0xf]
        %v5070 = vld [vmem:[#allocation7 + $0xb4c] sm:$0xf]
        %v5071 = vld [vmem:[#allocation7 + $0xb50] sm:$0xf]
        %v5072 = vld [vmem:[#allocation7 + $0xb54] sm:$0xf]
        %v5073 = vld [vmem:[#allocation7 + $0xb58] sm:$0xf]
        %v5074 = vld [vmem:[#allocation7 + $0xb5c] sm:$0xf]
        %v5075 = vld [vmem:[#allocation7 + $0xb60] sm:$0xf]
        %v5076 = vld [vmem:[#allocation7 + $0xb64] sm:$0xf]
        %v5077 = vld [vmem:[#allocation7 + $0xb68] sm:$0xf]
        %v5078 = vld [vmem:[#allocation7 + $0xb6c] sm:$0xf]
        %v5079 = vld [vmem:[#allocation7 + $0xb70] sm:$0xf]
        %v5080 = vld [vmem:[#allocation7 + $0xb74] sm:$0xf]
        %v5081 = vld [vmem:[#allocation7 + $0xb78] sm:$0xf]
        %v5082 = vld [vmem:[#allocation7 + $0xb7c] sm:$0xf]
        %v5083 = vld [vmem:[#allocation7 + $0xb80] sm:$0xf]
        %v5084 = vld [vmem:[#allocation7 + $0xb84] sm:$0xf]
        %v5085 = vld [vmem:[#allocation7 + $0xb88] sm:$0xf]
        %v5086 = vld [vmem:[#allocation7 + $0xb8c] sm:$0xf]
        %v5087 = vld [vmem:[#allocation7 + $0xb90] sm:$0xf]
        %v5088 = vld [vmem:[#allocation7 + $0xb94] sm:$0xf]
        %v5089 = vld [vmem:[#allocation7 + $0xb98] sm:$0xf]
        %v5090 = vld [vmem:[#allocation7 + $0xb9c] sm:$0xf]
        %v5091 = vld [vmem:[#allocation7 + $0xba0] sm:$0xf]
        %v5092 = vld [vmem:[#allocation7 + $0xba4] sm:$0xf]
        %v5093 = vld [vmem:[#allocation7 + $0xba8] sm:$0xf]
        %v5094 = vld [vmem:[#allocation7 + $0xbac] sm:$0xf]
        %v5095 = vld [vmem:[#allocation7 + $0xbb0] sm:$0xf]
        %v5096 = vld [vmem:[#allocation7 + $0xbb4] sm:$0xf]
        %v5097 = vld [vmem:[#allocation7 + $0xbb8] sm:$0xf]
        %v5098 = vld [vmem:[#allocation7 + $0xbbc] sm:$0xf]
        %v5099 = vld [vmem:[#allocation7 + $0xbc0] sm:$0xf]
        %v5100 = vld [vmem:[#allocation7 + $0xbc4] sm:$0xf]
        %v5101 = vld [vmem:[#allocation7 + $0xbc8] sm:$0xf]
        %v5102 = vld [vmem:[#allocation7 + $0xbcc] sm:$0xf]
        %v5103 = vld [vmem:[#allocation7 + $0xbd0] sm:$0xf]
        %v5104 = vld [vmem:[#allocation7 + $0xbd4] sm:$0xf]
        %v5105 = vld [vmem:[#allocation7 + $0xbd8] sm:$0xf]
        %v5106 = vld [vmem:[#allocation7 + $0xbdc] sm:$0xf]
        %v5107 = vld [vmem:[#allocation7 + $0xbe0] sm:$0xf]
        %v5108 = vld [vmem:[#allocation7 + $0xbe4] sm:$0xf]
        %v5109 = vld [vmem:[#allocation7 + $0xbe8] sm:$0xf]
        %v5110 = vld [vmem:[#allocation7 + $0xbec] sm:$0xf]
        %v5111 = vld [vmem:[#allocation7 + $0xbf0] sm:$0xf]
        %v5112 = vld [vmem:[#allocation7 + $0xbf4] sm:$0xf]
        %v5113 = vld [vmem:[#allocation7 + $0xbf8] sm:$0xf]
        %v5114 = vld [vmem:[#allocation7 + $0xbfc] sm:$0xf]
        %v5115 = vld [vmem:[#allocation7 + $0xc00] sm:$0xf]
        %v5116 = vld [vmem:[#allocation7 + $0xc04] sm:$0xf]
        %v5117 = vld [vmem:[#allocation7 + $0xc08] sm:$0xf]
        %v5118 = vld [vmem:[#allocation7 + $0xc0c] sm:$0xf]
        %v5119 = vld [vmem:[#allocation7 + $0xc10] sm:$0xf]
        %v5120 = vld [vmem:[#allocation7 + $0xc14] sm:$0xf]
        %v5121 = vld [vmem:[#allocation7 + $0xc18] sm:$0xf]
        %v5122 = vld [vmem:[#allocation7 + $0xc1c] sm:$0xf]
        %v5123 = vld [vmem:[#allocation7 + $0xc20] sm:$0xf]
        %v5124 = vld [vmem:[#allocation7 + $0xc24] sm:$0xf]
        %v5125 = vld [vmem:[#allocation7 + $0xc28] sm:$0xf]
        %v5126 = vld [vmem:[#allocation7 + $0xc2c] sm:$0xf]
        %v5127 = vld [vmem:[#allocation7 + $0xc30] sm:$0xf]
        %v5128 = vld [vmem:[#allocation7 + $0xc34] sm:$0xf]
        %v5129 = vld [vmem:[#allocation7 + $0xc38] sm:$0xf]
        %v5130 = vld [vmem:[#allocation7 + $0xc3c] sm:$0xf]
        %v5131 = vld [vmem:[#allocation7 + $0xc40] sm:$0xf]
        %v5132 = vld [vmem:[#allocation7 + $0xc44] sm:$0xf]
        %v5133 = vld [vmem:[#allocation7 + $0xc48] sm:$0xf]
        %v5134 = vld [vmem:[#allocation7 + $0xc4c] sm:$0xf]
        %v5135 = vld [vmem:[#allocation7 + $0xc50] sm:$0xf]
        %v5136 = vld [vmem:[#allocation7 + $0xc54] sm:$0xf]
        %v5137 = vld [vmem:[#allocation7 + $0xc58] sm:$0xf]
        %v5138 = vld [vmem:[#allocation7 + $0xc5c] sm:$0xf]
        %v5139 = vld [vmem:[#allocation7 + $0xc60] sm:$0xf]
        %v5140 = vld [vmem:[#allocation7 + $0xc64] sm:$0xf]
        %v5141 = vld [vmem:[#allocation7 + $0xc68] sm:$0xf]
        %v5142 = vld [vmem:[#allocation7 + $0xc6c] sm:$0xf]
        %v5143 = vld [vmem:[#allocation7 + $0xc70] sm:$0xf]
        %v5144 = vld [vmem:[#allocation7 + $0xc74] sm:$0xf]
        %v5145 = vld [vmem:[#allocation7 + $0xc78] sm:$0xf]
        %v5146 = vld [vmem:[#allocation7 + $0xc7c] sm:$0xf]
        %v5147 = vld [vmem:[#allocation7 + $0xc80] sm:$0xf]
        %v5148 = vld [vmem:[#allocation7 + $0xc84] sm:$0xf]
        %v5149 = vld [vmem:[#allocation7 + $0xc88] sm:$0xf]
        %v5150 = vld [vmem:[#allocation7 + $0xc8c] sm:$0xf]
        %v5151 = vld [vmem:[#allocation7 + $0xc90] sm:$0xf]
        %v5152 = vld [vmem:[#allocation7 + $0xc94] sm:$0xf]
        %v5153 = vld [vmem:[#allocation7 + $0xc98] sm:$0xf]
        %v5154 = vld [vmem:[#allocation7 + $0xc9c] sm:$0xf]
        %v5155 = vld [vmem:[#allocation7 + $0xca0] sm:$0xf]
        %v5156 = vld [vmem:[#allocation7 + $0xca4] sm:$0xf]
        %v5157 = vld [vmem:[#allocation7 + $0xca8] sm:$0xf]
        %v5158 = vld [vmem:[#allocation7 + $0xcac] sm:$0xf]
        %v5159 = vld [vmem:[#allocation7 + $0xcb0] sm:$0xf]
        %v5160 = vld [vmem:[#allocation7 + $0xcb4] sm:$0xf]
        %v5161 = vld [vmem:[#allocation7 + $0xcb8] sm:$0xf]
        %v5162 = vld [vmem:[#allocation7 + $0xcbc] sm:$0xf]
        %v5163 = vld [vmem:[#allocation7 + $0xcc0] sm:$0xf]
        %v5164 = vld [vmem:[#allocation7 + $0xcc4] sm:$0xf]
        %v5165 = vld [vmem:[#allocation7 + $0xcc8] sm:$0xf]
        %v5166 = vld [vmem:[#allocation7 + $0xccc] sm:$0xf]
        %v5167 = vld [vmem:[#allocation7 + $0xcd0] sm:$0xf]
        %v5168 = vld [vmem:[#allocation7 + $0xcd4] sm:$0xf]
        %v5169 = vld [vmem:[#allocation7 + $0xcd8] sm:$0xf]
        %v5170 = vld [vmem:[#allocation7 + $0xcdc] sm:$0xf]
        %v5171 = vld [vmem:[#allocation7 + $0xce0] sm:$0xf]
        %v5172 = vld [vmem:[#allocation7 + $0xce4] sm:$0xf]
        %v5173 = vld [vmem:[#allocation7 + $0xce8] sm:$0xf]
        %v5174 = vld [vmem:[#allocation7 + $0xcec] sm:$0xf]
        %v5175 = vld [vmem:[#allocation7 + $0xcf0] sm:$0xf]
        %v5176 = vld [vmem:[#allocation7 + $0xcf4] sm:$0xf]
        %v5177 = vld [vmem:[#allocation7 + $0xcf8] sm:$0xf]
        %v5178 = vld [vmem:[#allocation7 + $0xcfc] sm:$0xf]
        %v5179 = vld [vmem:[#allocation7 + $0xd00] sm:$0xf]
        %v5180 = vld [vmem:[#allocation7 + $0xd04] sm:$0xf]
        %v5181 = vld [vmem:[#allocation7 + $0xd08] sm:$0xf]
        %v5182 = vld [vmem:[#allocation7 + $0xd0c] sm:$0xf]
        %v5183 = vld [vmem:[#allocation7 + $0xd10] sm:$0xf]
        %v5184 = vld [vmem:[#allocation7 + $0xd14] sm:$0xf]
        %v5185 = vld [vmem:[#allocation7 + $0xd18] sm:$0xf]
        %v5186 = vld [vmem:[#allocation7 + $0xd1c] sm:$0xf]
        %v5187 = vld [vmem:[#allocation7 + $0xd20] sm:$0xf]
        %v5188 = vld [vmem:[#allocation7 + $0xd24] sm:$0xf]
        %v5189 = vld [vmem:[#allocation7 + $0xd28] sm:$0xf]
        %v5190 = vld [vmem:[#allocation7 + $0xd2c] sm:$0xf]
        %v5191 = vld [vmem:[#allocation7 + $0xd30] sm:$0xf]
        %v5192 = vld [vmem:[#allocation7 + $0xd34] sm:$0xf]
        %v5193 = vld [vmem:[#allocation7 + $0xd38] sm:$0xf]
        %v5194 = vld [vmem:[#allocation7 + $0xd3c] sm:$0xf]
        %v5195 = vld [vmem:[#allocation7 + $0xd40] sm:$0xf]
        %v5196 = vld [vmem:[#allocation7 + $0xd44] sm:$0xf]
        %v5197 = vld [vmem:[#allocation7 + $0xd48] sm:$0xf]
        %v5198 = vld [vmem:[#allocation7 + $0xd4c] sm:$0xf]
        %v5199 = vld [vmem:[#allocation7 + $0xd50] sm:$0xf]
        %v5200 = vld [vmem:[#allocation7 + $0xd54] sm:$0xf]
        %v5201 = vld [vmem:[#allocation7 + $0xd58] sm:$0xf]
        %v5202 = vld [vmem:[#allocation7 + $0xd5c] sm:$0xf]
        %v5203 = vld [vmem:[#allocation7 + $0xd60] sm:$0xf]
        %v5204 = vld [vmem:[#allocation7 + $0xd64] sm:$0xf]
        %v5205 = vld [vmem:[#allocation7 + $0xd68] sm:$0xf]
        %v5206 = vld [vmem:[#allocation7 + $0xd6c] sm:$0xf]
        %v5207 = vld [vmem:[#allocation7 + $0xd70] sm:$0xf]
        %v5208 = vld [vmem:[#allocation7 + $0xd74] sm:$0xf]
        %v5209 = vld [vmem:[#allocation7 + $0xd78] sm:$0xf]
        %v5210 = vld [vmem:[#allocation7 + $0xd7c] sm:$0xf]
        %v5211 = vld [vmem:[#allocation7 + $0xd80] sm:$0xf]
        %v5212 = vld [vmem:[#allocation7 + $0xd84] sm:$0xf]
        %v5213 = vld [vmem:[#allocation7 + $0xd88] sm:$0xf]
        %v5214 = vld [vmem:[#allocation7 + $0xd8c] sm:$0xf]
        %v5215 = vld [vmem:[#allocation7 + $0xd90] sm:$0xf]
        %v5216 = vld [vmem:[#allocation7 + $0xd94] sm:$0xf]
        %v5217 = vld [vmem:[#allocation7 + $0xd98] sm:$0xf]
        %v5218 = vld [vmem:[#allocation7 + $0xd9c] sm:$0xf]
        %v5219 = vld [vmem:[#allocation7 + $0xda0] sm:$0xf]
        %v5220 = vld [vmem:[#allocation7 + $0xda4] sm:$0xf]
        %v5221 = vld [vmem:[#allocation7 + $0xda8] sm:$0xf]
        %v5222 = vld [vmem:[#allocation7 + $0xdac] sm:$0xf]
        %v5223 = vld [vmem:[#allocation7 + $0xdb0] sm:$0xf]
        %v5224 = vld [vmem:[#allocation7 + $0xdb4] sm:$0xf]
        %v5225 = vld [vmem:[#allocation7 + $0xdb8] sm:$0xf]
        %v5226 = vld [vmem:[#allocation7 + $0xdbc] sm:$0xf]
        %v5227 = vld [vmem:[#allocation7 + $0xdc0] sm:$0xf]
        %v5228 = vld [vmem:[#allocation7 + $0xdc4] sm:$0xf]
        %v5229 = vld [vmem:[#allocation7 + $0xdc8] sm:$0xf]
        %v5230 = vld [vmem:[#allocation7 + $0xdcc] sm:$0xf]
        %v5231 = vld [vmem:[#allocation7 + $0xdd0] sm:$0xf]
        %v5232 = vld [vmem:[#allocation7 + $0xdd4] sm:$0xf]
        %v5233 = vld [vmem:[#allocation7 + $0xdd8] sm:$0xf]
        %v5234 = vld [vmem:[#allocation7 + $0xddc] sm:$0xf]
        %v5235 = vld [vmem:[#allocation7 + $0xde0] sm:$0xf]
        %v5236 = vld [vmem:[#allocation7 + $0xde4] sm:$0xf]
        %v5237 = vld [vmem:[#allocation7 + $0xde8] sm:$0xf]
        %v5238 = vld [vmem:[#allocation7 + $0xdec] sm:$0xf]
        %v5239 = vld [vmem:[#allocation7 + $0xdf0] sm:$0xf]
        %v5240 = vld [vmem:[#allocation7 + $0xdf4] sm:$0xf]
        %v5241 = vld [vmem:[#allocation7 + $0xdf8] sm:$0xf]
        %v5242 = vld [vmem:[#allocation7 + $0xdfc] sm:$0xf]
        %v5243 = vld [vmem:[#allocation7 + $0xe00] sm:$0xf]
        %v5244 = vld [vmem:[#allocation7 + $0xe04] sm:$0xf]
        %v5245 = vld [vmem:[#allocation7 + $0xe08] sm:$0xf]
        %v5246 = vld [vmem:[#allocation7 + $0xe0c] sm:$0xf]
        %v5247 = vld [vmem:[#allocation7 + $0xe10] sm:$0xf]
        %v5248 = vld [vmem:[#allocation7 + $0xe14] sm:$0xf]
        %v5249 = vld [vmem:[#allocation7 + $0xe18] sm:$0xf]
        %v5250 = vld [vmem:[#allocation7 + $0xe1c] sm:$0xf]
        %v5251 = vld [vmem:[#allocation7 + $0xe20] sm:$0xf]
        %v5252 = vld [vmem:[#allocation7 + $0xe24] sm:$0xf]
        %v5253 = vld [vmem:[#allocation7 + $0xe28] sm:$0xf]
        %v5254 = vld [vmem:[#allocation7 + $0xe2c] sm:$0xf]
        %v5255 = vld [vmem:[#allocation7 + $0xe30] sm:$0xf]
        %v5256 = vld [vmem:[#allocation7 + $0xe34] sm:$0xf]
        %v5257 = vld [vmem:[#allocation7 + $0xe38] sm:$0xf]
        %v5258 = vld [vmem:[#allocation7 + $0xe3c] sm:$0xf]
        %v5259 = vld [vmem:[#allocation7 + $0xe40] sm:$0xf]
        %v5260 = vld [vmem:[#allocation7 + $0xe44] sm:$0xf]
        %v5261 = vld [vmem:[#allocation7 + $0xe48] sm:$0xf]
        %v5262 = vld [vmem:[#allocation7 + $0xe4c] sm:$0xf]
        %v5263 = vld [vmem:[#allocation7 + $0xe50] sm:$0xf]
        %v5264 = vld [vmem:[#allocation7 + $0xe54] sm:$0xf]
        %v5265 = vld [vmem:[#allocation7 + $0xe58] sm:$0xf]
        %v5266 = vld [vmem:[#allocation7 + $0xe5c] sm:$0xf]
        %v5267 = vld [vmem:[#allocation7 + $0xe60] sm:$0xf]
        %v5268 = vld [vmem:[#allocation7 + $0xe64] sm:$0xf]
        %v5269 = vld [vmem:[#allocation7 + $0xe68] sm:$0xf]
        %v5270 = vld [vmem:[#allocation7 + $0xe6c] sm:$0xf]
        %v5271 = vld [vmem:[#allocation7 + $0xe70] sm:$0xf]
        %v5272 = vld [vmem:[#allocation7 + $0xe74] sm:$0xf]
        %v5273 = vld [vmem:[#allocation7 + $0xe78] sm:$0xf]
        %v5274 = vld [vmem:[#allocation7 + $0xe7c] sm:$0xf]
        %v5275 = vld [vmem:[#allocation7 + $0xe80] sm:$0xf]
        %v5276 = vld [vmem:[#allocation7 + $0xe84] sm:$0xf]
        %v5277 = vld [vmem:[#allocation7 + $0xe88] sm:$0xf]
        %v5278 = vld [vmem:[#allocation7 + $0xe8c] sm:$0xf]
        %v5279 = vld [vmem:[#allocation7 + $0xe90] sm:$0xf]
        %v5280 = vld [vmem:[#allocation7 + $0xe94] sm:$0xf]
        %v5281 = vld [vmem:[#allocation7 + $0xe98] sm:$0xf]
        %v5282 = vld [vmem:[#allocation7 + $0xe9c] sm:$0xf]
        %v5283 = vld [vmem:[#allocation7 + $0xea0] sm:$0xf]
        %v5284 = vld [vmem:[#allocation7 + $0xea4] sm:$0xf]
        %v5285 = vld [vmem:[#allocation7 + $0xea8] sm:$0xf]
        %v5286 = vld [vmem:[#allocation7 + $0xeac] sm:$0xf]
        %v5287 = vld [vmem:[#allocation7 + $0xeb0] sm:$0xf]
        %v5288 = vld [vmem:[#allocation7 + $0xeb4] sm:$0xf]
        %v5289 = vld [vmem:[#allocation7 + $0xeb8] sm:$0xf]
        %v5290 = vld [vmem:[#allocation7 + $0xebc] sm:$0xf]
        %v5291 = vld [vmem:[#allocation7 + $0xec0] sm:$0xf]
        %v5292 = vld [vmem:[#allocation7 + $0xec4] sm:$0xf]
        %v5293 = vld [vmem:[#allocation7 + $0xec8] sm:$0xf]
        %v5294 = vld [vmem:[#allocation7 + $0xecc] sm:$0xf]
        %v5295 = vld [vmem:[#allocation7 + $0xed0] sm:$0xf]
        %v5296 = vld [vmem:[#allocation7 + $0xed4] sm:$0xf]
        %v5297 = vld [vmem:[#allocation7 + $0xed8] sm:$0xf]
        %v5298 = vld [vmem:[#allocation7 + $0xedc] sm:$0xf]
        %v5299 = vld [vmem:[#allocation7 + $0xee0] sm:$0xf]
        %v5300 = vld [vmem:[#allocation7 + $0xee4] sm:$0xf]
        %v5301 = vld [vmem:[#allocation7 + $0xee8] sm:$0xf]
        %v5302 = vld [vmem:[#allocation7 + $0xeec] sm:$0xf]
        %v5303 = vld [vmem:[#allocation7 + $0xef0] sm:$0xf]
        %v5304 = vld [vmem:[#allocation7 + $0xef4] sm:$0xf]
        %v5305 = vld [vmem:[#allocation7 + $0xef8] sm:$0xf]
        %v5306 = vld [vmem:[#allocation7 + $0xefc] sm:$0xf]
        %v5307 = vld [vmem:[#allocation7 + $0xf00] sm:$0xf]
        %v5308 = vld [vmem:[#allocation7 + $0xf04] sm:$0xf]
        %v5309 = vld [vmem:[#allocation7 + $0xf08] sm:$0xf]
        %v5310 = vld [vmem:[#allocation7 + $0xf0c] sm:$0xf]
        %v5311 = vld [vmem:[#allocation7 + $0xf10] sm:$0xf]
        %v5312 = vld [vmem:[#allocation7 + $0xf14] sm:$0xf]
        %v5313 = vld [vmem:[#allocation7 + $0xf18] sm:$0xf]
        %v5314 = vld [vmem:[#allocation7 + $0xf1c] sm:$0xf]
        %v5315 = vld [vmem:[#allocation7 + $0xf20] sm:$0xf]
        %v5316 = vld [vmem:[#allocation7 + $0xf24] sm:$0xf]
        %v5317 = vld [vmem:[#allocation7 + $0xf28] sm:$0xf]
        %v5318 = vld [vmem:[#allocation7 + $0xf2c] sm:$0xf]
        %v5319 = vld [vmem:[#allocation7 + $0xf30] sm:$0xf]
        %v5320 = vld [vmem:[#allocation7 + $0xf34] sm:$0xf]
        %v5321 = vld [vmem:[#allocation7 + $0xf38] sm:$0xf]
        %v5322 = vld [vmem:[#allocation7 + $0xf3c] sm:$0xf]
        %v5323 = vld [vmem:[#allocation7 + $0xf40] sm:$0xf]
        %v5324 = vld [vmem:[#allocation7 + $0xf44] sm:$0xf]
        %v5325 = vld [vmem:[#allocation7 + $0xf48] sm:$0xf]
        %v5326 = vld [vmem:[#allocation7 + $0xf4c] sm:$0xf]
        %v5327 = vld [vmem:[#allocation7 + $0xf50] sm:$0xf]
        %v5328 = vld [vmem:[#allocation7 + $0xf54] sm:$0xf]
        %v5329 = vld [vmem:[#allocation7 + $0xf58] sm:$0xf]
        %v5330 = vld [vmem:[#allocation7 + $0xf5c] sm:$0xf]
        %v5331 = vld [vmem:[#allocation7 + $0xf60] sm:$0xf]
        %v5332 = vld [vmem:[#allocation7 + $0xf64] sm:$0xf]
        %v5333 = vld [vmem:[#allocation7 + $0xf68] sm:$0xf]
        %v5334 = vld [vmem:[#allocation7 + $0xf6c] sm:$0xf]
        %v5335 = vld [vmem:[#allocation7 + $0xf70] sm:$0xf]
        %v5336 = vld [vmem:[#allocation7 + $0xf74] sm:$0xf]
        %v5337 = vld [vmem:[#allocation7 + $0xf78] sm:$0xf]
        %v5338 = vld [vmem:[#allocation7 + $0xf7c] sm:$0xf]
        %v5339 = vld [vmem:[#allocation7 + $0xf80] sm:$0xf]
        %v5340 = vld [vmem:[#allocation7 + $0xf84] sm:$0xf]
        %v5341 = vld [vmem:[#allocation7 + $0xf88] sm:$0xf]
        %v5342 = vld [vmem:[#allocation7 + $0xf8c] sm:$0xf]
        %v5343 = vld [vmem:[#allocation7 + $0xf90] sm:$0xf]
        %v5344 = vld [vmem:[#allocation7 + $0xf94] sm:$0xf]
        %v5345 = vld [vmem:[#allocation7 + $0xf98] sm:$0xf]
        %v5346 = vld [vmem:[#allocation7 + $0xf9c] sm:$0xf]
        %v5347 = vld [vmem:[#allocation7 + $0xfa0] sm:$0xf]
        %v5348 = vld [vmem:[#allocation7 + $0xfa4] sm:$0xf]
        %v5349 = vld [vmem:[#allocation7 + $0xfa8] sm:$0xf]
        %v5350 = vld [vmem:[#allocation7 + $0xfac] sm:$0xf]
        %v5351 = vld [vmem:[#allocation7 + $0xfb0] sm:$0xf]
        %v5352 = vld [vmem:[#allocation7 + $0xfb4] sm:$0xf]
        %v5353 = vld [vmem:[#allocation7 + $0xfb8] sm:$0xf]
        %v5354 = vld [vmem:[#allocation7 + $0xfbc] sm:$0xf]
        %v5355 = vld [vmem:[#allocation7 + $0xfc0] sm:$0xf]
        %v5356 = vld [vmem:[#allocation7 + $0xfc4] sm:$0xf]
        %v5357 = vld [vmem:[#allocation7 + $0xfc8] sm:$0xf]
        %v5358 = vld [vmem:[#allocation7 + $0xfcc] sm:$0xf]
        %v5359 = vld [vmem:[#allocation7 + $0xfd0] sm:$0xf]
        %v5360 = vld [vmem:[#allocation7 + $0xfd4] sm:$0xf]
        %v5361 = vld [vmem:[#allocation7 + $0xfd8] sm:$0xf]
        %v5362 = vld [vmem:[#allocation7 + $0xfdc] sm:$0xf]
        %v5363 = vld [vmem:[#allocation7 + $0xfe0] sm:$0xf]
        %v5364 = vld [vmem:[#allocation7 + $0xfe4] sm:$0xf]
        %v5365 = vld [vmem:[#allocation7 + $0xfe8] sm:$0xf]
        %v5366 = vld [vmem:[#allocation7 + $0xfec] sm:$0xf]
        %v5367 = vld [vmem:[#allocation7 + $0xff0] sm:$0xf]
        %v5368 = vld [vmem:[#allocation7 + $0xff4] sm:$0xf]
        %v5369 = vld [vmem:[#allocation7 + $0xff8] sm:$0xf]
        %v5370 = vld [vmem:[#allocation7 + $0xffc] sm:$0xf]
        %v5371 = vld [vmem:[#allocation9] sm:$0x1]
        %v5373 = vlaneseq
        %v5374 = vshrl.u32 %v5373, 7
        %v5375 = vsub.s32 0, %v5374
        %v5376 = vrot.slane %v5371, %v5375
        %v6402 = vunpack.c.l.b16 %v4347
        %v6403 = vunpack.c.l.b16 %v4348
        %v6404 = vunpack.c.l.b16 %v4349
        %v6405 = vunpack.c.l.b16 %v4350
        %v6406 = vunpack.c.l.b16 %v4351
        %v6407 = vunpack.c.l.b16 %v4352
        %v6408 = vunpack.c.l.b16 %v4353
        %v6409 = vunpack.c.l.b16 %v4354
        %v6410 = vunpack.c.l.b16 %v4355
        %v6411 = vunpack.c.l.b16 %v4356
        %v6412 = vunpack.c.l.b16 %v4357
        %v6413 = vunpack.c.l.b16 %v4358
        %v6414 = vunpack.c.l.b16 %v4359
        %v6415 = vunpack.c.l.b16 %v4360
        %v6416 = vunpack.c.l.b16 %v4361
        %v6417 = vunpack.c.l.b16 %v4362
        %v6418 = vunpack.c.l.b16 %v4363
        %v6419 = vunpack.c.l.b16 %v4364
        %v6420 = vunpack.c.l.b16 %v4365
        %v6421 = vunpack.c.l.b16 %v4366
        %v6422 = vunpack.c.l.b16 %v4367
        %v6423 = vunpack.c.l.b16 %v4368
        %v6424 = vunpack.c.l.b16 %v4369
        %v6425 = vunpack.c.l.b16 %v4370
        %v6426 = vunpack.c.l.b16 %v4371
        %v6427 = vunpack.c.l.b16 %v4372
        %v6428 = vunpack.c.l.b16 %v4373
        %v6429 = vunpack.c.l.b16 %v4374
        %v6430 = vunpack.c.l.b16 %v4375
        %v6431 = vunpack.c.l.b16 %v4376
        %v6432 = vunpack.c.l.b16 %v4377
        %v6433 = vunpack.c.l.b16 %v4378
        %v6434 = vunpack.c.l.b16 %v4379
        %v6435 = vunpack.c.l.b16 %v4380
        %v6436 = vunpack.c.l.b16 %v4381
        %v6437 = vunpack.c.l.b16 %v4382
        %v6438 = vunpack.c.l.b16 %v4383
        %v6439 = vunpack.c.l.b16 %v4384
        %v6440 = vunpack.c.l.b16 %v4385
        %v6441 = vunpack.c.l.b16 %v4386
        %v6442 = vunpack.c.l.b16 %v4387
        %v6443 = vunpack.c.l.b16 %v4388
        %v6444 = vunpack.c.l.b16 %v4389
        %v6445 = vunpack.c.l.b16 %v4390
        %v6446 = vunpack.c.l.b16 %v4391
        %v6447 = vunpack.c.l.b16 %v4392
        %v6448 = vunpack.c.l.b16 %v4393
        %v6449 = vunpack.c.l.b16 %v4394
        %v6450 = vunpack.c.l.b16 %v4395
        %v6451 = vunpack.c.l.b16 %v4396
        %v6452 = vunpack.c.l.b16 %v4397
        %v6453 = vunpack.c.l.b16 %v4398
        %v6454 = vunpack.c.l.b16 %v4399
        %v6455 = vunpack.c.l.b16 %v4400
        %v6456 = vunpack.c.l.b16 %v4401
        %v6457 = vunpack.c.l.b16 %v4402
        %v6458 = vunpack.c.l.b16 %v4403
        %v6459 = vunpack.c.l.b16 %v4404
        %v6460 = vunpack.c.l.b16 %v4405
        %v6461 = vunpack.c.l.b16 %v4406
        %v6462 = vunpack.c.l.b16 %v4407
        %v6463 = vunpack.c.l.b16 %v4408
        %v6464 = vunpack.c.l.b16 %v4409
        %v6465 = vunpack.c.l.b16 %v4410
        %v6466 = vunpack.c.l.b16 %v4411
        %v6467 = vunpack.c.l.b16 %v4412
        %v6468 = vunpack.c.l.b16 %v4413
        %v6469 = vunpack.c.l.b16 %v4414
        %v6470 = vunpack.c.l.b16 %v4415
        %v6471 = vunpack.c.l.b16 %v4416
        %v6472 = vunpack.c.l.b16 %v4417
        %v6473 = vunpack.c.l.b16 %v4418
        %v6474 = vunpack.c.l.b16 %v4419
        %v6475 = vunpack.c.l.b16 %v4420
        %v6476 = vunpack.c.l.b16 %v4421
        %v6477 = vunpack.c.l.b16 %v4422
        %v6478 = vunpack.c.l.b16 %v4423
        %v6479 = vunpack.c.l.b16 %v4424
        %v6480 = vunpack.c.l.b16 %v4425
        %v6481 = vunpack.c.l.b16 %v4426
        %v6482 = vunpack.c.l.b16 %v4427
        %v6483 = vunpack.c.l.b16 %v4428
        %v6484 = vunpack.c.l.b16 %v4429
        %v6485 = vunpack.c.l.b16 %v4430
        %v6486 = vunpack.c.l.b16 %v4431
        %v6487 = vunpack.c.l.b16 %v4432
        %v6488 = vunpack.c.l.b16 %v4433
        %v6489 = vunpack.c.l.b16 %v4434
        %v6490 = vunpack.c.l.b16 %v4435
        %v6491 = vunpack.c.l.b16 %v4436
        %v6492 = vunpack.c.l.b16 %v4437
        %v6493 = vunpack.c.l.b16 %v4438
        %v6494 = vunpack.c.l.b16 %v4439
        %v6495 = vunpack.c.l.b16 %v4440
        %v6496 = vunpack.c.l.b16 %v4441
        %v6497 = vunpack.c.l.b16 %v4442
        %v6498 = vunpack.c.l.b16 %v4443
        %v6499 = vunpack.c.l.b16 %v4444
        %v6500 = vunpack.c.l.b16 %v4445
        %v6501 = vunpack.c.l.b16 %v4446
        %v6502 = vunpack.c.l.b16 %v4447
        %v6503 = vunpack.c.l.b16 %v4448
        %v6504 = vunpack.c.l.b16 %v4449
        %v6505 = vunpack.c.l.b16 %v4450
        %v6506 = vunpack.c.l.b16 %v4451
        %v6507 = vunpack.c.l.b16 %v4452
        %v6508 = vunpack.c.l.b16 %v4453
        %v6509 = vunpack.c.l.b16 %v4454
        %v6510 = vunpack.c.l.b16 %v4455
        %v6511 = vunpack.c.l.b16 %v4456
        %v6512 = vunpack.c.l.b16 %v4457
        %v6513 = vunpack.c.l.b16 %v4458
        %v6514 = vunpack.c.l.b16 %v4459
        %v6515 = vunpack.c.l.b16 %v4460
        %v6516 = vunpack.c.l.b16 %v4461
        %v6517 = vunpack.c.l.b16 %v4462
        %v6518 = vunpack.c.l.b16 %v4463
        %v6519 = vunpack.c.l.b16 %v4464
        %v6520 = vunpack.c.l.b16 %v4465
        %v6521 = vunpack.c.l.b16 %v4466
        %v6522 = vunpack.c.l.b16 %v4467
        %v6523 = vunpack.c.l.b16 %v4468
        %v6524 = vunpack.c.l.b16 %v4469
        %v6525 = vunpack.c.l.b16 %v4470
        %v6526 = vunpack.c.l.b16 %v4471
        %v6527 = vunpack.c.l.b16 %v4472
        %v6528 = vunpack.c.l.b16 %v4473
        %v6529 = vunpack.c.l.b16 %v4474
        %v6530 = vunpack.c.l.b16 %v4475
        %v6531 = vunpack.c.l.b16 %v4476
        %v6532 = vunpack.c.l.b16 %v4477
        %v6533 = vunpack.c.l.b16 %v4478
        %v6534 = vunpack.c.l.b16 %v4479
        %v6535 = vunpack.c.l.b16 %v4480
        %v6536 = vunpack.c.l.b16 %v4481
        %v6537 = vunpack.c.l.b16 %v4482
        %v6538 = vunpack.c.l.b16 %v4483
        %v6539 = vunpack.c.l.b16 %v4484
        %v6540 = vunpack.c.l.b16 %v4485
        %v6541 = vunpack.c.l.b16 %v4486
        %v6542 = vunpack.c.l.b16 %v4487
        %v6543 = vunpack.c.l.b16 %v4488
        %v6544 = vunpack.c.l.b16 %v4489
        %v6545 = vunpack.c.l.b16 %v4490
        %v6546 = vunpack.c.l.b16 %v4491
        %v6547 = vunpack.c.l.b16 %v4492
        %v6548 = vunpack.c.l.b16 %v4493
        %v6549 = vunpack.c.l.b16 %v4494
        %v6550 = vunpack.c.l.b16 %v4495
        %v6551 = vunpack.c.l.b16 %v4496
        %v6552 = vunpack.c.l.b16 %v4497
        %v6553 = vunpack.c.l.b16 %v4498
        %v6554 = vunpack.c.l.b16 %v4499
        %v6555 = vunpack.c.l.b16 %v4500
        %v6556 = vunpack.c.l.b16 %v4501
        %v6557 = vunpack.c.l.b16 %v4502
        %v6558 = vunpack.c.l.b16 %v4503
        %v6559 = vunpack.c.l.b16 %v4504
        %v6560 = vunpack.c.l.b16 %v4505
        %v6561 = vunpack.c.l.b16 %v4506
        %v6562 = vunpack.c.l.b16 %v4507
        %v6563 = vunpack.c.l.b16 %v4508
        %v6564 = vunpack.c.l.b16 %v4509
        %v6565 = vunpack.c.l.b16 %v4510
        %v6566 = vunpack.c.l.b16 %v4511
        %v6567 = vunpack.c.l.b16 %v4512
        %v6568 = vunpack.c.l.b16 %v4513
        %v6569 = vunpack.c.l.b16 %v4514
        %v6570 = vunpack.c.l.b16 %v4515
        %v6571 = vunpack.c.l.b16 %v4516
        %v6572 = vunpack.c.l.b16 %v4517
        %v6573 = vunpack.c.l.b16 %v4518
        %v6574 = vunpack.c.l.b16 %v4519
        %v6575 = vunpack.c.l.b16 %v4520
        %v6576 = vunpack.c.l.b16 %v4521
        %v6577 = vunpack.c.l.b16 %v4522
        %v6578 = vunpack.c.l.b16 %v4523
        %v6579 = vunpack.c.l.b16 %v4524
        %v6580 = vunpack.c.l.b16 %v4525
        %v6581 = vunpack.c.l.b16 %v4526
        %v6582 = vunpack.c.l.b16 %v4527
        %v6583 = vunpack.c.l.b16 %v4528
        %v6584 = vunpack.c.l.b16 %v4529
        %v6585 = vunpack.c.l.b16 %v4530
        %v6586 = vunpack.c.l.b16 %v4531
        %v6587 = vunpack.c.l.b16 %v4532
        %v6588 = vunpack.c.l.b16 %v4533
        %v6589 = vunpack.c.l.b16 %v4534
        %v6590 = vunpack.c.l.b16 %v4535
        %v6591 = vunpack.c.l.b16 %v4536
        %v6592 = vunpack.c.l.b16 %v4537
        %v6593 = vunpack.c.l.b16 %v4538
        %v6594 = vunpack.c.l.b16 %v4539
        %v6595 = vunpack.c.l.b16 %v4540
        %v6596 = vunpack.c.l.b16 %v4541
        %v6597 = vunpack.c.l.b16 %v4542
        %v6598 = vunpack.c.l.b16 %v4543
        %v6599 = vunpack.c.l.b16 %v4544
        %v6600 = vunpack.c.l.b16 %v4545
        %v6601 = vunpack.c.l.b16 %v4546
        %v6602 = vunpack.c.l.b16 %v4547
        %v6603 = vunpack.c.l.b16 %v4548
        %v6604 = vunpack.c.l.b16 %v4549
        %v6605 = vunpack.c.l.b16 %v4550
        %v6606 = vunpack.c.l.b16 %v4551
        %v6607 = vunpack.c.l.b16 %v4552
        %v6608 = vunpack.c.l.b16 %v4553
        %v6609 = vunpack.c.l.b16 %v4554
        %v6610 = vunpack.c.l.b16 %v4555
        %v6611 = vunpack.c.l.b16 %v4556
        %v6612 = vunpack.c.l.b16 %v4557
        %v6613 = vunpack.c.l.b16 %v4558
        %v6614 = vunpack.c.l.b16 %v4559
        %v6615 = vunpack.c.l.b16 %v4560
        %v6616 = vunpack.c.l.b16 %v4561
        %v6617 = vunpack.c.l.b16 %v4562
        %v6618 = vunpack.c.l.b16 %v4563
        %v6619 = vunpack.c.l.b16 %v4564
        %v6620 = vunpack.c.l.b16 %v4565
        %v6621 = vunpack.c.l.b16 %v4566
        %v6622 = vunpack.c.l.b16 %v4567
        %v6623 = vunpack.c.l.b16 %v4568
        %v6624 = vunpack.c.l.b16 %v4569
        %v6625 = vunpack.c.l.b16 %v4570
        %v6626 = vunpack.c.l.b16 %v4571
        %v6627 = vunpack.c.l.b16 %v4572
        %v6628 = vunpack.c.l.b16 %v4573
        %v6629 = vunpack.c.l.b16 %v4574
        %v6630 = vunpack.c.l.b16 %v4575
        %v6631 = vunpack.c.l.b16 %v4576
        %v6632 = vunpack.c.l.b16 %v4577
        %v6633 = vunpack.c.l.b16 %v4578
        %v6634 = vunpack.c.l.b16 %v4579
        %v6635 = vunpack.c.l.b16 %v4580
        %v6636 = vunpack.c.l.b16 %v4581
        %v6637 = vunpack.c.l.b16 %v4582
        %v6638 = vunpack.c.l.b16 %v4583
        %v6639 = vunpack.c.l.b16 %v4584
        %v6640 = vunpack.c.l.b16 %v4585
        %v6641 = vunpack.c.l.b16 %v4586
        %v6642 = vunpack.c.l.b16 %v4587
        %v6643 = vunpack.c.l.b16 %v4588
        %v6644 = vunpack.c.l.b16 %v4589
        %v6645 = vunpack.c.l.b16 %v4590
        %v6646 = vunpack.c.l.b16 %v4591
        %v6647 = vunpack.c.l.b16 %v4592
        %v6648 = vunpack.c.l.b16 %v4593
        %v6649 = vunpack.c.l.b16 %v4594
        %v6650 = vunpack.c.l.b16 %v4595
        %v6651 = vunpack.c.l.b16 %v4596
        %v6652 = vunpack.c.l.b16 %v4597
        %v6653 = vunpack.c.l.b16 %v4598
        %v6654 = vunpack.c.l.b16 %v4599
        %v6655 = vunpack.c.l.b16 %v4600
        %v6656 = vunpack.c.l.b16 %v4601
        %v6657 = vunpack.c.l.b16 %v4602
        %v6658 = vunpack.c.l.b16 %v4603
        %v6659 = vunpack.c.l.b16 %v4604
        %v6660 = vunpack.c.l.b16 %v4605
        %v6661 = vunpack.c.l.b16 %v4606
        %v6662 = vunpack.c.l.b16 %v4607
        %v6663 = vunpack.c.l.b16 %v4608
        %v6664 = vunpack.c.l.b16 %v4609
        %v6665 = vunpack.c.l.b16 %v4610
        %v6666 = vunpack.c.l.b16 %v4611
        %v6667 = vunpack.c.l.b16 %v4612
        %v6668 = vunpack.c.l.b16 %v4613
        %v6669 = vunpack.c.l.b16 %v4614
        %v6670 = vunpack.c.l.b16 %v4615
        %v6671 = vunpack.c.l.b16 %v4616
        %v6672 = vunpack.c.l.b16 %v4617
        %v6673 = vunpack.c.l.b16 %v4618
        %v6674 = vunpack.c.l.b16 %v4619
        %v6675 = vunpack.c.l.b16 %v4620
        %v6676 = vunpack.c.l.b16 %v4621
        %v6677 = vunpack.c.l.b16 %v4622
        %v6678 = vunpack.c.l.b16 %v4623
        %v6679 = vunpack.c.l.b16 %v4624
        %v6680 = vunpack.c.l.b16 %v4625
        %v6681 = vunpack.c.l.b16 %v4626
        %v6682 = vunpack.c.l.b16 %v4627
        %v6683 = vunpack.c.l.b16 %v4628
        %v6684 = vunpack.c.l.b16 %v4629
        %v6685 = vunpack.c.l.b16 %v4630
        %v6686 = vunpack.c.l.b16 %v4631
        %v6687 = vunpack.c.l.b16 %v4632
        %v6688 = vunpack.c.l.b16 %v4633
        %v6689 = vunpack.c.l.b16 %v4634
        %v6690 = vunpack.c.l.b16 %v4635
        %v6691 = vunpack.c.l.b16 %v4636
        %v6692 = vunpack.c.l.b16 %v4637
        %v6693 = vunpack.c.l.b16 %v4638
        %v6694 = vunpack.c.l.b16 %v4639
        %v6695 = vunpack.c.l.b16 %v4640
        %v6696 = vunpack.c.l.b16 %v4641
        %v6697 = vunpack.c.l.b16 %v4642
        %v6698 = vunpack.c.l.b16 %v4643
        %v6699 = vunpack.c.l.b16 %v4644
        %v6700 = vunpack.c.l.b16 %v4645
        %v6701 = vunpack.c.l.b16 %v4646
        %v6702 = vunpack.c.l.b16 %v4647
        %v6703 = vunpack.c.l.b16 %v4648
        %v6704 = vunpack.c.l.b16 %v4649
        %v6705 = vunpack.c.l.b16 %v4650
        %v6706 = vunpack.c.l.b16 %v4651
        %v6707 = vunpack.c.l.b16 %v4652
        %v6708 = vunpack.c.l.b16 %v4653
        %v6709 = vunpack.c.l.b16 %v4654
        %v6710 = vunpack.c.l.b16 %v4655
        %v6711 = vunpack.c.l.b16 %v4656
        %v6712 = vunpack.c.l.b16 %v4657
        %v6713 = vunpack.c.l.b16 %v4658
        %v6714 = vunpack.c.l.b16 %v4659
        %v6715 = vunpack.c.l.b16 %v4660
        %v6716 = vunpack.c.l.b16 %v4661
        %v6717 = vunpack.c.l.b16 %v4662
        %v6718 = vunpack.c.l.b16 %v4663
        %v6719 = vunpack.c.l.b16 %v4664
        %v6720 = vunpack.c.l.b16 %v4665
        %v6721 = vunpack.c.l.b16 %v4666
        %v6722 = vunpack.c.l.b16 %v4667
        %v6723 = vunpack.c.l.b16 %v4668
        %v6724 = vunpack.c.l.b16 %v4669
        %v6725 = vunpack.c.l.b16 %v4670
        %v6726 = vunpack.c.l.b16 %v4671
        %v6727 = vunpack.c.l.b16 %v4672
        %v6728 = vunpack.c.l.b16 %v4673
        %v6729 = vunpack.c.l.b16 %v4674
        %v6730 = vunpack.c.l.b16 %v4675
        %v6731 = vunpack.c.l.b16 %v4676
        %v6732 = vunpack.c.l.b16 %v4677
        %v6733 = vunpack.c.l.b16 %v4678
        %v6734 = vunpack.c.l.b16 %v4679
        %v6735 = vunpack.c.l.b16 %v4680
        %v6736 = vunpack.c.l.b16 %v4681
        %v6737 = vunpack.c.l.b16 %v4682
        %v6738 = vunpack.c.l.b16 %v4683
        %v6739 = vunpack.c.l.b16 %v4684
        %v6740 = vunpack.c.l.b16 %v4685
        %v6741 = vunpack.c.l.b16 %v4686
        %v6742 = vunpack.c.l.b16 %v4687
        %v6743 = vunpack.c.l.b16 %v4688
        %v6744 = vunpack.c.l.b16 %v4689
        %v6745 = vunpack.c.l.b16 %v4690
        %v6746 = vunpack.c.l.b16 %v4691
        %v6747 = vunpack.c.l.b16 %v4692
        %v6748 = vunpack.c.l.b16 %v4693
        %v6749 = vunpack.c.l.b16 %v4694
        %v6750 = vunpack.c.l.b16 %v4695
        %v6751 = vunpack.c.l.b16 %v4696
        %v6752 = vunpack.c.l.b16 %v4697
        %v6753 = vunpack.c.l.b16 %v4698
        %v6754 = vunpack.c.l.b16 %v4699
        %v6755 = vunpack.c.l.b16 %v4700
        %v6756 = vunpack.c.l.b16 %v4701
        %v6757 = vunpack.c.l.b16 %v4702
        %v6758 = vunpack.c.l.b16 %v4703
        %v6759 = vunpack.c.l.b16 %v4704
        %v6760 = vunpack.c.l.b16 %v4705
        %v6761 = vunpack.c.l.b16 %v4706
        %v6762 = vunpack.c.l.b16 %v4707
        %v6763 = vunpack.c.l.b16 %v4708
        %v6764 = vunpack.c.l.b16 %v4709
        %v6765 = vunpack.c.l.b16 %v4710
        %v6766 = vunpack.c.l.b16 %v4711
        %v6767 = vunpack.c.l.b16 %v4712
        %v6768 = vunpack.c.l.b16 %v4713
        %v6769 = vunpack.c.l.b16 %v4714
        %v6770 = vunpack.c.l.b16 %v4715
        %v6771 = vunpack.c.l.b16 %v4716
        %v6772 = vunpack.c.l.b16 %v4717
        %v6773 = vunpack.c.l.b16 %v4718
        %v6774 = vunpack.c.l.b16 %v4719
        %v6775 = vunpack.c.l.b16 %v4720
        %v6776 = vunpack.c.l.b16 %v4721
        %v6777 = vunpack.c.l.b16 %v4722
        %v6778 = vunpack.c.l.b16 %v4723
        %v6779 = vunpack.c.l.b16 %v4724
        %v6780 = vunpack.c.l.b16 %v4725
        %v6781 = vunpack.c.l.b16 %v4726
        %v6782 = vunpack.c.l.b16 %v4727
        %v6783 = vunpack.c.l.b16 %v4728
        %v6784 = vunpack.c.l.b16 %v4729
        %v6785 = vunpack.c.l.b16 %v4730
        %v6786 = vunpack.c.l.b16 %v4731
        %v6787 = vunpack.c.l.b16 %v4732
        %v6788 = vunpack.c.l.b16 %v4733
        %v6789 = vunpack.c.l.b16 %v4734
        %v6790 = vunpack.c.l.b16 %v4735
        %v6791 = vunpack.c.l.b16 %v4736
        %v6792 = vunpack.c.l.b16 %v4737
        %v6793 = vunpack.c.l.b16 %v4738
        %v6794 = vunpack.c.l.b16 %v4739
        %v6795 = vunpack.c.l.b16 %v4740
        %v6796 = vunpack.c.l.b16 %v4741
        %v6797 = vunpack.c.l.b16 %v4742
        %v6798 = vunpack.c.l.b16 %v4743
        %v6799 = vunpack.c.l.b16 %v4744
        %v6800 = vunpack.c.l.b16 %v4745
        %v6801 = vunpack.c.l.b16 %v4746
        %v6802 = vunpack.c.l.b16 %v4747
        %v6803 = vunpack.c.l.b16 %v4748
        %v6804 = vunpack.c.l.b16 %v4749
        %v6805 = vunpack.c.l.b16 %v4750
        %v6806 = vunpack.c.l.b16 %v4751
        %v6807 = vunpack.c.l.b16 %v4752
        %v6808 = vunpack.c.l.b16 %v4753
        %v6809 = vunpack.c.l.b16 %v4754
        %v6810 = vunpack.c.l.b16 %v4755
        %v6811 = vunpack.c.l.b16 %v4756
        %v6812 = vunpack.c.l.b16 %v4757
        %v6813 = vunpack.c.l.b16 %v4758
        %v6814 = vunpack.c.l.b16 %v4759
        %v6815 = vunpack.c.l.b16 %v4760
        %v6816 = vunpack.c.l.b16 %v4761
        %v6817 = vunpack.c.l.b16 %v4762
        %v6818 = vunpack.c.l.b16 %v4763
        %v6819 = vunpack.c.l.b16 %v4764
        %v6820 = vunpack.c.l.b16 %v4765
        %v6821 = vunpack.c.l.b16 %v4766
        %v6822 = vunpack.c.l.b16 %v4767
        %v6823 = vunpack.c.l.b16 %v4768
        %v6824 = vunpack.c.l.b16 %v4769
        %v6825 = vunpack.c.l.b16 %v4770
        %v6826 = vunpack.c.l.b16 %v4771
        %v6827 = vunpack.c.l.b16 %v4772
        %v6828 = vunpack.c.l.b16 %v4773
        %v6829 = vunpack.c.l.b16 %v4774
        %v6830 = vunpack.c.l.b16 %v4775
        %v6831 = vunpack.c.l.b16 %v4776
        %v6832 = vunpack.c.l.b16 %v4777
        %v6833 = vunpack.c.l.b16 %v4778
        %v6834 = vunpack.c.l.b16 %v4779
        %v6835 = vunpack.c.l.b16 %v4780
        %v6836 = vunpack.c.l.b16 %v4781
        %v6837 = vunpack.c.l.b16 %v4782
        %v6838 = vunpack.c.l.b16 %v4783
        %v6839 = vunpack.c.l.b16 %v4784
        %v6840 = vunpack.c.l.b16 %v4785
        %v6841 = vunpack.c.l.b16 %v4786
        %v6842 = vunpack.c.l.b16 %v4787
        %v6843 = vunpack.c.l.b16 %v4788
        %v6844 = vunpack.c.l.b16 %v4789
        %v6845 = vunpack.c.l.b16 %v4790
        %v6846 = vunpack.c.l.b16 %v4791
        %v6847 = vunpack.c.l.b16 %v4792
        %v6848 = vunpack.c.l.b16 %v4793
        %v6849 = vunpack.c.l.b16 %v4794
        %v6850 = vunpack.c.l.b16 %v4795
        %v6851 = vunpack.c.l.b16 %v4796
        %v6852 = vunpack.c.l.b16 %v4797
        %v6853 = vunpack.c.l.b16 %v4798
        %v6854 = vunpack.c.l.b16 %v4799
        %v6855 = vunpack.c.l.b16 %v4800
        %v6856 = vunpack.c.l.b16 %v4801
        %v6857 = vunpack.c.l.b16 %v4802
        %v6858 = vunpack.c.l.b16 %v4803
        %v6859 = vunpack.c.l.b16 %v4804
        %v6860 = vunpack.c.l.b16 %v4805
        %v6861 = vunpack.c.l.b16 %v4806
        %v6862 = vunpack.c.l.b16 %v4807
        %v6863 = vunpack.c.l.b16 %v4808
        %v6864 = vunpack.c.l.b16 %v4809
        %v6865 = vunpack.c.l.b16 %v4810
        %v6866 = vunpack.c.l.b16 %v4811
        %v6867 = vunpack.c.l.b16 %v4812
        %v6868 = vunpack.c.l.b16 %v4813
        %v6869 = vunpack.c.l.b16 %v4814
        %v6870 = vunpack.c.l.b16 %v4815
        %v6871 = vunpack.c.l.b16 %v4816
        %v6872 = vunpack.c.l.b16 %v4817
        %v6873 = vunpack.c.l.b16 %v4818
        %v6874 = vunpack.c.l.b16 %v4819
        %v6875 = vunpack.c.l.b16 %v4820
        %v6876 = vunpack.c.l.b16 %v4821
        %v6877 = vunpack.c.l.b16 %v4822
        %v6878 = vunpack.c.l.b16 %v4823
        %v6879 = vunpack.c.l.b16 %v4824
        %v6880 = vunpack.c.l.b16 %v4825
        %v6881 = vunpack.c.l.b16 %v4826
        %v6882 = vunpack.c.l.b16 %v4827
        %v6883 = vunpack.c.l.b16 %v4828
        %v6884 = vunpack.c.l.b16 %v4829
        %v6885 = vunpack.c.l.b16 %v4830
        %v6886 = vunpack.c.l.b16 %v4831
        %v6887 = vunpack.c.l.b16 %v4832
        %v6888 = vunpack.c.l.b16 %v4833
        %v6889 = vunpack.c.l.b16 %v4834
        %v6890 = vunpack.c.l.b16 %v4835
        %v6891 = vunpack.c.l.b16 %v4836
        %v6892 = vunpack.c.l.b16 %v4837
        %v6893 = vunpack.c.l.b16 %v4838
        %v6894 = vunpack.c.l.b16 %v4839
        %v6895 = vunpack.c.l.b16 %v4840
        %v6896 = vunpack.c.l.b16 %v4841
        %v6897 = vunpack.c.l.b16 %v4842
        %v6898 = vunpack.c.l.b16 %v4843
        %v6899 = vunpack.c.l.b16 %v4844
        %v6900 = vunpack.c.l.b16 %v4845
        %v6901 = vunpack.c.l.b16 %v4846
        %v6902 = vunpack.c.l.b16 %v4847
        %v6903 = vunpack.c.l.b16 %v4848
        %v6904 = vunpack.c.l.b16 %v4849
        %v6905 = vunpack.c.l.b16 %v4850
        %v6906 = vunpack.c.l.b16 %v4851
        %v6907 = vunpack.c.l.b16 %v4852
        %v6908 = vunpack.c.l.b16 %v4853
        %v6909 = vunpack.c.l.b16 %v4854
        %v6910 = vunpack.c.l.b16 %v4855
        %v6911 = vunpack.c.l.b16 %v4856
        %v6912 = vunpack.c.l.b16 %v4857
        %v6913 = vunpack.c.l.b16 %v4858
        %v6914 = vunpack.c.l.b16 %v4859
        %v6915 = vunpack.c.l.b16 %v4860
        %v6916 = vunpack.c.l.b16 %v4861
        %v6917 = vunpack.c.l.b16 %v4862
        %v6918 = vunpack.c.l.b16 %v4863
        %v6919 = vunpack.c.l.b16 %v4864
        %v6920 = vunpack.c.l.b16 %v4865
        %v6921 = vunpack.c.l.b16 %v4866
        %v6922 = vunpack.c.l.b16 %v4867
        %v6923 = vunpack.c.l.b16 %v4868
        %v6924 = vunpack.c.l.b16 %v4869
        %v6925 = vunpack.c.l.b16 %v4870
        %v6926 = vunpack.c.l.b16 %v4871
        %v6927 = vunpack.c.l.b16 %v4872
        %v6928 = vunpack.c.l.b16 %v4873
        %v6929 = vunpack.c.l.b16 %v4874
        %v6930 = vunpack.c.l.b16 %v4875
        %v6931 = vunpack.c.l.b16 %v4876
        %v6932 = vunpack.c.l.b16 %v4877
        %v6933 = vunpack.c.l.b16 %v4878
        %v6934 = vunpack.c.l.b16 %v4879
        %v6935 = vunpack.c.l.b16 %v4880
        %v6936 = vunpack.c.l.b16 %v4881
        %v6937 = vunpack.c.l.b16 %v4882
        %v6938 = vunpack.c.l.b16 %v4883
        %v6939 = vunpack.c.l.b16 %v4884
        %v6940 = vunpack.c.l.b16 %v4885
        %v6941 = vunpack.c.l.b16 %v4886
        %v6942 = vunpack.c.l.b16 %v4887
        %v6943 = vunpack.c.l.b16 %v4888
        %v6944 = vunpack.c.l.b16 %v4889
        %v6945 = vunpack.c.l.b16 %v4890
        %v6946 = vunpack.c.l.b16 %v4891
        %v6947 = vunpack.c.l.b16 %v4892
        %v6948 = vunpack.c.l.b16 %v4893
        %v6949 = vunpack.c.l.b16 %v4894
        %v6950 = vunpack.c.l.b16 %v4895
        %v6951 = vunpack.c.l.b16 %v4896
        %v6952 = vunpack.c.l.b16 %v4897
        %v6953 = vunpack.c.l.b16 %v4898
        %v6954 = vunpack.c.l.b16 %v4899
        %v6955 = vunpack.c.l.b16 %v4900
        %v6956 = vunpack.c.l.b16 %v4901
        %v6957 = vunpack.c.l.b16 %v4902
        %v6958 = vunpack.c.l.b16 %v4903
        %v6959 = vunpack.c.l.b16 %v4904
        %v6960 = vunpack.c.l.b16 %v4905
        %v6961 = vunpack.c.l.b16 %v4906
        %v6962 = vunpack.c.l.b16 %v4907
        %v6963 = vunpack.c.l.b16 %v4908
        %v6964 = vunpack.c.l.b16 %v4909
        %v6965 = vunpack.c.l.b16 %v4910
        %v6966 = vunpack.c.l.b16 %v4911
        %v6967 = vunpack.c.l.b16 %v4912
        %v6968 = vunpack.c.l.b16 %v4913
        %v6969 = vunpack.c.l.b16 %v4914
        %v6970 = vunpack.c.l.b16 %v4915
        %v6971 = vunpack.c.l.b16 %v4916
        %v6972 = vunpack.c.l.b16 %v4917
        %v6973 = vunpack.c.l.b16 %v4918
        %v6974 = vunpack.c.l.b16 %v4919
        %v6975 = vunpack.c.l.b16 %v4920
        %v6976 = vunpack.c.l.b16 %v4921
        %v6977 = vunpack.c.l.b16 %v4922
        %v6978 = vunpack.c.l.b16 %v4923
        %v6979 = vunpack.c.l.b16 %v4924
        %v6980 = vunpack.c.l.b16 %v4925
        %v6981 = vunpack.c.l.b16 %v4926
        %v6982 = vunpack.c.l.b16 %v4927
        %v6983 = vunpack.c.l.b16 %v4928
        %v6984 = vunpack.c.l.b16 %v4929
        %v6985 = vunpack.c.l.b16 %v4930
        %v6986 = vunpack.c.l.b16 %v4931
        %v6987 = vunpack.c.l.b16 %v4932
        %v6988 = vunpack.c.l.b16 %v4933
        %v6989 = vunpack.c.l.b16 %v4934
        %v6990 = vunpack.c.l.b16 %v4935
        %v6991 = vunpack.c.l.b16 %v4936
        %v6992 = vunpack.c.l.b16 %v4937
        %v6993 = vunpack.c.l.b16 %v4938
        %v6994 = vunpack.c.l.b16 %v4939
        %v6995 = vunpack.c.l.b16 %v4940
        %v6996 = vunpack.c.l.b16 %v4941
        %v6997 = vunpack.c.l.b16 %v4942
        %v6998 = vunpack.c.l.b16 %v4943
        %v6999 = vunpack.c.l.b16 %v4944
        %v7000 = vunpack.c.l.b16 %v4945
        %v7001 = vunpack.c.l.b16 %v4946
        %v7002 = vunpack.c.l.b16 %v4947
        %v7003 = vunpack.c.l.b16 %v4948
        %v7004 = vunpack.c.l.b16 %v4949
        %v7005 = vunpack.c.l.b16 %v4950
        %v7006 = vunpack.c.l.b16 %v4951
        %v7007 = vunpack.c.l.b16 %v4952
        %v7008 = vunpack.c.l.b16 %v4953
        %v7009 = vunpack.c.l.b16 %v4954
        %v7010 = vunpack.c.l.b16 %v4955
        %v7011 = vunpack.c.l.b16 %v4956
        %v7012 = vunpack.c.l.b16 %v4957
        %v7013 = vunpack.c.l.b16 %v4958
        %v7014 = vunpack.c.l.b16 %v4959
        %v7015 = vunpack.c.l.b16 %v4960
        %v7016 = vunpack.c.l.b16 %v4961
        %v7017 = vunpack.c.l.b16 %v4962
        %v7018 = vunpack.c.l.b16 %v4963
        %v7019 = vunpack.c.l.b16 %v4964
        %v7020 = vunpack.c.l.b16 %v4965
        %v7021 = vunpack.c.l.b16 %v4966
        %v7022 = vunpack.c.l.b16 %v4967
        %v7023 = vunpack.c.l.b16 %v4968
        %v7024 = vunpack.c.l.b16 %v4969
        %v7025 = vunpack.c.l.b16 %v4970
        %v7026 = vunpack.c.l.b16 %v4971
        %v7027 = vunpack.c.l.b16 %v4972
        %v7028 = vunpack.c.l.b16 %v4973
        %v7029 = vunpack.c.l.b16 %v4974
        %v7030 = vunpack.c.l.b16 %v4975
        %v7031 = vunpack.c.l.b16 %v4976
        %v7032 = vunpack.c.l.b16 %v4977
        %v7033 = vunpack.c.l.b16 %v4978
        %v7034 = vunpack.c.l.b16 %v4979
        %v7035 = vunpack.c.l.b16 %v4980
        %v7036 = vunpack.c.l.b16 %v4981
        %v7037 = vunpack.c.l.b16 %v4982
        %v7038 = vunpack.c.l.b16 %v4983
        %v7039 = vunpack.c.l.b16 %v4984
        %v7040 = vunpack.c.l.b16 %v4985
        %v7041 = vunpack.c.l.b16 %v4986
        %v7042 = vunpack.c.l.b16 %v4987
        %v7043 = vunpack.c.l.b16 %v4988
        %v7044 = vunpack.c.l.b16 %v4989
        %v7045 = vunpack.c.l.b16 %v4990
        %v7046 = vunpack.c.l.b16 %v4991
        %v7047 = vunpack.c.l.b16 %v4992
        %v7048 = vunpack.c.l.b16 %v4993
        %v7049 = vunpack.c.l.b16 %v4994
        %v7050 = vunpack.c.l.b16 %v4995
        %v7051 = vunpack.c.l.b16 %v4996
        %v7052 = vunpack.c.l.b16 %v4997
        %v7053 = vunpack.c.l.b16 %v4998
        %v7054 = vunpack.c.l.b16 %v4999
        %v7055 = vunpack.c.l.b16 %v5000
        %v7056 = vunpack.c.l.b16 %v5001
        %v7057 = vunpack.c.l.b16 %v5002
        %v7058 = vunpack.c.l.b16 %v5003
        %v7059 = vunpack.c.l.b16 %v5004
        %v7060 = vunpack.c.l.b16 %v5005
        %v7061 = vunpack.c.l.b16 %v5006
        %v7062 = vunpack.c.l.b16 %v5007
        %v7063 = vunpack.c.l.b16 %v5008
        %v7064 = vunpack.c.l.b16 %v5009
        %v7065 = vunpack.c.l.b16 %v5010
        %v7066 = vunpack.c.l.b16 %v5011
        %v7067 = vunpack.c.l.b16 %v5012
        %v7068 = vunpack.c.l.b16 %v5013
        %v7069 = vunpack.c.l.b16 %v5014
        %v7070 = vunpack.c.l.b16 %v5015
        %v7071 = vunpack.c.l.b16 %v5016
        %v7072 = vunpack.c.l.b16 %v5017
        %v7073 = vunpack.c.l.b16 %v5018
        %v7074 = vunpack.c.l.b16 %v5019
        %v7075 = vunpack.c.l.b16 %v5020
        %v7076 = vunpack.c.l.b16 %v5021
        %v7077 = vunpack.c.l.b16 %v5022
        %v7078 = vunpack.c.l.b16 %v5023
        %v7079 = vunpack.c.l.b16 %v5024
        %v7080 = vunpack.c.l.b16 %v5025
        %v7081 = vunpack.c.l.b16 %v5026
        %v7082 = vunpack.c.l.b16 %v5027
        %v7083 = vunpack.c.l.b16 %v5028
        %v7084 = vunpack.c.l.b16 %v5029
        %v7085 = vunpack.c.l.b16 %v5030
        %v7086 = vunpack.c.l.b16 %v5031
        %v7087 = vunpack.c.l.b16 %v5032
        %v7088 = vunpack.c.l.b16 %v5033
        %v7089 = vunpack.c.l.b16 %v5034
        %v7090 = vunpack.c.l.b16 %v5035
        %v7091 = vunpack.c.l.b16 %v5036
        %v7092 = vunpack.c.l.b16 %v5037
        %v7093 = vunpack.c.l.b16 %v5038
        %v7094 = vunpack.c.l.b16 %v5039
        %v7095 = vunpack.c.l.b16 %v5040
        %v7096 = vunpack.c.l.b16 %v5041
        %v7097 = vunpack.c.l.b16 %v5042
        %v7098 = vunpack.c.l.b16 %v5043
        %v7099 = vunpack.c.l.b16 %v5044
        %v7100 = vunpack.c.l.b16 %v5045
        %v7101 = vunpack.c.l.b16 %v5046
        %v7102 = vunpack.c.l.b16 %v5047
        %v7103 = vunpack.c.l.b16 %v5048
        %v7104 = vunpack.c.l.b16 %v5049
        %v7105 = vunpack.c.l.b16 %v5050
        %v7106 = vunpack.c.l.b16 %v5051
        %v7107 = vunpack.c.l.b16 %v5052
        %v7108 = vunpack.c.l.b16 %v5053
        %v7109 = vunpack.c.l.b16 %v5054
        %v7110 = vunpack.c.l.b16 %v5055
        %v7111 = vunpack.c.l.b16 %v5056
        %v7112 = vunpack.c.l.b16 %v5057
        %v7113 = vunpack.c.l.b16 %v5058
        %v7114 = vunpack.c.l.b16 %v5059
        %v7115 = vunpack.c.l.b16 %v5060
        %v7116 = vunpack.c.l.b16 %v5061
        %v7117 = vunpack.c.l.b16 %v5062
        %v7118 = vunpack.c.l.b16 %v5063
        %v7119 = vunpack.c.l.b16 %v5064
        %v7120 = vunpack.c.l.b16 %v5065
        %v7121 = vunpack.c.l.b16 %v5066
        %v7122 = vunpack.c.l.b16 %v5067
        %v7123 = vunpack.c.l.b16 %v5068
        %v7124 = vunpack.c.l.b16 %v5069
        %v7125 = vunpack.c.l.b16 %v5070
        %v7126 = vunpack.c.l.b16 %v5071
        %v7127 = vunpack.c.l.b16 %v5072
        %v7128 = vunpack.c.l.b16 %v5073
        %v7129 = vunpack.c.l.b16 %v5074
        %v7130 = vunpack.c.l.b16 %v5075
        %v7131 = vunpack.c.l.b16 %v5076
        %v7132 = vunpack.c.l.b16 %v5077
        %v7133 = vunpack.c.l.b16 %v5078
        %v7134 = vunpack.c.l.b16 %v5079
        %v7135 = vunpack.c.l.b16 %v5080
        %v7136 = vunpack.c.l.b16 %v5081
        %v7137 = vunpack.c.l.b16 %v5082
        %v7138 = vunpack.c.l.b16 %v5083
        %v7139 = vunpack.c.l.b16 %v5084
        %v7140 = vunpack.c.l.b16 %v5085
        %v7141 = vunpack.c.l.b16 %v5086
        %v7142 = vunpack.c.l.b16 %v5087
        %v7143 = vunpack.c.l.b16 %v5088
        %v7144 = vunpack.c.l.b16 %v5089
        %v7145 = vunpack.c.l.b16 %v5090
        %v7146 = vunpack.c.l.b16 %v5091
        %v7147 = vunpack.c.l.b16 %v5092
        %v7148 = vunpack.c.l.b16 %v5093
        %v7149 = vunpack.c.l.b16 %v5094
        %v7150 = vunpack.c.l.b16 %v5095
        %v7151 = vunpack.c.l.b16 %v5096
        %v7152 = vunpack.c.l.b16 %v5097
        %v7153 = vunpack.c.l.b16 %v5098
        %v7154 = vunpack.c.l.b16 %v5099
        %v7155 = vunpack.c.l.b16 %v5100
        %v7156 = vunpack.c.l.b16 %v5101
        %v7157 = vunpack.c.l.b16 %v5102
        %v7158 = vunpack.c.l.b16 %v5103
        %v7159 = vunpack.c.l.b16 %v5104
        %v7160 = vunpack.c.l.b16 %v5105
        %v7161 = vunpack.c.l.b16 %v5106
        %v7162 = vunpack.c.l.b16 %v5107
        %v7163 = vunpack.c.l.b16 %v5108
        %v7164 = vunpack.c.l.b16 %v5109
        %v7165 = vunpack.c.l.b16 %v5110
        %v7166 = vunpack.c.l.b16 %v5111
        %v7167 = vunpack.c.l.b16 %v5112
        %v7168 = vunpack.c.l.b16 %v5113
        %v7169 = vunpack.c.l.b16 %v5114
        %v7170 = vunpack.c.l.b16 %v5115
        %v7171 = vunpack.c.l.b16 %v5116
        %v7172 = vunpack.c.l.b16 %v5117
        %v7173 = vunpack.c.l.b16 %v5118
        %v7174 = vunpack.c.l.b16 %v5119
        %v7175 = vunpack.c.l.b16 %v5120
        %v7176 = vunpack.c.l.b16 %v5121
        %v7177 = vunpack.c.l.b16 %v5122
        %v7178 = vunpack.c.l.b16 %v5123
        %v7179 = vunpack.c.l.b16 %v5124
        %v7180 = vunpack.c.l.b16 %v5125
        %v7181 = vunpack.c.l.b16 %v5126
        %v7182 = vunpack.c.l.b16 %v5127
        %v7183 = vunpack.c.l.b16 %v5128
        %v7184 = vunpack.c.l.b16 %v5129
        %v7185 = vunpack.c.l.b16 %v5130
        %v7186 = vunpack.c.l.b16 %v5131
        %v7187 = vunpack.c.l.b16 %v5132
        %v7188 = vunpack.c.l.b16 %v5133
        %v7189 = vunpack.c.l.b16 %v5134
        %v7190 = vunpack.c.l.b16 %v5135
        %v7191 = vunpack.c.l.b16 %v5136
        %v7192 = vunpack.c.l.b16 %v5137
        %v7193 = vunpack.c.l.b16 %v5138
        %v7194 = vunpack.c.l.b16 %v5139
        %v7195 = vunpack.c.l.b16 %v5140
        %v7196 = vunpack.c.l.b16 %v5141
        %v7197 = vunpack.c.l.b16 %v5142
        %v7198 = vunpack.c.l.b16 %v5143
        %v7199 = vunpack.c.l.b16 %v5144
        %v7200 = vunpack.c.l.b16 %v5145
        %v7201 = vunpack.c.l.b16 %v5146
        %v7202 = vunpack.c.l.b16 %v5147
        %v7203 = vunpack.c.l.b16 %v5148
        %v7204 = vunpack.c.l.b16 %v5149
        %v7205 = vunpack.c.l.b16 %v5150
        %v7206 = vunpack.c.l.b16 %v5151
        %v7207 = vunpack.c.l.b16 %v5152
        %v7208 = vunpack.c.l.b16 %v5153
        %v7209 = vunpack.c.l.b16 %v5154
        %v7210 = vunpack.c.l.b16 %v5155
        %v7211 = vunpack.c.l.b16 %v5156
        %v7212 = vunpack.c.l.b16 %v5157
        %v7213 = vunpack.c.l.b16 %v5158
        %v7214 = vunpack.c.l.b16 %v5159
        %v7215 = vunpack.c.l.b16 %v5160
        %v7216 = vunpack.c.l.b16 %v5161
        %v7217 = vunpack.c.l.b16 %v5162
        %v7218 = vunpack.c.l.b16 %v5163
        %v7219 = vunpack.c.l.b16 %v5164
        %v7220 = vunpack.c.l.b16 %v5165
        %v7221 = vunpack.c.l.b16 %v5166
        %v7222 = vunpack.c.l.b16 %v5167
        %v7223 = vunpack.c.l.b16 %v5168
        %v7224 = vunpack.c.l.b16 %v5169
        %v7225 = vunpack.c.l.b16 %v5170
        %v7226 = vunpack.c.l.b16 %v5171
        %v7227 = vunpack.c.l.b16 %v5172
        %v7228 = vunpack.c.l.b16 %v5173
        %v7229 = vunpack.c.l.b16 %v5174
        %v7230 = vunpack.c.l.b16 %v5175
        %v7231 = vunpack.c.l.b16 %v5176
        %v7232 = vunpack.c.l.b16 %v5177
        %v7233 = vunpack.c.l.b16 %v5178
        %v7234 = vunpack.c.l.b16 %v5179
        %v7235 = vunpack.c.l.b16 %v5180
        %v7236 = vunpack.c.l.b16 %v5181
        %v7237 = vunpack.c.l.b16 %v5182
        %v7238 = vunpack.c.l.b16 %v5183
        %v7239 = vunpack.c.l.b16 %v5184
        %v7240 = vunpack.c.l.b16 %v5185
        %v7241 = vunpack.c.l.b16 %v5186
        %v7242 = vunpack.c.l.b16 %v5187
        %v7243 = vunpack.c.l.b16 %v5188
        %v7244 = vunpack.c.l.b16 %v5189
        %v7245 = vunpack.c.l.b16 %v5190
        %v7246 = vunpack.c.l.b16 %v5191
        %v7247 = vunpack.c.l.b16 %v5192
        %v7248 = vunpack.c.l.b16 %v5193
        %v7249 = vunpack.c.l.b16 %v5194
        %v7250 = vunpack.c.l.b16 %v5195
        %v7251 = vunpack.c.l.b16 %v5196
        %v7252 = vunpack.c.l.b16 %v5197
        %v7253 = vunpack.c.l.b16 %v5198
        %v7254 = vunpack.c.l.b16 %v5199
        %v7255 = vunpack.c.l.b16 %v5200
        %v7256 = vunpack.c.l.b16 %v5201
        %v7257 = vunpack.c.l.b16 %v5202
        %v7258 = vunpack.c.l.b16 %v5203
        %v7259 = vunpack.c.l.b16 %v5204
        %v7260 = vunpack.c.l.b16 %v5205
        %v7261 = vunpack.c.l.b16 %v5206
        %v7262 = vunpack.c.l.b16 %v5207
        %v7263 = vunpack.c.l.b16 %v5208
        %v7264 = vunpack.c.l.b16 %v5209
        %v7265 = vunpack.c.l.b16 %v5210
        %v7266 = vunpack.c.l.b16 %v5211
        %v7267 = vunpack.c.l.b16 %v5212
        %v7268 = vunpack.c.l.b16 %v5213
        %v7269 = vunpack.c.l.b16 %v5214
        %v7270 = vunpack.c.l.b16 %v5215
        %v7271 = vunpack.c.l.b16 %v5216
        %v7272 = vunpack.c.l.b16 %v5217
        %v7273 = vunpack.c.l.b16 %v5218
        %v7274 = vunpack.c.l.b16 %v5219
        %v7275 = vunpack.c.l.b16 %v5220
        %v7276 = vunpack.c.l.b16 %v5221
        %v7277 = vunpack.c.l.b16 %v5222
        %v7278 = vunpack.c.l.b16 %v5223
        %v7279 = vunpack.c.l.b16 %v5224
        %v7280 = vunpack.c.l.b16 %v5225
        %v7281 = vunpack.c.l.b16 %v5226
        %v7282 = vunpack.c.l.b16 %v5227
        %v7283 = vunpack.c.l.b16 %v5228
        %v7284 = vunpack.c.l.b16 %v5229
        %v7285 = vunpack.c.l.b16 %v5230
        %v7286 = vunpack.c.l.b16 %v5231
        %v7287 = vunpack.c.l.b16 %v5232
        %v7288 = vunpack.c.l.b16 %v5233
        %v7289 = vunpack.c.l.b16 %v5234
        %v7290 = vunpack.c.l.b16 %v5235
        %v7291 = vunpack.c.l.b16 %v5236
        %v7292 = vunpack.c.l.b16 %v5237
        %v7293 = vunpack.c.l.b16 %v5238
        %v7294 = vunpack.c.l.b16 %v5239
        %v7295 = vunpack.c.l.b16 %v5240
        %v7296 = vunpack.c.l.b16 %v5241
        %v7297 = vunpack.c.l.b16 %v5242
        %v7298 = vunpack.c.l.b16 %v5243
        %v7299 = vunpack.c.l.b16 %v5244
        %v7300 = vunpack.c.l.b16 %v5245
        %v7301 = vunpack.c.l.b16 %v5246
        %v7302 = vunpack.c.l.b16 %v5247
        %v7303 = vunpack.c.l.b16 %v5248
        %v7304 = vunpack.c.l.b16 %v5249
        %v7305 = vunpack.c.l.b16 %v5250
        %v7306 = vunpack.c.l.b16 %v5251
        %v7307 = vunpack.c.l.b16 %v5252
        %v7308 = vunpack.c.l.b16 %v5253
        %v7309 = vunpack.c.l.b16 %v5254
        %v7310 = vunpack.c.l.b16 %v5255
        %v7311 = vunpack.c.l.b16 %v5256
        %v7312 = vunpack.c.l.b16 %v5257
        %v7313 = vunpack.c.l.b16 %v5258
        %v7314 = vunpack.c.l.b16 %v5259
        %v7315 = vunpack.c.l.b16 %v5260
        %v7316 = vunpack.c.l.b16 %v5261
        %v7317 = vunpack.c.l.b16 %v5262
        %v7318 = vunpack.c.l.b16 %v5263
        %v7319 = vunpack.c.l.b16 %v5264
        %v7320 = vunpack.c.l.b16 %v5265
        %v7321 = vunpack.c.l.b16 %v5266
        %v7322 = vunpack.c.l.b16 %v5267
        %v7323 = vunpack.c.l.b16 %v5268
        %v7324 = vunpack.c.l.b16 %v5269
        %v7325 = vunpack.c.l.b16 %v5270
        %v7326 = vunpack.c.l.b16 %v5271
        %v7327 = vunpack.c.l.b16 %v5272
        %v7328 = vunpack.c.l.b16 %v5273
        %v7329 = vunpack.c.l.b16 %v5274
        %v7330 = vunpack.c.l.b16 %v5275
        %v7331 = vunpack.c.l.b16 %v5276
        %v7332 = vunpack.c.l.b16 %v5277
        %v7333 = vunpack.c.l.b16 %v5278
        %v7334 = vunpack.c.l.b16 %v5279
        %v7335 = vunpack.c.l.b16 %v5280
        %v7336 = vunpack.c.l.b16 %v5281
        %v7337 = vunpack.c.l.b16 %v5282
        %v7338 = vunpack.c.l.b16 %v5283
        %v7339 = vunpack.c.l.b16 %v5284
        %v7340 = vunpack.c.l.b16 %v5285
        %v7341 = vunpack.c.l.b16 %v5286
        %v7342 = vunpack.c.l.b16 %v5287
        %v7343 = vunpack.c.l.b16 %v5288
        %v7344 = vunpack.c.l.b16 %v5289
        %v7345 = vunpack.c.l.b16 %v5290
        %v7346 = vunpack.c.l.b16 %v5291
        %v7347 = vunpack.c.l.b16 %v5292
        %v7348 = vunpack.c.l.b16 %v5293
        %v7349 = vunpack.c.l.b16 %v5294
        %v7350 = vunpack.c.l.b16 %v5295
        %v7351 = vunpack.c.l.b16 %v5296
        %v7352 = vunpack.c.l.b16 %v5297
        %v7353 = vunpack.c.l.b16 %v5298
        %v7354 = vunpack.c.l.b16 %v5299
        %v7355 = vunpack.c.l.b16 %v5300
        %v7356 = vunpack.c.l.b16 %v5301
        %v7357 = vunpack.c.l.b16 %v5302
        %v7358 = vunpack.c.l.b16 %v5303
        %v7359 = vunpack.c.l.b16 %v5304
        %v7360 = vunpack.c.l.b16 %v5305
        %v7361 = vunpack.c.l.b16 %v5306
        %v7362 = vunpack.c.l.b16 %v5307
        %v7363 = vunpack.c.l.b16 %v5308
        %v7364 = vunpack.c.l.b16 %v5309
        %v7365 = vunpack.c.l.b16 %v5310
        %v7366 = vunpack.c.l.b16 %v5311
        %v7367 = vunpack.c.l.b16 %v5312
        %v7368 = vunpack.c.l.b16 %v5313
        %v7369 = vunpack.c.l.b16 %v5314
        %v7370 = vunpack.c.l.b16 %v5315
        %v7371 = vunpack.c.l.b16 %v5316
        %v7372 = vunpack.c.l.b16 %v5317
        %v7373 = vunpack.c.l.b16 %v5318
        %v7374 = vunpack.c.l.b16 %v5319
        %v7375 = vunpack.c.l.b16 %v5320
        %v7376 = vunpack.c.l.b16 %v5321
        %v7377 = vunpack.c.l.b16 %v5322
        %v7378 = vunpack.c.l.b16 %v5323
        %v7379 = vunpack.c.l.b16 %v5324
        %v7380 = vunpack.c.l.b16 %v5325
        %v7381 = vunpack.c.l.b16 %v5326
        %v7382 = vunpack.c.l.b16 %v5327
        %v7383 = vunpack.c.l.b16 %v5328
        %v7384 = vunpack.c.l.b16 %v5329
        %v7385 = vunpack.c.l.b16 %v5330
        %v7386 = vunpack.c.l.b16 %v5331
        %v7387 = vunpack.c.l.b16 %v5332
        %v7388 = vunpack.c.l.b16 %v5333
        %v7389 = vunpack.c.l.b16 %v5334
        %v7390 = vunpack.c.l.b16 %v5335
        %v7391 = vunpack.c.l.b16 %v5336
        %v7392 = vunpack.c.l.b16 %v5337
        %v7393 = vunpack.c.l.b16 %v5338
        %v7394 = vunpack.c.l.b16 %v5339
        %v7395 = vunpack.c.l.b16 %v5340
        %v7396 = vunpack.c.l.b16 %v5341
        %v7397 = vunpack.c.l.b16 %v5342
        %v7398 = vunpack.c.l.b16 %v5343
        %v7399 = vunpack.c.l.b16 %v5344
        %v7400 = vunpack.c.l.b16 %v5345
        %v7401 = vunpack.c.l.b16 %v5346
        %v7402 = vunpack.c.l.b16 %v5347
        %v7403 = vunpack.c.l.b16 %v5348
        %v7404 = vunpack.c.l.b16 %v5349
        %v7405 = vunpack.c.l.b16 %v5350
        %v7406 = vunpack.c.l.b16 %v5351
        %v7407 = vunpack.c.l.b16 %v5352
        %v7408 = vunpack.c.l.b16 %v5353
        %v7409 = vunpack.c.l.b16 %v5354
        %v7410 = vunpack.c.l.b16 %v5355
        %v7411 = vunpack.c.l.b16 %v5356
        %v7412 = vunpack.c.l.b16 %v5357
        %v7413 = vunpack.c.l.b16 %v5358
        %v7414 = vunpack.c.l.b16 %v5359
        %v7415 = vunpack.c.l.b16 %v5360
        %v7416 = vunpack.c.l.b16 %v5361
        %v7417 = vunpack.c.l.b16 %v5362
        %v7418 = vunpack.c.l.b16 %v5363
        %v7419 = vunpack.c.l.b16 %v5364
        %v7420 = vunpack.c.l.b16 %v5365
        %v7421 = vunpack.c.l.b16 %v5366
        %v7422 = vunpack.c.l.b16 %v5367
        %v7423 = vunpack.c.l.b16 %v5368
        %v7424 = vunpack.c.l.b16 %v5369
        %v7425 = vunpack.c.l.b16 %v5370
        %v7426 = vpack.c.b16 %v6403, %v6402
        %v7427 = vpack.c.b16 %v6405, %v6404
        %v7428 = vpack.c.b16 %v6407, %v6406
        %v7429 = vpack.c.b16 %v6409, %v6408
        %v7430 = vpack.c.b16 %v6411, %v6410
        %v7431 = vpack.c.b16 %v6413, %v6412
        %v7432 = vpack.c.b16 %v6415, %v6414
        %v7433 = vpack.c.b16 %v6417, %v6416
        %v7434 = vpack.c.b16 %v6419, %v6418
        %v7435 = vpack.c.b16 %v6421, %v6420
        %v7436 = vpack.c.b16 %v6423, %v6422
        %v7437 = vpack.c.b16 %v6425, %v6424
        %v7438 = vpack.c.b16 %v6427, %v6426
        %v7439 = vpack.c.b16 %v6429, %v6428
        %v7440 = vpack.c.b16 %v6431, %v6430
        %v7441 = vpack.c.b16 %v6433, %v6432
        %v7442 = vpack.c.b16 %v6435, %v6434
        %v7443 = vpack.c.b16 %v6437, %v6436
        %v7444 = vpack.c.b16 %v6439, %v6438
        %v7445 = vpack.c.b16 %v6441, %v6440
        %v7446 = vpack.c.b16 %v6443, %v6442
        %v7447 = vpack.c.b16 %v6445, %v6444
        %v7448 = vpack.c.b16 %v6447, %v6446
        %v7449 = vpack.c.b16 %v6449, %v6448
        %v7450 = vpack.c.b16 %v6451, %v6450
        %v7451 = vpack.c.b16 %v6453, %v6452
        %v7452 = vpack.c.b16 %v6455, %v6454
        %v7453 = vpack.c.b16 %v6457, %v6456
        %v7454 = vpack.c.b16 %v6459, %v6458
        %v7455 = vpack.c.b16 %v6461, %v6460
        %v7456 = vpack.c.b16 %v6463, %v6462
        %v7457 = vpack.c.b16 %v6465, %v6464
        %v7458 = vpack.c.b16 %v6467, %v6466
        %v7459 = vpack.c.b16 %v6469, %v6468
        %v7460 = vpack.c.b16 %v6471, %v6470
        %v7461 = vpack.c.b16 %v6473, %v6472
        %v7462 = vpack.c.b16 %v6475, %v6474
        %v7463 = vpack.c.b16 %v6477, %v6476
        %v7464 = vpack.c.b16 %v6479, %v6478
        %v7465 = vpack.c.b16 %v6481, %v6480
        %v7466 = vpack.c.b16 %v6483, %v6482
        %v7467 = vpack.c.b16 %v6485, %v6484
        %v7468 = vpack.c.b16 %v6487, %v6486
        %v7469 = vpack.c.b16 %v6489, %v6488
        %v7470 = vpack.c.b16 %v6491, %v6490
        %v7471 = vpack.c.b16 %v6493, %v6492
        %v7472 = vpack.c.b16 %v6495, %v6494
        %v7473 = vpack.c.b16 %v6497, %v6496
        %v7474 = vpack.c.b16 %v6499, %v6498
        %v7475 = vpack.c.b16 %v6501, %v6500
        %v7476 = vpack.c.b16 %v6503, %v6502
        %v7477 = vpack.c.b16 %v6505, %v6504
        %v7478 = vpack.c.b16 %v6507, %v6506
        %v7479 = vpack.c.b16 %v6509, %v6508
        %v7480 = vpack.c.b16 %v6511, %v6510
        %v7481 = vpack.c.b16 %v6513, %v6512
        %v7482 = vpack.c.b16 %v6515, %v6514
        %v7483 = vpack.c.b16 %v6517, %v6516
        %v7484 = vpack.c.b16 %v6519, %v6518
        %v7485 = vpack.c.b16 %v6521, %v6520
        %v7486 = vpack.c.b16 %v6523, %v6522
        %v7487 = vpack.c.b16 %v6525, %v6524
        %v7488 = vpack.c.b16 %v6527, %v6526
        %v7489 = vpack.c.b16 %v6529, %v6528
        %v7490 = vpack.c.b16 %v6531, %v6530
        %v7491 = vpack.c.b16 %v6533, %v6532
        %v7492 = vpack.c.b16 %v6535, %v6534
        %v7493 = vpack.c.b16 %v6537, %v6536
        %v7494 = vpack.c.b16 %v6539, %v6538
        %v7495 = vpack.c.b16 %v6541, %v6540
        %v7496 = vpack.c.b16 %v6543, %v6542
        %v7497 = vpack.c.b16 %v6545, %v6544
        %v7498 = vpack.c.b16 %v6547, %v6546
        %v7499 = vpack.c.b16 %v6549, %v6548
        %v7500 = vpack.c.b16 %v6551, %v6550
        %v7501 = vpack.c.b16 %v6553, %v6552
        %v7502 = vpack.c.b16 %v6555, %v6554
        %v7503 = vpack.c.b16 %v6557, %v6556
        %v7504 = vpack.c.b16 %v6559, %v6558
        %v7505 = vpack.c.b16 %v6561, %v6560
        %v7506 = vpack.c.b16 %v6563, %v6562
        %v7507 = vpack.c.b16 %v6565, %v6564
        %v7508 = vpack.c.b16 %v6567, %v6566
        %v7509 = vpack.c.b16 %v6569, %v6568
        %v7510 = vpack.c.b16 %v6571, %v6570
        %v7511 = vpack.c.b16 %v6573, %v6572
        %v7512 = vpack.c.b16 %v6575, %v6574
        %v7513 = vpack.c.b16 %v6577, %v6576
        %v7514 = vpack.c.b16 %v6579, %v6578
        %v7515 = vpack.c.b16 %v6581, %v6580
        %v7516 = vpack.c.b16 %v6583, %v6582
        %v7517 = vpack.c.b16 %v6585, %v6584
        %v7518 = vpack.c.b16 %v6587, %v6586
        %v7519 = vpack.c.b16 %v6589, %v6588
        %v7520 = vpack.c.b16 %v6591, %v6590
        %v7521 = vpack.c.b16 %v6593, %v6592
        %v7522 = vpack.c.b16 %v6595, %v6594
        %v7523 = vpack.c.b16 %v6597, %v6596
        %v7524 = vpack.c.b16 %v6599, %v6598
        %v7525 = vpack.c.b16 %v6601, %v6600
        %v7526 = vpack.c.b16 %v6603, %v6602
        %v7527 = vpack.c.b16 %v6605, %v6604
        %v7528 = vpack.c.b16 %v6607, %v6606
        %v7529 = vpack.c.b16 %v6609, %v6608
        %v7530 = vpack.c.b16 %v6611, %v6610
        %v7531 = vpack.c.b16 %v6613, %v6612
        %v7532 = vpack.c.b16 %v6615, %v6614
        %v7533 = vpack.c.b16 %v6617, %v6616
        %v7534 = vpack.c.b16 %v6619, %v6618
        %v7535 = vpack.c.b16 %v6621, %v6620
        %v7536 = vpack.c.b16 %v6623, %v6622
        %v7537 = vpack.c.b16 %v6625, %v6624
        %v7538 = vpack.c.b16 %v6627, %v6626
        %v7539 = vpack.c.b16 %v6629, %v6628
        %v7540 = vpack.c.b16 %v6631, %v6630
        %v7541 = vpack.c.b16 %v6633, %v6632
        %v7542 = vpack.c.b16 %v6635, %v6634
        %v7543 = vpack.c.b16 %v6637, %v6636
        %v7544 = vpack.c.b16 %v6639, %v6638
        %v7545 = vpack.c.b16 %v6641, %v6640
        %v7546 = vpack.c.b16 %v6643, %v6642
        %v7547 = vpack.c.b16 %v6645, %v6644
        %v7548 = vpack.c.b16 %v6647, %v6646
        %v7549 = vpack.c.b16 %v6649, %v6648
        %v7550 = vpack.c.b16 %v6651, %v6650
        %v7551 = vpack.c.b16 %v6653, %v6652
        %v7552 = vpack.c.b16 %v6655, %v6654
        %v7553 = vpack.c.b16 %v6657, %v6656
        %v7554 = vpack.c.b16 %v6659, %v6658
        %v7555 = vpack.c.b16 %v6661, %v6660
        %v7556 = vpack.c.b16 %v6663, %v6662
        %v7557 = vpack.c.b16 %v6665, %v6664
        %v7558 = vpack.c.b16 %v6667, %v6666
        %v7559 = vpack.c.b16 %v6669, %v6668
        %v7560 = vpack.c.b16 %v6671, %v6670
        %v7561 = vpack.c.b16 %v6673, %v6672
        %v7562 = vpack.c.b16 %v6675, %v6674
        %v7563 = vpack.c.b16 %v6677, %v6676
        %v7564 = vpack.c.b16 %v6679, %v6678
        %v7565 = vpack.c.b16 %v6681, %v6680
        %v7566 = vpack.c.b16 %v6683, %v6682
        %v7567 = vpack.c.b16 %v6685, %v6684
        %v7568 = vpack.c.b16 %v6687, %v6686
        %v7569 = vpack.c.b16 %v6689, %v6688
        %v7570 = vpack.c.b16 %v6691, %v6690
        %v7571 = vpack.c.b16 %v6693, %v6692
        %v7572 = vpack.c.b16 %v6695, %v6694
        %v7573 = vpack.c.b16 %v6697, %v6696
        %v7574 = vpack.c.b16 %v6699, %v6698
        %v7575 = vpack.c.b16 %v6701, %v6700
        %v7576 = vpack.c.b16 %v6703, %v6702
        %v7577 = vpack.c.b16 %v6705, %v6704
        %v7578 = vpack.c.b16 %v6707, %v6706
        %v7579 = vpack.c.b16 %v6709, %v6708
        %v7580 = vpack.c.b16 %v6711, %v6710
        %v7581 = vpack.c.b16 %v6713, %v6712
        %v7582 = vpack.c.b16 %v6715, %v6714
        %v7583 = vpack.c.b16 %v6717, %v6716
        %v7584 = vpack.c.b16 %v6719, %v6718
        %v7585 = vpack.c.b16 %v6721, %v6720
        %v7586 = vpack.c.b16 %v6723, %v6722
        %v7587 = vpack.c.b16 %v6725, %v6724
        %v7588 = vpack.c.b16 %v6727, %v6726
        %v7589 = vpack.c.b16 %v6729, %v6728
        %v7590 = vpack.c.b16 %v6731, %v6730
        %v7591 = vpack.c.b16 %v6733, %v6732
        %v7592 = vpack.c.b16 %v6735, %v6734
        %v7593 = vpack.c.b16 %v6737, %v6736
        %v7594 = vpack.c.b16 %v6739, %v6738
        %v7595 = vpack.c.b16 %v6741, %v6740
        %v7596 = vpack.c.b16 %v6743, %v6742
        %v7597 = vpack.c.b16 %v6745, %v6744
        %v7598 = vpack.c.b16 %v6747, %v6746
        %v7599 = vpack.c.b16 %v6749, %v6748
        %v7600 = vpack.c.b16 %v6751, %v6750
        %v7601 = vpack.c.b16 %v6753, %v6752
        %v7602 = vpack.c.b16 %v6755, %v6754
        %v7603 = vpack.c.b16 %v6757, %v6756
        %v7604 = vpack.c.b16 %v6759, %v6758
        %v7605 = vpack.c.b16 %v6761, %v6760
        %v7606 = vpack.c.b16 %v6763, %v6762
        %v7607 = vpack.c.b16 %v6765, %v6764
        %v7608 = vpack.c.b16 %v6767, %v6766
        %v7609 = vpack.c.b16 %v6769, %v6768
        %v7610 = vpack.c.b16 %v6771, %v6770
        %v7611 = vpack.c.b16 %v6773, %v6772
        %v7612 = vpack.c.b16 %v6775, %v6774
        %v7613 = vpack.c.b16 %v6777, %v6776
        %v7614 = vpack.c.b16 %v6779, %v6778
        %v7615 = vpack.c.b16 %v6781, %v6780
        %v7616 = vpack.c.b16 %v6783, %v6782
        %v7617 = vpack.c.b16 %v6785, %v6784
        %v7618 = vpack.c.b16 %v6787, %v6786
        %v7619 = vpack.c.b16 %v6789, %v6788
        %v7620 = vpack.c.b16 %v6791, %v6790
        %v7621 = vpack.c.b16 %v6793, %v6792
        %v7622 = vpack.c.b16 %v6795, %v6794
        %v7623 = vpack.c.b16 %v6797, %v6796
        %v7624 = vpack.c.b16 %v6799, %v6798
        %v7625 = vpack.c.b16 %v6801, %v6800
        %v7626 = vpack.c.b16 %v6803, %v6802
        %v7627 = vpack.c.b16 %v6805, %v6804
        %v7628 = vpack.c.b16 %v6807, %v6806
        %v7629 = vpack.c.b16 %v6809, %v6808
        %v7630 = vpack.c.b16 %v6811, %v6810
        %v7631 = vpack.c.b16 %v6813, %v6812
        %v7632 = vpack.c.b16 %v6815, %v6814
        %v7633 = vpack.c.b16 %v6817, %v6816
        %v7634 = vpack.c.b16 %v6819, %v6818
        %v7635 = vpack.c.b16 %v6821, %v6820
        %v7636 = vpack.c.b16 %v6823, %v6822
        %v7637 = vpack.c.b16 %v6825, %v6824
        %v7638 = vpack.c.b16 %v6827, %v6826
        %v7639 = vpack.c.b16 %v6829, %v6828
        %v7640 = vpack.c.b16 %v6831, %v6830
        %v7641 = vpack.c.b16 %v6833, %v6832
        %v7642 = vpack.c.b16 %v6835, %v6834
        %v7643 = vpack.c.b16 %v6837, %v6836
        %v7644 = vpack.c.b16 %v6839, %v6838
        %v7645 = vpack.c.b16 %v6841, %v6840
        %v7646 = vpack.c.b16 %v6843, %v6842
        %v7647 = vpack.c.b16 %v6845, %v6844
        %v7648 = vpack.c.b16 %v6847, %v6846
        %v7649 = vpack.c.b16 %v6849, %v6848
        %v7650 = vpack.c.b16 %v6851, %v6850
        %v7651 = vpack.c.b16 %v6853, %v6852
        %v7652 = vpack.c.b16 %v6855, %v6854
        %v7653 = vpack.c.b16 %v6857, %v6856
        %v7654 = vpack.c.b16 %v6859, %v6858
        %v7655 = vpack.c.b16 %v6861, %v6860
        %v7656 = vpack.c.b16 %v6863, %v6862
        %v7657 = vpack.c.b16 %v6865, %v6864
        %v7658 = vpack.c.b16 %v6867, %v6866
        %v7659 = vpack.c.b16 %v6869, %v6868
        %v7660 = vpack.c.b16 %v6871, %v6870
        %v7661 = vpack.c.b16 %v6873, %v6872
        %v7662 = vpack.c.b16 %v6875, %v6874
        %v7663 = vpack.c.b16 %v6877, %v6876
        %v7664 = vpack.c.b16 %v6879, %v6878
        %v7665 = vpack.c.b16 %v6881, %v6880
        %v7666 = vpack.c.b16 %v6883, %v6882
        %v7667 = vpack.c.b16 %v6885, %v6884
        %v7668 = vpack.c.b16 %v6887, %v6886
        %v7669 = vpack.c.b16 %v6889, %v6888
        %v7670 = vpack.c.b16 %v6891, %v6890
        %v7671 = vpack.c.b16 %v6893, %v6892
        %v7672 = vpack.c.b16 %v6895, %v6894
        %v7673 = vpack.c.b16 %v6897, %v6896
        %v7674 = vpack.c.b16 %v6899, %v6898
        %v7675 = vpack.c.b16 %v6901, %v6900
        %v7676 = vpack.c.b16 %v6903, %v6902
        %v7677 = vpack.c.b16 %v6905, %v6904
        %v7678 = vpack.c.b16 %v6907, %v6906
        %v7679 = vpack.c.b16 %v6909, %v6908
        %v7680 = vpack.c.b16 %v6911, %v6910
        %v7681 = vpack.c.b16 %v6913, %v6912
        %v7682 = vpack.c.b16 %v6915, %v6914
        %v7683 = vpack.c.b16 %v6917, %v6916
        %v7684 = vpack.c.b16 %v6919, %v6918
        %v7685 = vpack.c.b16 %v6921, %v6920
        %v7686 = vpack.c.b16 %v6923, %v6922
        %v7687 = vpack.c.b16 %v6925, %v6924
        %v7688 = vpack.c.b16 %v6927, %v6926
        %v7689 = vpack.c.b16 %v6929, %v6928
        %v7690 = vpack.c.b16 %v6931, %v6930
        %v7691 = vpack.c.b16 %v6933, %v6932
        %v7692 = vpack.c.b16 %v6935, %v6934
        %v7693 = vpack.c.b16 %v6937, %v6936
        %v7694 = vpack.c.b16 %v6939, %v6938
        %v7695 = vpack.c.b16 %v6941, %v6940
        %v7696 = vpack.c.b16 %v6943, %v6942
        %v7697 = vpack.c.b16 %v6945, %v6944
        %v7698 = vpack.c.b16 %v6947, %v6946
        %v7699 = vpack.c.b16 %v6949, %v6948
        %v7700 = vpack.c.b16 %v6951, %v6950
        %v7701 = vpack.c.b16 %v6953, %v6952
        %v7702 = vpack.c.b16 %v6955, %v6954
        %v7703 = vpack.c.b16 %v6957, %v6956
        %v7704 = vpack.c.b16 %v6959, %v6958
        %v7705 = vpack.c.b16 %v6961, %v6960
        %v7706 = vpack.c.b16 %v6963, %v6962
        %v7707 = vpack.c.b16 %v6965, %v6964
        %v7708 = vpack.c.b16 %v6967, %v6966
        %v7709 = vpack.c.b16 %v6969, %v6968
        %v7710 = vpack.c.b16 %v6971, %v6970
        %v7711 = vpack.c.b16 %v6973, %v6972
        %v7712 = vpack.c.b16 %v6975, %v6974
        %v7713 = vpack.c.b16 %v6977, %v6976
        %v7714 = vpack.c.b16 %v6979, %v6978
        %v7715 = vpack.c.b16 %v6981, %v6980
        %v7716 = vpack.c.b16 %v6983, %v6982
        %v7717 = vpack.c.b16 %v6985, %v6984
        %v7718 = vpack.c.b16 %v6987, %v6986
        %v7719 = vpack.c.b16 %v6989, %v6988
        %v7720 = vpack.c.b16 %v6991, %v6990
        %v7721 = vpack.c.b16 %v6993, %v6992
        %v7722 = vpack.c.b16 %v6995, %v6994
        %v7723 = vpack.c.b16 %v6997, %v6996
        %v7724 = vpack.c.b16 %v6999, %v6998
        %v7725 = vpack.c.b16 %v7001, %v7000
        %v7726 = vpack.c.b16 %v7003, %v7002
        %v7727 = vpack.c.b16 %v7005, %v7004
        %v7728 = vpack.c.b16 %v7007, %v7006
        %v7729 = vpack.c.b16 %v7009, %v7008
        %v7730 = vpack.c.b16 %v7011, %v7010
        %v7731 = vpack.c.b16 %v7013, %v7012
        %v7732 = vpack.c.b16 %v7015, %v7014
        %v7733 = vpack.c.b16 %v7017, %v7016
        %v7734 = vpack.c.b16 %v7019, %v7018
        %v7735 = vpack.c.b16 %v7021, %v7020
        %v7736 = vpack.c.b16 %v7023, %v7022
        %v7737 = vpack.c.b16 %v7025, %v7024
        %v7738 = vpack.c.b16 %v7027, %v7026
        %v7739 = vpack.c.b16 %v7029, %v7028
        %v7740 = vpack.c.b16 %v7031, %v7030
        %v7741 = vpack.c.b16 %v7033, %v7032
        %v7742 = vpack.c.b16 %v7035, %v7034
        %v7743 = vpack.c.b16 %v7037, %v7036
        %v7744 = vpack.c.b16 %v7039, %v7038
        %v7745 = vpack.c.b16 %v7041, %v7040
        %v7746 = vpack.c.b16 %v7043, %v7042
        %v7747 = vpack.c.b16 %v7045, %v7044
        %v7748 = vpack.c.b16 %v7047, %v7046
        %v7749 = vpack.c.b16 %v7049, %v7048
        %v7750 = vpack.c.b16 %v7051, %v7050
        %v7751 = vpack.c.b16 %v7053, %v7052
        %v7752 = vpack.c.b16 %v7055, %v7054
        %v7753 = vpack.c.b16 %v7057, %v7056
        %v7754 = vpack.c.b16 %v7059, %v7058
        %v7755 = vpack.c.b16 %v7061, %v7060
        %v7756 = vpack.c.b16 %v7063, %v7062
        %v7757 = vpack.c.b16 %v7065, %v7064
        %v7758 = vpack.c.b16 %v7067, %v7066
        %v7759 = vpack.c.b16 %v7069, %v7068
        %v7760 = vpack.c.b16 %v7071, %v7070
        %v7761 = vpack.c.b16 %v7073, %v7072
        %v7762 = vpack.c.b16 %v7075, %v7074
        %v7763 = vpack.c.b16 %v7077, %v7076
        %v7764 = vpack.c.b16 %v7079, %v7078
        %v7765 = vpack.c.b16 %v7081, %v7080
        %v7766 = vpack.c.b16 %v7083, %v7082
        %v7767 = vpack.c.b16 %v7085, %v7084
        %v7768 = vpack.c.b16 %v7087, %v7086
        %v7769 = vpack.c.b16 %v7089, %v7088
        %v7770 = vpack.c.b16 %v7091, %v7090
        %v7771 = vpack.c.b16 %v7093, %v7092
        %v7772 = vpack.c.b16 %v7095, %v7094
        %v7773 = vpack.c.b16 %v7097, %v7096
        %v7774 = vpack.c.b16 %v7099, %v7098
        %v7775 = vpack.c.b16 %v7101, %v7100
        %v7776 = vpack.c.b16 %v7103, %v7102
        %v7777 = vpack.c.b16 %v7105, %v7104
        %v7778 = vpack.c.b16 %v7107, %v7106
        %v7779 = vpack.c.b16 %v7109, %v7108
        %v7780 = vpack.c.b16 %v7111, %v7110
        %v7781 = vpack.c.b16 %v7113, %v7112
        %v7782 = vpack.c.b16 %v7115, %v7114
        %v7783 = vpack.c.b16 %v7117, %v7116
        %v7784 = vpack.c.b16 %v7119, %v7118
        %v7785 = vpack.c.b16 %v7121, %v7120
        %v7786 = vpack.c.b16 %v7123, %v7122
        %v7787 = vpack.c.b16 %v7125, %v7124
        %v7788 = vpack.c.b16 %v7127, %v7126
        %v7789 = vpack.c.b16 %v7129, %v7128
        %v7790 = vpack.c.b16 %v7131, %v7130
        %v7791 = vpack.c.b16 %v7133, %v7132
        %v7792 = vpack.c.b16 %v7135, %v7134
        %v7793 = vpack.c.b16 %v7137, %v7136
        %v7794 = vpack.c.b16 %v7139, %v7138
        %v7795 = vpack.c.b16 %v7141, %v7140
        %v7796 = vpack.c.b16 %v7143, %v7142
        %v7797 = vpack.c.b16 %v7145, %v7144
        %v7798 = vpack.c.b16 %v7147, %v7146
        %v7799 = vpack.c.b16 %v7149, %v7148
        %v7800 = vpack.c.b16 %v7151, %v7150
        %v7801 = vpack.c.b16 %v7153, %v7152
        %v7802 = vpack.c.b16 %v7155, %v7154
        %v7803 = vpack.c.b16 %v7157, %v7156
        %v7804 = vpack.c.b16 %v7159, %v7158
        %v7805 = vpack.c.b16 %v7161, %v7160
        %v7806 = vpack.c.b16 %v7163, %v7162
        %v7807 = vpack.c.b16 %v7165, %v7164
        %v7808 = vpack.c.b16 %v7167, %v7166
        %v7809 = vpack.c.b16 %v7169, %v7168
        %v7810 = vpack.c.b16 %v7171, %v7170
        %v7811 = vpack.c.b16 %v7173, %v7172
        %v7812 = vpack.c.b16 %v7175, %v7174
        %v7813 = vpack.c.b16 %v7177, %v7176
        %v7814 = vpack.c.b16 %v7179, %v7178
        %v7815 = vpack.c.b16 %v7181, %v7180
        %v7816 = vpack.c.b16 %v7183, %v7182
        %v7817 = vpack.c.b16 %v7185, %v7184
        %v7818 = vpack.c.b16 %v7187, %v7186
        %v7819 = vpack.c.b16 %v7189, %v7188
        %v7820 = vpack.c.b16 %v7191, %v7190
        %v7821 = vpack.c.b16 %v7193, %v7192
        %v7822 = vpack.c.b16 %v7195, %v7194
        %v7823 = vpack.c.b16 %v7197, %v7196
        %v7824 = vpack.c.b16 %v7199, %v7198
        %v7825 = vpack.c.b16 %v7201, %v7200
        %v7826 = vpack.c.b16 %v7203, %v7202
        %v7827 = vpack.c.b16 %v7205, %v7204
        %v7828 = vpack.c.b16 %v7207, %v7206
        %v7829 = vpack.c.b16 %v7209, %v7208
        %v7830 = vpack.c.b16 %v7211, %v7210
        %v7831 = vpack.c.b16 %v7213, %v7212
        %v7832 = vpack.c.b16 %v7215, %v7214
        %v7833 = vpack.c.b16 %v7217, %v7216
        %v7834 = vpack.c.b16 %v7219, %v7218
        %v7835 = vpack.c.b16 %v7221, %v7220
        %v7836 = vpack.c.b16 %v7223, %v7222
        %v7837 = vpack.c.b16 %v7225, %v7224
        %v7838 = vpack.c.b16 %v7227, %v7226
        %v7839 = vpack.c.b16 %v7229, %v7228
        %v7840 = vpack.c.b16 %v7231, %v7230
        %v7841 = vpack.c.b16 %v7233, %v7232
        %v7842 = vpack.c.b16 %v7235, %v7234
        %v7843 = vpack.c.b16 %v7237, %v7236
        %v7844 = vpack.c.b16 %v7239, %v7238
        %v7845 = vpack.c.b16 %v7241, %v7240
        %v7846 = vpack.c.b16 %v7243, %v7242
        %v7847 = vpack.c.b16 %v7245, %v7244
        %v7848 = vpack.c.b16 %v7247, %v7246
        %v7849 = vpack.c.b16 %v7249, %v7248
        %v7850 = vpack.c.b16 %v7251, %v7250
        %v7851 = vpack.c.b16 %v7253, %v7252
        %v7852 = vpack.c.b16 %v7255, %v7254
        %v7853 = vpack.c.b16 %v7257, %v7256
        %v7854 = vpack.c.b16 %v7259, %v7258
        %v7855 = vpack.c.b16 %v7261, %v7260
        %v7856 = vpack.c.b16 %v7263, %v7262
        %v7857 = vpack.c.b16 %v7265, %v7264
        %v7858 = vpack.c.b16 %v7267, %v7266
        %v7859 = vpack.c.b16 %v7269, %v7268
        %v7860 = vpack.c.b16 %v7271, %v7270
        %v7861 = vpack.c.b16 %v7273, %v7272
        %v7862 = vpack.c.b16 %v7275, %v7274
        %v7863 = vpack.c.b16 %v7277, %v7276
        %v7864 = vpack.c.b16 %v7279, %v7278
        %v7865 = vpack.c.b16 %v7281, %v7280
        %v7866 = vpack.c.b16 %v7283, %v7282
        %v7867 = vpack.c.b16 %v7285, %v7284
        %v7868 = vpack.c.b16 %v7287, %v7286
        %v7869 = vpack.c.b16 %v7289, %v7288
        %v7870 = vpack.c.b16 %v7291, %v7290
        %v7871 = vpack.c.b16 %v7293, %v7292
        %v7872 = vpack.c.b16 %v7295, %v7294
        %v7873 = vpack.c.b16 %v7297, %v7296
        %v7874 = vpack.c.b16 %v7299, %v7298
        %v7875 = vpack.c.b16 %v7301, %v7300
        %v7876 = vpack.c.b16 %v7303, %v7302
        %v7877 = vpack.c.b16 %v7305, %v7304
        %v7878 = vpack.c.b16 %v7307, %v7306
        %v7879 = vpack.c.b16 %v7309, %v7308
        %v7880 = vpack.c.b16 %v7311, %v7310
        %v7881 = vpack.c.b16 %v7313, %v7312
        %v7882 = vpack.c.b16 %v7315, %v7314
        %v7883 = vpack.c.b16 %v7317, %v7316
        %v7884 = vpack.c.b16 %v7319, %v7318
        %v7885 = vpack.c.b16 %v7321, %v7320
        %v7886 = vpack.c.b16 %v7323, %v7322
        %v7887 = vpack.c.b16 %v7325, %v7324
        %v7888 = vpack.c.b16 %v7327, %v7326
        %v7889 = vpack.c.b16 %v7329, %v7328
        %v7890 = vpack.c.b16 %v7331, %v7330
        %v7891 = vpack.c.b16 %v7333, %v7332
        %v7892 = vpack.c.b16 %v7335, %v7334
        %v7893 = vpack.c.b16 %v7337, %v7336
        %v7894 = vpack.c.b16 %v7339, %v7338
        %v7895 = vpack.c.b16 %v7341, %v7340
        %v7896 = vpack.c.b16 %v7343, %v7342
        %v7897 = vpack.c.b16 %v7345, %v7344
        %v7898 = vpack.c.b16 %v7347, %v7346
        %v7899 = vpack.c.b16 %v7349, %v7348
        %v7900 = vpack.c.b16 %v7351, %v7350
        %v7901 = vpack.c.b16 %v7353, %v7352
        %v7902 = vpack.c.b16 %v7355, %v7354
        %v7903 = vpack.c.b16 %v7357, %v7356
        %v7904 = vpack.c.b16 %v7359, %v7358
        %v7905 = vpack.c.b16 %v7361, %v7360
        %v7906 = vpack.c.b16 %v7363, %v7362
        %v7907 = vpack.c.b16 %v7365, %v7364
        %v7908 = vpack.c.b16 %v7367, %v7366
        %v7909 = vpack.c.b16 %v7369, %v7368
        %v7910 = vpack.c.b16 %v7371, %v7370
        %v7911 = vpack.c.b16 %v7373, %v7372
        %v7912 = vpack.c.b16 %v7375, %v7374
        %v7913 = vpack.c.b16 %v7377, %v7376
        %v7914 = vpack.c.b16 %v7379, %v7378
        %v7915 = vpack.c.b16 %v7381, %v7380
        %v7916 = vpack.c.b16 %v7383, %v7382
        %v7917 = vpack.c.b16 %v7385, %v7384
        %v7918 = vpack.c.b16 %v7387, %v7386
        %v7919 = vpack.c.b16 %v7389, %v7388
        %v7920 = vpack.c.b16 %v7391, %v7390
        %v7921 = vpack.c.b16 %v7393, %v7392
        %v7922 = vpack.c.b16 %v7395, %v7394
        %v7923 = vpack.c.b16 %v7397, %v7396
        %v7924 = vpack.c.b16 %v7399, %v7398
        %v7925 = vpack.c.b16 %v7401, %v7400
        %v7926 = vpack.c.b16 %v7403, %v7402
        %v7927 = vpack.c.b16 %v7405, %v7404
        %v7928 = vpack.c.b16 %v7407, %v7406
        %v7929 = vpack.c.b16 %v7409, %v7408
        %v7930 = vpack.c.b16 %v7411, %v7410
        %v7931 = vpack.c.b16 %v7413, %v7412
        %v7932 = vpack.c.b16 %v7415, %v7414
        %v7933 = vpack.c.b16 %v7417, %v7416
        %v7934 = vpack.c.b16 %v7419, %v7418
        %v7935 = vpack.c.b16 %v7421, %v7420
        %v7936 = vpack.c.b16 %v7423, %v7422
        %v7937 = vpack.c.b16 %v7425, %v7424
        %8450 = vmatprep.subr.bf16.mxu0 0
        %8451 = vmatpush1.bf16.msra.mxu0 %v7433
        %8452 = vmatprep.subr.bf16.mxu0 0
        %8453 = vmatpush1.bf16.msra.mxu0 %v7432
        %8454 = vmatprep.subr.bf16.mxu0 0
        %8455 = vmatpush1.bf16.msra.mxu0 %v7431
        %8456 = vmatprep.subr.bf16.mxu0 0
        %8457 = vmatpush1.bf16.msra.mxu0 %v7430
        %8458 = vmatprep.subr.bf16.mxu0 0
        %8459 = vmatpush1.bf16.msra.mxu0 %v7429
        %8460 = vmatprep.subr.bf16.mxu0 0
        %8461 = vmatpush1.bf16.msra.mxu0 %v7428
        %8462 = vmatprep.subr.bf16.mxu0 0
        %8463 = vmatpush1.bf16.msra.mxu0 %v7427
        %8464 = vmatprep.subr.bf16.mxu0 0
        %8465 = vmatpush1.bf16.msra.mxu0 %v7426
        %8466 = vmatprep.subr.bf16.mxu0 0
        %8467 = vmatpush2.bf16.msra.mxu0 %v7441
        %8468 = vmatprep.subr.bf16.mxu0 0
        %8469 = vmatpush2.bf16.msra.mxu0 %v7440
        %8470 = vmatprep.subr.bf16.mxu0 0
        %8471 = vmatpush2.bf16.msra.mxu0 %v7439
        %8472 = vmatprep.subr.bf16.mxu0 0
        %8473 = vmatpush2.bf16.msra.mxu0 %v7438
        %8474 = vmatprep.subr.bf16.mxu0 0
        %8475 = vmatpush2.bf16.msra.mxu0 %v7437
        %8476 = vmatprep.subr.bf16.mxu0 0
        %8477 = vmatpush2.bf16.msra.mxu0 %v7436
        %8478 = vmatprep.subr.bf16.mxu0 0
        %8479 = vmatpush2.bf16.msra.mxu0 %v7435
        %8480 = vmatprep.subr.bf16.mxu0 0
        %8481 = vmatpush2.bf16.msra.mxu0 %v7434
        %8482 = vmatprep.mubr.bf16.mxu0 %v4284
        %8483 = vmatmul.mubr.bf16.gmra.mxu0 %v4283
        %v8484 = vpop.f32.mrf.mxu0
        %v8485 = vadd.f32 %v5376, %v8484
        %v8486 = vpop.f32.mrf.mxu0
        %v8487 = vpop.f32.mrf.mxu0
        %v8488 = vpop.f32.mrf.mxu0
        %8489 = vdwg.mxu0
        %8490 = vmatprep.subr.bf16.mxu0 0
        %8491 = vmatpush1.bf16.msra.mxu0 %v7449
        %8492 = vmatprep.subr.bf16.mxu0 0
        %8493 = vmatpush1.bf16.msra.mxu0 %v7448
        %8494 = vmatprep.subr.bf16.mxu0 0
        %8495 = vmatpush1.bf16.msra.mxu0 %v7447
        %8496 = vmatprep.subr.bf16.mxu0 0
        %8497 = vmatpush1.bf16.msra.mxu0 %v7446
        %8498 = vmatprep.subr.bf16.mxu0 0
        %8499 = vmatpush1.bf16.msra.mxu0 %v7445
        %8500 = vmatprep.subr.bf16.mxu0 0
        %8501 = vmatpush1.bf16.msra.mxu0 %v7444
        %8502 = vmatprep.subr.bf16.mxu0 0
        %8503 = vmatpush1.bf16.msra.mxu0 %v7443
        %8504 = vmatprep.subr.bf16.mxu0 0
        %8505 = vmatpush1.bf16.msra.mxu0 %v7442
        %8506 = vmatprep.subr.bf16.mxu0 0
        %8507 = vmatpush2.bf16.msra.mxu0 %v7457
        %8508 = vmatprep.subr.bf16.mxu0 0
        %8509 = vmatpush2.bf16.msra.mxu0 %v7456
        %8510 = vmatprep.subr.bf16.mxu0 0
        %8511 = vmatpush2.bf16.msra.mxu0 %v7455
        %8512 = vmatprep.subr.bf16.mxu0 0
        %8513 = vmatpush2.bf16.msra.mxu0 %v7454
        %8514 = vmatprep.subr.bf16.mxu0 0
        %8515 = vmatpush2.bf16.msra.mxu0 %v7453
        %8516 = vmatprep.subr.bf16.mxu0 0
        %8517 = vmatpush2.bf16.msra.mxu0 %v7452
        %8518 = vmatprep.subr.bf16.mxu0 0
        %8519 = vmatpush2.bf16.msra.mxu0 %v7451
        %8520 = vmatprep.subr.bf16.mxu0 0
        %8521 = vmatpush2.bf16.msra.mxu0 %v7450
        %8522 = vmatprep.mubr.bf16.mxu0 %v4286
        %8523 = vmatmul.mubr.bf16.gmra.mxu0 %v4285
        %v8524 = vpop.f32.mrf.mxu0
        %v8525 = vadd.f32 %v8485, %v8524
        %v8526 = vpop.f32.mrf.mxu0
        %v8527 = vpop.f32.mrf.mxu0
        %v8528 = vpop.f32.mrf.mxu0
        %8529 = vdwg.mxu0
        %8530 = vmatprep.subr.bf16.mxu0 0
        %8531 = vmatpush1.bf16.msra.mxu0 %v7465
        %8532 = vmatprep.subr.bf16.mxu0 0
        %8533 = vmatpush1.bf16.msra.mxu0 %v7464
        %8534 = vmatprep.subr.bf16.mxu0 0
        %8535 = vmatpush1.bf16.msra.mxu0 %v7463
        %8536 = vmatprep.subr.bf16.mxu0 0
        %8537 = vmatpush1.bf16.msra.mxu0 %v7462
        %8538 = vmatprep.subr.bf16.mxu0 0
        %8539 = vmatpush1.bf16.msra.mxu0 %v7461
        %8540 = vmatprep.subr.bf16.mxu0 0
        %8541 = vmatpush1.bf16.msra.mxu0 %v7460
        %8542 = vmatprep.subr.bf16.mxu0 0
        %8543 = vmatpush1.bf16.msra.mxu0 %v7459
        %8544 = vmatprep.subr.bf16.mxu0 0
        %8545 = vmatpush1.bf16.msra.mxu0 %v7458
        %8546 = vmatprep.subr.bf16.mxu0 0
        %8547 = vmatpush2.bf16.msra.mxu0 %v7473
        %8548 = vmatprep.subr.bf16.mxu0 0
        %8549 = vmatpush2.bf16.msra.mxu0 %v7472
        %8550 = vmatprep.subr.bf16.mxu0 0
        %8551 = vmatpush2.bf16.msra.mxu0 %v7471
        %8552 = vmatprep.subr.bf16.mxu0 0
        %8553 = vmatpush2.bf16.msra.mxu0 %v7470
        %8554 = vmatprep.subr.bf16.mxu0 0
        %8555 = vmatpush2.bf16.msra.mxu0 %v7469
        %8556 = vmatprep.subr.bf16.mxu0 0
        %8557 = vmatpush2.bf16.msra.mxu0 %v7468
        %8558 = vmatprep.subr.bf16.mxu0 0
        %8559 = vmatpush2.bf16.msra.mxu0 %v7467
        %8560 = vmatprep.subr.bf16.mxu0 0
        %8561 = vmatpush2.bf16.msra.mxu0 %v7466
        %8562 = vmatprep.mubr.bf16.mxu0 %v4288
        %8563 = vmatmul.mubr.bf16.gmra.mxu0 %v4287
        %v8564 = vpop.f32.mrf.mxu0
        %v8565 = vadd.f32 %v8525, %v8564
        %v8566 = vpop.f32.mrf.mxu0
        %v8567 = vpop.f32.mrf.mxu0
        %v8568 = vpop.f32.mrf.mxu0
        %8569 = vdwg.mxu0
        %8570 = vmatprep.subr.bf16.mxu0 0
        %8571 = vmatpush1.bf16.msra.mxu0 %v7481
        %8572 = vmatprep.subr.bf16.mxu0 0
        %8573 = vmatpush1.bf16.msra.mxu0 %v7480
        %8574 = vmatprep.subr.bf16.mxu0 0
        %8575 = vmatpush1.bf16.msra.mxu0 %v7479
        %8576 = vmatprep.subr.bf16.mxu0 0
        %8577 = vmatpush1.bf16.msra.mxu0 %v7478
        %8578 = vmatprep.subr.bf16.mxu0 0
        %8579 = vmatpush1.bf16.msra.mxu0 %v7477
        %8580 = vmatprep.subr.bf16.mxu0 0
        %8581 = vmatpush1.bf16.msra.mxu0 %v7476
        %8582 = vmatprep.subr.bf16.mxu0 0
        %8583 = vmatpush1.bf16.msra.mxu0 %v7475
        %8584 = vmatprep.subr.bf16.mxu0 0
        %8585 = vmatpush1.bf16.msra.mxu0 %v7474
        %8586 = vmatprep.subr.bf16.mxu0 0
        %8587 = vmatpush2.bf16.msra.mxu0 %v7489
        %8588 = vmatprep.subr.bf16.mxu0 0
        %8589 = vmatpush2.bf16.msra.mxu0 %v7488
        %8590 = vmatprep.subr.bf16.mxu0 0
        %8591 = vmatpush2.bf16.msra.mxu0 %v7487
        %8592 = vmatprep.subr.bf16.mxu0 0
        %8593 = vmatpush2.bf16.msra.mxu0 %v7486
        %8594 = vmatprep.subr.bf16.mxu0 0
        %8595 = vmatpush2.bf16.msra.mxu0 %v7485
        %8596 = vmatprep.subr.bf16.mxu0 0
        %8597 = vmatpush2.bf16.msra.mxu0 %v7484
        %8598 = vmatprep.subr.bf16.mxu0 0
        %8599 = vmatpush2.bf16.msra.mxu0 %v7483
        %8600 = vmatprep.subr.bf16.mxu0 0
        %8601 = vmatpush2.bf16.msra.mxu0 %v7482
        %8602 = vmatprep.mubr.bf16.mxu0 %v4290
        %8603 = vmatmul.mubr.bf16.gmra.mxu0 %v4289
        %v8604 = vpop.f32.mrf.mxu0
        %v8605 = vadd.f32 %v8565, %v8604
        %v8606 = vpop.f32.mrf.mxu0
        %v8607 = vpop.f32.mrf.mxu0
        %v8608 = vpop.f32.mrf.mxu0
        %8609 = vdwg.mxu0
        %8610 = vmatprep.subr.bf16.mxu0 0
        %8611 = vmatpush1.bf16.msra.mxu0 %v7497
        %8612 = vmatprep.subr.bf16.mxu0 0
        %8613 = vmatpush1.bf16.msra.mxu0 %v7496
        %8614 = vmatprep.subr.bf16.mxu0 0
        %8615 = vmatpush1.bf16.msra.mxu0 %v7495
        %8616 = vmatprep.subr.bf16.mxu0 0
        %8617 = vmatpush1.bf16.msra.mxu0 %v7494
        %8618 = vmatprep.subr.bf16.mxu0 0
        %8619 = vmatpush1.bf16.msra.mxu0 %v7493
        %8620 = vmatprep.subr.bf16.mxu0 0
        %8621 = vmatpush1.bf16.msra.mxu0 %v7492
        %8622 = vmatprep.subr.bf16.mxu0 0
        %8623 = vmatpush1.bf16.msra.mxu0 %v7491
        %8624 = vmatprep.subr.bf16.mxu0 0
        %8625 = vmatpush1.bf16.msra.mxu0 %v7490
        %8626 = vmatprep.subr.bf16.mxu0 0
        %8627 = vmatpush2.bf16.msra.mxu0 %v7505
        %8628 = vmatprep.subr.bf16.mxu0 0
        %8629 = vmatpush2.bf16.msra.mxu0 %v7504
        %8630 = vmatprep.subr.bf16.mxu0 0
        %8631 = vmatpush2.bf16.msra.mxu0 %v7503
        %8632 = vmatprep.subr.bf16.mxu0 0
        %8633 = vmatpush2.bf16.msra.mxu0 %v7502
        %8634 = vmatprep.subr.bf16.mxu0 0
        %8635 = vmatpush2.bf16.msra.mxu0 %v7501
        %8636 = vmatprep.subr.bf16.mxu0 0
        %8637 = vmatpush2.bf16.msra.mxu0 %v7500
        %8638 = vmatprep.subr.bf16.mxu0 0
        %8639 = vmatpush2.bf16.msra.mxu0 %v7499
        %8640 = vmatprep.subr.bf16.mxu0 0
        %8641 = vmatpush2.bf16.msra.mxu0 %v7498
        %8642 = vmatprep.mubr.bf16.mxu0 %v4292
        %8643 = vmatmul.mubr.bf16.gmra.mxu0 %v4291
        %v8644 = vpop.f32.mrf.mxu0
        %v8645 = vadd.f32 %v8605, %v8644
        %v8646 = vpop.f32.mrf.mxu0
        %v8647 = vpop.f32.mrf.mxu0
        %v8648 = vpop.f32.mrf.mxu0
        %8649 = vdwg.mxu0
        %8650 = vmatprep.subr.bf16.mxu0 0
        %8651 = vmatpush1.bf16.msra.mxu0 %v7513
        %8652 = vmatprep.subr.bf16.mxu0 0
        %8653 = vmatpush1.bf16.msra.mxu0 %v7512
        %8654 = vmatprep.subr.bf16.mxu0 0
        %8655 = vmatpush1.bf16.msra.mxu0 %v7511
        %8656 = vmatprep.subr.bf16.mxu0 0
        %8657 = vmatpush1.bf16.msra.mxu0 %v7510
        %8658 = vmatprep.subr.bf16.mxu0 0
        %8659 = vmatpush1.bf16.msra.mxu0 %v7509
        %8660 = vmatprep.subr.bf16.mxu0 0
        %8661 = vmatpush1.bf16.msra.mxu0 %v7508
        %8662 = vmatprep.subr.bf16.mxu0 0
        %8663 = vmatpush1.bf16.msra.mxu0 %v7507
        %8664 = vmatprep.subr.bf16.mxu0 0
        %8665 = vmatpush1.bf16.msra.mxu0 %v7506
        %8666 = vmatprep.subr.bf16.mxu0 0
        %8667 = vmatpush2.bf16.msra.mxu0 %v7521
        %8668 = vmatprep.subr.bf16.mxu0 0
        %8669 = vmatpush2.bf16.msra.mxu0 %v7520
        %8670 = vmatprep.subr.bf16.mxu0 0
        %8671 = vmatpush2.bf16.msra.mxu0 %v7519
        %8672 = vmatprep.subr.bf16.mxu0 0
        %8673 = vmatpush2.bf16.msra.mxu0 %v7518
        %8674 = vmatprep.subr.bf16.mxu0 0
        %8675 = vmatpush2.bf16.msra.mxu0 %v7517
        %8676 = vmatprep.subr.bf16.mxu0 0
        %8677 = vmatpush2.bf16.msra.mxu0 %v7516
        %8678 = vmatprep.subr.bf16.mxu0 0
        %8679 = vmatpush2.bf16.msra.mxu0 %v7515
        %8680 = vmatprep.subr.bf16.mxu0 0
        %8681 = vmatpush2.bf16.msra.mxu0 %v7514
        %8682 = vmatprep.mubr.bf16.mxu0 %v4294
        %8683 = vmatmul.mubr.bf16.gmra.mxu0 %v4293
        %v8684 = vpop.f32.mrf.mxu0
        %v8685 = vadd.f32 %v8645, %v8684
        %v8686 = vpop.f32.mrf.mxu0
        %v8687 = vpop.f32.mrf.mxu0
        %v8688 = vpop.f32.mrf.mxu0
        %8689 = vdwg.mxu0
        %8690 = vmatprep.subr.bf16.mxu0 0
        %8691 = vmatpush1.bf16.msra.mxu0 %v7529
        %8692 = vmatprep.subr.bf16.mxu0 0
        %8693 = vmatpush1.bf16.msra.mxu0 %v7528
        %8694 = vmatprep.subr.bf16.mxu0 0
        %8695 = vmatpush1.bf16.msra.mxu0 %v7527
        %8696 = vmatprep.subr.bf16.mxu0 0
        %8697 = vmatpush1.bf16.msra.mxu0 %v7526
        %8698 = vmatprep.subr.bf16.mxu0 0
        %8699 = vmatpush1.bf16.msra.mxu0 %v7525
        %8700 = vmatprep.subr.bf16.mxu0 0
        %8701 = vmatpush1.bf16.msra.mxu0 %v7524
        %8702 = vmatprep.subr.bf16.mxu0 0
        %8703 = vmatpush1.bf16.msra.mxu0 %v7523
        %8704 = vmatprep.subr.bf16.mxu0 0
        %8705 = vmatpush1.bf16.msra.mxu0 %v7522
        %8706 = vmatprep.subr.bf16.mxu0 0
        %8707 = vmatpush2.bf16.msra.mxu0 %v7537
        %8708 = vmatprep.subr.bf16.mxu0 0
        %8709 = vmatpush2.bf16.msra.mxu0 %v7536
        %8710 = vmatprep.subr.bf16.mxu0 0
        %8711 = vmatpush2.bf16.msra.mxu0 %v7535
        %8712 = vmatprep.subr.bf16.mxu0 0
        %8713 = vmatpush2.bf16.msra.mxu0 %v7534
        %8714 = vmatprep.subr.bf16.mxu0 0
        %8715 = vmatpush2.bf16.msra.mxu0 %v7533
        %8716 = vmatprep.subr.bf16.mxu0 0
        %8717 = vmatpush2.bf16.msra.mxu0 %v7532
        %8718 = vmatprep.subr.bf16.mxu0 0
        %8719 = vmatpush2.bf16.msra.mxu0 %v7531
        %8720 = vmatprep.subr.bf16.mxu0 0
        %8721 = vmatpush2.bf16.msra.mxu0 %v7530
        %8722 = vmatprep.mubr.bf16.mxu0 %v4296
        %8723 = vmatmul.mubr.bf16.gmra.mxu0 %v4295
        %v8724 = vpop.f32.mrf.mxu0
        %v8725 = vadd.f32 %v8685, %v8724
        %v8726 = vpop.f32.mrf.mxu0
        %v8727 = vpop.f32.mrf.mxu0
        %v8728 = vpop.f32.mrf.mxu0
        %8729 = vdwg.mxu0
        %8730 = vmatprep.subr.bf16.mxu0 0
        %8731 = vmatpush1.bf16.msra.mxu0 %v7545
        %8732 = vmatprep.subr.bf16.mxu0 0
        %8733 = vmatpush1.bf16.msra.mxu0 %v7544
        %8734 = vmatprep.subr.bf16.mxu0 0
        %8735 = vmatpush1.bf16.msra.mxu0 %v7543
        %8736 = vmatprep.subr.bf16.mxu0 0
        %8737 = vmatpush1.bf16.msra.mxu0 %v7542
        %8738 = vmatprep.subr.bf16.mxu0 0
        %8739 = vmatpush1.bf16.msra.mxu0 %v7541
        %8740 = vmatprep.subr.bf16.mxu0 0
        %8741 = vmatpush1.bf16.msra.mxu0 %v7540
        %8742 = vmatprep.subr.bf16.mxu0 0
        %8743 = vmatpush1.bf16.msra.mxu0 %v7539
        %8744 = vmatprep.subr.bf16.mxu0 0
        %8745 = vmatpush1.bf16.msra.mxu0 %v7538
        %8746 = vmatprep.subr.bf16.mxu0 0
        %8747 = vmatpush2.bf16.msra.mxu0 %v7553
        %8748 = vmatprep.subr.bf16.mxu0 0
        %8749 = vmatpush2.bf16.msra.mxu0 %v7552
        %8750 = vmatprep.subr.bf16.mxu0 0
        %8751 = vmatpush2.bf16.msra.mxu0 %v7551
        %8752 = vmatprep.subr.bf16.mxu0 0
        %8753 = vmatpush2.bf16.msra.mxu0 %v7550
        %8754 = vmatprep.subr.bf16.mxu0 0
        %8755 = vmatpush2.bf16.msra.mxu0 %v7549
        %8756 = vmatprep.subr.bf16.mxu0 0
        %8757 = vmatpush2.bf16.msra.mxu0 %v7548
        %8758 = vmatprep.subr.bf16.mxu0 0
        %8759 = vmatpush2.bf16.msra.mxu0 %v7547
        %8760 = vmatprep.subr.bf16.mxu0 0
        %8761 = vmatpush2.bf16.msra.mxu0 %v7546
        %8762 = vmatprep.mubr.bf16.mxu0 %v4298
        %8763 = vmatmul.mubr.bf16.gmra.mxu0 %v4297
        %v8764 = vpop.f32.mrf.mxu0
        %v8765 = vadd.f32 %v8725, %v8764
        %v8766 = vpop.f32.mrf.mxu0
        %v8767 = vpop.f32.mrf.mxu0
        %v8768 = vpop.f32.mrf.mxu0
        %8769 = vdwg.mxu0
        %8770 = vmatprep.subr.bf16.mxu0 0
        %8771 = vmatpush1.bf16.msra.mxu0 %v7561
        %8772 = vmatprep.subr.bf16.mxu0 0
        %8773 = vmatpush1.bf16.msra.mxu0 %v7560
        %8774 = vmatprep.subr.bf16.mxu0 0
        %8775 = vmatpush1.bf16.msra.mxu0 %v7559
        %8776 = vmatprep.subr.bf16.mxu0 0
        %8777 = vmatpush1.bf16.msra.mxu0 %v7558
        %8778 = vmatprep.subr.bf16.mxu0 0
        %8779 = vmatpush1.bf16.msra.mxu0 %v7557
        %8780 = vmatprep.subr.bf16.mxu0 0
        %8781 = vmatpush1.bf16.msra.mxu0 %v7556
        %8782 = vmatprep.subr.bf16.mxu0 0
        %8783 = vmatpush1.bf16.msra.mxu0 %v7555
        %8784 = vmatprep.subr.bf16.mxu0 0
        %8785 = vmatpush1.bf16.msra.mxu0 %v7554
        %8786 = vmatprep.subr.bf16.mxu0 0
        %8787 = vmatpush2.bf16.msra.mxu0 %v7569
        %8788 = vmatprep.subr.bf16.mxu0 0
        %8789 = vmatpush2.bf16.msra.mxu0 %v7568
        %8790 = vmatprep.subr.bf16.mxu0 0
        %8791 = vmatpush2.bf16.msra.mxu0 %v7567
        %8792 = vmatprep.subr.bf16.mxu0 0
        %8793 = vmatpush2.bf16.msra.mxu0 %v7566
        %8794 = vmatprep.subr.bf16.mxu0 0
        %8795 = vmatpush2.bf16.msra.mxu0 %v7565
        %8796 = vmatprep.subr.bf16.mxu0 0
        %8797 = vmatpush2.bf16.msra.mxu0 %v7564
        %8798 = vmatprep.subr.bf16.mxu0 0
        %8799 = vmatpush2.bf16.msra.mxu0 %v7563
        %8800 = vmatprep.subr.bf16.mxu0 0
        %8801 = vmatpush2.bf16.msra.mxu0 %v7562
        %8802 = vmatprep.mubr.bf16.mxu0 %v4300
        %8803 = vmatmul.mubr.bf16.gmra.mxu0 %v4299
        %v8804 = vpop.f32.mrf.mxu0
        %v8805 = vadd.f32 %v8765, %v8804
        %v8806 = vpop.f32.mrf.mxu0
        %v8807 = vpop.f32.mrf.mxu0
        %v8808 = vpop.f32.mrf.mxu0
        %8809 = vdwg.mxu0
        %8810 = vmatprep.subr.bf16.mxu0 0
        %8811 = vmatpush1.bf16.msra.mxu0 %v7577
        %8812 = vmatprep.subr.bf16.mxu0 0
        %8813 = vmatpush1.bf16.msra.mxu0 %v7576
        %8814 = vmatprep.subr.bf16.mxu0 0
        %8815 = vmatpush1.bf16.msra.mxu0 %v7575
        %8816 = vmatprep.subr.bf16.mxu0 0
        %8817 = vmatpush1.bf16.msra.mxu0 %v7574
        %8818 = vmatprep.subr.bf16.mxu0 0
        %8819 = vmatpush1.bf16.msra.mxu0 %v7573
        %8820 = vmatprep.subr.bf16.mxu0 0
        %8821 = vmatpush1.bf16.msra.mxu0 %v7572
        %8822 = vmatprep.subr.bf16.mxu0 0
        %8823 = vmatpush1.bf16.msra.mxu0 %v7571
        %8824 = vmatprep.subr.bf16.mxu0 0
        %8825 = vmatpush1.bf16.msra.mxu0 %v7570
        %8826 = vmatprep.subr.bf16.mxu0 0
        %8827 = vmatpush2.bf16.msra.mxu0 %v7585
        %8828 = vmatprep.subr.bf16.mxu0 0
        %8829 = vmatpush2.bf16.msra.mxu0 %v7584
        %8830 = vmatprep.subr.bf16.mxu0 0
        %8831 = vmatpush2.bf16.msra.mxu0 %v7583
        %8832 = vmatprep.subr.bf16.mxu0 0
        %8833 = vmatpush2.bf16.msra.mxu0 %v7582
        %8834 = vmatprep.subr.bf16.mxu0 0
        %8835 = vmatpush2.bf16.msra.mxu0 %v7581
        %8836 = vmatprep.subr.bf16.mxu0 0
        %8837 = vmatpush2.bf16.msra.mxu0 %v7580
        %8838 = vmatprep.subr.bf16.mxu0 0
        %8839 = vmatpush2.bf16.msra.mxu0 %v7579
        %8840 = vmatprep.subr.bf16.mxu0 0
        %8841 = vmatpush2.bf16.msra.mxu0 %v7578
        %8842 = vmatprep.mubr.bf16.mxu0 %v4302
        %8843 = vmatmul.mubr.bf16.gmra.mxu0 %v4301
        %v8844 = vpop.f32.mrf.mxu0
        %v8845 = vadd.f32 %v8805, %v8844
        %v8846 = vpop.f32.mrf.mxu0
        %v8847 = vpop.f32.mrf.mxu0
        %v8848 = vpop.f32.mrf.mxu0
        %8849 = vdwg.mxu0
        %8850 = vmatprep.subr.bf16.mxu0 0
        %8851 = vmatpush1.bf16.msra.mxu0 %v7593
        %8852 = vmatprep.subr.bf16.mxu0 0
        %8853 = vmatpush1.bf16.msra.mxu0 %v7592
        %8854 = vmatprep.subr.bf16.mxu0 0
        %8855 = vmatpush1.bf16.msra.mxu0 %v7591
        %8856 = vmatprep.subr.bf16.mxu0 0
        %8857 = vmatpush1.bf16.msra.mxu0 %v7590
        %8858 = vmatprep.subr.bf16.mxu0 0
        %8859 = vmatpush1.bf16.msra.mxu0 %v7589
        %8860 = vmatprep.subr.bf16.mxu0 0
        %8861 = vmatpush1.bf16.msra.mxu0 %v7588
        %8862 = vmatprep.subr.bf16.mxu0 0
        %8863 = vmatpush1.bf16.msra.mxu0 %v7587
        %8864 = vmatprep.subr.bf16.mxu0 0
        %8865 = vmatpush1.bf16.msra.mxu0 %v7586
        %8866 = vmatprep.subr.bf16.mxu0 0
        %8867 = vmatpush2.bf16.msra.mxu0 %v7601
        %8868 = vmatprep.subr.bf16.mxu0 0
        %8869 = vmatpush2.bf16.msra.mxu0 %v7600
        %8870 = vmatprep.subr.bf16.mxu0 0
        %8871 = vmatpush2.bf16.msra.mxu0 %v7599
        %8872 = vmatprep.subr.bf16.mxu0 0
        %8873 = vmatpush2.bf16.msra.mxu0 %v7598
        %8874 = vmatprep.subr.bf16.mxu0 0
        %8875 = vmatpush2.bf16.msra.mxu0 %v7597
        %8876 = vmatprep.subr.bf16.mxu0 0
        %8877 = vmatpush2.bf16.msra.mxu0 %v7596
        %8878 = vmatprep.subr.bf16.mxu0 0
        %8879 = vmatpush2.bf16.msra.mxu0 %v7595
        %8880 = vmatprep.subr.bf16.mxu0 0
        %8881 = vmatpush2.bf16.msra.mxu0 %v7594
        %8882 = vmatprep.mubr.bf16.mxu0 %v4304
        %8883 = vmatmul.mubr.bf16.gmra.mxu0 %v4303
        %v8884 = vpop.f32.mrf.mxu0
        %v8885 = vadd.f32 %v8845, %v8884
        %v8886 = vpop.f32.mrf.mxu0
        %v8887 = vpop.f32.mrf.mxu0
        %v8888 = vpop.f32.mrf.mxu0
        %8889 = vdwg.mxu0
        %8890 = vmatprep.subr.bf16.mxu0 0
        %8891 = vmatpush1.bf16.msra.mxu0 %v7609
        %8892 = vmatprep.subr.bf16.mxu0 0
        %8893 = vmatpush1.bf16.msra.mxu0 %v7608
        %8894 = vmatprep.subr.bf16.mxu0 0
        %8895 = vmatpush1.bf16.msra.mxu0 %v7607
        %8896 = vmatprep.subr.bf16.mxu0 0
        %8897 = vmatpush1.bf16.msra.mxu0 %v7606
        %8898 = vmatprep.subr.bf16.mxu0 0
        %8899 = vmatpush1.bf16.msra.mxu0 %v7605
        %8900 = vmatprep.subr.bf16.mxu0 0
        %8901 = vmatpush1.bf16.msra.mxu0 %v7604
        %8902 = vmatprep.subr.bf16.mxu0 0
        %8903 = vmatpush1.bf16.msra.mxu0 %v7603
        %8904 = vmatprep.subr.bf16.mxu0 0
        %8905 = vmatpush1.bf16.msra.mxu0 %v7602
        %8906 = vmatprep.subr.bf16.mxu0 0
        %8907 = vmatpush2.bf16.msra.mxu0 %v7617
        %8908 = vmatprep.subr.bf16.mxu0 0
        %8909 = vmatpush2.bf16.msra.mxu0 %v7616
        %8910 = vmatprep.subr.bf16.mxu0 0
        %8911 = vmatpush2.bf16.msra.mxu0 %v7615
        %8912 = vmatprep.subr.bf16.mxu0 0
        %8913 = vmatpush2.bf16.msra.mxu0 %v7614
        %8914 = vmatprep.subr.bf16.mxu0 0
        %8915 = vmatpush2.bf16.msra.mxu0 %v7613
        %8916 = vmatprep.subr.bf16.mxu0 0
        %8917 = vmatpush2.bf16.msra.mxu0 %v7612
        %8918 = vmatprep.subr.bf16.mxu0 0
        %8919 = vmatpush2.bf16.msra.mxu0 %v7611
        %8920 = vmatprep.subr.bf16.mxu0 0
        %8921 = vmatpush2.bf16.msra.mxu0 %v7610
        %8922 = vmatprep.mubr.bf16.mxu0 %v4306
        %8923 = vmatmul.mubr.bf16.gmra.mxu0 %v4305
        %v8924 = vpop.f32.mrf.mxu0
        %v8925 = vadd.f32 %v8885, %v8924
        %v8926 = vpop.f32.mrf.mxu0
        %v8927 = vpop.f32.mrf.mxu0
        %v8928 = vpop.f32.mrf.mxu0
        %8929 = vdwg.mxu0
        %8930 = vmatprep.subr.bf16.mxu0 0
        %8931 = vmatpush1.bf16.msra.mxu0 %v7625
        %8932 = vmatprep.subr.bf16.mxu0 0
        %8933 = vmatpush1.bf16.msra.mxu0 %v7624
        %8934 = vmatprep.subr.bf16.mxu0 0
        %8935 = vmatpush1.bf16.msra.mxu0 %v7623
        %8936 = vmatprep.subr.bf16.mxu0 0
        %8937 = vmatpush1.bf16.msra.mxu0 %v7622
        %8938 = vmatprep.subr.bf16.mxu0 0
        %8939 = vmatpush1.bf16.msra.mxu0 %v7621
        %8940 = vmatprep.subr.bf16.mxu0 0
        %8941 = vmatpush1.bf16.msra.mxu0 %v7620
        %8942 = vmatprep.subr.bf16.mxu0 0
        %8943 = vmatpush1.bf16.msra.mxu0 %v7619
        %8944 = vmatprep.subr.bf16.mxu0 0
        %8945 = vmatpush1.bf16.msra.mxu0 %v7618
        %8946 = vmatprep.subr.bf16.mxu0 0
        %8947 = vmatpush2.bf16.msra.mxu0 %v7633
        %8948 = vmatprep.subr.bf16.mxu0 0
        %8949 = vmatpush2.bf16.msra.mxu0 %v7632
        %8950 = vmatprep.subr.bf16.mxu0 0
        %8951 = vmatpush2.bf16.msra.mxu0 %v7631
        %8952 = vmatprep.subr.bf16.mxu0 0
        %8953 = vmatpush2.bf16.msra.mxu0 %v7630
        %8954 = vmatprep.subr.bf16.mxu0 0
        %8955 = vmatpush2.bf16.msra.mxu0 %v7629
        %8956 = vmatprep.subr.bf16.mxu0 0
        %8957 = vmatpush2.bf16.msra.mxu0 %v7628
        %8958 = vmatprep.subr.bf16.mxu0 0
        %8959 = vmatpush2.bf16.msra.mxu0 %v7627
        %8960 = vmatprep.subr.bf16.mxu0 0
        %8961 = vmatpush2.bf16.msra.mxu0 %v7626
        %8962 = vmatprep.mubr.bf16.mxu0 %v4308
        %8963 = vmatmul.mubr.bf16.gmra.mxu0 %v4307
        %v8964 = vpop.f32.mrf.mxu0
        %v8965 = vadd.f32 %v8925, %v8964
        %v8966 = vpop.f32.mrf.mxu0
        %v8967 = vpop.f32.mrf.mxu0
        %v8968 = vpop.f32.mrf.mxu0
        %8969 = vdwg.mxu0
        %8970 = vmatprep.subr.bf16.mxu0 0
        %8971 = vmatpush1.bf16.msra.mxu0 %v7641
        %8972 = vmatprep.subr.bf16.mxu0 0
        %8973 = vmatpush1.bf16.msra.mxu0 %v7640
        %8974 = vmatprep.subr.bf16.mxu0 0
        %8975 = vmatpush1.bf16.msra.mxu0 %v7639
        %8976 = vmatprep.subr.bf16.mxu0 0
        %8977 = vmatpush1.bf16.msra.mxu0 %v7638
        %8978 = vmatprep.subr.bf16.mxu0 0
        %8979 = vmatpush1.bf16.msra.mxu0 %v7637
        %8980 = vmatprep.subr.bf16.mxu0 0
        %8981 = vmatpush1.bf16.msra.mxu0 %v7636
        %8982 = vmatprep.subr.bf16.mxu0 0
        %8983 = vmatpush1.bf16.msra.mxu0 %v7635
        %8984 = vmatprep.subr.bf16.mxu0 0
        %8985 = vmatpush1.bf16.msra.mxu0 %v7634
        %8986 = vmatprep.subr.bf16.mxu0 0
        %8987 = vmatpush2.bf16.msra.mxu0 %v7649
        %8988 = vmatprep.subr.bf16.mxu0 0
        %8989 = vmatpush2.bf16.msra.mxu0 %v7648
        %8990 = vmatprep.subr.bf16.mxu0 0
        %8991 = vmatpush2.bf16.msra.mxu0 %v7647
        %8992 = vmatprep.subr.bf16.mxu0 0
        %8993 = vmatpush2.bf16.msra.mxu0 %v7646
        %8994 = vmatprep.subr.bf16.mxu0 0
        %8995 = vmatpush2.bf16.msra.mxu0 %v7645
        %8996 = vmatprep.subr.bf16.mxu0 0
        %8997 = vmatpush2.bf16.msra.mxu0 %v7644
        %8998 = vmatprep.subr.bf16.mxu0 0
        %8999 = vmatpush2.bf16.msra.mxu0 %v7643
        %9000 = vmatprep.subr.bf16.mxu0 0
        %9001 = vmatpush2.bf16.msra.mxu0 %v7642
        %9002 = vmatprep.mubr.bf16.mxu0 %v4310
        %9003 = vmatmul.mubr.bf16.gmra.mxu0 %v4309
        %v9004 = vpop.f32.mrf.mxu0
        %v9005 = vadd.f32 %v8965, %v9004
        %v9006 = vpop.f32.mrf.mxu0
        %v9007 = vpop.f32.mrf.mxu0
        %v9008 = vpop.f32.mrf.mxu0
        %9009 = vdwg.mxu0
        %9010 = vmatprep.subr.bf16.mxu0 0
        %9011 = vmatpush1.bf16.msra.mxu0 %v7657
        %9012 = vmatprep.subr.bf16.mxu0 0
        %9013 = vmatpush1.bf16.msra.mxu0 %v7656
        %9014 = vmatprep.subr.bf16.mxu0 0
        %9015 = vmatpush1.bf16.msra.mxu0 %v7655
        %9016 = vmatprep.subr.bf16.mxu0 0
        %9017 = vmatpush1.bf16.msra.mxu0 %v7654
        %9018 = vmatprep.subr.bf16.mxu0 0
        %9019 = vmatpush1.bf16.msra.mxu0 %v7653
        %9020 = vmatprep.subr.bf16.mxu0 0
        %9021 = vmatpush1.bf16.msra.mxu0 %v7652
        %9022 = vmatprep.subr.bf16.mxu0 0
        %9023 = vmatpush1.bf16.msra.mxu0 %v7651
        %9024 = vmatprep.subr.bf16.mxu0 0
        %9025 = vmatpush1.bf16.msra.mxu0 %v7650
        %9026 = vmatprep.subr.bf16.mxu0 0
        %9027 = vmatpush2.bf16.msra.mxu0 %v7665
        %9028 = vmatprep.subr.bf16.mxu0 0
        %9029 = vmatpush2.bf16.msra.mxu0 %v7664
        %9030 = vmatprep.subr.bf16.mxu0 0
        %9031 = vmatpush2.bf16.msra.mxu0 %v7663
        %9032 = vmatprep.subr.bf16.mxu0 0
        %9033 = vmatpush2.bf16.msra.mxu0 %v7662
        %9034 = vmatprep.subr.bf16.mxu0 0
        %9035 = vmatpush2.bf16.msra.mxu0 %v7661
        %9036 = vmatprep.subr.bf16.mxu0 0
        %9037 = vmatpush2.bf16.msra.mxu0 %v7660
        %9038 = vmatprep.subr.bf16.mxu0 0
        %9039 = vmatpush2.bf16.msra.mxu0 %v7659
        %9040 = vmatprep.subr.bf16.mxu0 0
        %9041 = vmatpush2.bf16.msra.mxu0 %v7658
        %9042 = vmatprep.mubr.bf16.mxu0 %v4312
        %9043 = vmatmul.mubr.bf16.gmra.mxu0 %v4311
        %v9044 = vpop.f32.mrf.mxu0
        %v9045 = vadd.f32 %v9005, %v9044
        %v9046 = vpop.f32.mrf.mxu0
        %v9047 = vpop.f32.mrf.mxu0
        %v9048 = vpop.f32.mrf.mxu0
        %9049 = vdwg.mxu0
        %9050 = vmatprep.subr.bf16.mxu0 0
        %9051 = vmatpush1.bf16.msra.mxu0 %v7673
        %9052 = vmatprep.subr.bf16.mxu0 0
        %9053 = vmatpush1.bf16.msra.mxu0 %v7672
        %9054 = vmatprep.subr.bf16.mxu0 0
        %9055 = vmatpush1.bf16.msra.mxu0 %v7671
        %9056 = vmatprep.subr.bf16.mxu0 0
        %9057 = vmatpush1.bf16.msra.mxu0 %v7670
        %9058 = vmatprep.subr.bf16.mxu0 0
        %9059 = vmatpush1.bf16.msra.mxu0 %v7669
        %9060 = vmatprep.subr.bf16.mxu0 0
        %9061 = vmatpush1.bf16.msra.mxu0 %v7668
        %9062 = vmatprep.subr.bf16.mxu0 0
        %9063 = vmatpush1.bf16.msra.mxu0 %v7667
        %9064 = vmatprep.subr.bf16.mxu0 0
        %9065 = vmatpush1.bf16.msra.mxu0 %v7666
        %9066 = vmatprep.subr.bf16.mxu0 0
        %9067 = vmatpush2.bf16.msra.mxu0 %v7681
        %9068 = vmatprep.subr.bf16.mxu0 0
        %9069 = vmatpush2.bf16.msra.mxu0 %v7680
        %9070 = vmatprep.subr.bf16.mxu0 0
        %9071 = vmatpush2.bf16.msra.mxu0 %v7679
        %9072 = vmatprep.subr.bf16.mxu0 0
        %9073 = vmatpush2.bf16.msra.mxu0 %v7678
        %9074 = vmatprep.subr.bf16.mxu0 0
        %9075 = vmatpush2.bf16.msra.mxu0 %v7677
        %9076 = vmatprep.subr.bf16.mxu0 0
        %9077 = vmatpush2.bf16.msra.mxu0 %v7676
        %9078 = vmatprep.subr.bf16.mxu0 0
        %9079 = vmatpush2.bf16.msra.mxu0 %v7675
        %9080 = vmatprep.subr.bf16.mxu0 0
        %9081 = vmatpush2.bf16.msra.mxu0 %v7674
        %9082 = vmatprep.mubr.bf16.mxu0 %v4314
        %9083 = vmatmul.mubr.bf16.gmra.mxu0 %v4313
        %v9084 = vpop.f32.mrf.mxu0
        %v9085 = vadd.f32 %v9045, %v9084
        %v9086 = vpop.f32.mrf.mxu0
        %v9087 = vpop.f32.mrf.mxu0
        %v9088 = vpop.f32.mrf.mxu0
        %9089 = vdwg.mxu0
        %9090 = vmatprep.subr.bf16.mxu0 0
        %9091 = vmatpush1.bf16.msra.mxu0 %v7689
        %9092 = vmatprep.subr.bf16.mxu0 0
        %9093 = vmatpush1.bf16.msra.mxu0 %v7688
        %9094 = vmatprep.subr.bf16.mxu0 0
        %9095 = vmatpush1.bf16.msra.mxu0 %v7687
        %9096 = vmatprep.subr.bf16.mxu0 0
        %9097 = vmatpush1.bf16.msra.mxu0 %v7686
        %9098 = vmatprep.subr.bf16.mxu0 0
        %9099 = vmatpush1.bf16.msra.mxu0 %v7685
        %9100 = vmatprep.subr.bf16.mxu0 0
        %9101 = vmatpush1.bf16.msra.mxu0 %v7684
        %9102 = vmatprep.subr.bf16.mxu0 0
        %9103 = vmatpush1.bf16.msra.mxu0 %v7683
        %9104 = vmatprep.subr.bf16.mxu0 0
        %9105 = vmatpush1.bf16.msra.mxu0 %v7682
        %9106 = vmatprep.subr.bf16.mxu0 0
        %9107 = vmatpush2.bf16.msra.mxu0 %v7697
        %9108 = vmatprep.subr.bf16.mxu0 0
        %9109 = vmatpush2.bf16.msra.mxu0 %v7696
        %9110 = vmatprep.subr.bf16.mxu0 0
        %9111 = vmatpush2.bf16.msra.mxu0 %v7695
        %9112 = vmatprep.subr.bf16.mxu0 0
        %9113 = vmatpush2.bf16.msra.mxu0 %v7694
        %9114 = vmatprep.subr.bf16.mxu0 0
        %9115 = vmatpush2.bf16.msra.mxu0 %v7693
        %9116 = vmatprep.subr.bf16.mxu0 0
        %9117 = vmatpush2.bf16.msra.mxu0 %v7692
        %9118 = vmatprep.subr.bf16.mxu0 0
        %9119 = vmatpush2.bf16.msra.mxu0 %v7691
        %9120 = vmatprep.subr.bf16.mxu0 0
        %9121 = vmatpush2.bf16.msra.mxu0 %v7690
        %9122 = vmatprep.mubr.bf16.mxu0 %v4316
        %9123 = vmatmul.mubr.bf16.gmra.mxu0 %v4315
        %v9124 = vpop.f32.mrf.mxu0
        %v9125 = vadd.f32 %v9085, %v9124
        %v9126 = vpop.f32.mrf.mxu0
        %v9127 = vpop.f32.mrf.mxu0
        %v9128 = vpop.f32.mrf.mxu0
        %9129 = vdwg.mxu0
        %9130 = vmatprep.subr.bf16.mxu0 0
        %9131 = vmatpush1.bf16.msra.mxu0 %v7705
        %9132 = vmatprep.subr.bf16.mxu0 0
        %9133 = vmatpush1.bf16.msra.mxu0 %v7704
        %9134 = vmatprep.subr.bf16.mxu0 0
        %9135 = vmatpush1.bf16.msra.mxu0 %v7703
        %9136 = vmatprep.subr.bf16.mxu0 0
        %9137 = vmatpush1.bf16.msra.mxu0 %v7702
        %9138 = vmatprep.subr.bf16.mxu0 0
        %9139 = vmatpush1.bf16.msra.mxu0 %v7701
        %9140 = vmatprep.subr.bf16.mxu0 0
        %9141 = vmatpush1.bf16.msra.mxu0 %v7700
        %9142 = vmatprep.subr.bf16.mxu0 0
        %9143 = vmatpush1.bf16.msra.mxu0 %v7699
        %9144 = vmatprep.subr.bf16.mxu0 0
        %9145 = vmatpush1.bf16.msra.mxu0 %v7698
        %9146 = vmatprep.subr.bf16.mxu0 0
        %9147 = vmatpush2.bf16.msra.mxu0 %v7713
        %9148 = vmatprep.subr.bf16.mxu0 0
        %9149 = vmatpush2.bf16.msra.mxu0 %v7712
        %9150 = vmatprep.subr.bf16.mxu0 0
        %9151 = vmatpush2.bf16.msra.mxu0 %v7711
        %9152 = vmatprep.subr.bf16.mxu0 0
        %9153 = vmatpush2.bf16.msra.mxu0 %v7710
        %9154 = vmatprep.subr.bf16.mxu0 0
        %9155 = vmatpush2.bf16.msra.mxu0 %v7709
        %9156 = vmatprep.subr.bf16.mxu0 0
        %9157 = vmatpush2.bf16.msra.mxu0 %v7708
        %9158 = vmatprep.subr.bf16.mxu0 0
        %9159 = vmatpush2.bf16.msra.mxu0 %v7707
        %9160 = vmatprep.subr.bf16.mxu0 0
        %9161 = vmatpush2.bf16.msra.mxu0 %v7706
        %9162 = vmatprep.mubr.bf16.mxu0 %v4318
        %9163 = vmatmul.mubr.bf16.gmra.mxu0 %v4317
        %v9164 = vpop.f32.mrf.mxu0
        %v9165 = vadd.f32 %v9125, %v9164
        %v9166 = vpop.f32.mrf.mxu0
        %v9167 = vpop.f32.mrf.mxu0
        %v9168 = vpop.f32.mrf.mxu0
        %9169 = vdwg.mxu0
        %9170 = vmatprep.subr.bf16.mxu0 0
        %9171 = vmatpush1.bf16.msra.mxu0 %v7721
        %9172 = vmatprep.subr.bf16.mxu0 0
        %9173 = vmatpush1.bf16.msra.mxu0 %v7720
        %9174 = vmatprep.subr.bf16.mxu0 0
        %9175 = vmatpush1.bf16.msra.mxu0 %v7719
        %9176 = vmatprep.subr.bf16.mxu0 0
        %9177 = vmatpush1.bf16.msra.mxu0 %v7718
        %9178 = vmatprep.subr.bf16.mxu0 0
        %9179 = vmatpush1.bf16.msra.mxu0 %v7717
        %9180 = vmatprep.subr.bf16.mxu0 0
        %9181 = vmatpush1.bf16.msra.mxu0 %v7716
        %9182 = vmatprep.subr.bf16.mxu0 0
        %9183 = vmatpush1.bf16.msra.mxu0 %v7715
        %9184 = vmatprep.subr.bf16.mxu0 0
        %9185 = vmatpush1.bf16.msra.mxu0 %v7714
        %9186 = vmatprep.subr.bf16.mxu0 0
        %9187 = vmatpush2.bf16.msra.mxu0 %v7729
        %9188 = vmatprep.subr.bf16.mxu0 0
        %9189 = vmatpush2.bf16.msra.mxu0 %v7728
        %9190 = vmatprep.subr.bf16.mxu0 0
        %9191 = vmatpush2.bf16.msra.mxu0 %v7727
        %9192 = vmatprep.subr.bf16.mxu0 0
        %9193 = vmatpush2.bf16.msra.mxu0 %v7726
        %9194 = vmatprep.subr.bf16.mxu0 0
        %9195 = vmatpush2.bf16.msra.mxu0 %v7725
        %9196 = vmatprep.subr.bf16.mxu0 0
        %9197 = vmatpush2.bf16.msra.mxu0 %v7724
        %9198 = vmatprep.subr.bf16.mxu0 0
        %9199 = vmatpush2.bf16.msra.mxu0 %v7723
        %9200 = vmatprep.subr.bf16.mxu0 0
        %9201 = vmatpush2.bf16.msra.mxu0 %v7722
        %9202 = vmatprep.mubr.bf16.mxu0 %v4320
        %9203 = vmatmul.mubr.bf16.gmra.mxu0 %v4319
        %v9204 = vpop.f32.mrf.mxu0
        %v9205 = vadd.f32 %v9165, %v9204
        %v9206 = vpop.f32.mrf.mxu0
        %v9207 = vpop.f32.mrf.mxu0
        %v9208 = vpop.f32.mrf.mxu0
        %9209 = vdwg.mxu0
        %9210 = vmatprep.subr.bf16.mxu0 0
        %9211 = vmatpush1.bf16.msra.mxu0 %v7737
        %9212 = vmatprep.subr.bf16.mxu0 0
        %9213 = vmatpush1.bf16.msra.mxu0 %v7736
        %9214 = vmatprep.subr.bf16.mxu0 0
        %9215 = vmatpush1.bf16.msra.mxu0 %v7735
        %9216 = vmatprep.subr.bf16.mxu0 0
        %9217 = vmatpush1.bf16.msra.mxu0 %v7734
        %9218 = vmatprep.subr.bf16.mxu0 0
        %9219 = vmatpush1.bf16.msra.mxu0 %v7733
        %9220 = vmatprep.subr.bf16.mxu0 0
        %9221 = vmatpush1.bf16.msra.mxu0 %v7732
        %9222 = vmatprep.subr.bf16.mxu0 0
        %9223 = vmatpush1.bf16.msra.mxu0 %v7731
        %9224 = vmatprep.subr.bf16.mxu0 0
        %9225 = vmatpush1.bf16.msra.mxu0 %v7730
        %9226 = vmatprep.subr.bf16.mxu0 0
        %9227 = vmatpush2.bf16.msra.mxu0 %v7745
        %9228 = vmatprep.subr.bf16.mxu0 0
        %9229 = vmatpush2.bf16.msra.mxu0 %v7744
        %9230 = vmatprep.subr.bf16.mxu0 0
        %9231 = vmatpush2.bf16.msra.mxu0 %v7743
        %9232 = vmatprep.subr.bf16.mxu0 0
        %9233 = vmatpush2.bf16.msra.mxu0 %v7742
        %9234 = vmatprep.subr.bf16.mxu0 0
        %9235 = vmatpush2.bf16.msra.mxu0 %v7741
        %9236 = vmatprep.subr.bf16.mxu0 0
        %9237 = vmatpush2.bf16.msra.mxu0 %v7740
        %9238 = vmatprep.subr.bf16.mxu0 0
        %9239 = vmatpush2.bf16.msra.mxu0 %v7739
        %9240 = vmatprep.subr.bf16.mxu0 0
        %9241 = vmatpush2.bf16.msra.mxu0 %v7738
        %9242 = vmatprep.mubr.bf16.mxu0 %v4322
        %9243 = vmatmul.mubr.bf16.gmra.mxu0 %v4321
        %v9244 = vpop.f32.mrf.mxu0
        %v9245 = vadd.f32 %v9205, %v9244
        %v9246 = vpop.f32.mrf.mxu0
        %v9247 = vpop.f32.mrf.mxu0
        %v9248 = vpop.f32.mrf.mxu0
        %9249 = vdwg.mxu0
        %9250 = vmatprep.subr.bf16.mxu0 0
        %9251 = vmatpush1.bf16.msra.mxu0 %v7753
        %9252 = vmatprep.subr.bf16.mxu0 0
        %9253 = vmatpush1.bf16.msra.mxu0 %v7752
        %9254 = vmatprep.subr.bf16.mxu0 0
        %9255 = vmatpush1.bf16.msra.mxu0 %v7751
        %9256 = vmatprep.subr.bf16.mxu0 0
        %9257 = vmatpush1.bf16.msra.mxu0 %v7750
        %9258 = vmatprep.subr.bf16.mxu0 0
        %9259 = vmatpush1.bf16.msra.mxu0 %v7749
        %9260 = vmatprep.subr.bf16.mxu0 0
        %9261 = vmatpush1.bf16.msra.mxu0 %v7748
        %9262 = vmatprep.subr.bf16.mxu0 0
        %9263 = vmatpush1.bf16.msra.mxu0 %v7747
        %9264 = vmatprep.subr.bf16.mxu0 0
        %9265 = vmatpush1.bf16.msra.mxu0 %v7746
        %9266 = vmatprep.subr.bf16.mxu0 0
        %9267 = vmatpush2.bf16.msra.mxu0 %v7761
        %9268 = vmatprep.subr.bf16.mxu0 0
        %9269 = vmatpush2.bf16.msra.mxu0 %v7760
        %9270 = vmatprep.subr.bf16.mxu0 0
        %9271 = vmatpush2.bf16.msra.mxu0 %v7759
        %9272 = vmatprep.subr.bf16.mxu0 0
        %9273 = vmatpush2.bf16.msra.mxu0 %v7758
        %9274 = vmatprep.subr.bf16.mxu0 0
        %9275 = vmatpush2.bf16.msra.mxu0 %v7757
        %9276 = vmatprep.subr.bf16.mxu0 0
        %9277 = vmatpush2.bf16.msra.mxu0 %v7756
        %9278 = vmatprep.subr.bf16.mxu0 0
        %9279 = vmatpush2.bf16.msra.mxu0 %v7755
        %9280 = vmatprep.subr.bf16.mxu0 0
        %9281 = vmatpush2.bf16.msra.mxu0 %v7754
        %9282 = vmatprep.mubr.bf16.mxu0 %v4324
        %9283 = vmatmul.mubr.bf16.gmra.mxu0 %v4323
        %v9284 = vpop.f32.mrf.mxu0
        %v9285 = vadd.f32 %v9245, %v9284
        %v9286 = vpop.f32.mrf.mxu0
        %v9287 = vpop.f32.mrf.mxu0
        %v9288 = vpop.f32.mrf.mxu0
        %9289 = vdwg.mxu0
        %9290 = vmatprep.subr.bf16.mxu0 0
        %9291 = vmatpush1.bf16.msra.mxu0 %v7769
        %9292 = vmatprep.subr.bf16.mxu0 0
        %9293 = vmatpush1.bf16.msra.mxu0 %v7768
        %9294 = vmatprep.subr.bf16.mxu0 0
        %9295 = vmatpush1.bf16.msra.mxu0 %v7767
        %9296 = vmatprep.subr.bf16.mxu0 0
        %9297 = vmatpush1.bf16.msra.mxu0 %v7766
        %9298 = vmatprep.subr.bf16.mxu0 0
        %9299 = vmatpush1.bf16.msra.mxu0 %v7765
        %9300 = vmatprep.subr.bf16.mxu0 0
        %9301 = vmatpush1.bf16.msra.mxu0 %v7764
        %9302 = vmatprep.subr.bf16.mxu0 0
        %9303 = vmatpush1.bf16.msra.mxu0 %v7763
        %9304 = vmatprep.subr.bf16.mxu0 0
        %9305 = vmatpush1.bf16.msra.mxu0 %v7762
        %9306 = vmatprep.subr.bf16.mxu0 0
        %9307 = vmatpush2.bf16.msra.mxu0 %v7777
        %9308 = vmatprep.subr.bf16.mxu0 0
        %9309 = vmatpush2.bf16.msra.mxu0 %v7776
        %9310 = vmatprep.subr.bf16.mxu0 0
        %9311 = vmatpush2.bf16.msra.mxu0 %v7775
        %9312 = vmatprep.subr.bf16.mxu0 0
        %9313 = vmatpush2.bf16.msra.mxu0 %v7774
        %9314 = vmatprep.subr.bf16.mxu0 0
        %9315 = vmatpush2.bf16.msra.mxu0 %v7773
        %9316 = vmatprep.subr.bf16.mxu0 0
        %9317 = vmatpush2.bf16.msra.mxu0 %v7772
        %9318 = vmatprep.subr.bf16.mxu0 0
        %9319 = vmatpush2.bf16.msra.mxu0 %v7771
        %9320 = vmatprep.subr.bf16.mxu0 0
        %9321 = vmatpush2.bf16.msra.mxu0 %v7770
        %9322 = vmatprep.mubr.bf16.mxu0 %v4326
        %9323 = vmatmul.mubr.bf16.gmra.mxu0 %v4325
        %v9324 = vpop.f32.mrf.mxu0
        %v9325 = vadd.f32 %v9285, %v9324
        %v9326 = vpop.f32.mrf.mxu0
        %v9327 = vpop.f32.mrf.mxu0
        %v9328 = vpop.f32.mrf.mxu0
        %9329 = vdwg.mxu0
        %9330 = vmatprep.subr.bf16.mxu0 0
        %9331 = vmatpush1.bf16.msra.mxu0 %v7785
        %9332 = vmatprep.subr.bf16.mxu0 0
        %9333 = vmatpush1.bf16.msra.mxu0 %v7784
        %9334 = vmatprep.subr.bf16.mxu0 0
        %9335 = vmatpush1.bf16.msra.mxu0 %v7783
        %9336 = vmatprep.subr.bf16.mxu0 0
        %9337 = vmatpush1.bf16.msra.mxu0 %v7782
        %9338 = vmatprep.subr.bf16.mxu0 0
        %9339 = vmatpush1.bf16.msra.mxu0 %v7781
        %9340 = vmatprep.subr.bf16.mxu0 0
        %9341 = vmatpush1.bf16.msra.mxu0 %v7780
        %9342 = vmatprep.subr.bf16.mxu0 0
        %9343 = vmatpush1.bf16.msra.mxu0 %v7779
        %9344 = vmatprep.subr.bf16.mxu0 0
        %9345 = vmatpush1.bf16.msra.mxu0 %v7778
        %9346 = vmatprep.subr.bf16.mxu0 0
        %9347 = vmatpush2.bf16.msra.mxu0 %v7793
        %9348 = vmatprep.subr.bf16.mxu0 0
        %9349 = vmatpush2.bf16.msra.mxu0 %v7792
        %9350 = vmatprep.subr.bf16.mxu0 0
        %9351 = vmatpush2.bf16.msra.mxu0 %v7791
        %9352 = vmatprep.subr.bf16.mxu0 0
        %9353 = vmatpush2.bf16.msra.mxu0 %v7790
        %9354 = vmatprep.subr.bf16.mxu0 0
        %9355 = vmatpush2.bf16.msra.mxu0 %v7789
        %9356 = vmatprep.subr.bf16.mxu0 0
        %9357 = vmatpush2.bf16.msra.mxu0 %v7788
        %9358 = vmatprep.subr.bf16.mxu0 0
        %9359 = vmatpush2.bf16.msra.mxu0 %v7787
        %9360 = vmatprep.subr.bf16.mxu0 0
        %9361 = vmatpush2.bf16.msra.mxu0 %v7786
        %9362 = vmatprep.mubr.bf16.mxu0 %v4328
        %9363 = vmatmul.mubr.bf16.gmra.mxu0 %v4327
        %v9364 = vpop.f32.mrf.mxu0
        %v9365 = vadd.f32 %v9325, %v9364
        %v9366 = vpop.f32.mrf.mxu0
        %v9367 = vpop.f32.mrf.mxu0
        %v9368 = vpop.f32.mrf.mxu0
        %9369 = vdwg.mxu0
        %9370 = vmatprep.subr.bf16.mxu0 0
        %9371 = vmatpush1.bf16.msra.mxu0 %v7801
        %9372 = vmatprep.subr.bf16.mxu0 0
        %9373 = vmatpush1.bf16.msra.mxu0 %v7800
        %9374 = vmatprep.subr.bf16.mxu0 0
        %9375 = vmatpush1.bf16.msra.mxu0 %v7799
        %9376 = vmatprep.subr.bf16.mxu0 0
        %9377 = vmatpush1.bf16.msra.mxu0 %v7798
        %9378 = vmatprep.subr.bf16.mxu0 0
        %9379 = vmatpush1.bf16.msra.mxu0 %v7797
        %9380 = vmatprep.subr.bf16.mxu0 0
        %9381 = vmatpush1.bf16.msra.mxu0 %v7796
        %9382 = vmatprep.subr.bf16.mxu0 0
        %9383 = vmatpush1.bf16.msra.mxu0 %v7795
        %9384 = vmatprep.subr.bf16.mxu0 0
        %9385 = vmatpush1.bf16.msra.mxu0 %v7794
        %9386 = vmatprep.subr.bf16.mxu0 0
        %9387 = vmatpush2.bf16.msra.mxu0 %v7809
        %9388 = vmatprep.subr.bf16.mxu0 0
        %9389 = vmatpush2.bf16.msra.mxu0 %v7808
        %9390 = vmatprep.subr.bf16.mxu0 0
        %9391 = vmatpush2.bf16.msra.mxu0 %v7807
        %9392 = vmatprep.subr.bf16.mxu0 0
        %9393 = vmatpush2.bf16.msra.mxu0 %v7806
        %9394 = vmatprep.subr.bf16.mxu0 0
        %9395 = vmatpush2.bf16.msra.mxu0 %v7805
        %9396 = vmatprep.subr.bf16.mxu0 0
        %9397 = vmatpush2.bf16.msra.mxu0 %v7804
        %9398 = vmatprep.subr.bf16.mxu0 0
        %9399 = vmatpush2.bf16.msra.mxu0 %v7803
        %9400 = vmatprep.subr.bf16.mxu0 0
        %9401 = vmatpush2.bf16.msra.mxu0 %v7802
        %9402 = vmatprep.mubr.bf16.mxu0 %v4330
        %9403 = vmatmul.mubr.bf16.gmra.mxu0 %v4329
        %v9404 = vpop.f32.mrf.mxu0
        %v9405 = vadd.f32 %v9365, %v9404
        %v9406 = vpop.f32.mrf.mxu0
        %v9407 = vpop.f32.mrf.mxu0
        %v9408 = vpop.f32.mrf.mxu0
        %9409 = vdwg.mxu0
        %9410 = vmatprep.subr.bf16.mxu0 0
        %9411 = vmatpush1.bf16.msra.mxu0 %v7817
        %9412 = vmatprep.subr.bf16.mxu0 0
        %9413 = vmatpush1.bf16.msra.mxu0 %v7816
        %9414 = vmatprep.subr.bf16.mxu0 0
        %9415 = vmatpush1.bf16.msra.mxu0 %v7815
        %9416 = vmatprep.subr.bf16.mxu0 0
        %9417 = vmatpush1.bf16.msra.mxu0 %v7814
        %9418 = vmatprep.subr.bf16.mxu0 0
        %9419 = vmatpush1.bf16.msra.mxu0 %v7813
        %9420 = vmatprep.subr.bf16.mxu0 0
        %9421 = vmatpush1.bf16.msra.mxu0 %v7812
        %9422 = vmatprep.subr.bf16.mxu0 0
        %9423 = vmatpush1.bf16.msra.mxu0 %v7811
        %9424 = vmatprep.subr.bf16.mxu0 0
        %9425 = vmatpush1.bf16.msra.mxu0 %v7810
        %9426 = vmatprep.subr.bf16.mxu0 0
        %9427 = vmatpush2.bf16.msra.mxu0 %v7825
        %9428 = vmatprep.subr.bf16.mxu0 0
        %9429 = vmatpush2.bf16.msra.mxu0 %v7824
        %9430 = vmatprep.subr.bf16.mxu0 0
        %9431 = vmatpush2.bf16.msra.mxu0 %v7823
        %9432 = vmatprep.subr.bf16.mxu0 0
        %9433 = vmatpush2.bf16.msra.mxu0 %v7822
        %9434 = vmatprep.subr.bf16.mxu0 0
        %9435 = vmatpush2.bf16.msra.mxu0 %v7821
        %9436 = vmatprep.subr.bf16.mxu0 0
        %9437 = vmatpush2.bf16.msra.mxu0 %v7820
        %9438 = vmatprep.subr.bf16.mxu0 0
        %9439 = vmatpush2.bf16.msra.mxu0 %v7819
        %9440 = vmatprep.subr.bf16.mxu0 0
        %9441 = vmatpush2.bf16.msra.mxu0 %v7818
        %9442 = vmatprep.mubr.bf16.mxu0 %v4332
        %9443 = vmatmul.mubr.bf16.gmra.mxu0 %v4331
        %v9444 = vpop.f32.mrf.mxu0
        %v9445 = vadd.f32 %v9405, %v9444
        %v9446 = vpop.f32.mrf.mxu0
        %v9447 = vpop.f32.mrf.mxu0
        %v9448 = vpop.f32.mrf.mxu0
        %9449 = vdwg.mxu0
        %9450 = vmatprep.subr.bf16.mxu0 0
        %9451 = vmatpush1.bf16.msra.mxu0 %v7833
        %9452 = vmatprep.subr.bf16.mxu0 0
        %9453 = vmatpush1.bf16.msra.mxu0 %v7832
        %9454 = vmatprep.subr.bf16.mxu0 0
        %9455 = vmatpush1.bf16.msra.mxu0 %v7831
        %9456 = vmatprep.subr.bf16.mxu0 0
        %9457 = vmatpush1.bf16.msra.mxu0 %v7830
        %9458 = vmatprep.subr.bf16.mxu0 0
        %9459 = vmatpush1.bf16.msra.mxu0 %v7829
        %9460 = vmatprep.subr.bf16.mxu0 0
        %9461 = vmatpush1.bf16.msra.mxu0 %v7828
        %9462 = vmatprep.subr.bf16.mxu0 0
        %9463 = vmatpush1.bf16.msra.mxu0 %v7827
        %9464 = vmatprep.subr.bf16.mxu0 0
        %9465 = vmatpush1.bf16.msra.mxu0 %v7826
        %9466 = vmatprep.subr.bf16.mxu0 0
        %9467 = vmatpush2.bf16.msra.mxu0 %v7841
        %9468 = vmatprep.subr.bf16.mxu0 0
        %9469 = vmatpush2.bf16.msra.mxu0 %v7840
        %9470 = vmatprep.subr.bf16.mxu0 0
        %9471 = vmatpush2.bf16.msra.mxu0 %v7839
        %9472 = vmatprep.subr.bf16.mxu0 0
        %9473 = vmatpush2.bf16.msra.mxu0 %v7838
        %9474 = vmatprep.subr.bf16.mxu0 0
        %9475 = vmatpush2.bf16.msra.mxu0 %v7837
        %9476 = vmatprep.subr.bf16.mxu0 0
        %9477 = vmatpush2.bf16.msra.mxu0 %v7836
        %9478 = vmatprep.subr.bf16.mxu0 0
        %9479 = vmatpush2.bf16.msra.mxu0 %v7835
        %9480 = vmatprep.subr.bf16.mxu0 0
        %9481 = vmatpush2.bf16.msra.mxu0 %v7834
        %9482 = vmatprep.mubr.bf16.mxu0 %v4334
        %9483 = vmatmul.mubr.bf16.gmra.mxu0 %v4333
        %v9484 = vpop.f32.mrf.mxu0
        %v9485 = vadd.f32 %v9445, %v9484
        %v9486 = vpop.f32.mrf.mxu0
        %v9487 = vpop.f32.mrf.mxu0
        %v9488 = vpop.f32.mrf.mxu0
        %9489 = vdwg.mxu0
        %9490 = vmatprep.subr.bf16.mxu0 0
        %9491 = vmatpush1.bf16.msra.mxu0 %v7849
        %9492 = vmatprep.subr.bf16.mxu0 0
        %9493 = vmatpush1.bf16.msra.mxu0 %v7848
        %9494 = vmatprep.subr.bf16.mxu0 0
        %9495 = vmatpush1.bf16.msra.mxu0 %v7847
        %9496 = vmatprep.subr.bf16.mxu0 0
        %9497 = vmatpush1.bf16.msra.mxu0 %v7846
        %9498 = vmatprep.subr.bf16.mxu0 0
        %9499 = vmatpush1.bf16.msra.mxu0 %v7845
        %9500 = vmatprep.subr.bf16.mxu0 0
        %9501 = vmatpush1.bf16.msra.mxu0 %v7844
        %9502 = vmatprep.subr.bf16.mxu0 0
        %9503 = vmatpush1.bf16.msra.mxu0 %v7843
        %9504 = vmatprep.subr.bf16.mxu0 0
        %9505 = vmatpush1.bf16.msra.mxu0 %v7842
        %9506 = vmatprep.subr.bf16.mxu0 0
        %9507 = vmatpush2.bf16.msra.mxu0 %v7857
        %9508 = vmatprep.subr.bf16.mxu0 0
        %9509 = vmatpush2.bf16.msra.mxu0 %v7856
        %9510 = vmatprep.subr.bf16.mxu0 0
        %9511 = vmatpush2.bf16.msra.mxu0 %v7855
        %9512 = vmatprep.subr.bf16.mxu0 0
        %9513 = vmatpush2.bf16.msra.mxu0 %v7854
        %9514 = vmatprep.subr.bf16.mxu0 0
        %9515 = vmatpush2.bf16.msra.mxu0 %v7853
        %9516 = vmatprep.subr.bf16.mxu0 0
        %9517 = vmatpush2.bf16.msra.mxu0 %v7852
        %9518 = vmatprep.subr.bf16.mxu0 0
        %9519 = vmatpush2.bf16.msra.mxu0 %v7851
        %9520 = vmatprep.subr.bf16.mxu0 0
        %9521 = vmatpush2.bf16.msra.mxu0 %v7850
        %9522 = vmatprep.mubr.bf16.mxu0 %v4336
        %9523 = vmatmul.mubr.bf16.gmra.mxu0 %v4335
        %v9524 = vpop.f32.mrf.mxu0
        %v9525 = vadd.f32 %v9485, %v9524
        %v9526 = vpop.f32.mrf.mxu0
        %v9527 = vpop.f32.mrf.mxu0
        %v9528 = vpop.f32.mrf.mxu0
        %9529 = vdwg.mxu0
        %9530 = vmatprep.subr.bf16.mxu0 0
        %9531 = vmatpush1.bf16.msra.mxu0 %v7865
        %9532 = vmatprep.subr.bf16.mxu0 0
        %9533 = vmatpush1.bf16.msra.mxu0 %v7864
        %9534 = vmatprep.subr.bf16.mxu0 0
        %9535 = vmatpush1.bf16.msra.mxu0 %v7863
        %9536 = vmatprep.subr.bf16.mxu0 0
        %9537 = vmatpush1.bf16.msra.mxu0 %v7862
        %9538 = vmatprep.subr.bf16.mxu0 0
        %9539 = vmatpush1.bf16.msra.mxu0 %v7861
        %9540 = vmatprep.subr.bf16.mxu0 0
        %9541 = vmatpush1.bf16.msra.mxu0 %v7860
        %9542 = vmatprep.subr.bf16.mxu0 0
        %9543 = vmatpush1.bf16.msra.mxu0 %v7859
        %9544 = vmatprep.subr.bf16.mxu0 0
        %9545 = vmatpush1.bf16.msra.mxu0 %v7858
        %9546 = vmatprep.subr.bf16.mxu0 0
        %9547 = vmatpush2.bf16.msra.mxu0 %v7873
        %9548 = vmatprep.subr.bf16.mxu0 0
        %9549 = vmatpush2.bf16.msra.mxu0 %v7872
        %9550 = vmatprep.subr.bf16.mxu0 0
        %9551 = vmatpush2.bf16.msra.mxu0 %v7871
        %9552 = vmatprep.subr.bf16.mxu0 0
        %9553 = vmatpush2.bf16.msra.mxu0 %v7870
        %9554 = vmatprep.subr.bf16.mxu0 0
        %9555 = vmatpush2.bf16.msra.mxu0 %v7869
        %9556 = vmatprep.subr.bf16.mxu0 0
        %9557 = vmatpush2.bf16.msra.mxu0 %v7868
        %9558 = vmatprep.subr.bf16.mxu0 0
        %9559 = vmatpush2.bf16.msra.mxu0 %v7867
        %9560 = vmatprep.subr.bf16.mxu0 0
        %9561 = vmatpush2.bf16.msra.mxu0 %v7866
        %9562 = vmatprep.mubr.bf16.mxu0 %v4338
        %9563 = vmatmul.mubr.bf16.gmra.mxu0 %v4337
        %v9564 = vpop.f32.mrf.mxu0
        %v9565 = vadd.f32 %v9525, %v9564
        %v9566 = vpop.f32.mrf.mxu0
        %v9567 = vpop.f32.mrf.mxu0
        %v9568 = vpop.f32.mrf.mxu0
        %9569 = vdwg.mxu0
        %9570 = vmatprep.subr.bf16.mxu0 0
        %9571 = vmatpush1.bf16.msra.mxu0 %v7881
        %9572 = vmatprep.subr.bf16.mxu0 0
        %9573 = vmatpush1.bf16.msra.mxu0 %v7880
        %9574 = vmatprep.subr.bf16.mxu0 0
        %9575 = vmatpush1.bf16.msra.mxu0 %v7879
        %9576 = vmatprep.subr.bf16.mxu0 0
        %9577 = vmatpush1.bf16.msra.mxu0 %v7878
        %9578 = vmatprep.subr.bf16.mxu0 0
        %9579 = vmatpush1.bf16.msra.mxu0 %v7877
        %9580 = vmatprep.subr.bf16.mxu0 0
        %9581 = vmatpush1.bf16.msra.mxu0 %v7876
        %9582 = vmatprep.subr.bf16.mxu0 0
        %9583 = vmatpush1.bf16.msra.mxu0 %v7875
        %9584 = vmatprep.subr.bf16.mxu0 0
        %9585 = vmatpush1.bf16.msra.mxu0 %v7874
        %9586 = vmatprep.subr.bf16.mxu0 0
        %9587 = vmatpush2.bf16.msra.mxu0 %v7889
        %9588 = vmatprep.subr.bf16.mxu0 0
        %9589 = vmatpush2.bf16.msra.mxu0 %v7888
        %9590 = vmatprep.subr.bf16.mxu0 0
        %9591 = vmatpush2.bf16.msra.mxu0 %v7887
        %9592 = vmatprep.subr.bf16.mxu0 0
        %9593 = vmatpush2.bf16.msra.mxu0 %v7886
        %9594 = vmatprep.subr.bf16.mxu0 0
        %9595 = vmatpush2.bf16.msra.mxu0 %v7885
        %9596 = vmatprep.subr.bf16.mxu0 0
        %9597 = vmatpush2.bf16.msra.mxu0 %v7884
        %9598 = vmatprep.subr.bf16.mxu0 0
        %9599 = vmatpush2.bf16.msra.mxu0 %v7883
        %9600 = vmatprep.subr.bf16.mxu0 0
        %9601 = vmatpush2.bf16.msra.mxu0 %v7882
        %9602 = vmatprep.mubr.bf16.mxu0 %v4340
        %9603 = vmatmul.mubr.bf16.gmra.mxu0 %v4339
        %v9604 = vpop.f32.mrf.mxu0
        %v9605 = vadd.f32 %v9565, %v9604
        %v9606 = vpop.f32.mrf.mxu0
        %v9607 = vpop.f32.mrf.mxu0
        %v9608 = vpop.f32.mrf.mxu0
        %9609 = vdwg.mxu0
        %9610 = vmatprep.subr.bf16.mxu0 0
        %9611 = vmatpush1.bf16.msra.mxu0 %v7897
        %9612 = vmatprep.subr.bf16.mxu0 0
        %9613 = vmatpush1.bf16.msra.mxu0 %v7896
        %9614 = vmatprep.subr.bf16.mxu0 0
        %9615 = vmatpush1.bf16.msra.mxu0 %v7895
        %9616 = vmatprep.subr.bf16.mxu0 0
        %9617 = vmatpush1.bf16.msra.mxu0 %v7894
        %9618 = vmatprep.subr.bf16.mxu0 0
        %9619 = vmatpush1.bf16.msra.mxu0 %v7893
        %9620 = vmatprep.subr.bf16.mxu0 0
        %9621 = vmatpush1.bf16.msra.mxu0 %v7892
        %9622 = vmatprep.subr.bf16.mxu0 0
        %9623 = vmatpush1.bf16.msra.mxu0 %v7891
        %9624 = vmatprep.subr.bf16.mxu0 0
        %9625 = vmatpush1.bf16.msra.mxu0 %v7890
        %9626 = vmatprep.subr.bf16.mxu0 0
        %9627 = vmatpush2.bf16.msra.mxu0 %v7905
        %9628 = vmatprep.subr.bf16.mxu0 0
        %9629 = vmatpush2.bf16.msra.mxu0 %v7904
        %9630 = vmatprep.subr.bf16.mxu0 0
        %9631 = vmatpush2.bf16.msra.mxu0 %v7903
        %9632 = vmatprep.subr.bf16.mxu0 0
        %9633 = vmatpush2.bf16.msra.mxu0 %v7902
        %9634 = vmatprep.subr.bf16.mxu0 0
        %9635 = vmatpush2.bf16.msra.mxu0 %v7901
        %9636 = vmatprep.subr.bf16.mxu0 0
        %9637 = vmatpush2.bf16.msra.mxu0 %v7900
        %9638 = vmatprep.subr.bf16.mxu0 0
        %9639 = vmatpush2.bf16.msra.mxu0 %v7899
        %9640 = vmatprep.subr.bf16.mxu0 0
        %9641 = vmatpush2.bf16.msra.mxu0 %v7898
        %9642 = vmatprep.mubr.bf16.mxu0 %v4342
        %9643 = vmatmul.mubr.bf16.gmra.mxu0 %v4341
        %v9644 = vpop.f32.mrf.mxu0
        %v9645 = vadd.f32 %v9605, %v9644
        %v9646 = vpop.f32.mrf.mxu0
        %v9647 = vpop.f32.mrf.mxu0
        %v9648 = vpop.f32.mrf.mxu0
        %9649 = vdwg.mxu0
        %9650 = vmatprep.subr.bf16.mxu0 0
        %9651 = vmatpush1.bf16.msra.mxu0 %v7913
        %9652 = vmatprep.subr.bf16.mxu0 0
        %9653 = vmatpush1.bf16.msra.mxu0 %v7912
        %9654 = vmatprep.subr.bf16.mxu0 0
        %9655 = vmatpush1.bf16.msra.mxu0 %v7911
        %9656 = vmatprep.subr.bf16.mxu0 0
        %9657 = vmatpush1.bf16.msra.mxu0 %v7910
        %9658 = vmatprep.subr.bf16.mxu0 0
        %9659 = vmatpush1.bf16.msra.mxu0 %v7909
        %9660 = vmatprep.subr.bf16.mxu0 0
        %9661 = vmatpush1.bf16.msra.mxu0 %v7908
        %9662 = vmatprep.subr.bf16.mxu0 0
        %9663 = vmatpush1.bf16.msra.mxu0 %v7907
        %9664 = vmatprep.subr.bf16.mxu0 0
        %9665 = vmatpush1.bf16.msra.mxu0 %v7906
        %9666 = vmatprep.subr.bf16.mxu0 0
        %9667 = vmatpush2.bf16.msra.mxu0 %v7921
        %9668 = vmatprep.subr.bf16.mxu0 0
        %9669 = vmatpush2.bf16.msra.mxu0 %v7920
        %9670 = vmatprep.subr.bf16.mxu0 0
        %9671 = vmatpush2.bf16.msra.mxu0 %v7919
        %9672 = vmatprep.subr.bf16.mxu0 0
        %9673 = vmatpush2.bf16.msra.mxu0 %v7918
        %9674 = vmatprep.subr.bf16.mxu0 0
        %9675 = vmatpush2.bf16.msra.mxu0 %v7917
        %9676 = vmatprep.subr.bf16.mxu0 0
        %9677 = vmatpush2.bf16.msra.mxu0 %v7916
        %9678 = vmatprep.subr.bf16.mxu0 0
        %9679 = vmatpush2.bf16.msra.mxu0 %v7915
        %9680 = vmatprep.subr.bf16.mxu0 0
        %9681 = vmatpush2.bf16.msra.mxu0 %v7914
        %9682 = vmatprep.mubr.bf16.mxu0 %v4344
        %9683 = vmatmul.mubr.bf16.gmra.mxu0 %v4343
        %v9684 = vpop.f32.mrf.mxu0
        %v9685 = vadd.f32 %v9645, %v9684
        %v9686 = vpop.f32.mrf.mxu0
        %v9687 = vpop.f32.mrf.mxu0
        %v9688 = vpop.f32.mrf.mxu0
        %9689 = vdwg.mxu0
        %9690 = vmatprep.subr.bf16.mxu0 0
        %9691 = vmatpush1.bf16.msra.mxu0 %v7929
        %9692 = vmatprep.subr.bf16.mxu0 0
        %9693 = vmatpush1.bf16.msra.mxu0 %v7928
        %9694 = vmatprep.subr.bf16.mxu0 0
        %9695 = vmatpush1.bf16.msra.mxu0 %v7927
        %9696 = vmatprep.subr.bf16.mxu0 0
        %9697 = vmatpush1.bf16.msra.mxu0 %v7926
        %9698 = vmatprep.subr.bf16.mxu0 0
        %9699 = vmatpush1.bf16.msra.mxu0 %v7925
        %9700 = vmatprep.subr.bf16.mxu0 0
        %9701 = vmatpush1.bf16.msra.mxu0 %v7924
        %9702 = vmatprep.subr.bf16.mxu0 0
        %9703 = vmatpush1.bf16.msra.mxu0 %v7923
        %9704 = vmatprep.subr.bf16.mxu0 0
        %9705 = vmatpush1.bf16.msra.mxu0 %v7922
        %9706 = vmatprep.subr.bf16.mxu0 0
        %9707 = vmatpush2.bf16.msra.mxu0 %v7937
        %9708 = vmatprep.subr.bf16.mxu0 0
        %9709 = vmatpush2.bf16.msra.mxu0 %v7936
        %9710 = vmatprep.subr.bf16.mxu0 0
        %9711 = vmatpush2.bf16.msra.mxu0 %v7935
        %9712 = vmatprep.subr.bf16.mxu0 0
        %9713 = vmatpush2.bf16.msra.mxu0 %v7934
        %9714 = vmatprep.subr.bf16.mxu0 0
        %9715 = vmatpush2.bf16.msra.mxu0 %v7933
        %9716 = vmatprep.subr.bf16.mxu0 0
        %9717 = vmatpush2.bf16.msra.mxu0 %v7932
        %9718 = vmatprep.subr.bf16.mxu0 0
        %9719 = vmatpush2.bf16.msra.mxu0 %v7931
        %9720 = vmatprep.subr.bf16.mxu0 0
        %9721 = vmatpush2.bf16.msra.mxu0 %v7930
        %9722 = vmatprep.mubr.bf16.mxu0 %v4346
        %9723 = vmatmul.mubr.bf16.gmra.mxu0 %v4345
        %v9724 = vpop.f32.mrf.mxu0
        %v9725 = vadd.f32 %v9685, %v9724
        %v9726 = vpop.f32.mrf.mxu0
        %v9727 = vpop.f32.mrf.mxu0
        %v9728 = vpop.f32.mrf.mxu0
        %9729 = vdwg.mxu0
        %v9730 = vmax.f32 %v9725, 0.0
        %9731 = vst [vmem:[%s297] sm:$0xff] %v9730
        %s9732 = sand.u32 %s164, 1
        %s9733 = scalar_lea.sflag [#allocation6], %s9732
        %s9734 = sand.u32 %s164, 1
        %s9735 = smul.addr %s9734, 8
        %s9736 = scalar_lea.vmem [#allocation10], %s9735
        // Predicated region
        $region57: #{tpu_custom_call.1} parent=43 // pred_check
          %p9737 = pneg %p174
        $region58: #{tpu_custom_call.1} parent=43 // pred_check_branch
          %9739 = sbr.rel (%p9737) target = $region60
        $region59: #{tpu_custom_call.1} parent=43 // pred_region
          %s9741 = ssub.s32 128, 128
          %9742 = vsyncadd %s9733, %s9741
          %s9743 = smul.addr %s25, 128
          %s9744 = scalar_lea.hbm %s6, %s9743
          %s9746 = sshll.u32 %s9736, 4
          %s9747 = int_to_ptr.vmem [resolvable:$true] %s9746
          %9749 = dma.vmem_to_hbm [thread:$0]  %s9747, 128, %s9744, %s9733
        $region60: #{tpu_custom_call.1} parent=43 // pred_fallthru
          _
      $region44: #{tpu_custom_call.1} parent=5 // pred_fallthru
        _
      %p9750 = scmp.le.s32.totalorder 2, %s20
      // Predicated region
      $region61: #{tpu_custom_call.1} parent=5 // pred_check
        %p9751 = pneg %p9750
      $region62: #{tpu_custom_call.1} parent=5 // pred_check_branch
        %9753 = sbr.rel (%p9751) target = $region64
      $region63: #{tpu_custom_call.1} parent=5 // pred_region
        %s9754 = ssub.s32 %s20, 2
        // Predicated region
        $region65: #{tpu_custom_call.1} parent=63 // pred_check
          %p9755 = pneg %p180
        $region66: #{tpu_custom_call.1} parent=63 // pred_check_branch
          %9757 = sbr.rel (%p9755) target = $region68
        $region67: #{tpu_custom_call.1} parent=63 // pred_region
          %s9758 = sand.u32 %s165, 1
          %s9759 = scalar_lea.sflag [#allocation6], %s9758
          %s9760 = sand.u32 %s165, 1
          %s9761 = smul.addr %s9760, 8
          %s9762 = scalar_lea.vmem [#allocation10], %s9761
          %9763 = dma.done %s9759, 128
        $region68: #{tpu_custom_call.1} parent=63 // pred_fallthru
          _
      $region64: #{tpu_custom_call.1} parent=5 // pred_fallthru
        _
    $region6: #{tpu_custom_call.1} parent=1 // loop_footer
      %s24 = sadd.s32 1, %s20
    $region7: #{tpu_custom_call.1} parent=1 // loop_footer_branch
      %19 = sbr.rel target = $region3
    $region8: #{tpu_custom_call.1} parent=1 // loop_exit
      _
    %9764 = vsyncpa [#allocation5], 1
    %s9765 = scalar_lea.sflag [#allocation5], 1
    %9766 = vsyncpa %s9765, 1
    %9767 = vsyncpa [#allocation8], 1
    %9768 = vsyncpa [#allocation6], 1
    %s9769 = scalar_lea.sflag [#allocation6], 1
    %9770 = vsyncpa %s9769, 1

</llo_original>
